<compile_context>
chip_gen: v7x
topology: tpu7x:2x2x1
jax: 0.10.0
libtpu: 0.0.40
codegen_flags: <defaults>
</compile_context>

<pallas_src>
import functools

import jax
import jax.numpy as jnp
from jax.experimental import pallas as pl
from jax.experimental.pallas import tpu as pltpu

CFG = dict(
    img_size=8,
    patch_size=1,
    in_chans=8,
    embed_dim=32,
    depth=12,              # forward() hard-codes stage indices 2, 5, 8, 11
    num_heads=4,
    mlp_ratio=4.0,
    out_chans=16,
    window_size=0,
    global_attn_indexes=(2, 5, 8, 11),
)


# ----------------------------- fused encoder kernel -----------------------------

def _encoder_kernel(
    tok_ref, pos_ref, patch_w_ref, patch_b_ref,
    ln1_g_ref, ln1_b_ref, qkv_w_ref, qkv_b_ref,
    proj_w_ref, proj_b_ref, ln2_g_ref, ln2_b_ref,
    mlp_w1_ref, mlp_b1_ref, mlp_w2_ref, mlp_b2_ref,
    router_w_ref, neck_w1_ref, neck_ln1_g_ref, neck_ln1_b_ref,
    neck_w2_ref, neck_ln2_g_ref, neck_ln2_b_ref,
    out_ref,
    x_ref, stage_ref, pad_ref,
    *, depth, num_heads, stage_ids, hp, wp, ln_eps, ln2d_eps):
  d = pl.program_id(1)               # depth step (grid = (batch, depth))
  n_tok, e = x_ref.shape
  hd = e // num_heads
  scale = hd ** (-0.5)
  oc = out_ref.shape[-1]

  def layer_norm(v, g, b, eps):
    mu = jnp.mean(v, axis=-1, keepdims=True)
    c = v - mu
    var = jnp.mean(c * c, axis=-1, keepdims=True)
    return c * jax.lax.rsqrt(var + eps) * g + b

  def gelu(v):                       # exact erf GELU (torch.nn.GELU default)
    return 0.5 * v * (1.0 + jax.lax.erf(v * 0.7071067811865475))

  # ---- step 0: patch embed (stride==kernel conv as matmul) + absolute pos embed ----
  @pl.when(d == 0)
  def _():
    t = tok_ref[0]                                                     # (N, Cin*p*p)
    x0 = jnp.dot(t, patch_w_ref[...], preferred_element_type=jnp.float32)
    x_ref[...] = x0 + patch_b_ref[...] + pos_ref[...]

  x = x_ref[...]                                                       # (N, E) f32

  # ---- transformer block d: LN1 -> qkv -> MHA -> proj -> +res -> LN2 -> MLP -> +res ----
  xn = layer_norm(x, ln1_g_ref[0], ln1_b_ref[0], ln_eps)
  qkv = jnp.dot(xn, qkv_w_ref[0], preferred_element_type=jnp.float32) + qkv_b_ref[0]
  proj_w = proj_w_ref[0]                                               # (E, E)
  attn_out = jnp.zeros((n_tok, e), jnp.float32)
  for h in range(num_heads):         # head split / merge in-register, no HBM relayout
    lo = h * hd
    qh = qkv[:, lo:lo + hd] * scale                                    # (N, hd)
    kh = qkv[:, e + lo:e + lo + hd]
    vh = qkv[:, 2 * e + lo:2 * e + lo + hd]
    s = jax.lax.dot_general(qh, kh, (((1,), (1,)), ((), ())),
                            preferred_element_type=jnp.float32)        # (N, N)
    s = s - jnp.max(s, axis=-1, keepdims=True)
    p = jnp.exp(s)
    p = p / jnp.sum(p, axis=-1, keepdims=True)
    oh = jnp.dot(p, vh, preferred_element_type=jnp.float32)            # (N, hd)
    # concat(heads) @ proj_w  ==  sum_h  oh @ proj_w[h*hd:(h+1)*hd, :]
    attn_out = attn_out + jnp.dot(oh, proj_w[lo:lo + hd, :],
                                  preferred_element_type=jnp.float32)
  x = x + attn_out + proj_b_ref[0]

  xn2 = layer_norm(x, ln2_g_ref[0], ln2_b_ref[0], ln_eps)
  h1 = gelu(jnp.dot(xn2, mlp_w1_ref[0], preferred_element_type=jnp.float32)
            + mlp_b1_ref[0])
  x = x + jnp.dot(h1, mlp_w2_ref[0], preferred_element_type=jnp.float32) + mlp_b2_ref[0]
  x_ref[...] = x

  # ---- capture SMoE stage outputs (after blocks 2, 5, 8, 11) in VMEM ----
  for si, sd in enumerate(stage_ids):
    @pl.when(d == sd)
    def _(si=si):
      stage_ref[si] = x

  # ---- last block: router combine + neck, entirely in VMEM ----
  @pl.when(d == depth - 1)
  def _():
    logits = jnp.dot(x, router_w_ref[...], preferred_element_type=jnp.float32)   # (N, 4)
    logits = logits - jnp.max(logits, axis=-1, keepdims=True)
    ew = jnp.exp(logits)
    rw = ew / jnp.sum(ew, axis=-1, keepdims=True)
    comb = x
    for si in range(len(stage_ids)):
      comb = comb + rw[:, si:si + 1] * stage_ref[si]

    # neck: 1x1 conv (no bias) -> LayerNorm2d -> 3x3 conv pad=1 (no bias) -> LayerNorm2d
    y = jnp.dot(comb, neck_w1_ref[...], preferred_element_type=jnp.float32)      # (N, oc)
    y = layer_norm(y, neck_ln1_g_ref[...], neck_ln1_b_ref[...], ln2d_eps)

    pad_ref[...] = jnp.zeros((hp + 2, wp + 2, oc), jnp.float32)
    pad_ref[1:1 + hp, 1:1 + wp, :] = y.reshape(hp, wp, oc)
    acc = jnp.zeros((n_tok, oc), jnp.float32)
    for t in range(9):                              # 9 shifted-tap matmuls
      di, dj = t // 3, t % 3
      tap = pad_ref[di:di + hp, dj:dj + wp, :].reshape(n_tok, oc)
      acc = acc + jnp.dot(tap, neck_w2_ref[t], preferred_element_type=jnp.float32)
    acc = layer_norm(acc, neck_ln2_g_ref[...], neck_ln2_b_ref[...], ln2d_eps)
    out_ref[0] = acc.astype(out_ref.dtype)


# ----------------------------- wrapper -----------------------------

def image_encoder_vit_forward(params, x_nchw):
  B, Cin, H, W = x_nchw.shape
  p = CFG['patch_size']
  Hp, Wp = H // p, W // p
  N = Hp * Wp
  E = params['patch_w'].shape[1]
  oc = params['neck_w1'].shape[1]
  blk = params['blocks']
  depth = blk['qkv_w'].shape[0]
  mlp_dim = blk['mlp_w1'].shape[2]
  ck = Cin * p * p

  # patch im2col (pure layout op; with patch_size==1 it is just a permute to NHWC)
  tok = x_nchw.reshape(B, Cin, Hp, p, Wp, p).transpose(0, 2, 4, 1, 3, 5).reshape(B, N, ck)

  kernel = functools.partial(
      _encoder_kernel,
      depth=depth, num_heads=CFG['num_heads'],
      stage_ids=tuple(CFG['global_attn_indexes']),
      hp=Hp, wp=Wp, ln_eps=1e-6, ln2d_eps=1e-6)

  const2 = lambda b, d: (0, 0)
  const3 = lambda b, d: (0, 0, 0)
  per_blk = lambda b, d: (d, 0, 0)
  per_b = lambda b, d: (b, 0, 0)

  out = pl.pallas_call(
      kernel,
      out_shape=jax.ShapeDtypeStruct((B, N, oc), jnp.float32),
      grid=(B, depth),
      in_specs=[
          pl.BlockSpec((1, N, ck), per_b),            # tokens (per batch image)
          pl.BlockSpec((N, E), const2),               # pos embed (flattened)
          pl.BlockSpec((ck, E), const2),              # patch_w
          pl.BlockSpec((1, E), const2),               # patch_b
          pl.BlockSpec((1, 1, E), per_blk),           # ln1_g
          pl.BlockSpec((1, 1, E), per_blk),           # ln1_b
          pl.BlockSpec((1, E, 3 * E), per_blk),       # qkv_w
          pl.BlockSpec((1, 1, 3 * E), per_blk),       # qkv_b
          pl.BlockSpec((1, E, E), per_blk),           # proj_w
          pl.BlockSpec((1, 1, E), per_blk),           # proj_b
          pl.BlockSpec((1, 1, E), per_blk),           # ln2_g
          pl.BlockSpec((1, 1, E), per_blk),           # ln2_b
          pl.BlockSpec((1, E, mlp_dim), per_blk),     # mlp_w1
          pl.BlockSpec((1, 1, mlp_dim), per_blk),     # mlp_b1
          pl.BlockSpec((1, mlp_dim, E), per_blk),     # mlp_w2
          pl.BlockSpec((1, 1, E), per_blk),           # mlp_b2
          pl.BlockSpec((E, 4), const2),               # router_w
          pl.BlockSpec((E, oc), const2),              # neck_w1 (1x1 conv)
          pl.BlockSpec((1, oc), const2),              # neck_ln1_g
          pl.BlockSpec((1, oc), const2),              # neck_ln1_b
          pl.BlockSpec((9, oc, oc), const3),          # neck_w2 (3x3 conv, 9 taps)
          pl.BlockSpec((1, oc), const2),              # neck_ln2_g
          pl.BlockSpec((1, oc), const2),              # neck_ln2_b
      ],
      out_specs=pl.BlockSpec((1, N, oc), per_b),
      scratch_shapes=[
          pltpu.VMEM((N, E), jnp.float32),            # resident activation
          pltpu.VMEM((4, N, E), jnp.float32),         # stage outputs 2/5/8/11
          pltpu.VMEM((Hp + 2, Wp + 2, oc), jnp.float32),  # zero-padded neck buffer
      ],
      compiler_params=pltpu.CompilerParams(
          dimension_semantics=("parallel", "arbitrary")),
  )(tok, params['pos_embed'], params['patch_w'], params['patch_b'],
    blk['ln1_g'], blk['ln1_b'], blk['qkv_w'], blk['qkv_b'],
    blk['proj_w'], blk['proj_b'], blk['ln2_g'], blk['ln2_b'],
    blk['mlp_w1'], blk['mlp_b1'], blk['mlp_w2'], blk['mlp_b2'],
    params['router_w'], params['neck_w1'],
    params['neck_ln1_g'], params['neck_ln1_b'], params['neck_w2'],
    params['neck_ln2_g'], params['neck_ln2_b'])

  # NHWC -> NCHW to match the PyTorch module's output
  return out.reshape(B, Hp, Wp, oc).transpose(0, 3, 1, 2)


# ----------------------------- params -----------------------------

def init_params(key):
  E = CFG['embed_dim']
  Cin = CFG['in_chans']
  p = CFG['patch_size']
  Hp = CFG['img_size'] // p
  N = Hp * Hp
  mlp_dim = int(E * CFG['mlp_ratio'])
  oc = CFG['out_chans']
  depth = CFG['depth']

  keys = jax.random.split(key, 6 + depth)

  def nrm(k, shape, s=0.02):
    return (s * jax.random.normal(k, shape)).astype(jnp.float32)

  params = dict(
      patch_w=nrm(keys[0], (Cin * p * p, E)),
      patch_b=jnp.zeros((1, E), jnp.float32),
      pos_embed=nrm(keys[1], (N, E)),           # PyTorch (1, Hp, Wp, E) flattened to (N, E)
      router_w=nrm(keys[2], (E, 4)),
      neck_w1=nrm(keys[3], (E, oc)),
      neck_ln1_g=jnp.ones((1, oc), jnp.float32),
      neck_ln1_b=jnp.zeros((1, oc), jnp.float32),
      # neck_w2[t] is the (c_in, c_out) matrix of 3x3 tap t = kh*3+kw
      # (== PyTorch conv weight[:, :, kh, kw].T when porting real weights).
      neck_w2=nrm(keys[4], (9, oc, oc)),
      neck_ln2_g=jnp.ones((1, oc), jnp.float32),
      neck_ln2_b=jnp.zeros((1, oc), jnp.float32),
  )

  blocks = []
  for i in range(depth):
    bk = jax.random.split(keys[6 + i], 4)
    blocks.append(dict(
        ln1_g=jnp.ones((1, E), jnp.float32), ln1_b=jnp.zeros((1, E), jnp.float32),
        qkv_w=nrm(bk[0], (E, 3 * E)), qkv_b=jnp.zeros((1, 3 * E), jnp.float32),
        proj_w=nrm(bk[1], (E, E)), proj_b=jnp.zeros((1, E), jnp.float32),
        ln2_g=jnp.ones((1, E), jnp.float32), ln2_b=jnp.zeros((1, E), jnp.float32),
        mlp_w1=nrm(bk[2], (E, mlp_dim)), mlp_b1=jnp.zeros((1, mlp_dim), jnp.float32),
        mlp_w2=nrm(bk[3], (mlp_dim, E)), mlp_b2=jnp.zeros((1, E), jnp.float32),
    ))
  # stack per-block params along a leading depth axis (streamed per grid step)
  params['blocks'] = {k: jnp.stack([b[k] for b in blocks]) for k in blocks[0]}
  return params


if __name__ == "__main__":
  key = jax.random.PRNGKey(0)
  kx, kp = jax.random.split(key)
  x = jax.random.normal(
      kx, (2, CFG['in_chans'], CFG['img_size'], CFG['img_size']), jnp.float32)
  params = init_params(kp)

  fwd = jax.jit(image_encoder_vit_forward)
  out = fwd(params, x)
  jax.block_until_ready(out)

  expected = (2, CFG['out_chans'],
              CFG['img_size'] // CFG['patch_size'],
              CFG['img_size'] // CFG['patch_size'])
  assert out.shape == expected, (out.shape, expected)
  assert out.dtype == jnp.float32
  assert bool(jnp.all(jnp.isfinite(out)))
  print("KERNEL_OK")
</pallas_src>

<mosaic_0001>
module attributes {stable_mosaic.version = 11 : i64} {
  func.func @_encoder_kernel(%arg0: i32, %arg1: i32, %arg2: memref<1x64x8xf32, #tpu.memory_space<vmem>>, %arg3: memref<64x32xf32, #tpu.memory_space<vmem>>, %arg4: memref<8x32xf32, #tpu.memory_space<vmem>>, %arg5: memref<1x32xf32, #tpu.memory_space<vmem>>, %arg6: memref<1x1x32xf32, #tpu.memory_space<vmem>>, %arg7: memref<1x1x32xf32, #tpu.memory_space<vmem>>, %arg8: memref<1x32x96xf32, #tpu.memory_space<vmem>>, %arg9: memref<1x1x96xf32, #tpu.memory_space<vmem>>, %arg10: memref<1x32x32xf32, #tpu.memory_space<vmem>>, %arg11: memref<1x1x32xf32, #tpu.memory_space<vmem>>, %arg12: memref<1x1x32xf32, #tpu.memory_space<vmem>>, %arg13: memref<1x1x32xf32, #tpu.memory_space<vmem>>, %arg14: memref<1x32x128xf32, #tpu.memory_space<vmem>>, %arg15: memref<1x1x128xf32, #tpu.memory_space<vmem>>, %arg16: memref<1x128x32xf32, #tpu.memory_space<vmem>>, %arg17: memref<1x1x32xf32, #tpu.memory_space<vmem>>, %arg18: memref<32x4xf32, #tpu.memory_space<vmem>>, %arg19: memref<32x16xf32, #tpu.memory_space<vmem>>, %arg20: memref<1x16xf32, #tpu.memory_space<vmem>>, %arg21: memref<1x16xf32, #tpu.memory_space<vmem>>, %arg22: memref<9x16x16xf32, #tpu.memory_space<vmem>>, %arg23: memref<1x16xf32, #tpu.memory_space<vmem>>, %arg24: memref<1x16xf32, #tpu.memory_space<vmem>>, %arg25: memref<1x64x16xf32, #tpu.memory_space<vmem>>, %arg26: memref<64x32xf32, #tpu.memory_space<vmem>>, %arg27: memref<4x64x32xf32, #tpu.memory_space<vmem>>, %arg28: memref<10x10x16xf32, #tpu.memory_space<vmem>>) attributes {dimension_semantics = [#tpu.dimension_semantics<parallel>, #tpu.dimension_semantics<arbitrary>], iteration_bounds = array<i64: 2, 12>, scalar_prefetch = 0 : i64, scratch_operands = 3 : i64, tpu.core_type = #tpu.core_type<tc>, window_params = [{transform_indices = @transform_0, window_bounds = array<i64: 1, 64, 8>}, {pipeline_mode = #tpu.pipeline_mode<synchronous>, transform_indices = @transform_1, window_bounds = array<i64: 64, 32>}, {pipeline_mode = #tpu.pipeline_mode<synchronous>, transform_indices = @transform_2, window_bounds = array<i64: 8, 32>}, {pipeline_mode = #tpu.pipeline_mode<synchronous>, transform_indices = @transform_3, window_bounds = array<i64: 1, 32>}, {transform_indices = @transform_4, window_bounds = array<i64: 1, 1, 32>}, {transform_indices = @transform_5, window_bounds = array<i64: 1, 1, 32>}, {transform_indices = @transform_6, window_bounds = array<i64: 1, 32, 96>}, {transform_indices = @transform_7, window_bounds = array<i64: 1, 1, 96>}, {transform_indices = @transform_8, window_bounds = array<i64: 1, 32, 32>}, {transform_indices = @transform_9, window_bounds = array<i64: 1, 1, 32>}, {transform_indices = @transform_10, window_bounds = array<i64: 1, 1, 32>}, {transform_indices = @transform_11, window_bounds = array<i64: 1, 1, 32>}, {transform_indices = @transform_12, window_bounds = array<i64: 1, 32, 128>}, {transform_indices = @transform_13, window_bounds = array<i64: 1, 1, 128>}, {transform_indices = @transform_14, window_bounds = array<i64: 1, 128, 32>}, {transform_indices = @transform_15, window_bounds = array<i64: 1, 1, 32>}, {pipeline_mode = #tpu.pipeline_mode<synchronous>, transform_indices = @transform_16, window_bounds = array<i64: 32, 4>}, {pipeline_mode = #tpu.pipeline_mode<synchronous>, transform_indices = @transform_17, window_bounds = array<i64: 32, 16>}, {pipeline_mode = #tpu.pipeline_mode<synchronous>, transform_indices = @transform_18, window_bounds = array<i64: 1, 16>}, {pipeline_mode = #tpu.pipeline_mode<synchronous>, transform_indices = @transform_19, window_bounds = array<i64: 1, 16>}, {pipeline_mode = #tpu.pipeline_mode<synchronous>, transform_indices = @transform_20, window_bounds = array<i64: 9, 16, 16>}, {pipeline_mode = #tpu.pipeline_mode<synchronous>, transform_indices = @transform_21, window_bounds = array<i64: 1, 16>}, {pipeline_mode = #tpu.pipeline_mode<synchronous>, transform_indices = @transform_22, window_bounds = array<i64: 1, 16>}, {transform_indices = @transform_23, window_bounds = array<i64: 1, 64, 16>}]} {
    %c0_i32 = arith.constant 0 : i32
    %0 = arith.cmpi eq, %arg1, %c0_i32 : i32
    %1 = arith.extui %0 : i1 to i32
    %c0_i32_0 = arith.constant 0 : i32
    %2 = arith.cmpi ne, %1, %c0_i32_0 : i32
    scf.if %2 {
      %c0_86 = arith.constant 0 : index
      %c0_87 = arith.constant 0 : index
      %c0_88 = arith.constant 0 : index
      %182 = vector.load %arg2[%c0_86, %c0_87, %c0_88] : memref<1x64x8xf32, #tpu.memory_space<vmem>>, vector<1x64x8xf32>
      %183 = vector.shape_cast %182 : vector<1x64x8xf32> to vector<64x8xf32>
      %c0_89 = arith.constant 0 : index
      %c0_90 = arith.constant 0 : index
      %184 = vector.load %arg4[%c0_89, %c0_90] : memref<8x32xf32, #tpu.memory_space<vmem>>, vector<8x32xf32>
      %cst_91 = arith.constant dense<0.000000e+00> : vector<64x32xf32>
      %185 = tpu.matmul %183, %184, %cst_91 {dimension_numbers = #tpu.dot_dimension_numbers<[1], [0], [0], [1], [0, 0, 1, 1], [], []>} : vector<64x8xf32>, vector<8x32xf32>, vector<64x32xf32> -> vector<64x32xf32>
      %c0_92 = arith.constant 0 : index
      %c0_93 = arith.constant 0 : index
      %186 = vector.load %arg5[%c0_92, %c0_93] : memref<1x32xf32, #tpu.memory_space<vmem>>, vector<1x32xf32>
      %187 = vector.broadcast %186 : vector<1x32xf32> to vector<64x32xf32>
      %188 = arith.addf %185, %187 : vector<64x32xf32>
      %c0_94 = arith.constant 0 : index
      %c0_95 = arith.constant 0 : index
      %189 = vector.load %arg3[%c0_94, %c0_95] : memref<64x32xf32, #tpu.memory_space<vmem>>, vector<64x32xf32>
      %190 = arith.addf %188, %189 : vector<64x32xf32>
      %c0_96 = arith.constant 0 : index
      %c0_97 = arith.constant 0 : index
      %191 = vector.load %arg26[%c0_96, %c0_97] : memref<64x32xf32, #tpu.memory_space<vmem>>, vector<64x32xf32>
      tpu.vector_store %arg26[%c0_96, %c0_97], %190 {strides = array<i32>} : memref<64x32xf32, #tpu.memory_space<vmem>>, vector<64x32xf32>,
    } else {
    }
    %c0 = arith.constant 0 : index
    %c0_1 = arith.constant 0 : index
    %3 = vector.load %arg26[%c0, %c0_1] : memref<64x32xf32, #tpu.memory_space<vmem>>, vector<64x32xf32>
    %c0_2 = arith.constant 0 : index
    %c0_3 = arith.constant 0 : index
    %c0_4 = arith.constant 0 : index
    %4 = vector.load %arg6[%c0_2, %c0_3, %c0_4] : memref<1x1x32xf32, #tpu.memory_space<vmem>>, vector<1x1x32xf32>
    %5 = vector.shape_cast %4 : vector<1x1x32xf32> to vector<1x32xf32>
    %c0_5 = arith.constant 0 : index
    %c0_6 = arith.constant 0 : index
    %c0_7 = arith.constant 0 : index
    %6 = vector.load %arg7[%c0_5, %c0_6, %c0_7] : memref<1x1x32xf32, #tpu.memory_space<vmem>>, vector<1x1x32xf32>
    %7 = vector.shape_cast %6 : vector<1x1x32xf32> to vector<1x32xf32>
    %cst = arith.constant dense<0.000000e+00> : vector<64xf32>
    %8 = vector.multi_reduction <add>, %3, %cst [1] : vector<64x32xf32> to vector<64xf32>
    %9 = vector.shape_cast %8 : vector<64xf32> to vector<64x1xf32>
    %cst_8 = arith.constant 3.200000e+01 : f32
    %10 = vector.broadcast %cst_8 : f32 to vector<64x1xf32>
    %11 = arith.divf %9, %10 : vector<64x1xf32>
    %12 = vector.broadcast %11 : vector<64x1xf32> to vector<64x32xf32>
    %13 = arith.subf %3, %12 : vector<64x32xf32>
    %14 = arith.mulf %13, %13 : vector<64x32xf32>
    %cst_9 = arith.constant dense<0.000000e+00> : vector<64xf32>
    %15 = vector.multi_reduction <add>, %14, %cst_9 [1] : vector<64x32xf32> to vector<64xf32>
    %16 = vector.shape_cast %15 : vector<64xf32> to vector<64x1xf32>
    %cst_10 = arith.constant 3.200000e+01 : f32
    %17 = vector.broadcast %cst_10 : f32 to vector<64x1xf32>
    %18 = arith.divf %16, %17 : vector<64x1xf32>
    %cst_11 = arith.constant 9.99999997E-7 : f32
    %19 = vector.broadcast %cst_11 : f32 to vector<64x1xf32>
    %20 = arith.addf %18, %19 : vector<64x1xf32>
    %21 = math.rsqrt %20 : vector<64x1xf32>
    %22 = vector.broadcast %21 : vector<64x1xf32> to vector<64x32xf32>
    %23 = arith.mulf %13, %22 : vector<64x32xf32>
    %24 = vector.broadcast %5 : vector<1x32xf32> to vector<64x32xf32>
    %25 = arith.mulf %23, %24 : vector<64x32xf32>
    %26 = vector.broadcast %7 : vector<1x32xf32> to vector<64x32xf32>
    %27 = arith.addf %25, %26 : vector<64x32xf32>
    %c0_12 = arith.constant 0 : index
    %c0_13 = arith.constant 0 : index
    %c0_14 = arith.constant 0 : index
    %28 = vector.load %arg8[%c0_12, %c0_13, %c0_14] : memref<1x32x96xf32, #tpu.memory_space<vmem>>, vector<1x32x96xf32>
    %29 = vector.shape_cast %28 : vector<1x32x96xf32> to vector<32x96xf32>
    %cst_15 = arith.constant dense<0.000000e+00> : vector<64x96xf32>
    %30 = tpu.matmul %27, %29, %cst_15 {dimension_numbers = #tpu.dot_dimension_numbers<[1], [0], [0], [1], [0, 0, 1, 1], [], []>} : vector<64x32xf32>, vector<32x96xf32>, vector<64x96xf32> -> vector<64x96xf32>
    %c0_16 = arith.constant 0 : index
    %c0_17 = arith.constant 0 : index
    %c0_18 = arith.constant 0 : index
    %31 = vector.load %arg9[%c0_16, %c0_17, %c0_18] : memref<1x1x96xf32, #tpu.memory_space<vmem>>, vector<1x1x96xf32>
    %32 = vector.shape_cast %31 : vector<1x1x96xf32> to vector<1x96xf32>
    %33 = vector.broadcast %32 : vector<1x96xf32> to vector<64x96xf32>
    %34 = arith.addf %30, %33 : vector<64x96xf32>
    %c0_19 = arith.constant 0 : index
    %c0_20 = arith.constant 0 : index
    %c0_21 = arith.constant 0 : index
    %35 = vector.load %arg10[%c0_19, %c0_20, %c0_21] : memref<1x32x32xf32, #tpu.memory_space<vmem>>, vector<1x32x32xf32>
    %36 = vector.shape_cast %35 : vector<1x32x32xf32> to vector<32x32xf32>
    %cst_22 = arith.constant 0.000000e+00 : f32
    %37 = vector.broadcast %cst_22 : f32 to vector<64x32xf32>
    %38 = vector.extract_strided_slice %34 {offsets = [0, 0], sizes = [64, 8], strides = [1, 1]} : vector<64x96xf32> to vector<64x8xf32>
    %cst_23 = arith.constant 0.353553385 : f32
    %39 = vector.broadcast %cst_23 : f32 to vector<64x8xf32>
    %40 = arith.mulf %38, %39 : vector<64x8xf32>
    %41 = vector.extract_strided_slice %34 {offsets = [0, 32], sizes = [64, 8], strides = [1, 1]} : vector<64x96xf32> to vector<64x8xf32>
    %42 = vector.extract_strided_slice %34 {offsets = [0, 64], sizes = [64, 8], strides = [1, 1]} : vector<64x96xf32> to vector<64x8xf32>
    %cst_24 = arith.constant dense<0.000000e+00> : vector<64x64xf32>
    %43 = tpu.matmul %40, %41, %cst_24 {dimension_numbers = #tpu.dot_dimension_numbers<[1], [1], [0], [0], [0, 0, 1, 0], [], []>} : vector<64x8xf32>, vector<64x8xf32>, vector<64x64xf32> -> vector<64x64xf32>
    %cst_25 = arith.constant dense<0xFF800000> : vector<64xf32>
    %44 = vector.multi_reduction <maximumf>, %43, %cst_25 [1] : vector<64x64xf32> to vector<64xf32>
    %45 = vector.shape_cast %44 : vector<64xf32> to vector<64x1xf32>
    %46 = vector.broadcast %45 : vector<64x1xf32> to vector<64x64xf32>
    %47 = arith.subf %43, %46 : vector<64x64xf32>
    %48 = math.exp %47 : vector<64x64xf32>
    %cst_26 = arith.constant dense<0.000000e+00> : vector<64xf32>
    %49 = vector.multi_reduction <add>, %48, %cst_26 [1] : vector<64x64xf32> to vector<64xf32>
    %50 = vector.shape_cast %49 : vector<64xf32> to vector<64x1xf32>
    %51 = vector.broadcast %50 : vector<64x1xf32> to vector<64x64xf32>
    %52 = arith.divf %48, %51 : vector<64x64xf32>
    %cst_27 = arith.constant dense<0.000000e+00> : vector<64x8xf32>
    %53 = tpu.matmul %52, %42, %cst_27 {dimension_numbers = #tpu.dot_dimension_numbers<[1], [0], [0], [1], [0, 0, 1, 1], [], []>} : vector<64x64xf32>, vector<64x8xf32>, vector<64x8xf32> -> vector<64x8xf32>
    %54 = vector.extract_strided_slice %36 {offsets = [0, 0], sizes = [8, 32], strides = [1, 1]} : vector<32x32xf32> to vector<8x32xf32>
    %cst_28 = arith.constant dense<0.000000e+00> : vector<64x32xf32>
    %55 = tpu.matmul %53, %54, %cst_28 {dimension_numbers = #tpu.dot_dimension_numbers<[1], [0], [0], [1], [0, 0, 1, 1], [], []>} : vector<64x8xf32>, vector<8x32xf32>, vector<64x32xf32> -> vector<64x32xf32>
    %56 = arith.addf %37, %55 : vector<64x32xf32>
    %57 = vector.extract_strided_slice %34 {offsets = [0, 8], sizes = [64, 8], strides = [1, 1]} : vector<64x96xf32> to vector<64x8xf32>
    %cst_29 = arith.constant 0.353553385 : f32
    %58 = vector.broadcast %cst_29 : f32 to vector<64x8xf32>
    %59 = arith.mulf %57, %58 : vector<64x8xf32>
    %60 = vector.extract_strided_slice %34 {offsets = [0, 40], sizes = [64, 8], strides = [1, 1]} : vector<64x96xf32> to vector<64x8xf32>
    %61 = vector.extract_strided_slice %34 {offsets = [0, 72], sizes = [64, 8], strides = [1, 1]} : vector<64x96xf32> to vector<64x8xf32>
    %cst_30 = arith.constant dense<0.000000e+00> : vector<64x64xf32>
    %62 = tpu.matmul %59, %60, %cst_30 {dimension_numbers = #tpu.dot_dimension_numbers<[1], [1], [0], [0], [0, 0, 1, 0], [], []>} : vector<64x8xf32>, vector<64x8xf32>, vector<64x64xf32> -> vector<64x64xf32>
    %cst_31 = arith.constant dense<0xFF800000> : vector<64xf32>
    %63 = vector.multi_reduction <maximumf>, %62, %cst_31 [1] : vector<64x64xf32> to vector<64xf32>
    %64 = vector.shape_cast %63 : vector<64xf32> to vector<64x1xf32>
    %65 = vector.broadcast %64 : vector<64x1xf32> to vector<64x64xf32>
    %66 = arith.subf %62, %65 : vector<64x64xf32>
    %67 = math.exp %66 : vector<64x64xf32>
    %cst_32 = arith.constant dense<0.000000e+00> : vector<64xf32>
    %68 = vector.multi_reduction <add>, %67, %cst_32 [1] : vector<64x64xf32> to vector<64xf32>
    %69 = vector.shape_cast %68 : vector<64xf32> to vector<64x1xf32>
    %70 = vector.broadcast %69 : vector<64x1xf32> to vector<64x64xf32>
    %71 = arith.divf %67, %70 : vector<64x64xf32>
    %cst_33 = arith.constant dense<0.000000e+00> : vector<64x8xf32>
    %72 = tpu.matmul %71, %61, %cst_33 {dimension_numbers = #tpu.dot_dimension_numbers<[1], [0], [0], [1], [0, 0, 1, 1], [], []>} : vector<64x64xf32>, vector<64x8xf32>, vector<64x8xf32> -> vector<64x8xf32>
    %73 = vector.extract_strided_slice %36 {offsets = [8, 0], sizes = [8, 32], strides = [1, 1]} : vector<32x32xf32> to vector<8x32xf32>
    %cst_34 = arith.constant dense<0.000000e+00> : vector<64x32xf32>
    %74 = tpu.matmul %72, %73, %cst_34 {dimension_numbers = #tpu.dot_dimension_numbers<[1], [0], [0], [1], [0, 0, 1, 1], [], []>} : vector<64x8xf32>, vector<8x32xf32>, vector<64x32xf32> -> vector<64x32xf32>
    %75 = arith.addf %56, %74 : vector<64x32xf32>
    %76 = vector.extract_strided_slice %34 {offsets = [0, 16], sizes = [64, 8], strides = [1, 1]} : vector<64x96xf32> to vector<64x8xf32>
    %cst_35 = arith.constant 0.353553385 : f32
    %77 = vector.broadcast %cst_35 : f32 to vector<64x8xf32>
    %78 = arith.mulf %76, %77 : vector<64x8xf32>
    %79 = vector.extract_strided_slice %34 {offsets = [0, 48], sizes = [64, 8], strides = [1, 1]} : vector<64x96xf32> to vector<64x8xf32>
    %80 = vector.extract_strided_slice %34 {offsets = [0, 80], sizes = [64, 8], strides = [1, 1]} : vector<64x96xf32> to vector<64x8xf32>
    %cst_36 = arith.constant dense<0.000000e+00> : vector<64x64xf32>
    %81 = tpu.matmul %78, %79, %cst_36 {dimension_numbers = #tpu.dot_dimension_numbers<[1], [1], [0], [0], [0, 0, 1, 0], [], []>} : vector<64x8xf32>, vector<64x8xf32>, vector<64x64xf32> -> vector<64x64xf32>
    %cst_37 = arith.constant dense<0xFF800000> : vector<64xf32>
    %82 = vector.multi_reduction <maximumf>, %81, %cst_37 [1] : vector<64x64xf32> to vector<64xf32>
    %83 = vector.shape_cast %82 : vector<64xf32> to vector<64x1xf32>
    %84 = vector.broadcast %83 : vector<64x1xf32> to vector<64x64xf32>
    %85 = arith.subf %81, %84 : vector<64x64xf32>
    %86 = math.exp %85 : vector<64x64xf32>
    %cst_38 = arith.constant dense<0.000000e+00> : vector<64xf32>
    %87 = vector.multi_reduction <add>, %86, %cst_38 [1] : vector<64x64xf32> to vector<64xf32>
    %88 = vector.shape_cast %87 : vector<64xf32> to vector<64x1xf32>
    %89 = vector.broadcast %88 : vector<64x1xf32> to vector<64x64xf32>
    %90 = arith.divf %86, %89 : vector<64x64xf32>
    %cst_39 = arith.constant dense<0.000000e+00> : vector<64x8xf32>
    %91 = tpu.matmul %90, %80, %cst_39 {dimension_numbers = #tpu.dot_dimension_numbers<[1], [0], [0], [1], [0, 0, 1, 1], [], []>} : vector<64x64xf32>, vector<64x8xf32>, vector<64x8xf32> -> vector<64x8xf32>
    %92 = vector.extract_strided_slice %36 {offsets = [16, 0], sizes = [8, 32], strides = [1, 1]} : vector<32x32xf32> to vector<8x32xf32>
    %cst_40 = arith.constant dense<0.000000e+00> : vector<64x32xf32>
    %93 = tpu.matmul %91, %92, %cst_40 {dimension_numbers = #tpu.dot_dimension_numbers<[1], [0], [0], [1], [0, 0, 1, 1], [], []>} : vector<64x8xf32>, vector<8x32xf32>, vector<64x32xf32> -> vector<64x32xf32>
    %94 = arith.addf %75, %93 : vector<64x32xf32>
    %95 = vector.extract_strided_slice %34 {offsets = [0, 24], sizes = [64, 8], strides = [1, 1]} : vector<64x96xf32> to vector<64x8xf32>
    %cst_41 = arith.constant 0.353553385 : f32
    %96 = vector.broadcast %cst_41 : f32 to vector<64x8xf32>
    %97 = arith.mulf %95, %96 : vector<64x8xf32>
    %98 = vector.extract_strided_slice %34 {offsets = [0, 56], sizes = [64, 8], strides = [1, 1]} : vector<64x96xf32> to vector<64x8xf32>
    %99 = vector.extract_strided_slice %34 {offsets = [0, 88], sizes = [64, 8], strides = [1, 1]} : vector<64x96xf32> to vector<64x8xf32>
    %cst_42 = arith.constant dense<0.000000e+00> : vector<64x64xf32>
    %100 = tpu.matmul %97, %98, %cst_42 {dimension_numbers = #tpu.dot_dimension_numbers<[1], [1], [0], [0], [0, 0, 1, 0], [], []>} : vector<64x8xf32>, vector<64x8xf32>, vector<64x64xf32> -> vector<64x64xf32>
    %cst_43 = arith.constant dense<0xFF800000> : vector<64xf32>
    %101 = vector.multi_reduction <maximumf>, %100, %cst_43 [1] : vector<64x64xf32> to vector<64xf32>
    %102 = vector.shape_cast %101 : vector<64xf32> to vector<64x1xf32>
    %103 = vector.broadcast %102 : vector<64x1xf32> to vector<64x64xf32>
    %104 = arith.subf %100, %103 : vector<64x64xf32>
    %105 = math.exp %104 : vector<64x64xf32>
    %cst_44 = arith.constant dense<0.000000e+00> : vector<64xf32>
    %106 = vector.multi_reduction <add>, %105, %cst_44 [1] : vector<64x64xf32> to vector<64xf32>
    %107 = vector.shape_cast %106 : vector<64xf32> to vector<64x1xf32>
    %108 = vector.broadcast %107 : vector<64x1xf32> to vector<64x64xf32>
    %109 = arith.divf %105, %108 : vector<64x64xf32>
    %cst_45 = arith.constant dense<0.000000e+00> : vector<64x8xf32>
    %110 = tpu.matmul %109, %99, %cst_45 {dimension_numbers = #tpu.dot_dimension_numbers<[1], [0], [0], [1], [0, 0, 1, 1], [], []>} : vector<64x64xf32>, vector<64x8xf32>, vector<64x8xf32> -> vector<64x8xf32>
    %111 = vector.extract_strided_slice %36 {offsets = [24, 0], sizes = [8, 32], strides = [1, 1]} : vector<32x32xf32> to vector<8x32xf32>
    %cst_46 = arith.constant dense<0.000000e+00> : vector<64x32xf32>
    %112 = tpu.matmul %110, %111, %cst_46 {dimension_numbers = #tpu.dot_dimension_numbers<[1], [0], [0], [1], [0, 0, 1, 1], [], []>} : vector<64x8xf32>, vector<8x32xf32>, vector<64x32xf32> -> vector<64x32xf32>
    %113 = arith.addf %94, %112 : vector<64x32xf32>
    %114 = arith.addf %3, %113 : vector<64x32xf32>
    %c0_47 = arith.constant 0 : index
    %c0_48 = arith.constant 0 : index
    %c0_49 = arith.constant 0 : index
    %115 = vector.load %arg11[%c0_47, %c0_48, %c0_49] : memref<1x1x32xf32, #tpu.memory_space<vmem>>, vector<1x1x32xf32>
    %116 = vector.shape_cast %115 : vector<1x1x32xf32> to vector<1x32xf32>
    %117 = vector.broadcast %116 : vector<1x32xf32> to vector<64x32xf32>
    %118 = arith.addf %114, %117 : vector<64x32xf32>
    %c0_50 = arith.constant 0 : index
    %c0_51 = arith.constant 0 : index
    %c0_52 = arith.constant 0 : index
    %119 = vector.load %arg12[%c0_50, %c0_51, %c0_52] : memref<1x1x32xf32, #tpu.memory_space<vmem>>, vector<1x1x32xf32>
    %120 = vector.shape_cast %119 : vector<1x1x32xf32> to vector<1x32xf32>
    %c0_53 = arith.constant 0 : index
    %c0_54 = arith.constant 0 : index
    %c0_55 = arith.constant 0 : index
    %121 = vector.load %arg13[%c0_53, %c0_54, %c0_55] : memref<1x1x32xf32, #tpu.memory_space<vmem>>, vector<1x1x32xf32>
    %122 = vector.shape_cast %121 : vector<1x1x32xf32> to vector<1x32xf32>
    %cst_56 = arith.constant dense<0.000000e+00> : vector<64xf32>
    %123 = vector.multi_reduction <add>, %118, %cst_56 [1] : vector<64x32xf32> to vector<64xf32>
    %124 = vector.shape_cast %123 : vector<64xf32> to vector<64x1xf32>
    %cst_57 = arith.constant 3.200000e+01 : f32
    %125 = vector.broadcast %cst_57 : f32 to vector<64x1xf32>
    %126 = arith.divf %124, %125 : vector<64x1xf32>
    %127 = vector.broadcast %126 : vector<64x1xf32> to vector<64x32xf32>
    %128 = arith.subf %118, %127 : vector<64x32xf32>
    %129 = arith.mulf %128, %128 : vector<64x32xf32>
    %cst_58 = arith.constant dense<0.000000e+00> : vector<64xf32>
    %130 = vector.multi_reduction <add>, %129, %cst_58 [1] : vector<64x32xf32> to vector<64xf32>
    %131 = vector.shape_cast %130 : vector<64xf32> to vector<64x1xf32>
    %cst_59 = arith.constant 3.200000e+01 : f32
    %132 = vector.broadcast %cst_59 : f32 to vector<64x1xf32>
    %133 = arith.divf %131, %132 : vector<64x1xf32>
    %cst_60 = arith.constant 9.99999997E-7 : f32
    %134 = vector.broadcast %cst_60 : f32 to vector<64x1xf32>
    %135 = arith.addf %133, %134 : vector<64x1xf32>
    %136 = math.rsqrt %135 : vector<64x1xf32>
    %137 = vector.broadcast %136 : vector<64x1xf32> to vector<64x32xf32>
    %138 = arith.mulf %128, %137 : vector<64x32xf32>
    %139 = vector.broadcast %120 : vector<1x32xf32> to vector<64x32xf32>
    %140 = arith.mulf %138, %139 : vector<64x32xf32>
    %141 = vector.broadcast %122 : vector<1x32xf32> to vector<64x32xf32>
    %142 = arith.addf %140, %141 : vector<64x32xf32>
    %c0_61 = arith.constant 0 : index
    %c0_62 = arith.constant 0 : index
    %c0_63 = arith.constant 0 : index
    %143 = vector.load %arg14[%c0_61, %c0_62, %c0_63] : memref<1x32x128xf32, #tpu.memory_space<vmem>>, vector<1x32x128xf32>
    %144 = vector.shape_cast %143 : vector<1x32x128xf32> to vector<32x128xf32>
    %cst_64 = arith.constant dense<0.000000e+00> : vector<64x128xf32>
    %145 = tpu.matmul %142, %144, %cst_64 {dimension_numbers = #tpu.dot_dimension_numbers<[1], [0], [0], [1], [0, 0, 1, 1], [], []>} : vector<64x32xf32>, vector<32x128xf32>, vector<64x128xf32> -> vector<64x128xf32>
    %c0_65 = arith.constant 0 : index
    %c0_66 = arith.constant 0 : index
    %c0_67 = arith.constant 0 : index
    %146 = vector.load %arg15[%c0_65, %c0_66, %c0_67] : memref<1x1x128xf32, #tpu.memory_space<vmem>>, vector<1x1x128xf32>
    %147 = vector.shape_cast %146 : vector<1x1x128xf32> to vector<1x128xf32>
    %148 = vector.broadcast %147 : vector<1x128xf32> to vector<64x128xf32>
    %149 = arith.addf %145, %148 : vector<64x128xf32>
    %cst_68 = arith.constant 5.000000e-01 : f32
    %150 = vector.broadcast %cst_68 : f32 to vector<64x128xf32>
    %151 = arith.mulf %150, %149 : vector<64x128xf32>
    %cst_69 = arith.constant 0.707106769 : f32
    %152 = vector.broadcast %cst_69 : f32 to vector<64x128xf32>
    %153 = arith.mulf %149, %152 : vector<64x128xf32>
    %154 = math.erf %153 : vector<64x128xf32>
    %cst_70 = arith.constant 1.000000e+00 : f32
    %155 = vector.broadcast %cst_70 : f32 to vector<64x128xf32>
    %156 = arith.addf %155, %154 : vector<64x128xf32>
    %157 = arith.mulf %151, %156 : vector<64x128xf32>
    %c0_71 = arith.constant 0 : index
    %c0_72 = arith.constant 0 : index
    %c0_73 = arith.constant 0 : index
    %158 = vector.load %arg16[%c0_71, %c0_72, %c0_73] : memref<1x128x32xf32, #tpu.memory_space<vmem>>, vector<1x128x32xf32>
    %159 = vector.shape_cast %158 : vector<1x128x32xf32> to vector<128x32xf32>
    %cst_74 = arith.constant dense<0.000000e+00> : vector<64x32xf32>
    %160 = tpu.matmul %157, %159, %cst_74 {dimension_numbers = #tpu.dot_dimension_numbers<[1], [0], [0], [1], [0, 0, 1, 1], [], []>} : vector<64x128xf32>, vector<128x32xf32>, vector<64x32xf32> -> vector<64x32xf32>
    %161 = arith.addf %118, %160 : vector<64x32xf32>
    %c0_75 = arith.constant 0 : index
    %c0_76 = arith.constant 0 : index
    %c0_77 = arith.constant 0 : index
    %162 = vector.load %arg17[%c0_75, %c0_76, %c0_77] : memref<1x1x32xf32, #tpu.memory_space<vmem>>, vector<1x1x32xf32>
    %163 = vector.shape_cast %162 : vector<1x1x32xf32> to vector<1x32xf32>
    %164 = vector.broadcast %163 : vector<1x32xf32> to vector<64x32xf32>
    %165 = arith.addf %161, %164 : vector<64x32xf32>
    %c0_78 = arith.constant 0 : index
    %c0_79 = arith.constant 0 : index
    %166 = vector.load %arg26[%c0_78, %c0_79] : memref<64x32xf32, #tpu.memory_space<vmem>>, vector<64x32xf32>
    tpu.vector_store %arg26[%c0_78, %c0_79], %165 {strides = array<i32>} : memref<64x32xf32, #tpu.memory_space<vmem>>, vector<64x32xf32>,
    %c2_i32 = arith.constant 2 : i32
    %167 = arith.cmpi eq, %arg1, %c2_i32 : i32
    %168 = arith.extui %167 : i1 to i32
    %c0_i32_80 = arith.constant 0 : i32
    %169 = arith.cmpi ne, %168, %c0_i32_80 : i32
    scf.if %169 {
      %c0_86 = arith.constant 0 : index
      %c0_87 = arith.constant 0 : index
      %c0_88 = arith.constant 0 : index
      %182 = vector.load %arg27[%c0_86, %c0_87, %c0_88] : memref<4x64x32xf32, #tpu.memory_space<vmem>>, vector<1x64x32xf32>
      %183 = vector.shape_cast %182 : vector<1x64x32xf32> to vector<64x32xf32>
      %184 = vector.shape_cast %165 : vector<64x32xf32> to vector<1x64x32xf32>
      tpu.vector_store %arg27[%c0_86, %c0_87, %c0_88], %184 {strides = array<i32>} : memref<4x64x32xf32, #tpu.memory_space<vmem>>, vector<1x64x32xf32>,
    } else {
    }
    %c5_i32 = arith.constant 5 : i32
    %170 = arith.cmpi eq, %arg1, %c5_i32 : i32
    %171 = arith.extui %170 : i1 to i32
    %c0_i32_81 = arith.constant 0 : i32
    %172 = arith.cmpi ne, %171, %c0_i32_81 : i32
    scf.if %172 {
      %c1 = arith.constant 1 : index
      %c0_86 = arith.constant 0 : index
      %c0_87 = arith.constant 0 : index
      %182 = vector.load %arg27[%c1, %c0_86, %c0_87] : memref<4x64x32xf32, #tpu.memory_space<vmem>>, vector<1x64x32xf32>
      %183 = vector.shape_cast %182 : vector<1x64x32xf32> to vector<64x32xf32>
      %184 = vector.shape_cast %165 : vector<64x32xf32> to vector<1x64x32xf32>
      tpu.vector_store %arg27[%c1, %c0_86, %c0_87], %184 {strides = array<i32>} : memref<4x64x32xf32, #tpu.memory_space<vmem>>, vector<1x64x32xf32>,
    } else {
    }
    %c8_i32 = arith.constant 8 : i32
    %173 = arith.cmpi eq, %arg1, %c8_i32 : i32
    %174 = arith.extui %173 : i1 to i32
    %c0_i32_82 = arith.constant 0 : i32
    %175 = arith.cmpi ne, %174, %c0_i32_82 : i32
    scf.if %175 {
      %c2 = arith.constant 2 : index
      %c0_86 = arith.constant 0 : index
      %c0_87 = arith.constant 0 : index
      %182 = vector.load %arg27[%c2, %c0_86, %c0_87] : memref<4x64x32xf32, #tpu.memory_space<vmem>>, vector<1x64x32xf32>
      %183 = vector.shape_cast %182 : vector<1x64x32xf32> to vector<64x32xf32>
      %184 = vector.shape_cast %165 : vector<64x32xf32> to vector<1x64x32xf32>
      tpu.vector_store %arg27[%c2, %c0_86, %c0_87], %184 {strides = array<i32>} : memref<4x64x32xf32, #tpu.memory_space<vmem>>, vector<1x64x32xf32>,
    } else {
    }
    %c11_i32 = arith.constant 11 : i32
    %176 = arith.cmpi eq, %arg1, %c11_i32 : i32
    %177 = arith.extui %176 : i1 to i32
    %c0_i32_83 = arith.constant 0 : i32
    %178 = arith.cmpi ne, %177, %c0_i32_83 : i32
    scf.if %178 {
      %c3 = arith.constant 3 : index
      %c0_86 = arith.constant 0 : index
      %c0_87 = arith.constant 0 : index
      %182 = vector.load %arg27[%c3, %c0_86, %c0_87] : memref<4x64x32xf32, #tpu.memory_space<vmem>>, vector<1x64x32xf32>
      %183 = vector.shape_cast %182 : vector<1x64x32xf32> to vector<64x32xf32>
      %184 = vector.shape_cast %165 : vector<64x32xf32> to vector<1x64x32xf32>
      tpu.vector_store %arg27[%c3, %c0_86, %c0_87], %184 {strides = array<i32>} : memref<4x64x32xf32, #tpu.memory_space<vmem>>, vector<1x64x32xf32>,
    } else {
    }
    %c11_i32_84 = arith.constant 11 : i32
    %179 = arith.cmpi eq, %arg1, %c11_i32_84 : i32
    %180 = arith.extui %179 : i1 to i32
    %c0_i32_85 = arith.constant 0 : i32
    %181 = arith.cmpi ne, %180, %c0_i32_85 : i32
    scf.if %181 {
      %c0_86 = arith.constant 0 : index
      %c0_87 = arith.constant 0 : index
      %182 = vector.load %arg18[%c0_86, %c0_87] : memref<32x4xf32, #tpu.memory_space<vmem>>, vector<32x4xf32>
      %cst_88 = arith.constant dense<0.000000e+00> : vector<64x4xf32>
      %183 = tpu.matmul %165, %182, %cst_88 {dimension_numbers = #tpu.dot_dimension_numbers<[1], [0], [0], [1], [0, 0, 1, 1], [], []>} : vector<64x32xf32>, vector<32x4xf32>, vector<64x4xf32> -> vector<64x4xf32>
      %cst_89 = arith.constant dense<0xFF800000> : vector<64xf32>
      %184 = vector.multi_reduction <maximumf>, %183, %cst_89 [1] : vector<64x4xf32> to vector<64xf32>
      %185 = vector.shape_cast %184 : vector<64xf32> to vector<64x1xf32>
      %186 = vector.broadcast %185 : vector<64x1xf32> to vector<64x4xf32>
      %187 = arith.subf %183, %186 : vector<64x4xf32>
      %188 = math.exp %187 : vector<64x4xf32>
      %cst_90 = arith.constant dense<0.000000e+00> : vector<64xf32>
      %189 = vector.multi_reduction <add>, %188, %cst_90 [1] : vector<64x4xf32> to vector<64xf32>
      %190 = vector.shape_cast %189 : vector<64xf32> to vector<64x1xf32>
      %191 = vector.broadcast %190 : vector<64x1xf32> to vector<64x4xf32>
      %192 = arith.divf %188, %191 : vector<64x4xf32>
      %193 = vector.extract_strided_slice %192 {offsets = [0, 0], sizes = [64, 1], strides = [1, 1]} : vector<64x4xf32> to vector<64x1xf32>
      %c0_91 = arith.constant 0 : index
      %c0_92 = arith.constant 0 : index
      %c0_93 = arith.constant 0 : index
      %194 = vector.load %arg27[%c0_91, %c0_92, %c0_93] : memref<4x64x32xf32, #tpu.memory_space<vmem>>, vector<1x64x32xf32>
      %195 = vector.shape_cast %194 : vector<1x64x32xf32> to vector<64x32xf32>
      %196 = vector.broadcast %193 : vector<64x1xf32> to vector<64x32xf32>
      %197 = arith.mulf %196, %195 : vector<64x32xf32>
      %198 = arith.addf %165, %197 : vector<64x32xf32>
      %199 = vector.extract_strided_slice %192 {offsets = [0, 1], sizes = [64, 1], strides = [1, 1]} : vector<64x4xf32> to vector<64x1xf32>
      %c1 = arith.constant 1 : index
      %c0_94 = arith.constant 0 : index
      %c0_95 = arith.constant 0 : index
      %200 = vector.load %arg27[%c1, %c0_94, %c0_95] : memref<4x64x32xf32, #tpu.memory_space<vmem>>, vector<1x64x32xf32>
      %201 = vector.shape_cast %200 : vector<1x64x32xf32> to vector<64x32xf32>
      %202 = vector.broadcast %199 : vector<64x1xf32> to vector<64x32xf32>
      %203 = arith.mulf %202, %201 : vector<64x32xf32>
      %204 = arith.addf %198, %203 : vector<64x32xf32>
      %205 = vector.extract_strided_slice %192 {offsets = [0, 2], sizes = [64, 1], strides = [1, 1]} : vector<64x4xf32> to vector<64x1xf32>
      %c2 = arith.constant 2 : index
      %c0_96 = arith.constant 0 : index
      %c0_97 = arith.constant 0 : index
      %206 = vector.load %arg27[%c2, %c0_96, %c0_97] : memref<4x64x32xf32, #tpu.memory_space<vmem>>, vector<1x64x32xf32>
      %207 = vector.shape_cast %206 : vector<1x64x32xf32> to vector<64x32xf32>
      %208 = vector.broadcast %205 : vector<64x1xf32> to vector<64x32xf32>
      %209 = arith.mulf %208, %207 : vector<64x32xf32>
      %210 = arith.addf %204, %209 : vector<64x32xf32>
      %211 = vector.extract_strided_slice %192 {offsets = [0, 3], sizes = [64, 1], strides = [1, 1]} : vector<64x4xf32> to vector<64x1xf32>
      %c3 = arith.constant 3 : index
      %c0_98 = arith.constant 0 : index
      %c0_99 = arith.constant 0 : index
      %212 = vector.load %arg27[%c3, %c0_98, %c0_99] : memref<4x64x32xf32, #tpu.memory_space<vmem>>, vector<1x64x32xf32>
      %213 = vector.shape_cast %212 : vector<1x64x32xf32> to vector<64x32xf32>
      %214 = vector.broadcast %211 : vector<64x1xf32> to vector<64x32xf32>
      %215 = arith.mulf %214, %213 : vector<64x32xf32>
      %216 = arith.addf %210, %215 : vector<64x32xf32>
      %c0_100 = arith.constant 0 : index
      %c0_101 = arith.constant 0 : index
      %217 = vector.load %arg19[%c0_100, %c0_101] : memref<32x16xf32, #tpu.memory_space<vmem>>, vector<32x16xf32>
      %cst_102 = arith.constant dense<0.000000e+00> : vector<64x16xf32>
      %218 = tpu.matmul %216, %217, %cst_102 {dimension_numbers = #tpu.dot_dimension_numbers<[1], [0], [0], [1], [0, 0, 1, 1], [], []>} : vector<64x32xf32>, vector<32x16xf32>, vector<64x16xf32> -> vector<64x16xf32>
      %c0_103 = arith.constant 0 : index
      %c0_104 = arith.constant 0 : index
      %219 = vector.load %arg20[%c0_103, %c0_104] : memref<1x16xf32, #tpu.memory_space<vmem>>, vector<1x16xf32>
      %c0_105 = arith.constant 0 : index
      %c0_106 = arith.constant 0 : index
      %220 = vector.load %arg21[%c0_105, %c0_106] : memref<1x16xf32, #tpu.memory_space<vmem>>, vector<1x16xf32>
      %cst_107 = arith.constant dense<0.000000e+00> : vector<64xf32>
      %221 = vector.multi_reduction <add>, %218, %cst_107 [1] : vector<64x16xf32> to vector<64xf32>
      %222 = vector.shape_cast %221 : vector<64xf32> to vector<64x1xf32>
      %cst_108 = arith.constant 1.600000e+01 : f32
      %223 = vector.broadcast %cst_108 : f32 to vector<64x1xf32>
      %224 = arith.divf %222, %223 : vector<64x1xf32>
      %225 = vector.broadcast %224 : vector<64x1xf32> to vector<64x16xf32>
      %226 = arith.subf %218, %225 : vector<64x16xf32>
      %227 = arith.mulf %226, %226 : vector<64x16xf32>
      %cst_109 = arith.constant dense<0.000000e+00> : vector<64xf32>
      %228 = vector.multi_reduction <add>, %227, %cst_109 [1] : vector<64x16xf32> to vector<64xf32>
      %229 = vector.shape_cast %228 : vector<64xf32> to vector<64x1xf32>
      %cst_110 = arith.constant 1.600000e+01 : f32
      %230 = vector.broadcast %cst_110 : f32 to vector<64x1xf32>
      %231 = arith.divf %229, %230 : vector<64x1xf32>
      %cst_111 = arith.constant 9.99999997E-7 : f32
      %232 = vector.broadcast %cst_111 : f32 to vector<64x1xf32>
      %233 = arith.addf %231, %232 : vector<64x1xf32>
      %234 = math.rsqrt %233 : vector<64x1xf32>
      %235 = vector.broadcast %234 : vector<64x1xf32> to vector<64x16xf32>
      %236 = arith.mulf %226, %235 : vector<64x16xf32>
      %237 = vector.broadcast %219 : vector<1x16xf32> to vector<64x16xf32>
      %238 = arith.mulf %236, %237 : vector<64x16xf32>
      %239 = vector.broadcast %220 : vector<1x16xf32> to vector<64x16xf32>
      %240 = arith.addf %238, %239 : vector<64x16xf32>
      %cst_112 = arith.constant 0.000000e+00 : f32
      %241 = vector.broadcast %cst_112 : f32 to vector<10x10x16xf32>
      %c0_113 = arith.constant 0 : index
      %c0_114 = arith.constant 0 : index
      %c0_115 = arith.constant 0 : index
      %242 = vector.load %arg28[%c0_113, %c0_114, %c0_115] : memref<10x10x16xf32, #tpu.memory_space<vmem>>, vector<10x10x16xf32>
      tpu.vector_store %arg28[%c0_113, %c0_114, %c0_115], %241 {strides = array<i32>} : memref<10x10x16xf32, #tpu.memory_space<vmem>>, vector<10x10x16xf32>,
      %243 = vector.shape_cast %240 : vector<64x16xf32> to vector<8x8x16xf32>
      %c1_116 = arith.constant 1 : index
      %c1_117 = arith.constant 1 : index
      %c0_118 = arith.constant 0 : index
      %244 = vector.load %arg28[%c1_116, %c1_117, %c0_118] : memref<10x10x16xf32, #tpu.memory_space<vmem>>, vector<8x8x16xf32>
      tpu.vector_store %arg28[%c1_116, %c1_117, %c0_118], %243 {strides = array<i32>} : memref<10x10x16xf32, #tpu.memory_space<vmem>>, vector<8x8x16xf32>,
      %cst_119 = arith.constant 0.000000e+00 : f32
      %245 = vector.broadcast %cst_119 : f32 to vector<64x16xf32>
      %c0_120 = arith.constant 0 : index
      %c0_121 = arith.constant 0 : index
      %c0_122 = arith.constant 0 : index
      %246 = vector.load %arg28[%c0_120, %c0_121, %c0_122] : memref<10x10x16xf32, #tpu.memory_space<vmem>>, vector<8x8x16xf32>
      %247 = vector.shape_cast %246 : vector<8x8x16xf32> to vector<64x16xf32>
      %c0_123 = arith.constant 0 : index
      %c0_124 = arith.constant 0 : index
      %c0_125 = arith.constant 0 : index
      %248 = vector.load %arg22[%c0_123, %c0_124, %c0_125] : memref<9x16x16xf32, #tpu.memory_space<vmem>>, vector<1x16x16xf32>
      %249 = vector.shape_cast %248 : vector<1x16x16xf32> to vector<16x16xf32>
      %cst_126 = arith.constant dense<0.000000e+00> : vector<64x16xf32>
      %250 = tpu.matmul %247, %249, %cst_126 {dimension_numbers = #tpu.dot_dimension_numbers<[1], [0], [0], [1], [0, 0, 1, 1], [], []>} : vector<64x16xf32>, vector<16x16xf32>, vector<64x16xf32> -> vector<64x16xf32>
      %251 = arith.addf %245, %250 : vector<64x16xf32>
      %c0_127 = arith.constant 0 : index
      %c1_128 = arith.constant 1 : index
      %c0_129 = arith.constant 0 : index
      %252 = vector.load %arg28[%c0_127, %c1_128, %c0_129] : memref<10x10x16xf32, #tpu.memory_space<vmem>>, vector<8x8x16xf32>
      %253 = vector.shape_cast %252 : vector<8x8x16xf32> to vector<64x16xf32>
      %c1_130 = arith.constant 1 : index
      %c0_131 = arith.constant 0 : index
      %c0_132 = arith.constant 0 : index
      %254 = vector.load %arg22[%c1_130, %c0_131, %c0_132] : memref<9x16x16xf32, #tpu.memory_space<vmem>>, vector<1x16x16xf32>
      %255 = vector.shape_cast %254 : vector<1x16x16xf32> to vector<16x16xf32>
      %cst_133 = arith.constant dense<0.000000e+00> : vector<64x16xf32>
      %256 = tpu.matmul %253, %255, %cst_133 {dimension_numbers = #tpu.dot_dimension_numbers<[1], [0], [0], [1], [0, 0, 1, 1], [], []>} : vector<64x16xf32>, vector<16x16xf32>, vector<64x16xf32> -> vector<64x16xf32>
      %257 = arith.addf %251, %256 : vector<64x16xf32>
      %c0_134 = arith.constant 0 : index
      %c2_135 = arith.constant 2 : index
      %c0_136 = arith.constant 0 : index
      %258 = vector.load %arg28[%c0_134, %c2_135, %c0_136] : memref<10x10x16xf32, #tpu.memory_space<vmem>>, vector<8x8x16xf32>
      %259 = vector.shape_cast %258 : vector<8x8x16xf32> to vector<64x16xf32>
      %c2_137 = arith.constant 2 : index
      %c0_138 = arith.constant 0 : index
      %c0_139 = arith.constant 0 : index
      %260 = vector.load %arg22[%c2_137, %c0_138, %c0_139] : memref<9x16x16xf32, #tpu.memory_space<vmem>>, vector<1x16x16xf32>
      %261 = vector.shape_cast %260 : vector<1x16x16xf32> to vector<16x16xf32>
      %cst_140 = arith.constant dense<0.000000e+00> : vector<64x16xf32>
      %262 = tpu.matmul %259, %261, %cst_140 {dimension_numbers = #tpu.dot_dimension_numbers<[1], [0], [0], [1], [0, 0, 1, 1], [], []>} : vector<64x16xf32>, vector<16x16xf32>, vector<64x16xf32> -> vector<64x16xf32>
      %263 = arith.addf %257, %262 : vector<64x16xf32>
      %c1_141 = arith.constant 1 : index
      %c0_142 = arith.constant 0 : index
      %c0_143 = arith.constant 0 : index
      %264 = vector.load %arg28[%c1_141, %c0_142, %c0_143] : memref<10x10x16xf32, #tpu.memory_space<vmem>>, vector<8x8x16xf32>
      %265 = vector.shape_cast %264 : vector<8x8x16xf32> to vector<64x16xf32>
      %c3_144 = arith.constant 3 : index
      %c0_145 = arith.constant 0 : index
      %c0_146 = arith.constant 0 : index
      %266 = vector.load %arg22[%c3_144, %c0_145, %c0_146] : memref<9x16x16xf32, #tpu.memory_space<vmem>>, vector<1x16x16xf32>
      %267 = vector.shape_cast %266 : vector<1x16x16xf32> to vector<16x16xf32>
      %cst_147 = arith.constant dense<0.000000e+00> : vector<64x16xf32>
      %268 = tpu.matmul %265, %267, %cst_147 {dimension_numbers = #tpu.dot_dimension_numbers<[1], [0], [0], [1], [0, 0, 1, 1], [], []>} : vector<64x16xf32>, vector<16x16xf32>, vector<64x16xf32> -> vector<64x16xf32>
      %269 = arith.addf %263, %268 : vector<64x16xf32>
      %c1_148 = arith.constant 1 : index
      %c1_149 = arith.constant 1 : index
      %c0_150 = arith.constant 0 : index
      %270 = vector.load %arg28[%c1_148, %c1_149, %c0_150] : memref<10x10x16xf32, #tpu.memory_space<vmem>>, vector<8x8x16xf32>
      %271 = vector.shape_cast %270 : vector<8x8x16xf32> to vector<64x16xf32>
      %c4 = arith.constant 4 : index
      %c0_151 = arith.constant 0 : index
      %c0_152 = arith.constant 0 : index
      %272 = vector.load %arg22[%c4, %c0_151, %c0_152] : memref<9x16x16xf32, #tpu.memory_space<vmem>>, vector<1x16x16xf32>
      %273 = vector.shape_cast %272 : vector<1x16x16xf32> to vector<16x16xf32>
      %cst_153 = arith.constant dense<0.000000e+00> : vector<64x16xf32>
      %274 = tpu.matmul %271, %273, %cst_153 {dimension_numbers = #tpu.dot_dimension_numbers<[1], [0], [0], [1], [0, 0, 1, 1], [], []>} : vector<64x16xf32>, vector<16x16xf32>, vector<64x16xf32> -> vector<64x16xf32>
      %275 = arith.addf %269, %274 : vector<64x16xf32>
      %c1_154 = arith.constant 1 : index
      %c2_155 = arith.constant 2 : index
      %c0_156 = arith.constant 0 : index
      %276 = vector.load %arg28[%c1_154, %c2_155, %c0_156] : memref<10x10x16xf32, #tpu.memory_space<vmem>>, vector<8x8x16xf32>
      %277 = vector.shape_cast %276 : vector<8x8x16xf32> to vector<64x16xf32>
      %c5 = arith.constant 5 : index
      %c0_157 = arith.constant 0 : index
      %c0_158 = arith.constant 0 : index
      %278 = vector.load %arg22[%c5, %c0_157, %c0_158] : memref<9x16x16xf32, #tpu.memory_space<vmem>>, vector<1x16x16xf32>
      %279 = vector.shape_cast %278 : vector<1x16x16xf32> to vector<16x16xf32>
      %cst_159 = arith.constant dense<0.000000e+00> : vector<64x16xf32>
      %280 = tpu.matmul %277, %279, %cst_159 {dimension_numbers = #tpu.dot_dimension_numbers<[1], [0], [0], [1], [0, 0, 1, 1], [], []>} : vector<64x16xf32>, vector<16x16xf32>, vector<64x16xf32> -> vector<64x16xf32>
      %281 = arith.addf %275, %280 : vector<64x16xf32>
      %c2_160 = arith.constant 2 : index
      %c0_161 = arith.constant 0 : index
      %c0_162 = arith.constant 0 : index
      %282 = vector.load %arg28[%c2_160, %c0_161, %c0_162] : memref<10x10x16xf32, #tpu.memory_space<vmem>>, vector<8x8x16xf32>
      %283 = vector.shape_cast %282 : vector<8x8x16xf32> to vector<64x16xf32>
      %c6 = arith.constant 6 : index
      %c0_163 = arith.constant 0 : index
      %c0_164 = arith.constant 0 : index
      %284 = vector.load %arg22[%c6, %c0_163, %c0_164] : memref<9x16x16xf32, #tpu.memory_space<vmem>>, vector<1x16x16xf32>
      %285 = vector.shape_cast %284 : vector<1x16x16xf32> to vector<16x16xf32>
      %cst_165 = arith.constant dense<0.000000e+00> : vector<64x16xf32>
      %286 = tpu.matmul %283, %285, %cst_165 {dimension_numbers = #tpu.dot_dimension_numbers<[1], [0], [0], [1], [0, 0, 1, 1], [], []>} : vector<64x16xf32>, vector<16x16xf32>, vector<64x16xf32> -> vector<64x16xf32>
      %287 = arith.addf %281, %286 : vector<64x16xf32>
      %c2_166 = arith.constant 2 : index
      %c1_167 = arith.constant 1 : index
      %c0_168 = arith.constant 0 : index
      %288 = vector.load %arg28[%c2_166, %c1_167, %c0_168] : memref<10x10x16xf32, #tpu.memory_space<vmem>>, vector<8x8x16xf32>
      %289 = vector.shape_cast %288 : vector<8x8x16xf32> to vector<64x16xf32>
      %c7 = arith.constant 7 : index
      %c0_169 = arith.constant 0 : index
      %c0_170 = arith.constant 0 : index
      %290 = vector.load %arg22[%c7, %c0_169, %c0_170] : memref<9x16x16xf32, #tpu.memory_space<vmem>>, vector<1x16x16xf32>
      %291 = vector.shape_cast %290 : vector<1x16x16xf32> to vector<16x16xf32>
      %cst_171 = arith.constant dense<0.000000e+00> : vector<64x16xf32>
      %292 = tpu.matmul %289, %291, %cst_171 {dimension_numbers = #tpu.dot_dimension_numbers<[1], [0], [0], [1], [0, 0, 1, 1], [], []>} : vector<64x16xf32>, vector<16x16xf32>, vector<64x16xf32> -> vector<64x16xf32>
      %293 = arith.addf %287, %292 : vector<64x16xf32>
      %c2_172 = arith.constant 2 : index
      %c2_173 = arith.constant 2 : index
      %c0_174 = arith.constant 0 : index
      %294 = vector.load %arg28[%c2_172, %c2_173, %c0_174] : memref<10x10x16xf32, #tpu.memory_space<vmem>>, vector<8x8x16xf32>
      %295 = vector.shape_cast %294 : vector<8x8x16xf32> to vector<64x16xf32>
      %c8 = arith.constant 8 : index
      %c0_175 = arith.constant 0 : index
      %c0_176 = arith.constant 0 : index
      %296 = vector.load %arg22[%c8, %c0_175, %c0_176] : memref<9x16x16xf32, #tpu.memory_space<vmem>>, vector<1x16x16xf32>
      %297 = vector.shape_cast %296 : vector<1x16x16xf32> to vector<16x16xf32>
      %cst_177 = arith.constant dense<0.000000e+00> : vector<64x16xf32>
      %298 = tpu.matmul %295, %297, %cst_177 {dimension_numbers = #tpu.dot_dimension_numbers<[1], [0], [0], [1], [0, 0, 1, 1], [], []>} : vector<64x16xf32>, vector<16x16xf32>, vector<64x16xf32> -> vector<64x16xf32>
      %299 = arith.addf %293, %298 : vector<64x16xf32>
      %c0_178 = arith.constant 0 : index
      %c0_179 = arith.constant 0 : index
      %300 = vector.load %arg23[%c0_178, %c0_179] : memref<1x16xf32, #tpu.memory_space<vmem>>, vector<1x16xf32>
      %c0_180 = arith.constant 0 : index
      %c0_181 = arith.constant 0 : index
      %301 = vector.load %arg24[%c0_180, %c0_181] : memref<1x16xf32, #tpu.memory_space<vmem>>, vector<1x16xf32>
      %cst_182 = arith.constant dense<0.000000e+00> : vector<64xf32>
      %302 = vector.multi_reduction <add>, %299, %cst_182 [1] : vector<64x16xf32> to vector<64xf32>
      %303 = vector.shape_cast %302 : vector<64xf32> to vector<64x1xf32>
      %cst_183 = arith.constant 1.600000e+01 : f32
      %304 = vector.broadcast %cst_183 : f32 to vector<64x1xf32>
      %305 = arith.divf %303, %304 : vector<64x1xf32>
      %306 = vector.broadcast %305 : vector<64x1xf32> to vector<64x16xf32>
      %307 = arith.subf %299, %306 : vector<64x16xf32>
      %308 = arith.mulf %307, %307 : vector<64x16xf32>
      %cst_184 = arith.constant dense<0.000000e+00> : vector<64xf32>
      %309 = vector.multi_reduction <add>, %308, %cst_184 [1] : vector<64x16xf32> to vector<64xf32>
      %310 = vector.shape_cast %309 : vector<64xf32> to vector<64x1xf32>
      %cst_185 = arith.constant 1.600000e+01 : f32
      %311 = vector.broadcast %cst_185 : f32 to vector<64x1xf32>
      %312 = arith.divf %310, %311 : vector<64x1xf32>
      %cst_186 = arith.constant 9.99999997E-7 : f32
      %313 = vector.broadcast %cst_186 : f32 to vector<64x1xf32>
      %314 = arith.addf %312, %313 : vector<64x1xf32>
      %315 = math.rsqrt %314 : vector<64x1xf32>
      %316 = vector.broadcast %315 : vector<64x1xf32> to vector<64x16xf32>
      %317 = arith.mulf %307, %316 : vector<64x16xf32>
      %318 = vector.broadcast %300 : vector<1x16xf32> to vector<64x16xf32>
      %319 = arith.mulf %317, %318 : vector<64x16xf32>
      %320 = vector.broadcast %301 : vector<1x16xf32> to vector<64x16xf32>
      %321 = arith.addf %319, %320 : vector<64x16xf32>
      %c0_187 = arith.constant 0 : index
      %c0_188 = arith.constant 0 : index
      %c0_189 = arith.constant 0 : index
      %322 = vector.load %arg25[%c0_187, %c0_188, %c0_189] : memref<1x64x16xf32, #tpu.memory_space<vmem>>, vector<1x64x16xf32>
      %323 = vector.shape_cast %322 : vector<1x64x16xf32> to vector<64x16xf32>
      %324 = vector.shape_cast %321 : vector<64x16xf32> to vector<1x64x16xf32>
      tpu.vector_store %arg25[%c0_187, %c0_188, %c0_189], %324 {strides = array<i32>} : memref<1x64x16xf32, #tpu.memory_space<vmem>>, vector<1x64x16xf32>,
    } else {
    }
    return
  }
  func.func @transform_0(%arg0: i32, %arg1: i32) -> (i32, i32, i32) {
    %c0_i32 = arith.constant 0 : i32
    %c0_i32_0 = arith.constant 0 : i32
    %c0_i32_1 = arith.constant 0 : i32
    return %arg0, %c0_i32, %c0_i32_0 : i32, i32, i32
  }
  func.func @transform_1(%arg0: i32, %arg1: i32) -> (i32, i32) {
    %c0_i32 = arith.constant 0 : i32
    %c0_i32_0 = arith.constant 0 : i32
    %c0_i32_1 = arith.constant 0 : i32
    return %c0_i32, %c0_i32_0 : i32, i32
  }
  func.func @transform_2(%arg0: i32, %arg1: i32) -> (i32, i32) {
    %c0_i32 = arith.constant 0 : i32
    %c0_i32_0 = arith.constant 0 : i32
    %c0_i32_1 = arith.constant 0 : i32
    return %c0_i32, %c0_i32_0 : i32, i32
  }
  func.func @transform_3(%arg0: i32, %arg1: i32) -> (i32, i32) {
    %c0_i32 = arith.constant 0 : i32
    %c0_i32_0 = arith.constant 0 : i32
    %c0_i32_1 = arith.constant 0 : i32
    return %c0_i32, %c0_i32_0 : i32, i32
  }
  func.func @transform_4(%arg0: i32, %arg1: i32) -> (i32, i32, i32) {
    %c0_i32 = arith.constant 0 : i32
    %c0_i32_0 = arith.constant 0 : i32
    %c0_i32_1 = arith.constant 0 : i32
    return %arg1, %c0_i32, %c0_i32_0 : i32, i32, i32
  }
  func.func @transform_5(%arg0: i32, %arg1: i32) -> (i32, i32, i32) {
    %c0_i32 = arith.constant 0 : i32
    %c0_i32_0 = arith.constant 0 : i32
    %c0_i32_1 = arith.constant 0 : i32
    return %arg1, %c0_i32, %c0_i32_0 : i32, i32, i32
  }
  func.func @transform_6(%arg0: i32, %arg1: i32) -> (i32, i32, i32) {
    %c0_i32 = arith.constant 0 : i32
    %c0_i32_0 = arith.constant 0 : i32
    %c0_i32_1 = arith.constant 0 : i32
    return %arg1, %c0_i32, %c0_i32_0 : i32, i32, i32
  }
  func.func @transform_7(%arg0: i32, %arg1: i32) -> (i32, i32, i32) {
    %c0_i32 = arith.constant 0 : i32
    %c0_i32_0 = arith.constant 0 : i32
    %c0_i32_1 = arith.constant 0 : i32
    return %arg1, %c0_i32, %c0_i32_0 : i32, i32, i32
  }
  func.func @transform_8(%arg0: i32, %arg1: i32) -> (i32, i32, i32) {
    %c0_i32 = arith.constant 0 : i32
    %c0_i32_0 = arith.constant 0 : i32
    %c0_i32_1 = arith.constant 0 : i32
    return %arg1, %c0_i32, %c0_i32_0 : i32, i32, i32
  }
  func.func @transform_9(%arg0: i32, %arg1: i32) -> (i32, i32, i32) {
    %c0_i32 = arith.constant 0 : i32
    %c0_i32_0 = arith.constant 0 : i32
    %c0_i32_1 = arith.constant 0 : i32
    return %arg1, %c0_i32, %c0_i32_0 : i32, i32, i32
  }
  func.func @transform_10(%arg0: i32, %arg1: i32) -> (i32, i32, i32) {
    %c0_i32 = arith.constant 0 : i32
    %c0_i32_0 = arith.constant 0 : i32
    %c0_i32_1 = arith.constant 0 : i32
    return %arg1, %c0_i32, %c0_i32_0 : i32, i32, i32
  }
  func.func @transform_11(%arg0: i32, %arg1: i32) -> (i32, i32, i32) {
    %c0_i32 = arith.constant 0 : i32
    %c0_i32_0 = arith.constant 0 : i32
    %c0_i32_1 = arith.constant 0 : i32
    return %arg1, %c0_i32, %c0_i32_0 : i32, i32, i32
  }
  func.func @transform_12(%arg0: i32, %arg1: i32) -> (i32, i32, i32) {
    %c0_i32 = arith.constant 0 : i32
    %c0_i32_0 = arith.constant 0 : i32
    %c0_i32_1 = arith.constant 0 : i32
    return %arg1, %c0_i32, %c0_i32_0 : i32, i32, i32
  }
  func.func @transform_13(%arg0: i32, %arg1: i32) -> (i32, i32, i32) {
    %c0_i32 = arith.constant 0 : i32
    %c0_i32_0 = arith.constant 0 : i32
    %c0_i32_1 = arith.constant 0 : i32
    return %arg1, %c0_i32, %c0_i32_0 : i32, i32, i32
  }
  func.func @transform_14(%arg0: i32, %arg1: i32) -> (i32, i32, i32) {
    %c0_i32 = arith.constant 0 : i32
    %c0_i32_0 = arith.constant 0 : i32
    %c0_i32_1 = arith.constant 0 : i32
    return %arg1, %c0_i32, %c0_i32_0 : i32, i32, i32
  }
  func.func @transform_15(%arg0: i32, %arg1: i32) -> (i32, i32, i32) {
    %c0_i32 = arith.constant 0 : i32
    %c0_i32_0 = arith.constant 0 : i32
    %c0_i32_1 = arith.constant 0 : i32
    return %arg1, %c0_i32, %c0_i32_0 : i32, i32, i32
  }
  func.func @transform_16(%arg0: i32, %arg1: i32) -> (i32, i32) {
    %c0_i32 = arith.constant 0 : i32
    %c0_i32_0 = arith.constant 0 : i32
    %c0_i32_1 = arith.constant 0 : i32
    return %c0_i32, %c0_i32_0 : i32, i32
  }
  func.func @transform_17(%arg0: i32, %arg1: i32) -> (i32, i32) {
    %c0_i32 = arith.constant 0 : i32
    %c0_i32_0 = arith.constant 0 : i32
    %c0_i32_1 = arith.constant 0 : i32
    return %c0_i32, %c0_i32_0 : i32, i32
  }
  func.func @transform_18(%arg0: i32, %arg1: i32) -> (i32, i32) {
    %c0_i32 = arith.constant 0 : i32
    %c0_i32_0 = arith.constant 0 : i32
    %c0_i32_1 = arith.constant 0 : i32
    return %c0_i32, %c0_i32_0 : i32, i32
  }
  func.func @transform_19(%arg0: i32, %arg1: i32) -> (i32, i32) {
    %c0_i32 = arith.constant 0 : i32
    %c0_i32_0 = arith.constant 0 : i32
    %c0_i32_1 = arith.constant 0 : i32
    return %c0_i32, %c0_i32_0 : i32, i32
  }
  func.func @transform_20(%arg0: i32, %arg1: i32) -> (i32, i32, i32) {
    %c0_i32 = arith.constant 0 : i32
    %c0_i32_0 = arith.constant 0 : i32
    %c0_i32_1 = arith.constant 0 : i32
    %c0_i32_2 = arith.constant 0 : i32
    return %c0_i32, %c0_i32_0, %c0_i32_1 : i32, i32, i32
  }
  func.func @transform_21(%arg0: i32, %arg1: i32) -> (i32, i32) {
    %c0_i32 = arith.constant 0 : i32
    %c0_i32_0 = arith.constant 0 : i32
    %c0_i32_1 = arith.constant 0 : i32
    return %c0_i32, %c0_i32_0 : i32, i32
  }
  func.func @transform_22(%arg0: i32, %arg1: i32) -> (i32, i32) {
    %c0_i32 = arith.constant 0 : i32
    %c0_i32_0 = arith.constant 0 : i32
    %c0_i32_1 = arith.constant 0 : i32
    return %c0_i32, %c0_i32_0 : i32, i32
  }
  func.func @transform_23(%arg0: i32, %arg1: i32) -> (i32, i32, i32) {
    %c0_i32 = arith.constant 0 : i32
    %c0_i32_0 = arith.constant 0 : i32
    %c0_i32_1 = arith.constant 0 : i32
    return %arg0, %c0_i32, %c0_i32_0 : i32, i32, i32
  }
}

</mosaic_0001>

<llo_original>
// kernel: image_encoder_vit_forward.1
$region0: #{image_encoder_vit_forward.1}
  #allocation0 [shape = 'u32[]', space=smem, size = 0x4, offset = 0x4, fixed_abs, tag = 'smem constant byte address 0x4 - core index']
  #allocation1 [shape = 'u32[144,128]{1,0:T(1,128)}', space=vmem, size = 0x12000, scoped, tag = 'internal scratch']
  #allocation2 [shape = 'f32[64,32]{1,0:T(8,128)}', space=vmem, size = 0x8000, scoped, tag = 'scratch operand']
  #allocation3 [shape = 'f32[4,64,32]{2,1,0:T(8,128)}', space=vmem, size = 0x20000, scoped, tag = 'scratch operand']
  #allocation4 [shape = 'f32[10,10,16]{2,1,0:T(8,128)}', space=vmem, size = 0x14000, scoped, tag = 'scratch operand']
  %s0 = inlined_call_operand.vmem [shape: f32[2,64,8], index: 0, kind: input, shape index: {}]
  %s1 = inlined_call_operand.vmem [shape: f32[64,32], index: 1, kind: input, shape index: {}]
  %s2 = inlined_call_operand.vmem [shape: f32[8,32], index: 2, kind: input, shape index: {}]
  %s3 = inlined_call_operand.vmem [shape: f32[1,32], index: 3, kind: input, shape index: {}]
  %s4 = inlined_call_operand.vmem [shape: f32[12,1,32], index: 4, kind: input, shape index: {}]
  %s5 = inlined_call_operand.vmem [shape: f32[12,1,32], index: 5, kind: input, shape index: {}]
  %s6 = inlined_call_operand.vmem [shape: f32[12,32,96], index: 6, kind: input, shape index: {}]
  %s7 = inlined_call_operand.vmem [shape: f32[12,1,96], index: 7, kind: input, shape index: {}]
  %s8 = inlined_call_operand.vmem [shape: f32[12,32,32], index: 8, kind: input, shape index: {}]
  %s9 = inlined_call_operand.vmem [shape: f32[12,1,32], index: 9, kind: input, shape index: {}]
  %s10 = inlined_call_operand.vmem [shape: f32[12,1,32], index: 10, kind: input, shape index: {}]
  %s11 = inlined_call_operand.vmem [shape: f32[12,1,32], index: 11, kind: input, shape index: {}]
  %s12 = inlined_call_operand.vmem [shape: f32[12,32,128], index: 12, kind: input, shape index: {}]
  %s13 = inlined_call_operand.vmem [shape: f32[12,1,128], index: 13, kind: input, shape index: {}]
  %s14 = inlined_call_operand.vmem [shape: f32[12,128,32], index: 14, kind: input, shape index: {}]
  %s15 = inlined_call_operand.vmem [shape: f32[12,1,32], index: 15, kind: input, shape index: {}]
  %s16 = inlined_call_operand.vmem [shape: f32[32,4], index: 16, kind: input, shape index: {}]
  %s17 = inlined_call_operand.vmem [shape: f32[32,16], index: 17, kind: input, shape index: {}]
  %s18 = inlined_call_operand.vmem [shape: f32[1,16], index: 18, kind: input, shape index: {}]
  %s19 = inlined_call_operand.vmem [shape: f32[1,16], index: 19, kind: input, shape index: {}]
  %s20 = inlined_call_operand.vmem [shape: f32[9,16,16], index: 20, kind: input, shape index: {}]
  %s21 = inlined_call_operand.vmem [shape: f32[1,16], index: 21, kind: input, shape index: {}]
  %s22 = inlined_call_operand.vmem [shape: f32[1,16], index: 22, kind: input, shape index: {}]
  %s23 = inlined_call_operand.hbm [shape: f32[2,64,16], index: 23, kind: output, shape index: {}]
  %s24 = sld [smem:[#allocation0]]
  $region145: #{image_encoder_vit_forward.1} parent=0
    _
  %s26 = ssub.s32 1, %s24
  %s27 = scalar_select 0, %s26, %s24
  $region1: #{image_encoder_vit_forward.1} parent=0
    #allocation5 [shape = 'u8[65536]{0}', space=vmem, size = 0x10000, scoped, tag = 'output window, operand 0']
    #allocation6 [shape = 's32[2]{0}', space=sflag, size = 0x8, scoped, tag = 'scoped memory for image_encoder_vit_forward.1']
    %28 = vsyncpa [#allocation6], 0
    %s29 = scalar_lea.sflag [#allocation6], 1
    %30 = vsyncpa %s29, 0
    loop: start=0, step=1, limit=26
    $region2: #{image_encoder_vit_forward.1} parent=1 // loop_pre_header
      _
    $region3: #{image_encoder_vit_forward.1} parent=1 // loop_header
      %s32 = sphi 0, %s36
      %p33 = scmp.ge.s32.totalorder %s32, 26
      %s39 = sphi 0, %s51
      %s40 = sphi 0, %s47
      %s41 = sphi 0, %s39
      %s42 = sphi 0, %s40
      %s43 = sphi 0, %s41
      %s44 = sphi 0, %s42
      %s54 = sphi 0, %s56
      %s57 = sphi 0, %s54
      %s58 = sphi 0, %s57
      %s74 = sphi 0, %s58
      %s78 = sphi 0, %s78
      %s80 = sphi 0, %s78
      %s81 = sphi 0, %s80
      %s95 = sphi 0, %s81
      %s99 = sphi 0, %s99
      %s101 = sphi 0, %s99
      %s102 = sphi 0, %s101
      %s116 = sphi 0, %s102
      %s120 = sphi 0, %s120
      %s122 = sphi 0, %s120
      %s123 = sphi 0, %s122
      %s137 = sphi 0, %s123
      %s143 = sphi 0, %s145
      %s146 = sphi 0, %s143
      %s147 = sphi 0, %s146
      %s163 = sphi 0, %s147
      %s169 = sphi 0, %s171
      %s172 = sphi 0, %s169
      %s173 = sphi 0, %s172
      %s189 = sphi 0, %s173
      %s195 = sphi 0, %s197
      %s198 = sphi 0, %s195
      %s199 = sphi 0, %s198
      %s215 = sphi 0, %s199
      %s221 = sphi 0, %s223
      %s224 = sphi 0, %s221
      %s225 = sphi 0, %s224
      %s241 = sphi 0, %s225
      %s247 = sphi 0, %s249
      %s250 = sphi 0, %s247
      %s251 = sphi 0, %s250
      %s267 = sphi 0, %s251
      %s273 = sphi 0, %s275
      %s276 = sphi 0, %s273
      %s277 = sphi 0, %s276
      %s293 = sphi 0, %s277
      %s299 = sphi 0, %s301
      %s302 = sphi 0, %s299
      %s303 = sphi 0, %s302
      %s319 = sphi 0, %s303
      %s325 = sphi 0, %s327
      %s328 = sphi 0, %s325
      %s329 = sphi 0, %s328
      %s345 = sphi 0, %s329
      %s351 = sphi 0, %s353
      %s354 = sphi 0, %s351
      %s355 = sphi 0, %s354
      %s371 = sphi 0, %s355
      %s377 = sphi 0, %s379
      %s380 = sphi 0, %s377
      %s381 = sphi 0, %s380
      %s397 = sphi 0, %s381
      %s403 = sphi 0, %s405
      %s406 = sphi 0, %s403
      %s407 = sphi 0, %s406
      %s423 = sphi 0, %s407
      %s429 = sphi 0, %s431
      %s432 = sphi 0, %s429
      %s433 = sphi 0, %s432
      %s449 = sphi 0, %s433
      %s453 = sphi 0, %s453
      %s455 = sphi 0, %s453
      %s456 = sphi 0, %s455
      %s470 = sphi 0, %s456
      %s474 = sphi 0, %s474
      %s476 = sphi 0, %s474
      %s477 = sphi 0, %s476
      %s491 = sphi 0, %s477
      %s495 = sphi 0, %s495
      %s497 = sphi 0, %s495
      %s498 = sphi 0, %s497
      %s512 = sphi 0, %s498
      %s516 = sphi 0, %s516
      %s518 = sphi 0, %s516
      %s519 = sphi 0, %s518
      %s533 = sphi 0, %s519
      %s537 = sphi 0, %s537
      %s539 = sphi 0, %s537
      %s540 = sphi 0, %s539
      %s554 = sphi 0, %s540
      %s558 = sphi 0, %s558
      %s560 = sphi 0, %s558
      %s561 = sphi 0, %s560
      %s575 = sphi 0, %s561
      %s579 = sphi 0, %s579
      %s581 = sphi 0, %s579
      %s582 = sphi 0, %s581
      %s596 = sphi 0, %s582
      %s602 = sphi 0, %s604
      %s605 = sphi 0, %s602
      %s606 = sphi 0, %s605
      %s622 = sphi 0, %s606
    $region4: #{image_encoder_vit_forward.1} parent=1 // loop_header_branch
      %35 = sbr.rel (%p33) target = $region8
    $region5: #{image_encoder_vit_forward.1} parent=1 // loop_body
      %s37 = ssub.s32 %s32, 1
      %s38 = ssub.s32 %s32, 2
      %s45 = sadd.s32 1, %s40
      %p46 = scmp.ge.s32.totalorder %s45, 12
      %s47 = scalar_select %p46, 0, %s45
      %s48 = sadd.s32 1, %s39
      %s49 = scalar_select %p46, %s48, %s39
      %p50 = scmp.ge.s32.totalorder %s49, 2
      %s51 = scalar_select %p50, 0, %s49
      %s52 = ssub.s32 %s39, %s51
      %p53 = scmp.eq.s32.totalorder %s52, 0
      %s55 = sadd.s32 %s54, 1
      %s56 = scalar_select %p53, %s54, %s55
      %p59 = pneg %p53
      %p60 = scmp.eq.s32.totalorder %s32, 23
      %p61 = por %p59, %p60
      %p62 = scmp.ne.s32.totalorder %s54, %s57
      %p63 = scmp.eq.s32.totalorder %s32, 0
      %p64 = por %p62, %p63
      %p65 = scmp.ne.s32.totalorder %s54, %s57
      %p66 = scmp.eq.s32.totalorder %s37, 23
      %p67 = por %p65, %p66
      %p68 = scmp.ne.s32.totalorder %s57, %s58
      %p69 = scmp.eq.s32.totalorder %s37, 0
      %p70 = por %p68, %p69
      %p71 = scmp.ne.s32.totalorder %s57, %s58
      %p72 = scmp.eq.s32.totalorder %s38, 23
      %p73 = por %p71, %p72
      %p75 = scmp.ne.s32.totalorder %s58, %s74
      %p76 = scmp.eq.s32.totalorder %s38, 0
      %p77 = por %p75, %p76
      %s79 = sadd.s32 %s78, 1
      %p82 = scmp.eq.s32.totalorder %s32, 23
      %p83 = scmp.ne.s32.totalorder %s78, %s80
      %p84 = scmp.eq.s32.totalorder %s32, 0
      %p85 = por %p83, %p84
      %p86 = scmp.ne.s32.totalorder %s78, %s80
      %p87 = scmp.eq.s32.totalorder %s37, 23
      %p88 = por %p86, %p87
      %p89 = scmp.ne.s32.totalorder %s80, %s81
      %p90 = scmp.eq.s32.totalorder %s37, 0
      %p91 = por %p89, %p90
      %p92 = scmp.ne.s32.totalorder %s80, %s81
      %p93 = scmp.eq.s32.totalorder %s38, 23
      %p94 = por %p92, %p93
      %p96 = scmp.ne.s32.totalorder %s81, %s95
      %p97 = scmp.eq.s32.totalorder %s38, 0
      %p98 = por %p96, %p97
      %s100 = sadd.s32 %s99, 1
      %p103 = scmp.eq.s32.totalorder %s32, 23
      %p104 = scmp.ne.s32.totalorder %s99, %s101
      %p105 = scmp.eq.s32.totalorder %s32, 0
      %p106 = por %p104, %p105
      %p107 = scmp.ne.s32.totalorder %s99, %s101
      %p108 = scmp.eq.s32.totalorder %s37, 23
      %p109 = por %p107, %p108
      %p110 = scmp.ne.s32.totalorder %s101, %s102
      %p111 = scmp.eq.s32.totalorder %s37, 0
      %p112 = por %p110, %p111
      %p113 = scmp.ne.s32.totalorder %s101, %s102
      %p114 = scmp.eq.s32.totalorder %s38, 23
      %p115 = por %p113, %p114
      %p117 = scmp.ne.s32.totalorder %s102, %s116
      %p118 = scmp.eq.s32.totalorder %s38, 0
      %p119 = por %p117, %p118
      %s121 = sadd.s32 %s120, 1
      %p124 = scmp.eq.s32.totalorder %s32, 23
      %p125 = scmp.ne.s32.totalorder %s120, %s122
      %p126 = scmp.eq.s32.totalorder %s32, 0
      %p127 = por %p125, %p126
      %p128 = scmp.ne.s32.totalorder %s120, %s122
      %p129 = scmp.eq.s32.totalorder %s37, 23
      %p130 = por %p128, %p129
      %p131 = scmp.ne.s32.totalorder %s122, %s123
      %p132 = scmp.eq.s32.totalorder %s37, 0
      %p133 = por %p131, %p132
      %p134 = scmp.ne.s32.totalorder %s122, %s123
      %p135 = scmp.eq.s32.totalorder %s38, 23
      %p136 = por %p134, %p135
      %p138 = scmp.ne.s32.totalorder %s123, %s137
      %p139 = scmp.eq.s32.totalorder %s38, 0
      %p140 = por %p138, %p139
      %s141 = ssub.s32 %s40, %s47
      %p142 = scmp.eq.s32.totalorder %s141, 0
      %s144 = sadd.s32 %s143, 1
      %s145 = scalar_select %p142, %s143, %s144
      %p148 = pneg %p142
      %p149 = scmp.eq.s32.totalorder %s32, 23
      %p150 = por %p148, %p149
      %p151 = scmp.ne.s32.totalorder %s143, %s146
      %p152 = scmp.eq.s32.totalorder %s32, 0
      %p153 = por %p151, %p152
      %p154 = scmp.ne.s32.totalorder %s143, %s146
      %p155 = scmp.eq.s32.totalorder %s37, 23
      %p156 = por %p154, %p155
      %p157 = scmp.ne.s32.totalorder %s146, %s147
      %p158 = scmp.eq.s32.totalorder %s37, 0
      %p159 = por %p157, %p158
      %p160 = scmp.ne.s32.totalorder %s146, %s147
      %p161 = scmp.eq.s32.totalorder %s38, 23
      %p162 = por %p160, %p161
      %p164 = scmp.ne.s32.totalorder %s147, %s163
      %p165 = scmp.eq.s32.totalorder %s38, 0
      %p166 = por %p164, %p165
      %s167 = ssub.s32 %s40, %s47
      %p168 = scmp.eq.s32.totalorder %s167, 0
      %s170 = sadd.s32 %s169, 1
      %s171 = scalar_select %p168, %s169, %s170
      %p174 = pneg %p168
      %p175 = scmp.eq.s32.totalorder %s32, 23
      %p176 = por %p174, %p175
      %p177 = scmp.ne.s32.totalorder %s169, %s172
      %p178 = scmp.eq.s32.totalorder %s32, 0
      %p179 = por %p177, %p178
      %p180 = scmp.ne.s32.totalorder %s169, %s172
      %p181 = scmp.eq.s32.totalorder %s37, 23
      %p182 = por %p180, %p181
      %p183 = scmp.ne.s32.totalorder %s172, %s173
      %p184 = scmp.eq.s32.totalorder %s37, 0
      %p185 = por %p183, %p184
      %p186 = scmp.ne.s32.totalorder %s172, %s173
      %p187 = scmp.eq.s32.totalorder %s38, 23
      %p188 = por %p186, %p187
      %p190 = scmp.ne.s32.totalorder %s173, %s189
      %p191 = scmp.eq.s32.totalorder %s38, 0
      %p192 = por %p190, %p191
      %s193 = ssub.s32 %s40, %s47
      %p194 = scmp.eq.s32.totalorder %s193, 0
      %s196 = sadd.s32 %s195, 1
      %s197 = scalar_select %p194, %s195, %s196
      %p200 = pneg %p194
      %p201 = scmp.eq.s32.totalorder %s32, 23
      %p202 = por %p200, %p201
      %p203 = scmp.ne.s32.totalorder %s195, %s198
      %p204 = scmp.eq.s32.totalorder %s32, 0
      %p205 = por %p203, %p204
      %p206 = scmp.ne.s32.totalorder %s195, %s198
      %p207 = scmp.eq.s32.totalorder %s37, 23
      %p208 = por %p206, %p207
      %p209 = scmp.ne.s32.totalorder %s198, %s199
      %p210 = scmp.eq.s32.totalorder %s37, 0
      %p211 = por %p209, %p210
      %p212 = scmp.ne.s32.totalorder %s198, %s199
      %p213 = scmp.eq.s32.totalorder %s38, 23
      %p214 = por %p212, %p213
      %p216 = scmp.ne.s32.totalorder %s199, %s215
      %p217 = scmp.eq.s32.totalorder %s38, 0
      %p218 = por %p216, %p217
      %s219 = ssub.s32 %s40, %s47
      %p220 = scmp.eq.s32.totalorder %s219, 0
      %s222 = sadd.s32 %s221, 1
      %s223 = scalar_select %p220, %s221, %s222
      %p226 = pneg %p220
      %p227 = scmp.eq.s32.totalorder %s32, 23
      %p228 = por %p226, %p227
      %p229 = scmp.ne.s32.totalorder %s221, %s224
      %p230 = scmp.eq.s32.totalorder %s32, 0
      %p231 = por %p229, %p230
      %p232 = scmp.ne.s32.totalorder %s221, %s224
      %p233 = scmp.eq.s32.totalorder %s37, 23
      %p234 = por %p232, %p233
      %p235 = scmp.ne.s32.totalorder %s224, %s225
      %p236 = scmp.eq.s32.totalorder %s37, 0
      %p237 = por %p235, %p236
      %p238 = scmp.ne.s32.totalorder %s224, %s225
      %p239 = scmp.eq.s32.totalorder %s38, 23
      %p240 = por %p238, %p239
      %p242 = scmp.ne.s32.totalorder %s225, %s241
      %p243 = scmp.eq.s32.totalorder %s38, 0
      %p244 = por %p242, %p243
      %s245 = ssub.s32 %s40, %s47
      %p246 = scmp.eq.s32.totalorder %s245, 0
      %s248 = sadd.s32 %s247, 1
      %s249 = scalar_select %p246, %s247, %s248
      %p252 = pneg %p246
      %p253 = scmp.eq.s32.totalorder %s32, 23
      %p254 = por %p252, %p253
      %p255 = scmp.ne.s32.totalorder %s247, %s250
      %p256 = scmp.eq.s32.totalorder %s32, 0
      %p257 = por %p255, %p256
      %p258 = scmp.ne.s32.totalorder %s247, %s250
      %p259 = scmp.eq.s32.totalorder %s37, 23
      %p260 = por %p258, %p259
      %p261 = scmp.ne.s32.totalorder %s250, %s251
      %p262 = scmp.eq.s32.totalorder %s37, 0
      %p263 = por %p261, %p262
      %p264 = scmp.ne.s32.totalorder %s250, %s251
      %p265 = scmp.eq.s32.totalorder %s38, 23
      %p266 = por %p264, %p265
      %p268 = scmp.ne.s32.totalorder %s251, %s267
      %p269 = scmp.eq.s32.totalorder %s38, 0
      %p270 = por %p268, %p269
      %s271 = ssub.s32 %s40, %s47
      %p272 = scmp.eq.s32.totalorder %s271, 0
      %s274 = sadd.s32 %s273, 1
      %s275 = scalar_select %p272, %s273, %s274
      %p278 = pneg %p272
      %p279 = scmp.eq.s32.totalorder %s32, 23
      %p280 = por %p278, %p279
      %p281 = scmp.ne.s32.totalorder %s273, %s276
      %p282 = scmp.eq.s32.totalorder %s32, 0
      %p283 = por %p281, %p282
      %p284 = scmp.ne.s32.totalorder %s273, %s276
      %p285 = scmp.eq.s32.totalorder %s37, 23
      %p286 = por %p284, %p285
      %p287 = scmp.ne.s32.totalorder %s276, %s277
      %p288 = scmp.eq.s32.totalorder %s37, 0
      %p289 = por %p287, %p288
      %p290 = scmp.ne.s32.totalorder %s276, %s277
      %p291 = scmp.eq.s32.totalorder %s38, 23
      %p292 = por %p290, %p291
      %p294 = scmp.ne.s32.totalorder %s277, %s293
      %p295 = scmp.eq.s32.totalorder %s38, 0
      %p296 = por %p294, %p295
      %s297 = ssub.s32 %s40, %s47
      %p298 = scmp.eq.s32.totalorder %s297, 0
      %s300 = sadd.s32 %s299, 1
      %s301 = scalar_select %p298, %s299, %s300
      %p304 = pneg %p298
      %p305 = scmp.eq.s32.totalorder %s32, 23
      %p306 = por %p304, %p305
      %p307 = scmp.ne.s32.totalorder %s299, %s302
      %p308 = scmp.eq.s32.totalorder %s32, 0
      %p309 = por %p307, %p308
      %p310 = scmp.ne.s32.totalorder %s299, %s302
      %p311 = scmp.eq.s32.totalorder %s37, 23
      %p312 = por %p310, %p311
      %p313 = scmp.ne.s32.totalorder %s302, %s303
      %p314 = scmp.eq.s32.totalorder %s37, 0
      %p315 = por %p313, %p314
      %p316 = scmp.ne.s32.totalorder %s302, %s303
      %p317 = scmp.eq.s32.totalorder %s38, 23
      %p318 = por %p316, %p317
      %p320 = scmp.ne.s32.totalorder %s303, %s319
      %p321 = scmp.eq.s32.totalorder %s38, 0
      %p322 = por %p320, %p321
      %s323 = ssub.s32 %s40, %s47
      %p324 = scmp.eq.s32.totalorder %s323, 0
      %s326 = sadd.s32 %s325, 1
      %s327 = scalar_select %p324, %s325, %s326
      %p330 = pneg %p324
      %p331 = scmp.eq.s32.totalorder %s32, 23
      %p332 = por %p330, %p331
      %p333 = scmp.ne.s32.totalorder %s325, %s328
      %p334 = scmp.eq.s32.totalorder %s32, 0
      %p335 = por %p333, %p334
      %p336 = scmp.ne.s32.totalorder %s325, %s328
      %p337 = scmp.eq.s32.totalorder %s37, 23
      %p338 = por %p336, %p337
      %p339 = scmp.ne.s32.totalorder %s328, %s329
      %p340 = scmp.eq.s32.totalorder %s37, 0
      %p341 = por %p339, %p340
      %p342 = scmp.ne.s32.totalorder %s328, %s329
      %p343 = scmp.eq.s32.totalorder %s38, 23
      %p344 = por %p342, %p343
      %p346 = scmp.ne.s32.totalorder %s329, %s345
      %p347 = scmp.eq.s32.totalorder %s38, 0
      %p348 = por %p346, %p347
      %s349 = ssub.s32 %s40, %s47
      %p350 = scmp.eq.s32.totalorder %s349, 0
      %s352 = sadd.s32 %s351, 1
      %s353 = scalar_select %p350, %s351, %s352
      %p356 = pneg %p350
      %p357 = scmp.eq.s32.totalorder %s32, 23
      %p358 = por %p356, %p357
      %p359 = scmp.ne.s32.totalorder %s351, %s354
      %p360 = scmp.eq.s32.totalorder %s32, 0
      %p361 = por %p359, %p360
      %p362 = scmp.ne.s32.totalorder %s351, %s354
      %p363 = scmp.eq.s32.totalorder %s37, 23
      %p364 = por %p362, %p363
      %p365 = scmp.ne.s32.totalorder %s354, %s355
      %p366 = scmp.eq.s32.totalorder %s37, 0
      %p367 = por %p365, %p366
      %p368 = scmp.ne.s32.totalorder %s354, %s355
      %p369 = scmp.eq.s32.totalorder %s38, 23
      %p370 = por %p368, %p369
      %p372 = scmp.ne.s32.totalorder %s355, %s371
      %p373 = scmp.eq.s32.totalorder %s38, 0
      %p374 = por %p372, %p373
      %s375 = ssub.s32 %s40, %s47
      %p376 = scmp.eq.s32.totalorder %s375, 0
      %s378 = sadd.s32 %s377, 1
      %s379 = scalar_select %p376, %s377, %s378
      %p382 = pneg %p376
      %p383 = scmp.eq.s32.totalorder %s32, 23
      %p384 = por %p382, %p383
      %p385 = scmp.ne.s32.totalorder %s377, %s380
      %p386 = scmp.eq.s32.totalorder %s32, 0
      %p387 = por %p385, %p386
      %p388 = scmp.ne.s32.totalorder %s377, %s380
      %p389 = scmp.eq.s32.totalorder %s37, 23
      %p390 = por %p388, %p389
      %p391 = scmp.ne.s32.totalorder %s380, %s381
      %p392 = scmp.eq.s32.totalorder %s37, 0
      %p393 = por %p391, %p392
      %p394 = scmp.ne.s32.totalorder %s380, %s381
      %p395 = scmp.eq.s32.totalorder %s38, 23
      %p396 = por %p394, %p395
      %p398 = scmp.ne.s32.totalorder %s381, %s397
      %p399 = scmp.eq.s32.totalorder %s38, 0
      %p400 = por %p398, %p399
      %s401 = ssub.s32 %s40, %s47
      %p402 = scmp.eq.s32.totalorder %s401, 0
      %s404 = sadd.s32 %s403, 1
      %s405 = scalar_select %p402, %s403, %s404
      %p408 = pneg %p402
      %p409 = scmp.eq.s32.totalorder %s32, 23
      %p410 = por %p408, %p409
      %p411 = scmp.ne.s32.totalorder %s403, %s406
      %p412 = scmp.eq.s32.totalorder %s32, 0
      %p413 = por %p411, %p412
      %p414 = scmp.ne.s32.totalorder %s403, %s406
      %p415 = scmp.eq.s32.totalorder %s37, 23
      %p416 = por %p414, %p415
      %p417 = scmp.ne.s32.totalorder %s406, %s407
      %p418 = scmp.eq.s32.totalorder %s37, 0
      %p419 = por %p417, %p418
      %p420 = scmp.ne.s32.totalorder %s406, %s407
      %p421 = scmp.eq.s32.totalorder %s38, 23
      %p422 = por %p420, %p421
      %p424 = scmp.ne.s32.totalorder %s407, %s423
      %p425 = scmp.eq.s32.totalorder %s38, 0
      %p426 = por %p424, %p425
      %s427 = ssub.s32 %s40, %s47
      %p428 = scmp.eq.s32.totalorder %s427, 0
      %s430 = sadd.s32 %s429, 1
      %s431 = scalar_select %p428, %s429, %s430
      %p434 = pneg %p428
      %p435 = scmp.eq.s32.totalorder %s32, 23
      %p436 = por %p434, %p435
      %p437 = scmp.ne.s32.totalorder %s429, %s432
      %p438 = scmp.eq.s32.totalorder %s32, 0
      %p439 = por %p437, %p438
      %p440 = scmp.ne.s32.totalorder %s429, %s432
      %p441 = scmp.eq.s32.totalorder %s37, 23
      %p442 = por %p440, %p441
      %p443 = scmp.ne.s32.totalorder %s432, %s433
      %p444 = scmp.eq.s32.totalorder %s37, 0
      %p445 = por %p443, %p444
      %p446 = scmp.ne.s32.totalorder %s432, %s433
      %p447 = scmp.eq.s32.totalorder %s38, 23
      %p448 = por %p446, %p447
      %p450 = scmp.ne.s32.totalorder %s433, %s449
      %p451 = scmp.eq.s32.totalorder %s38, 0
      %p452 = por %p450, %p451
      %s454 = sadd.s32 %s453, 1
      %p457 = scmp.eq.s32.totalorder %s32, 23
      %p458 = scmp.ne.s32.totalorder %s453, %s455
      %p459 = scmp.eq.s32.totalorder %s32, 0
      %p460 = por %p458, %p459
      %p461 = scmp.ne.s32.totalorder %s453, %s455
      %p462 = scmp.eq.s32.totalorder %s37, 23
      %p463 = por %p461, %p462
      %p464 = scmp.ne.s32.totalorder %s455, %s456
      %p465 = scmp.eq.s32.totalorder %s37, 0
      %p466 = por %p464, %p465
      %p467 = scmp.ne.s32.totalorder %s455, %s456
      %p468 = scmp.eq.s32.totalorder %s38, 23
      %p469 = por %p467, %p468
      %p471 = scmp.ne.s32.totalorder %s456, %s470
      %p472 = scmp.eq.s32.totalorder %s38, 0
      %p473 = por %p471, %p472
      %s475 = sadd.s32 %s474, 1
      %p478 = scmp.eq.s32.totalorder %s32, 23
      %p479 = scmp.ne.s32.totalorder %s474, %s476
      %p480 = scmp.eq.s32.totalorder %s32, 0
      %p481 = por %p479, %p480
      %p482 = scmp.ne.s32.totalorder %s474, %s476
      %p483 = scmp.eq.s32.totalorder %s37, 23
      %p484 = por %p482, %p483
      %p485 = scmp.ne.s32.totalorder %s476, %s477
      %p486 = scmp.eq.s32.totalorder %s37, 0
      %p487 = por %p485, %p486
      %p488 = scmp.ne.s32.totalorder %s476, %s477
      %p489 = scmp.eq.s32.totalorder %s38, 23
      %p490 = por %p488, %p489
      %p492 = scmp.ne.s32.totalorder %s477, %s491
      %p493 = scmp.eq.s32.totalorder %s38, 0
      %p494 = por %p492, %p493
      %s496 = sadd.s32 %s495, 1
      %p499 = scmp.eq.s32.totalorder %s32, 23
      %p500 = scmp.ne.s32.totalorder %s495, %s497
      %p501 = scmp.eq.s32.totalorder %s32, 0
      %p502 = por %p500, %p501
      %p503 = scmp.ne.s32.totalorder %s495, %s497
      %p504 = scmp.eq.s32.totalorder %s37, 23
      %p505 = por %p503, %p504
      %p506 = scmp.ne.s32.totalorder %s497, %s498
      %p507 = scmp.eq.s32.totalorder %s37, 0
      %p508 = por %p506, %p507
      %p509 = scmp.ne.s32.totalorder %s497, %s498
      %p510 = scmp.eq.s32.totalorder %s38, 23
      %p511 = por %p509, %p510
      %p513 = scmp.ne.s32.totalorder %s498, %s512
      %p514 = scmp.eq.s32.totalorder %s38, 0
      %p515 = por %p513, %p514
      %s517 = sadd.s32 %s516, 1
      %p520 = scmp.eq.s32.totalorder %s32, 23
      %p521 = scmp.ne.s32.totalorder %s516, %s518
      %p522 = scmp.eq.s32.totalorder %s32, 0
      %p523 = por %p521, %p522
      %p524 = scmp.ne.s32.totalorder %s516, %s518
      %p525 = scmp.eq.s32.totalorder %s37, 23
      %p526 = por %p524, %p525
      %p527 = scmp.ne.s32.totalorder %s518, %s519
      %p528 = scmp.eq.s32.totalorder %s37, 0
      %p529 = por %p527, %p528
      %p530 = scmp.ne.s32.totalorder %s518, %s519
      %p531 = scmp.eq.s32.totalorder %s38, 23
      %p532 = por %p530, %p531
      %p534 = scmp.ne.s32.totalorder %s519, %s533
      %p535 = scmp.eq.s32.totalorder %s38, 0
      %p536 = por %p534, %p535
      %s538 = sadd.s32 %s537, 1
      %p541 = scmp.eq.s32.totalorder %s32, 23
      %p542 = scmp.ne.s32.totalorder %s537, %s539
      %p543 = scmp.eq.s32.totalorder %s32, 0
      %p544 = por %p542, %p543
      %p545 = scmp.ne.s32.totalorder %s537, %s539
      %p546 = scmp.eq.s32.totalorder %s37, 23
      %p547 = por %p545, %p546
      %p548 = scmp.ne.s32.totalorder %s539, %s540
      %p549 = scmp.eq.s32.totalorder %s37, 0
      %p550 = por %p548, %p549
      %p551 = scmp.ne.s32.totalorder %s539, %s540
      %p552 = scmp.eq.s32.totalorder %s38, 23
      %p553 = por %p551, %p552
      %p555 = scmp.ne.s32.totalorder %s540, %s554
      %p556 = scmp.eq.s32.totalorder %s38, 0
      %p557 = por %p555, %p556
      %s559 = sadd.s32 %s558, 1
      %p562 = scmp.eq.s32.totalorder %s32, 23
      %p563 = scmp.ne.s32.totalorder %s558, %s560
      %p564 = scmp.eq.s32.totalorder %s32, 0
      %p565 = por %p563, %p564
      %p566 = scmp.ne.s32.totalorder %s558, %s560
      %p567 = scmp.eq.s32.totalorder %s37, 23
      %p568 = por %p566, %p567
      %p569 = scmp.ne.s32.totalorder %s560, %s561
      %p570 = scmp.eq.s32.totalorder %s37, 0
      %p571 = por %p569, %p570
      %p572 = scmp.ne.s32.totalorder %s560, %s561
      %p573 = scmp.eq.s32.totalorder %s38, 23
      %p574 = por %p572, %p573
      %p576 = scmp.ne.s32.totalorder %s561, %s575
      %p577 = scmp.eq.s32.totalorder %s38, 0
      %p578 = por %p576, %p577
      %s580 = sadd.s32 %s579, 1
      %p583 = scmp.eq.s32.totalorder %s32, 23
      %p584 = scmp.ne.s32.totalorder %s579, %s581
      %p585 = scmp.eq.s32.totalorder %s32, 0
      %p586 = por %p584, %p585
      %p587 = scmp.ne.s32.totalorder %s579, %s581
      %p588 = scmp.eq.s32.totalorder %s37, 23
      %p589 = por %p587, %p588
      %p590 = scmp.ne.s32.totalorder %s581, %s582
      %p591 = scmp.eq.s32.totalorder %s37, 0
      %p592 = por %p590, %p591
      %p593 = scmp.ne.s32.totalorder %s581, %s582
      %p594 = scmp.eq.s32.totalorder %s38, 23
      %p595 = por %p593, %p594
      %p597 = scmp.ne.s32.totalorder %s582, %s596
      %p598 = scmp.eq.s32.totalorder %s38, 0
      %p599 = por %p597, %p598
      %s600 = ssub.s32 %s39, %s51
      %p601 = scmp.eq.s32.totalorder %s600, 0
      %s603 = sadd.s32 %s602, 1
      %s604 = scalar_select %p601, %s602, %s603
      %p607 = pneg %p601
      %p608 = scmp.eq.s32.totalorder %s32, 23
      %p609 = por %p607, %p608
      %p610 = scmp.ne.s32.totalorder %s602, %s605
      %p611 = scmp.eq.s32.totalorder %s32, 0
      %p612 = por %p610, %p611
      %p613 = scmp.ne.s32.totalorder %s602, %s605
      %p614 = scmp.eq.s32.totalorder %s37, 23
      %p615 = por %p613, %p614
      %p616 = scmp.ne.s32.totalorder %s605, %s606
      %p617 = scmp.eq.s32.totalorder %s37, 0
      %p618 = por %p616, %p617
      %p619 = scmp.ne.s32.totalorder %s605, %s606
      %p620 = scmp.eq.s32.totalorder %s38, 23
      %p621 = por %p619, %p620
      %p623 = scmp.ne.s32.totalorder %s606, %s622
      %p624 = scmp.eq.s32.totalorder %s38, 0
      %p625 = por %p623, %p624
      %p626 = scmp.le.s32.totalorder 1, %s32
      %p627 = scmp.lt.s32.totalorder %s32, 25
      %p628 = pnand %p626, %p627
      %p629 = pneg %p628
      // Predicated region
      $region9: #{image_encoder_vit_forward.1} parent=5 // pred_check
        _
      $region10: #{image_encoder_vit_forward.1} parent=5 // pred_check_branch
        %631 = sbr.rel (%p628) target = $region12
      $region11: #{image_encoder_vit_forward.1} parent=5 // pred_region
        %s632 = ssub.s32 %s32, 1
        // Predicated region
        $region13: #{image_encoder_vit_forward.1} parent=11 // pred_check
          %p633 = pneg %p91
        $region14: #{image_encoder_vit_forward.1} parent=11 // pred_check_branch
          %635 = sbr.rel (%p633) target = $region16
        $region15: #{image_encoder_vit_forward.1} parent=11 // pred_region
          _
        $region16: #{image_encoder_vit_forward.1} parent=11 // pred_fallthru
          _
        // Predicated region
        $region17: #{image_encoder_vit_forward.1} parent=11 // pred_check
          %p636 = pneg %p112
        $region18: #{image_encoder_vit_forward.1} parent=11 // pred_check_branch
          %638 = sbr.rel (%p636) target = $region20
        $region19: #{image_encoder_vit_forward.1} parent=11 // pred_region
          _
        $region20: #{image_encoder_vit_forward.1} parent=11 // pred_fallthru
          _
        // Predicated region
        $region21: #{image_encoder_vit_forward.1} parent=11 // pred_check
          %p639 = pneg %p133
        $region22: #{image_encoder_vit_forward.1} parent=11 // pred_check_branch
          %641 = sbr.rel (%p639) target = $region24
        $region23: #{image_encoder_vit_forward.1} parent=11 // pred_region
          _
        $region24: #{image_encoder_vit_forward.1} parent=11 // pred_fallthru
          _
        // Predicated region
        $region25: #{image_encoder_vit_forward.1} parent=11 // pred_check
          %p642 = pneg %p466
        $region26: #{image_encoder_vit_forward.1} parent=11 // pred_check_branch
          %644 = sbr.rel (%p642) target = $region28
        $region27: #{image_encoder_vit_forward.1} parent=11 // pred_region
          _
        $region28: #{image_encoder_vit_forward.1} parent=11 // pred_fallthru
          _
        // Predicated region
        $region29: #{image_encoder_vit_forward.1} parent=11 // pred_check
          %p645 = pneg %p487
        $region30: #{image_encoder_vit_forward.1} parent=11 // pred_check_branch
          %647 = sbr.rel (%p645) target = $region32
        $region31: #{image_encoder_vit_forward.1} parent=11 // pred_region
          _
        $region32: #{image_encoder_vit_forward.1} parent=11 // pred_fallthru
          _
        // Predicated region
        $region33: #{image_encoder_vit_forward.1} parent=11 // pred_check
          %p648 = pneg %p508
        $region34: #{image_encoder_vit_forward.1} parent=11 // pred_check_branch
          %650 = sbr.rel (%p648) target = $region36
        $region35: #{image_encoder_vit_forward.1} parent=11 // pred_region
          _
        $region36: #{image_encoder_vit_forward.1} parent=11 // pred_fallthru
          _
        // Predicated region
        $region37: #{image_encoder_vit_forward.1} parent=11 // pred_check
          %p651 = pneg %p529
        $region38: #{image_encoder_vit_forward.1} parent=11 // pred_check_branch
          %653 = sbr.rel (%p651) target = $region40
        $region39: #{image_encoder_vit_forward.1} parent=11 // pred_region
          _
        $region40: #{image_encoder_vit_forward.1} parent=11 // pred_fallthru
          _
        // Predicated region
        $region41: #{image_encoder_vit_forward.1} parent=11 // pred_check
          %p654 = pneg %p550
        $region42: #{image_encoder_vit_forward.1} parent=11 // pred_check_branch
          %656 = sbr.rel (%p654) target = $region44
        $region43: #{image_encoder_vit_forward.1} parent=11 // pred_region
          _
        $region44: #{image_encoder_vit_forward.1} parent=11 // pred_fallthru
          _
        // Predicated region
        $region45: #{image_encoder_vit_forward.1} parent=11 // pred_check
          %p657 = pneg %p571
        $region46: #{image_encoder_vit_forward.1} parent=11 // pred_check_branch
          %659 = sbr.rel (%p657) target = $region48
        $region47: #{image_encoder_vit_forward.1} parent=11 // pred_region
          _
        $region48: #{image_encoder_vit_forward.1} parent=11 // pred_fallthru
          _
        // Predicated region
        $region49: #{image_encoder_vit_forward.1} parent=11 // pred_check
          %p660 = pneg %p592
        $region50: #{image_encoder_vit_forward.1} parent=11 // pred_check_branch
          %662 = sbr.rel (%p660) target = $region52
        $region51: #{image_encoder_vit_forward.1} parent=11 // pred_region
          _
        $region52: #{image_encoder_vit_forward.1} parent=11 // pred_fallthru
          _
      $region12: #{image_encoder_vit_forward.1} parent=5 // pred_fallthru
        _
      %p663 = scmp.lt.s32.totalorder %s32, 24
      // Predicated region
      $region53: #{image_encoder_vit_forward.1} parent=5 // pred_check
        %p664 = pneg %p663
      $region54: #{image_encoder_vit_forward.1} parent=5 // pred_check_branch
        %666 = sbr.rel (%p664) target = $region56
      $region55: #{image_encoder_vit_forward.1} parent=5 // pred_region
        // Predicated region
        $region57: #{image_encoder_vit_forward.1} parent=55 // pred_check
          %p667 = pneg %p64
        $region58: #{image_encoder_vit_forward.1} parent=55 // pred_check_branch
          %669 = sbr.rel (%p667) target = $region60
        $region59: #{image_encoder_vit_forward.1} parent=55 // pred_region
          %p670 = scmp.lt.s32.totalorder %s39, 1
          %s671 = scalar_select %p670, %s39, 1
          %s672 = smul.addr %s671, 8
          %s673 = smul.addr %s672, 8
          %s674 = scalar_lea.vmem %s0, %s673
        $region60: #{image_encoder_vit_forward.1} parent=55 // pred_fallthru
          _
        // Predicated region
        $region61: #{image_encoder_vit_forward.1} parent=55 // pred_check
          %p675 = pneg %p153
        $region62: #{image_encoder_vit_forward.1} parent=55 // pred_check_branch
          %677 = sbr.rel (%p675) target = $region64
        $region63: #{image_encoder_vit_forward.1} parent=55 // pred_region
          %p678 = scmp.lt.s32.totalorder %s40, 11
          %s679 = scalar_select %p678, %s40, 11
          %s680 = scalar_lea.vmem %s4, %s679
        $region64: #{image_encoder_vit_forward.1} parent=55 // pred_fallthru
          _
        // Predicated region
        $region65: #{image_encoder_vit_forward.1} parent=55 // pred_check
          %p681 = pneg %p179
        $region66: #{image_encoder_vit_forward.1} parent=55 // pred_check_branch
          %683 = sbr.rel (%p681) target = $region68
        $region67: #{image_encoder_vit_forward.1} parent=55 // pred_region
          %p684 = scmp.lt.s32.totalorder %s40, 11
          %s685 = scalar_select %p684, %s40, 11
          %s686 = scalar_lea.vmem %s5, %s685
        $region68: #{image_encoder_vit_forward.1} parent=55 // pred_fallthru
          _
        // Predicated region
        $region69: #{image_encoder_vit_forward.1} parent=55 // pred_check
          %p687 = pneg %p205
        $region70: #{image_encoder_vit_forward.1} parent=55 // pred_check_branch
          %689 = sbr.rel (%p687) target = $region72
        $region71: #{image_encoder_vit_forward.1} parent=55 // pred_region
          %p690 = scmp.lt.s32.totalorder %s40, 11
          %s691 = scalar_select %p690, %s40, 11
          %s692 = smul.addr %s691, 4
          %s693 = smul.addr %s692, 8
          %s694 = scalar_lea.vmem %s6, %s693
        $region72: #{image_encoder_vit_forward.1} parent=55 // pred_fallthru
          _
        // Predicated region
        $region73: #{image_encoder_vit_forward.1} parent=55 // pred_check
          %p695 = pneg %p231
        $region74: #{image_encoder_vit_forward.1} parent=55 // pred_check_branch
          %697 = sbr.rel (%p695) target = $region76
        $region75: #{image_encoder_vit_forward.1} parent=55 // pred_region
          %p698 = scmp.lt.s32.totalorder %s40, 11
          %s699 = scalar_select %p698, %s40, 11
          %s700 = scalar_lea.vmem %s7, %s699
        $region76: #{image_encoder_vit_forward.1} parent=55 // pred_fallthru
          _
        // Predicated region
        $region77: #{image_encoder_vit_forward.1} parent=55 // pred_check
          %p701 = pneg %p257
        $region78: #{image_encoder_vit_forward.1} parent=55 // pred_check_branch
          %703 = sbr.rel (%p701) target = $region80
        $region79: #{image_encoder_vit_forward.1} parent=55 // pred_region
          %p704 = scmp.lt.s32.totalorder %s40, 11
          %s705 = scalar_select %p704, %s40, 11
          %s706 = smul.addr %s705, 4
          %s707 = smul.addr %s706, 8
          %s708 = scalar_lea.vmem %s8, %s707
        $region80: #{image_encoder_vit_forward.1} parent=55 // pred_fallthru
          _
        // Predicated region
        $region81: #{image_encoder_vit_forward.1} parent=55 // pred_check
          %p709 = pneg %p283
        $region82: #{image_encoder_vit_forward.1} parent=55 // pred_check_branch
          %711 = sbr.rel (%p709) target = $region84
        $region83: #{image_encoder_vit_forward.1} parent=55 // pred_region
          %p712 = scmp.lt.s32.totalorder %s40, 11
          %s713 = scalar_select %p712, %s40, 11
          %s714 = scalar_lea.vmem %s9, %s713
        $region84: #{image_encoder_vit_forward.1} parent=55 // pred_fallthru
          _
        // Predicated region
        $region85: #{image_encoder_vit_forward.1} parent=55 // pred_check
          %p715 = pneg %p309
        $region86: #{image_encoder_vit_forward.1} parent=55 // pred_check_branch
          %717 = sbr.rel (%p715) target = $region88
        $region87: #{image_encoder_vit_forward.1} parent=55 // pred_region
          %p718 = scmp.lt.s32.totalorder %s40, 11
          %s719 = scalar_select %p718, %s40, 11
          %s720 = scalar_lea.vmem %s10, %s719
        $region88: #{image_encoder_vit_forward.1} parent=55 // pred_fallthru
          _
        // Predicated region
        $region89: #{image_encoder_vit_forward.1} parent=55 // pred_check
          %p721 = pneg %p335
        $region90: #{image_encoder_vit_forward.1} parent=55 // pred_check_branch
          %723 = sbr.rel (%p721) target = $region92
        $region91: #{image_encoder_vit_forward.1} parent=55 // pred_region
          %p724 = scmp.lt.s32.totalorder %s40, 11
          %s725 = scalar_select %p724, %s40, 11
          %s726 = scalar_lea.vmem %s11, %s725
        $region92: #{image_encoder_vit_forward.1} parent=55 // pred_fallthru
          _
        // Predicated region
        $region93: #{image_encoder_vit_forward.1} parent=55 // pred_check
          %p727 = pneg %p361
        $region94: #{image_encoder_vit_forward.1} parent=55 // pred_check_branch
          %729 = sbr.rel (%p727) target = $region96
        $region95: #{image_encoder_vit_forward.1} parent=55 // pred_region
          %p730 = scmp.lt.s32.totalorder %s40, 11
          %s731 = scalar_select %p730, %s40, 11
          %s732 = smul.addr %s731, 4
          %s733 = smul.addr %s732, 8
          %s734 = scalar_lea.vmem %s12, %s733
        $region96: #{image_encoder_vit_forward.1} parent=55 // pred_fallthru
          _
        // Predicated region
        $region97: #{image_encoder_vit_forward.1} parent=55 // pred_check
          %p735 = pneg %p387
        $region98: #{image_encoder_vit_forward.1} parent=55 // pred_check_branch
          %737 = sbr.rel (%p735) target = $region100
        $region99: #{image_encoder_vit_forward.1} parent=55 // pred_region
          %p738 = scmp.lt.s32.totalorder %s40, 11
          %s739 = scalar_select %p738, %s40, 11
          %s740 = scalar_lea.vmem %s13, %s739
        $region100: #{image_encoder_vit_forward.1} parent=55 // pred_fallthru
          _
        // Predicated region
        $region101: #{image_encoder_vit_forward.1} parent=55 // pred_check
          %p741 = pneg %p413
        $region102: #{image_encoder_vit_forward.1} parent=55 // pred_check_branch
          %743 = sbr.rel (%p741) target = $region104
        $region103: #{image_encoder_vit_forward.1} parent=55 // pred_region
          %p744 = scmp.lt.s32.totalorder %s40, 11
          %s745 = scalar_select %p744, %s40, 11
          %s746 = smul.addr %s745, 16
          %s747 = smul.addr %s746, 8
          %s748 = scalar_lea.vmem %s14, %s747
        $region104: #{image_encoder_vit_forward.1} parent=55 // pred_fallthru
          _
        // Predicated region
        $region105: #{image_encoder_vit_forward.1} parent=55 // pred_check
          %p749 = pneg %p439
        $region106: #{image_encoder_vit_forward.1} parent=55 // pred_check_branch
          %751 = sbr.rel (%p749) target = $region108
        $region107: #{image_encoder_vit_forward.1} parent=55 // pred_region
          %p752 = scmp.lt.s32.totalorder %s40, 11
          %s753 = scalar_select %p752, %s40, 11
          %s754 = scalar_lea.vmem %s15, %s753
        $region108: #{image_encoder_vit_forward.1} parent=55 // pred_fallthru
          _
      $region56: #{image_encoder_vit_forward.1} parent=5 // pred_fallthru
        _
      %p755 = scmp.le.s32.totalorder 1, %s32
      %p756 = scmp.lt.s32.totalorder %s32, 25
      %p757 = pnand %p755, %p756
      %p758 = pneg %p757
      // Predicated region
      $region109: #{image_encoder_vit_forward.1} parent=5 // pred_check
        _
      $region110: #{image_encoder_vit_forward.1} parent=5 // pred_check_branch
        %760 = sbr.rel (%p757) target = $region112
      $region111: #{image_encoder_vit_forward.1} parent=5 // pred_region
        %s761 = ssub.s32 %s32, 1
        %p762 = scmp.lt.s32.totalorder %s41, 1
        %s763 = scalar_select %p762, %s41, 1
        %s764 = smul.addr %s763, 8
        %s765 = smul.addr %s764, 8
        %s766 = scalar_lea.vmem %s0, %s765
        %p767 = pneg %p70
        %p768 = pneg %p67
        %p769 = pneg %p91
        %p770 = pneg %p88
        %p771 = pneg %p112
        %p772 = pneg %p109
        %p773 = pneg %p133
        %p774 = pneg %p130
        %p775 = scmp.lt.s32.totalorder %s42, 11
        %s776 = scalar_select %p775, %s42, 11
        %s777 = scalar_lea.vmem %s4, %s776
        %p778 = pneg %p159
        %p779 = pneg %p156
        %p780 = scmp.lt.s32.totalorder %s42, 11
        %s781 = scalar_select %p780, %s42, 11
        %s782 = scalar_lea.vmem %s5, %s781
        %p783 = pneg %p185
        %p784 = pneg %p182
        %p785 = scmp.lt.s32.totalorder %s42, 11
        %s786 = scalar_select %p785, %s42, 11
        %s787 = smul.addr %s786, 4
        %s788 = smul.addr %s787, 8
        %s789 = scalar_lea.vmem %s6, %s788
        %p790 = pneg %p211
        %p791 = pneg %p208
        %p792 = scmp.lt.s32.totalorder %s42, 11
        %s793 = scalar_select %p792, %s42, 11
        %s794 = scalar_lea.vmem %s7, %s793
        %p795 = pneg %p237
        %p796 = pneg %p234
        %p797 = scmp.lt.s32.totalorder %s42, 11
        %s798 = scalar_select %p797, %s42, 11
        %s799 = smul.addr %s798, 4
        %s800 = smul.addr %s799, 8
        %s801 = scalar_lea.vmem %s8, %s800
        %p802 = pneg %p263
        %p803 = pneg %p260
        %p804 = scmp.lt.s32.totalorder %s42, 11
        %s805 = scalar_select %p804, %s42, 11
        %s806 = scalar_lea.vmem %s9, %s805
        %p807 = pneg %p289
        %p808 = pneg %p286
        %p809 = scmp.lt.s32.totalorder %s42, 11
        %s810 = scalar_select %p809, %s42, 11
        %s811 = scalar_lea.vmem %s10, %s810
        %p812 = pneg %p315
        %p813 = pneg %p312
        %p814 = scmp.lt.s32.totalorder %s42, 11
        %s815 = scalar_select %p814, %s42, 11
        %s816 = scalar_lea.vmem %s11, %s815
        %p817 = pneg %p341
        %p818 = pneg %p338
        %p819 = scmp.lt.s32.totalorder %s42, 11
        %s820 = scalar_select %p819, %s42, 11
        %s821 = smul.addr %s820, 4
        %s822 = smul.addr %s821, 8
        %s823 = scalar_lea.vmem %s12, %s822
        %p824 = pneg %p367
        %p825 = pneg %p364
        %p826 = scmp.lt.s32.totalorder %s42, 11
        %s827 = scalar_select %p826, %s42, 11
        %s828 = scalar_lea.vmem %s13, %s827
        %p829 = pneg %p393
        %p830 = pneg %p390
        %p831 = scmp.lt.s32.totalorder %s42, 11
        %s832 = scalar_select %p831, %s42, 11
        %s833 = smul.addr %s832, 16
        %s834 = smul.addr %s833, 8
        %s835 = scalar_lea.vmem %s14, %s834
        %p836 = pneg %p419
        %p837 = pneg %p416
        %p838 = scmp.lt.s32.totalorder %s42, 11
        %s839 = scalar_select %p838, %s42, 11
        %s840 = scalar_lea.vmem %s15, %s839
        %p841 = pneg %p445
        %p842 = pneg %p442
        %p843 = pneg %p466
        %p844 = pneg %p463
        %p845 = pneg %p487
        %p846 = pneg %p484
        %p847 = pneg %p508
        %p848 = pneg %p505
        %p849 = pneg %p529
        %p850 = pneg %p526
        %p851 = pneg %p550
        %p852 = pneg %p547
        %p853 = pneg %p571
        %p854 = pneg %p568
        %p855 = pneg %p592
        %p856 = pneg %p589
        %p857 = pneg %p618
        %p858 = pneg %p615
        %s859 = sand.u32 %s605, 1
        %s860 = scalar_lea.sflag [#allocation6], %s859
        %s861 = sand.u32 %s605, 1
        %s862 = smul.addr %s861, 64
        %s863 = scalar_lea.vmem [#allocation5], %s862
        %p864 = scmp.lt.s32.totalorder %s41, 1
        %s865 = scalar_select %p864, %s41, 1
        %s866 = smul.addr %s865, 8
        %s867 = smul.addr %s866, 8
        %s868 = scalar_lea.vmem %s0, %s867
        %p869 = scmp.lt.s32.totalorder %s42, 11
        %s870 = scalar_select %p869, %s42, 11
        %s871 = scalar_lea.vmem %s4, %s870
        %p872 = scmp.lt.s32.totalorder %s42, 11
        %s873 = scalar_select %p872, %s42, 11
        %s874 = scalar_lea.vmem %s5, %s873
        %p875 = scmp.lt.s32.totalorder %s42, 11
        %s876 = scalar_select %p875, %s42, 11
        %s877 = smul.addr %s876, 4
        %s878 = smul.addr %s877, 8
        %s879 = scalar_lea.vmem %s6, %s878
        %p880 = scmp.lt.s32.totalorder %s42, 11
        %s881 = scalar_select %p880, %s42, 11
        %s882 = scalar_lea.vmem %s7, %s881
        %p883 = scmp.lt.s32.totalorder %s42, 11
        %s884 = scalar_select %p883, %s42, 11
        %s885 = smul.addr %s884, 4
        %s886 = smul.addr %s885, 8
        %s887 = scalar_lea.vmem %s8, %s886
        %p888 = scmp.lt.s32.totalorder %s42, 11
        %s889 = scalar_select %p888, %s42, 11
        %s890 = scalar_lea.vmem %s9, %s889
        %p891 = scmp.lt.s32.totalorder %s42, 11
        %s892 = scalar_select %p891, %s42, 11
        %s893 = scalar_lea.vmem %s10, %s892
        %p894 = scmp.lt.s32.totalorder %s42, 11
        %s895 = scalar_select %p894, %s42, 11
        %s896 = scalar_lea.vmem %s11, %s895
        %p897 = scmp.lt.s32.totalorder %s42, 11
        %s898 = scalar_select %p897, %s42, 11
        %s899 = smul.addr %s898, 4
        %s900 = smul.addr %s899, 8
        %s901 = scalar_lea.vmem %s12, %s900
        %p902 = scmp.lt.s32.totalorder %s42, 11
        %s903 = scalar_select %p902, %s42, 11
        %s904 = scalar_lea.vmem %s13, %s903
        %p905 = scmp.lt.s32.totalorder %s42, 11
        %s906 = scalar_select %p905, %s42, 11
        %s907 = smul.addr %s906, 16
        %s908 = smul.addr %s907, 8
        %s909 = scalar_lea.vmem %s14, %s908
        %p910 = scmp.lt.s32.totalorder %s42, 11
        %s911 = scalar_select %p910, %s42, 11
        %s912 = scalar_lea.vmem %s15, %s911
        %p913 = scmp.eq.s32.totalorder %s42, 0
        // Predicated region
        $region113: #{image_encoder_vit_forward.1} parent=111 // pred_check
          %p914 = pneg %p913
        $region114: #{image_encoder_vit_forward.1} parent=111 // pred_check_branch
          %916 = sbr.rel (%p914) target = $region116
        $region115: #{image_encoder_vit_forward.1} parent=111 // pred_region
          %v917 = vld [vmem:[%s868] sm:$0xff]
          %v918 = vld [vmem:[%s868 + $0x8] sm:$0xff]
          %v919 = vld [vmem:[%s868 + $0x10] sm:$0xff]
          %v920 = vld [vmem:[%s868 + $0x18] sm:$0xff]
          %v921 = vld [vmem:[%s868 + $0x20] sm:$0xff]
          %v922 = vld [vmem:[%s868 + $0x28] sm:$0xff]
          %v923 = vld [vmem:[%s868 + $0x30] sm:$0xff]
          %v924 = vld [vmem:[%s868 + $0x38] sm:$0xff]
          %v925 = vld [vmem:[%s2] sm:$0xff]
          %v926 = vld [vmem:[%s3] sm:$0x1]
          %v928 = vlaneseq
          %v929 = vshrl.u32 %v928, 7
          %v930 = vsub.s32 0, %v929
          %v931 = vrot.slane %v926, %v930
          %vm933 = vcmask 64512
          %v935 = vsel %vm933, %v917, 0
          %v938 = vsel %vm933, %v918, 0
          %v941 = vsel %vm933, %v919, 0
          %v944 = vsel %vm933, %v920, 0
          %v947 = vsel %vm933, %v921, 0
          %v950 = vsel %vm933, %v922, 0
          %v953 = vsel %vm933, %v923, 0
          %v956 = vsel %vm933, %v924, 0
          %958 = vmatprep.subr.mxu0 0.0
          %959 = vmatpush1.msra.mxu0 %v925
          %960 = vmatprep.subr.mxu0 0.0
          %961 = vmatpush1.msra.mxu0 0.0
          %962 = vmatprep.subr.mxu0 0.0
          %963 = vmatpush1.msra.mxu0 0.0
          %964 = vmatprep.subr.mxu0 0.0
          %965 = vmatpush1.msra.mxu0 0.0
          %966 = vmatprep.subr.mxu0 0.0
          %967 = vmatpush1.msra.mxu0 0.0
          %968 = vmatprep.subr.mxu0 0.0
          %969 = vmatpush1.msra.mxu0 0.0
          %970 = vmatprep.subr.mxu0 0.0
          %971 = vmatpush1.msra.mxu0 0.0
          %972 = vmatprep.subr.mxu0 0.0
          %973 = vmatpush1.msra.mxu0 0.0
          %974 = vmatprep.subr.mxu0 0.0
          %975 = vmatpush1.msra.mxu0 0.0
          %976 = vmatprep.subr.mxu0 0.0
          %977 = vmatpush1.msra.mxu0 0.0
          %978 = vmatprep.subr.mxu0 0.0
          %979 = vmatpush1.msra.mxu0 0.0
          %980 = vmatprep.subr.mxu0 0.0
          %981 = vmatpush1.msra.mxu0 0.0
          %982 = vmatprep.subr.mxu0 0.0
          %983 = vmatpush1.msra.mxu0 0.0
          %984 = vmatprep.subr.mxu0 0.0
          %985 = vmatpush1.msra.mxu0 0.0
          %986 = vmatprep.subr.mxu0 0.0
          %987 = vmatpush1.msra.mxu0 0.0
          %988 = vmatprep.subr.mxu0 0.0
          %989 = vmatpush1.msra.mxu0 0.0
          %990 = vmatprep.subr.mxu0 0.0
          %991 = vmatpush1.msra.mxu0 0.0
          %992 = vmatprep.subr.mxu0 0.0
          %993 = vmatpush1.msra.mxu0 0.0
          %994 = vmatprep.subr.mxu0 0.0
          %995 = vmatpush1.msra.mxu0 0.0
          %996 = vmatprep.subr.mxu0 0.0
          %997 = vmatpush1.msra.mxu0 0.0
          %998 = vmatprep.subr.mxu0 0.0
          %999 = vmatpush1.msra.mxu0 0.0
          %1000 = vmatprep.subr.mxu0 0.0
          %1001 = vmatpush1.msra.mxu0 0.0
          %1002 = vmatprep.subr.mxu0 0.0
          %1003 = vmatpush1.msra.mxu0 0.0
          %1004 = vmatprep.subr.mxu0 0.0
          %1005 = vmatpush1.msra.mxu0 0.0
          %1006 = vmatprep.subr.mxu0 0.0
          %1007 = vmatpush1.msra.mxu0 0.0
          %1008 = vmatprep.subr.mxu0 0.0
          %1009 = vmatpush1.msra.mxu0 0.0
          %1010 = vmatprep.subr.mxu0 0.0
          %1011 = vmatpush1.msra.mxu0 0.0
          %1012 = vmatprep.subr.mxu0 0.0
          %1013 = vmatpush1.msra.mxu0 0.0
          %1014 = vmatprep.subr.mxu0 0.0
          %1015 = vmatpush1.msra.mxu0 0.0
          %1016 = vmatprep.subr.mxu0 0.0
          %1017 = vmatpush1.msra.mxu0 0.0
          %1018 = vmatprep.subr.mxu0 0.0
          %1019 = vmatpush1.msra.mxu0 0.0
          %1020 = vmatprep.subr.mxu0 0.0
          %1021 = vmatpush1.msra.mxu0 0.0
          %1022 = vmatprep.mubr.f32.mxu0 0.0
          %1023 = vmatmul.mubr.f32.gmra.mrb[0].mxu0 %v935
          %v1024 = vpop.f32.mrb[0].mxu0
          %v1025 = vadd.f32 %v931, %v1024
          %v1026 = vpop.f32.mrb[0].mxu0
          %1027 = vmatprep.mubr.f32.mxu0 0.0
          %1028 = vmatmul.mubr.f32.gmra.mrb[0].mxu0 %v938
          %v1029 = vpop.f32.mrb[0].mxu0
          %v1030 = vadd.f32 %v931, %v1029
          %v1031 = vpop.f32.mrb[0].mxu0
          %1032 = vmatprep.mubr.f32.mxu0 0.0
          %1033 = vmatmul.mubr.f32.gmra.mrb[0].mxu0 %v941
          %v1034 = vpop.f32.mrb[0].mxu0
          %v1035 = vadd.f32 %v931, %v1034
          %v1036 = vpop.f32.mrb[0].mxu0
          %1037 = vmatprep.mubr.f32.mxu0 0.0
          %1038 = vmatmul.mubr.f32.gmra.mrb[0].mxu0 %v944
          %v1039 = vpop.f32.mrb[0].mxu0
          %v1040 = vadd.f32 %v931, %v1039
          %v1041 = vpop.f32.mrb[0].mxu0
          %1042 = vmatprep.mubr.f32.mxu0 0.0
          %1043 = vmatmul.mubr.f32.gmra.mrb[0].mxu0 %v947
          %v1044 = vpop.f32.mrb[0].mxu0
          %v1045 = vadd.f32 %v931, %v1044
          %v1046 = vpop.f32.mrb[0].mxu0
          %1047 = vmatprep.mubr.f32.mxu0 0.0
          %1048 = vmatmul.mubr.f32.gmra.mrb[0].mxu0 %v950
          %v1049 = vpop.f32.mrb[0].mxu0
          %v1050 = vadd.f32 %v931, %v1049
          %v1051 = vpop.f32.mrb[0].mxu0
          %1052 = vmatprep.mubr.f32.mxu0 0.0
          %1053 = vmatmul.mubr.f32.gmra.mrb[0].mxu0 %v953
          %v1054 = vpop.f32.mrb[0].mxu0
          %v1055 = vadd.f32 %v931, %v1054
          %v1056 = vpop.f32.mrb[0].mxu0
          %1057 = vmatprep.mubr.f32.mxu0 0.0
          %1058 = vmatmul.mubr.f32.gmra.mrb[0].mxu0 %v956
          %v1059 = vpop.f32.mrb[0].mxu0
          %v1060 = vadd.f32 %v931, %v1059
          %v1061 = vpop.f32.mrb[0].mxu0
          %1062 = vdwg.mxu0
          %v1063 = vld [vmem:[%s1] sm:$0xff]
          %v1064 = vld [vmem:[%s1 + $0x8] sm:$0xff]
          %v1065 = vld [vmem:[%s1 + $0x10] sm:$0xff]
          %v1066 = vld [vmem:[%s1 + $0x18] sm:$0xff]
          %v1067 = vld [vmem:[%s1 + $0x20] sm:$0xff]
          %v1068 = vld [vmem:[%s1 + $0x28] sm:$0xff]
          %v1069 = vld [vmem:[%s1 + $0x30] sm:$0xff]
          %v1070 = vld [vmem:[%s1 + $0x38] sm:$0xff]
          %v1071 = vadd.f32 %v1025, %v1063
          %v1072 = vadd.f32 %v1030, %v1064
          %v1073 = vadd.f32 %v1035, %v1065
          %v1074 = vadd.f32 %v1040, %v1066
          %v1075 = vadd.f32 %v1045, %v1067
          %v1076 = vadd.f32 %v1050, %v1068
          %v1077 = vadd.f32 %v1055, %v1069
          %v1078 = vadd.f32 %v1060, %v1070
          %vm1079 = vcmask 261120
          %1080 = vst.msk [vmem:[#allocation2] sm:$0xff] %vm1079, %v1071
          %1081 = vst.msk [vmem:[#allocation2 + $0x8] sm:$0xff] %vm1079, %v1072
          %1082 = vst.msk [vmem:[#allocation2 + $0x10] sm:$0xff] %vm1079, %v1073
          %1083 = vst.msk [vmem:[#allocation2 + $0x18] sm:$0xff] %vm1079, %v1074
          %1084 = vst.msk [vmem:[#allocation2 + $0x20] sm:$0xff] %vm1079, %v1075
          %1085 = vst.msk [vmem:[#allocation2 + $0x28] sm:$0xff] %vm1079, %v1076
          %1086 = vst.msk [vmem:[#allocation2 + $0x30] sm:$0xff] %vm1079, %v1077
          %1087 = vst.msk [vmem:[#allocation2 + $0x38] sm:$0xff] %vm1079, %v1078
        $region116: #{image_encoder_vit_forward.1} parent=111 // pred_fallthru
          _
        %v1088 = vld [vmem:[#allocation2] sm:$0xff]
        %v1089 = vld [vmem:[#allocation2 + $0x8] sm:$0xff]
        %v1090 = vld [vmem:[#allocation2 + $0x10] sm:$0xff]
        %v1091 = vld [vmem:[#allocation2 + $0x18] sm:$0xff]
        %v1092 = vld [vmem:[#allocation2 + $0x20] sm:$0xff]
        %v1093 = vld [vmem:[#allocation2 + $0x28] sm:$0xff]
        %v1094 = vld [vmem:[#allocation2 + $0x30] sm:$0xff]
        %v1095 = vld [vmem:[#allocation2 + $0x38] sm:$0xff]
        %v1096 = vld [vmem:[%s871] sm:$0x1]
        %v1097 = vld [vmem:[%s874] sm:$0x1]
        %vm1098 = vcmask 261120
        %v1099 = vsel %vm1098, %v1088, 0.0
        %1100 = vadd.xlane.f32.xlu0 %v1099
        %v1101 = vpop.xlane.xlu0 %1100
        %v1102 = vsel %vm1098, %v1089, 0.0
        %1103 = vadd.xlane.f32.xlu0 %v1102
        %v1104 = vpop.xlane.xlu0 %1103
        %v1105 = vsel %vm1098, %v1090, 0.0
        %1106 = vadd.xlane.f32.xlu0 %v1105
        %v1107 = vpop.xlane.xlu0 %1106
        %v1108 = vsel %vm1098, %v1091, 0.0
        %1109 = vadd.xlane.f32.xlu0 %v1108
        %v1110 = vpop.xlane.xlu0 %1109
        %v1111 = vsel %vm1098, %v1092, 0.0
        %1112 = vadd.xlane.f32.xlu0 %v1111
        %v1113 = vpop.xlane.xlu0 %1112
        %v1114 = vsel %vm1098, %v1093, 0.0
        %1115 = vadd.xlane.f32.xlu0 %v1114
        %v1116 = vpop.xlane.xlu0 %1115
        %v1117 = vsel %vm1098, %v1094, 0.0
        %1118 = vadd.xlane.f32.xlu0 %v1117
        %v1119 = vpop.xlane.xlu0 %1118
        %v1120 = vsel %vm1098, %v1095, 0.0
        %1121 = vadd.xlane.f32.xlu0 %v1120
        %v1122 = vpop.xlane.xlu0 %1121
        %v1123 = vrcp.pop 32.0
        %v1124 = vmul.f32 %v1101, %v1123
        %v1125 = vmul.f32 %v1104, %v1123
        %v1126 = vmul.f32 %v1107, %v1123
        %v1127 = vmul.f32 %v1110, %v1123
        %v1128 = vmul.f32 %v1113, %v1123
        %v1129 = vmul.f32 %v1116, %v1123
        %v1130 = vmul.f32 %v1119, %v1123
        %v1131 = vmul.f32 %v1122, %v1123
        %v1132 = vsub.f32 %v1088, %v1124
        %v1133 = vsub.f32 %v1089, %v1125
        %v1134 = vsub.f32 %v1090, %v1126
        %v1135 = vsub.f32 %v1091, %v1127
        %v1136 = vsub.f32 %v1092, %v1128
        %v1137 = vsub.f32 %v1093, %v1129
        %v1138 = vsub.f32 %v1094, %v1130
        %v1139 = vsub.f32 %v1095, %v1131
        %v1140 = vmul.f32 %v1132, %v1132
        %v1141 = vmul.f32 %v1133, %v1133
        %v1142 = vmul.f32 %v1134, %v1134
        %v1143 = vmul.f32 %v1135, %v1135
        %v1144 = vmul.f32 %v1136, %v1136
        %v1145 = vmul.f32 %v1137, %v1137
        %v1146 = vmul.f32 %v1138, %v1138
        %v1147 = vmul.f32 %v1139, %v1139
        %v1148 = vsel %vm1098, %v1140, 0.0
        %1149 = vadd.xlane.f32.xlu0 %v1148
        %v1150 = vpop.xlane.xlu0 %1149
        %v1151 = vsel %vm1098, %v1141, 0.0
        %1152 = vadd.xlane.f32.xlu0 %v1151
        %v1153 = vpop.xlane.xlu0 %1152
        %v1154 = vsel %vm1098, %v1142, 0.0
        %1155 = vadd.xlane.f32.xlu0 %v1154
        %v1156 = vpop.xlane.xlu0 %1155
        %v1157 = vsel %vm1098, %v1143, 0.0
        %1158 = vadd.xlane.f32.xlu0 %v1157
        %v1159 = vpop.xlane.xlu0 %1158
        %v1160 = vsel %vm1098, %v1144, 0.0
        %1161 = vadd.xlane.f32.xlu0 %v1160
        %v1162 = vpop.xlane.xlu0 %1161
        %v1163 = vsel %vm1098, %v1145, 0.0
        %1164 = vadd.xlane.f32.xlu0 %v1163
        %v1165 = vpop.xlane.xlu0 %1164
        %v1166 = vsel %vm1098, %v1146, 0.0
        %1167 = vadd.xlane.f32.xlu0 %v1166
        %v1168 = vpop.xlane.xlu0 %1167
        %v1169 = vsel %vm1098, %v1147, 0.0
        %1170 = vadd.xlane.f32.xlu0 %v1169
        %v1171 = vpop.xlane.xlu0 %1170
        %v1172 = vmul.f32 %v1150, %v1123
        %v1173 = vmul.f32 %v1153, %v1123
        %v1174 = vmul.f32 %v1156, %v1123
        %v1175 = vmul.f32 %v1159, %v1123
        %v1176 = vmul.f32 %v1162, %v1123
        %v1177 = vmul.f32 %v1165, %v1123
        %v1178 = vmul.f32 %v1168, %v1123
        %v1179 = vmul.f32 %v1171, %v1123
        %v1180 = vadd.f32 %v1172, 1e-06
        %v1181 = vadd.f32 %v1173, 1e-06
        %v1182 = vadd.f32 %v1174, 1e-06
        %v1183 = vadd.f32 %v1175, 1e-06
        %v1184 = vadd.f32 %v1176, 1e-06
        %v1185 = vadd.f32 %v1177, 1e-06
        %v1186 = vadd.f32 %v1178, 1e-06
        %v1187 = vadd.f32 %v1179, 1e-06
        %v1188 = vrsqrt.pop %v1180
        %v1189 = vrsqrt.pop %v1181
        %v1190 = vrsqrt.pop %v1182
        %v1191 = vrsqrt.pop %v1183
        %v1192 = vrsqrt.pop %v1184
        %v1193 = vrsqrt.pop %v1185
        %v1194 = vrsqrt.pop %v1186
        %v1195 = vrsqrt.pop %v1187
        %v1196 = vmul.f32 %v1132, %v1188
        %v1197 = vmul.f32 %v1133, %v1189
        %v1198 = vmul.f32 %v1134, %v1190
        %v1199 = vmul.f32 %v1135, %v1191
        %v1200 = vmul.f32 %v1136, %v1192
        %v1201 = vmul.f32 %v1137, %v1193
        %v1202 = vmul.f32 %v1138, %v1194
        %v1203 = vmul.f32 %v1139, %v1195
        %v1205 = vlaneseq
        %v1206 = vshrl.u32 %v1205, 7
        %v1207 = vsub.s32 0, %v1206
        %v1208 = vrot.slane %v1096, %v1207
        %v1210 = vmul.f32 %v1196, %v1208
        %v1211 = vmul.f32 %v1197, %v1208
        %v1212 = vmul.f32 %v1198, %v1208
        %v1213 = vmul.f32 %v1199, %v1208
        %v1214 = vmul.f32 %v1200, %v1208
        %v1215 = vmul.f32 %v1201, %v1208
        %v1216 = vmul.f32 %v1202, %v1208
        %v1217 = vmul.f32 %v1203, %v1208
        %v1219 = vlaneseq
        %v1220 = vshrl.u32 %v1219, 7
        %v1221 = vsub.s32 0, %v1220
        %v1222 = vrot.slane %v1097, %v1221
        %v1224 = vadd.f32 %v1210, %v1222
        %v1225 = vadd.f32 %v1211, %v1222
        %v1226 = vadd.f32 %v1212, %v1222
        %v1227 = vadd.f32 %v1213, %v1222
        %v1228 = vadd.f32 %v1214, %v1222
        %v1229 = vadd.f32 %v1215, %v1222
        %v1230 = vadd.f32 %v1216, %v1222
        %v1231 = vadd.f32 %v1217, %v1222
        %v1232 = vld [vmem:[%s879] sm:$0xff]
        %v1233 = vld [vmem:[%s879 + $0x8] sm:$0xff]
        %v1234 = vld [vmem:[%s879 + $0x10] sm:$0xff]
        %v1235 = vld [vmem:[%s879 + $0x18] sm:$0xff]
        %v1236 = vld [vmem:[%s882] sm:$0x1]
        %v1238 = vlaneseq
        %v1239 = vshrl.u32 %v1238, 7
        %v1240 = vsub.s32 0, %v1239
        %v1241 = vrot.slane %v1236, %v1240
        %v1244 = vsel %vm1098, %v1224, 0
        %v1247 = vsel %vm1098, %v1225, 0
        %v1250 = vsel %vm1098, %v1226, 0
        %v1253 = vsel %vm1098, %v1227, 0
        %v1256 = vsel %vm1098, %v1228, 0
        %v1259 = vsel %vm1098, %v1229, 0
        %v1262 = vsel %vm1098, %v1230, 0
        %v1265 = vsel %vm1098, %v1231, 0
        %1267 = vmatprep.subr.mxu0 0.0
        %1268 = vmatpush1.msra.mxu0 %v1232
        %1269 = vmatprep.subr.mxu0 0.0
        %1270 = vmatpush1.msra.mxu0 %v1233
        %1271 = vmatprep.subr.mxu0 0.0
        %1272 = vmatpush1.msra.mxu0 %v1234
        %1273 = vmatprep.subr.mxu0 0.0
        %1274 = vmatpush1.msra.mxu0 %v1235
        %1275 = vmatprep.subr.mxu0 0.0
        %1276 = vmatpush1.msra.mxu0 0.0
        %1277 = vmatprep.subr.mxu0 0.0
        %1278 = vmatpush1.msra.mxu0 0.0
        %1279 = vmatprep.subr.mxu0 0.0
        %1280 = vmatpush1.msra.mxu0 0.0
        %1281 = vmatprep.subr.mxu0 0.0
        %1282 = vmatpush1.msra.mxu0 0.0
        %1283 = vmatprep.subr.mxu0 0.0
        %1284 = vmatpush1.msra.mxu0 0.0
        %1285 = vmatprep.subr.mxu0 0.0
        %1286 = vmatpush1.msra.mxu0 0.0
        %1287 = vmatprep.subr.mxu0 0.0
        %1288 = vmatpush1.msra.mxu0 0.0
        %1289 = vmatprep.subr.mxu0 0.0
        %1290 = vmatpush1.msra.mxu0 0.0
        %1291 = vmatprep.subr.mxu0 0.0
        %1292 = vmatpush1.msra.mxu0 0.0
        %1293 = vmatprep.subr.mxu0 0.0
        %1294 = vmatpush1.msra.mxu0 0.0
        %1295 = vmatprep.subr.mxu0 0.0
        %1296 = vmatpush1.msra.mxu0 0.0
        %1297 = vmatprep.subr.mxu0 0.0
        %1298 = vmatpush1.msra.mxu0 0.0
        %1299 = vmatprep.subr.mxu0 0.0
        %1300 = vmatpush1.msra.mxu0 0.0
        %1301 = vmatprep.subr.mxu0 0.0
        %1302 = vmatpush1.msra.mxu0 0.0
        %1303 = vmatprep.subr.mxu0 0.0
        %1304 = vmatpush1.msra.mxu0 0.0
        %1305 = vmatprep.subr.mxu0 0.0
        %1306 = vmatpush1.msra.mxu0 0.0
        %1307 = vmatprep.subr.mxu0 0.0
        %1308 = vmatpush1.msra.mxu0 0.0
        %1309 = vmatprep.subr.mxu0 0.0
        %1310 = vmatpush1.msra.mxu0 0.0
        %1311 = vmatprep.subr.mxu0 0.0
        %1312 = vmatpush1.msra.mxu0 0.0
        %1313 = vmatprep.subr.mxu0 0.0
        %1314 = vmatpush1.msra.mxu0 0.0
        %1315 = vmatprep.subr.mxu0 0.0
        %1316 = vmatpush1.msra.mxu0 0.0
        %1317 = vmatprep.subr.mxu0 0.0
        %1318 = vmatpush1.msra.mxu0 0.0
        %1319 = vmatprep.subr.mxu0 0.0
        %1320 = vmatpush1.msra.mxu0 0.0
        %1321 = vmatprep.subr.mxu0 0.0
        %1322 = vmatpush1.msra.mxu0 0.0
        %1323 = vmatprep.subr.mxu0 0.0
        %1324 = vmatpush1.msra.mxu0 0.0
        %1325 = vmatprep.subr.mxu0 0.0
        %1326 = vmatpush1.msra.mxu0 0.0
        %1327 = vmatprep.subr.mxu0 0.0
        %1328 = vmatpush1.msra.mxu0 0.0
        %1329 = vmatprep.subr.mxu0 0.0
        %1330 = vmatpush1.msra.mxu0 0.0
        %1331 = vmatprep.mubr.f32.mxu0 0.0
        %1332 = vmatmul.mubr.f32.gmra.mrb[0].mxu0 %v1244
        %v1333 = vpop.f32.mrb[0].mxu0
        %v1334 = vadd.f32 %v1241, %v1333
        %v1335 = vpop.f32.mrb[0].mxu0
        %1336 = vmatprep.mubr.f32.mxu0 0.0
        %1337 = vmatmul.mubr.f32.gmra.mrb[0].mxu0 %v1247
        %v1338 = vpop.f32.mrb[0].mxu0
        %v1339 = vadd.f32 %v1241, %v1338
        %v1340 = vpop.f32.mrb[0].mxu0
        %1341 = vmatprep.mubr.f32.mxu0 0.0
        %1342 = vmatmul.mubr.f32.gmra.mrb[0].mxu0 %v1250
        %v1343 = vpop.f32.mrb[0].mxu0
        %v1344 = vadd.f32 %v1241, %v1343
        %v1345 = vpop.f32.mrb[0].mxu0
        %1346 = vmatprep.mubr.f32.mxu0 0.0
        %1347 = vmatmul.mubr.f32.gmra.mrb[0].mxu0 %v1253
        %v1348 = vpop.f32.mrb[0].mxu0
        %v1349 = vadd.f32 %v1241, %v1348
        %v1350 = vpop.f32.mrb[0].mxu0
        %1351 = vmatprep.mubr.f32.mxu0 0.0
        %1352 = vmatmul.mubr.f32.gmra.mrb[0].mxu0 %v1256
        %v1353 = vpop.f32.mrb[0].mxu0
        %v1354 = vadd.f32 %v1241, %v1353
        %v1355 = vpop.f32.mrb[0].mxu0
        %1356 = vmatprep.mubr.f32.mxu0 0.0
        %1357 = vmatmul.mubr.f32.gmra.mrb[0].mxu0 %v1259
        %v1358 = vpop.f32.mrb[0].mxu0
        %v1359 = vadd.f32 %v1241, %v1358
        %v1360 = vpop.f32.mrb[0].mxu0
        %1361 = vmatprep.mubr.f32.mxu0 0.0
        %1362 = vmatmul.mubr.f32.gmra.mrb[0].mxu0 %v1262
        %v1363 = vpop.f32.mrb[0].mxu0
        %v1364 = vadd.f32 %v1241, %v1363
        %v1365 = vpop.f32.mrb[0].mxu0
        %1366 = vmatprep.mubr.f32.mxu0 0.0
        %1367 = vmatmul.mubr.f32.gmra.mrb[0].mxu0 %v1265
        %v1368 = vpop.f32.mrb[0].mxu0
        %v1369 = vadd.f32 %v1241, %v1368
        %v1370 = vpop.f32.mrb[0].mxu0
        %1371 = vdwg.mxu0
        %v1372 = vld [vmem:[%s887] sm:$0xff]
        %v1373 = vld [vmem:[%s887 + $0x8] sm:$0xff]
        %v1374 = vld [vmem:[%s887 + $0x10] sm:$0xff]
        %v1375 = vld [vmem:[%s887 + $0x18] sm:$0xff]
        %v1376 = vmul.f32 %v1334, 0.35355338
        %v1377 = vmul.f32 %v1339, 0.35355338
        %v1378 = vmul.f32 %v1344, 0.35355338
        %v1379 = vmul.f32 %v1349, 0.35355338
        %v1380 = vmul.f32 %v1354, 0.35355338
        %v1381 = vmul.f32 %v1359, 0.35355338
        %v1382 = vmul.f32 %v1364, 0.35355338
        %v1383 = vmul.f32 %v1369, 0.35355338
        %1392 = vrot.lane.b32.xlu0 %v1334, 96
        %v1393 = vpop.permute.xlu0 %1392
        %1394 = vrot.lane.b32.xlu0 %v1339, 96
        %v1395 = vpop.permute.xlu0 %1394
        %1396 = vrot.lane.b32.xlu0 %v1344, 96
        %v1397 = vpop.permute.xlu0 %1396
        %1398 = vrot.lane.b32.xlu0 %v1349, 96
        %v1399 = vpop.permute.xlu0 %1398
        %1400 = vrot.lane.b32.xlu0 %v1354, 96
        %v1401 = vpop.permute.xlu0 %1400
        %1402 = vrot.lane.b32.xlu0 %v1359, 96
        %v1403 = vpop.permute.xlu0 %1402
        %1404 = vrot.lane.b32.xlu0 %v1364, 96
        %v1405 = vpop.permute.xlu0 %1404
        %1406 = vrot.lane.b32.xlu0 %v1369, 96
        %v1407 = vpop.permute.xlu0 %1406
        %vm1408 = vcmask 64512
        %v1410 = vsel %vm1408, %v1376, 0
        %v1413 = vsel %vm1408, %v1377, 0
        %v1416 = vsel %vm1408, %v1378, 0
        %v1419 = vsel %vm1408, %v1379, 0
        %v1422 = vsel %vm1408, %v1380, 0
        %v1425 = vsel %vm1408, %v1381, 0
        %v1428 = vsel %vm1408, %v1382, 0
        %v1431 = vsel %vm1408, %v1383, 0
        %v1433 = vsel %vm1408, %v1393, 0
        %v1435 = vsel %vm1408, %v1395, 0
        %v1437 = vsel %vm1408, %v1397, 0
        %v1439 = vsel %vm1408, %v1399, 0
        %v1441 = vsel %vm1408, %v1401, 0
        %v1443 = vsel %vm1408, %v1403, 0
        %v1445 = vsel %vm1408, %v1405, 0
        %v1447 = vsel %vm1408, %v1407, 0
        %1449 = vmatprep.subr.mxu0 0.0
        %1450 = vmatpush1.xpose.msra.mxu0 %v1433
        %1451 = vmatprep.subr.mxu0 0.0
        %1452 = vmatpush1.xpose.msra.mxu0 %v1435
        %1453 = vmatprep.subr.mxu0 0.0
        %1454 = vmatpush1.xpose.msra.mxu0 %v1437
        %1455 = vmatprep.subr.mxu0 0.0
        %1456 = vmatpush1.xpose.msra.mxu0 %v1439
        %1457 = vmatprep.subr.mxu0 0.0
        %1458 = vmatpush1.xpose.msra.mxu0 %v1441
        %1459 = vmatprep.subr.mxu0 0.0
        %1460 = vmatpush1.xpose.msra.mxu0 %v1443
        %1461 = vmatprep.subr.mxu0 0.0
        %1462 = vmatpush1.xpose.msra.mxu0 %v1445
        %1463 = vmatprep.subr.mxu0 0.0
        %1464 = vmatpush1.xpose.msra.mxu0 %v1447
        %1465 = vmatprep.subr.mxu0 0.0
        %1466 = vmatpush1.xpose.msra.mxu0 0.0
        %1467 = vmatprep.subr.mxu0 0.0
        %1468 = vmatpush1.xpose.msra.mxu0 0.0
        %1469 = vmatprep.subr.mxu0 0.0
        %1470 = vmatpush1.xpose.msra.mxu0 0.0
        %1471 = vmatprep.subr.mxu0 0.0
        %1472 = vmatpush1.xpose.msra.mxu0 0.0
        %1473 = vmatprep.subr.mxu0 0.0
        %1474 = vmatpush1.xpose.msra.mxu0 0.0
        %1475 = vmatprep.subr.mxu0 0.0
        %1476 = vmatpush1.xpose.msra.mxu0 0.0
        %1477 = vmatprep.subr.mxu0 0.0
        %1478 = vmatpush1.xpose.msra.mxu0 0.0
        %1479 = vmatprep.subr.mxu0 0.0
        %1480 = vmatpush1.xpose.msra.mxu0 0.0
        %1481 = vmatprep.subr.mxu0 0.0
        %1482 = vmatpush1.xpose.msra.mxu0 0.0
        %1483 = vmatprep.subr.mxu0 0.0
        %1484 = vmatpush1.xpose.msra.mxu0 0.0
        %1485 = vmatprep.subr.mxu0 0.0
        %1486 = vmatpush1.xpose.msra.mxu0 0.0
        %1487 = vmatprep.subr.mxu0 0.0
        %1488 = vmatpush1.xpose.msra.mxu0 0.0
        %1489 = vmatprep.subr.mxu0 0.0
        %1490 = vmatpush1.xpose.msra.mxu0 0.0
        %1491 = vmatprep.subr.mxu0 0.0
        %1492 = vmatpush1.xpose.msra.mxu0 0.0
        %1493 = vmatprep.subr.mxu0 0.0
        %1494 = vmatpush1.xpose.msra.mxu0 0.0
        %1495 = vmatprep.subr.mxu0 0.0
        %1496 = vmatpush1.xpose.msra.mxu0 0.0
        %1497 = vmatprep.subr.mxu0 0.0
        %1498 = vmatpush1.xpose.msra.mxu0 0.0
        %1499 = vmatprep.subr.mxu0 0.0
        %1500 = vmatpush1.xpose.msra.mxu0 0.0
        %1501 = vmatprep.subr.mxu0 0.0
        %1502 = vmatpush1.xpose.msra.mxu0 0.0
        %1503 = vmatprep.subr.mxu0 0.0
        %1504 = vmatpush1.xpose.msra.mxu0 0.0
        %1505 = vmatprep.subr.mxu0 0.0
        %1506 = vmatpush1.xpose.msra.mxu0 0.0
        %1507 = vmatprep.subr.mxu0 0.0
        %1508 = vmatpush1.xpose.msra.mxu0 0.0
        %1509 = vmatprep.subr.mxu0 0.0
        %1510 = vmatpush1.xpose.msra.mxu0 0.0
        %1511 = vmatprep.subr.mxu0 0.0
        %1512 = vmatpush1.xpose.msra.mxu0 0.0
        %1513 = vmatprep.mubr.f32.mxu0 0.0
        %1514 = vmatmul.mubr.f32.gmra.mrb[0].mxu0 %v1410
        %v1515 = vpop.f32.mrb[0].mxu0
        %v1516 = vadd.f32 0.0, %v1515
        %v1517 = vpop.f32.mrb[0].mxu0
        %1518 = vmatprep.mubr.f32.mxu0 0.0
        %1519 = vmatmul.mubr.f32.gmra.mrb[0].mxu0 %v1413
        %v1520 = vpop.f32.mrb[0].mxu0
        %v1521 = vadd.f32 0.0, %v1520
        %v1522 = vpop.f32.mrb[0].mxu0
        %1523 = vmatprep.mubr.f32.mxu0 0.0
        %1524 = vmatmul.mubr.f32.gmra.mrb[0].mxu0 %v1416
        %v1525 = vpop.f32.mrb[0].mxu0
        %v1526 = vadd.f32 0.0, %v1525
        %v1527 = vpop.f32.mrb[0].mxu0
        %1528 = vmatprep.mubr.f32.mxu0 0.0
        %1529 = vmatmul.mubr.f32.gmra.mrb[0].mxu0 %v1419
        %v1530 = vpop.f32.mrb[0].mxu0
        %v1531 = vadd.f32 0.0, %v1530
        %v1532 = vpop.f32.mrb[0].mxu0
        %1533 = vmatprep.mubr.f32.mxu0 0.0
        %1534 = vmatmul.mubr.f32.gmra.mrb[0].mxu0 %v1422
        %v1535 = vpop.f32.mrb[0].mxu0
        %v1536 = vadd.f32 0.0, %v1535
        %v1537 = vpop.f32.mrb[0].mxu0
        %1538 = vmatprep.mubr.f32.mxu0 0.0
        %1539 = vmatmul.mubr.f32.gmra.mrb[0].mxu0 %v1425
        %v1540 = vpop.f32.mrb[0].mxu0
        %v1541 = vadd.f32 0.0, %v1540
        %v1542 = vpop.f32.mrb[0].mxu0
        %1543 = vmatprep.mubr.f32.mxu0 0.0
        %1544 = vmatmul.mubr.f32.gmra.mrb[0].mxu0 %v1428
        %v1545 = vpop.f32.mrb[0].mxu0
        %v1546 = vadd.f32 0.0, %v1545
        %v1547 = vpop.f32.mrb[0].mxu0
        %1548 = vmatprep.mubr.f32.mxu0 0.0
        %1549 = vmatmul.mubr.f32.gmra.mrb[0].mxu0 %v1431
        %v1550 = vpop.f32.mrb[0].mxu0
        %v1551 = vadd.f32 0.0, %v1550
        %v1552 = vpop.f32.mrb[0].mxu0
        %1553 = vdwg.mxu0
        %vm1554 = vcmask 523264
        %v1555 = vsel %vm1554, %v1516, -inf
        %1556 = vmax.xlane.f32.xlu0 %v1555
        %v1557 = vpop.xlane.xlu0 %1556
        %v1558 = vsel %vm1554, %v1521, -inf
        %1559 = vmax.xlane.f32.xlu0 %v1558
        %v1560 = vpop.xlane.xlu0 %1559
        %v1561 = vsel %vm1554, %v1526, -inf
        %1562 = vmax.xlane.f32.xlu0 %v1561
        %v1563 = vpop.xlane.xlu0 %1562
        %v1564 = vsel %vm1554, %v1531, -inf
        %1565 = vmax.xlane.f32.xlu0 %v1564
        %v1566 = vpop.xlane.xlu0 %1565
        %v1567 = vsel %vm1554, %v1536, -inf
        %1568 = vmax.xlane.f32.xlu0 %v1567
        %v1569 = vpop.xlane.xlu0 %1568
        %v1570 = vsel %vm1554, %v1541, -inf
        %1571 = vmax.xlane.f32.xlu0 %v1570
        %v1572 = vpop.xlane.xlu0 %1571
        %v1573 = vsel %vm1554, %v1546, -inf
        %1574 = vmax.xlane.f32.xlu0 %v1573
        %v1575 = vpop.xlane.xlu0 %1574
        %v1576 = vsel %vm1554, %v1551, -inf
        %1577 = vmax.xlane.f32.xlu0 %v1576
        %v1578 = vpop.xlane.xlu0 %1577
        %v1579 = vsub.f32 %v1516, %v1557
        %v1580 = vsub.f32 %v1521, %v1560
        %v1581 = vsub.f32 %v1526, %v1563
        %v1582 = vsub.f32 %v1531, %v1566
        %v1583 = vsub.f32 %v1536, %v1569
        %v1584 = vsub.f32 %v1541, %v1572
        %v1585 = vsub.f32 %v1546, %v1575
        %v1586 = vsub.f32 %v1551, %v1578
        %v1587 = vmul.f32 %v1579, 1.442695
        %v1588 = vpow.pop %v1587
        %v1589 = vmul.f32 %v1580, 1.442695
        %v1590 = vpow.pop %v1589
        %v1591 = vmul.f32 %v1581, 1.442695
        %v1592 = vpow.pop %v1591
        %v1593 = vmul.f32 %v1582, 1.442695
        %v1594 = vpow.pop %v1593
        %v1595 = vmul.f32 %v1583, 1.442695
        %v1596 = vpow.pop %v1595
        %v1597 = vmul.f32 %v1584, 1.442695
        %v1598 = vpow.pop %v1597
        %v1599 = vmul.f32 %v1585, 1.442695
        %v1600 = vpow.pop %v1599
        %v1601 = vmul.f32 %v1586, 1.442695
        %v1602 = vpow.pop %v1601
        %v1603 = vsel %vm1554, %v1588, 0.0
        %1604 = vadd.xlane.f32.xlu0 %v1603
        %v1605 = vpop.xlane.xlu0 %1604
        %v1606 = vsel %vm1554, %v1590, 0.0
        %1607 = vadd.xlane.f32.xlu0 %v1606
        %v1608 = vpop.xlane.xlu0 %1607
        %v1609 = vsel %vm1554, %v1592, 0.0
        %1610 = vadd.xlane.f32.xlu0 %v1609
        %v1611 = vpop.xlane.xlu0 %1610
        %v1612 = vsel %vm1554, %v1594, 0.0
        %1613 = vadd.xlane.f32.xlu0 %v1612
        %v1614 = vpop.xlane.xlu0 %1613
        %v1615 = vsel %vm1554, %v1596, 0.0
        %1616 = vadd.xlane.f32.xlu0 %v1615
        %v1617 = vpop.xlane.xlu0 %1616
        %v1618 = vsel %vm1554, %v1598, 0.0
        %1619 = vadd.xlane.f32.xlu0 %v1618
        %v1620 = vpop.xlane.xlu0 %1619
        %v1621 = vsel %vm1554, %v1600, 0.0
        %1622 = vadd.xlane.f32.xlu0 %v1621
        %v1623 = vpop.xlane.xlu0 %1622
        %v1624 = vsel %vm1554, %v1602, 0.0
        %1625 = vadd.xlane.f32.xlu0 %v1624
        %v1626 = vpop.xlane.xlu0 %1625
        %v1627 = vrcp.pop %v1605
        %v1628 = vmul.f32 %v1588, %v1627
        %v1629 = vrcp.pop %v1608
        %v1630 = vmul.f32 %v1590, %v1629
        %v1631 = vrcp.pop %v1611
        %v1632 = vmul.f32 %v1592, %v1631
        %v1633 = vrcp.pop %v1614
        %v1634 = vmul.f32 %v1594, %v1633
        %v1635 = vrcp.pop %v1617
        %v1636 = vmul.f32 %v1596, %v1635
        %v1637 = vrcp.pop %v1620
        %v1638 = vmul.f32 %v1598, %v1637
        %v1639 = vrcp.pop %v1623
        %v1640 = vmul.f32 %v1600, %v1639
        %v1641 = vrcp.pop %v1626
        %v1642 = vmul.f32 %v1602, %v1641
        %1643 = vrot.lane.b32.xlu0 %v1334, 64
        %v1644 = vpop.permute.xlu0 %1643
        %1645 = vrot.lane.b32.xlu0 %v1339, 64
        %v1646 = vpop.permute.xlu0 %1645
        %1647 = vrot.lane.b32.xlu0 %v1344, 64
        %v1648 = vpop.permute.xlu0 %1647
        %1649 = vrot.lane.b32.xlu0 %v1349, 64
        %v1650 = vpop.permute.xlu0 %1649
        %1651 = vrot.lane.b32.xlu0 %v1354, 64
        %v1652 = vpop.permute.xlu0 %1651
        %1653 = vrot.lane.b32.xlu0 %v1359, 64
        %v1654 = vpop.permute.xlu0 %1653
        %1655 = vrot.lane.b32.xlu0 %v1364, 64
        %v1656 = vpop.permute.xlu0 %1655
        %1657 = vrot.lane.b32.xlu0 %v1369, 64
        %v1658 = vpop.permute.xlu0 %1657
        %v1668 = vsel %vm1554, %v1628, 0
        %v1671 = vsel %vm1554, %v1630, 0
        %v1674 = vsel %vm1554, %v1632, 0
        %v1677 = vsel %vm1554, %v1634, 0
        %v1680 = vsel %vm1554, %v1636, 0
        %v1683 = vsel %vm1554, %v1638, 0
        %v1686 = vsel %vm1554, %v1640, 0
        %v1689 = vsel %vm1554, %v1642, 0
        %1691 = vmatprep.subr.mxu0 0.0
        %1692 = vmatpush1.msra.mxu0 %v1644
        %1693 = vmatprep.subr.mxu0 0.0
        %1694 = vmatpush1.msra.mxu0 %v1646
        %1695 = vmatprep.subr.mxu0 0.0
        %1696 = vmatpush1.msra.mxu0 %v1648
        %1697 = vmatprep.subr.mxu0 0.0
        %1698 = vmatpush1.msra.mxu0 %v1650
        %1699 = vmatprep.subr.mxu0 0.0
        %1700 = vmatpush1.msra.mxu0 %v1652
        %1701 = vmatprep.subr.mxu0 0.0
        %1702 = vmatpush1.msra.mxu0 %v1654
        %1703 = vmatprep.subr.mxu0 0.0
        %1704 = vmatpush1.msra.mxu0 %v1656
        %1705 = vmatprep.subr.mxu0 0.0
        %1706 = vmatpush1.msra.mxu0 %v1658
        %1707 = vmatprep.subr.mxu0 0.0
        %1708 = vmatpush1.msra.mxu0 0.0
        %1709 = vmatprep.subr.mxu0 0.0
        %1710 = vmatpush1.msra.mxu0 0.0
        %1711 = vmatprep.subr.mxu0 0.0
        %1712 = vmatpush1.msra.mxu0 0.0
        %1713 = vmatprep.subr.mxu0 0.0
        %1714 = vmatpush1.msra.mxu0 0.0
        %1715 = vmatprep.subr.mxu0 0.0
        %1716 = vmatpush1.msra.mxu0 0.0
        %1717 = vmatprep.subr.mxu0 0.0
        %1718 = vmatpush1.msra.mxu0 0.0
        %1719 = vmatprep.subr.mxu0 0.0
        %1720 = vmatpush1.msra.mxu0 0.0
        %1721 = vmatprep.subr.mxu0 0.0
        %1722 = vmatpush1.msra.mxu0 0.0
        %1723 = vmatprep.subr.mxu0 0.0
        %1724 = vmatpush1.msra.mxu0 0.0
        %1725 = vmatprep.subr.mxu0 0.0
        %1726 = vmatpush1.msra.mxu0 0.0
        %1727 = vmatprep.subr.mxu0 0.0
        %1728 = vmatpush1.msra.mxu0 0.0
        %1729 = vmatprep.subr.mxu0 0.0
        %1730 = vmatpush1.msra.mxu0 0.0
        %1731 = vmatprep.subr.mxu0 0.0
        %1732 = vmatpush1.msra.mxu0 0.0
        %1733 = vmatprep.subr.mxu0 0.0
        %1734 = vmatpush1.msra.mxu0 0.0
        %1735 = vmatprep.subr.mxu0 0.0
        %1736 = vmatpush1.msra.mxu0 0.0
        %1737 = vmatprep.subr.mxu0 0.0
        %1738 = vmatpush1.msra.mxu0 0.0
        %1739 = vmatprep.subr.mxu0 0.0
        %1740 = vmatpush1.msra.mxu0 0.0
        %1741 = vmatprep.subr.mxu0 0.0
        %1742 = vmatpush1.msra.mxu0 0.0
        %1743 = vmatprep.subr.mxu0 0.0
        %1744 = vmatpush1.msra.mxu0 0.0
        %1745 = vmatprep.subr.mxu0 0.0
        %1746 = vmatpush1.msra.mxu0 0.0
        %1747 = vmatprep.subr.mxu0 0.0
        %1748 = vmatpush1.msra.mxu0 0.0
        %1749 = vmatprep.subr.mxu0 0.0
        %1750 = vmatpush1.msra.mxu0 0.0
        %1751 = vmatprep.subr.mxu0 0.0
        %1752 = vmatpush1.msra.mxu0 0.0
        %1753 = vmatprep.subr.mxu0 0.0
        %1754 = vmatpush1.msra.mxu0 0.0
        %1755 = vmatprep.mubr.f32.mxu0 0.0
        %1756 = vmatmul.mubr.f32.gmra.mrb[0].mxu0 %v1668
        %v1757 = vpop.f32.mrb[0].mxu0
        %v1758 = vadd.f32 0.0, %v1757
        %v1759 = vpop.f32.mrb[0].mxu0
        %1760 = vmatprep.mubr.f32.mxu0 0.0
        %1761 = vmatmul.mubr.f32.gmra.mrb[0].mxu0 %v1671
        %v1762 = vpop.f32.mrb[0].mxu0
        %v1763 = vadd.f32 0.0, %v1762
        %v1764 = vpop.f32.mrb[0].mxu0
        %1765 = vmatprep.mubr.f32.mxu0 0.0
        %1766 = vmatmul.mubr.f32.gmra.mrb[0].mxu0 %v1674
        %v1767 = vpop.f32.mrb[0].mxu0
        %v1768 = vadd.f32 0.0, %v1767
        %v1769 = vpop.f32.mrb[0].mxu0
        %1770 = vmatprep.mubr.f32.mxu0 0.0
        %1771 = vmatmul.mubr.f32.gmra.mrb[0].mxu0 %v1677
        %v1772 = vpop.f32.mrb[0].mxu0
        %v1773 = vadd.f32 0.0, %v1772
        %v1774 = vpop.f32.mrb[0].mxu0
        %1775 = vmatprep.mubr.f32.mxu0 0.0
        %1776 = vmatmul.mubr.f32.gmra.mrb[0].mxu0 %v1680
        %v1777 = vpop.f32.mrb[0].mxu0
        %v1778 = vadd.f32 0.0, %v1777
        %v1779 = vpop.f32.mrb[0].mxu0
        %1780 = vmatprep.mubr.f32.mxu0 0.0
        %1781 = vmatmul.mubr.f32.gmra.mrb[0].mxu0 %v1683
        %v1782 = vpop.f32.mrb[0].mxu0
        %v1783 = vadd.f32 0.0, %v1782
        %v1784 = vpop.f32.mrb[0].mxu0
        %1785 = vmatprep.mubr.f32.mxu0 0.0
        %1786 = vmatmul.mubr.f32.gmra.mrb[0].mxu0 %v1686
        %v1787 = vpop.f32.mrb[0].mxu0
        %v1788 = vadd.f32 0.0, %v1787
        %v1789 = vpop.f32.mrb[0].mxu0
        %1790 = vmatprep.mubr.f32.mxu0 0.0
        %1791 = vmatmul.mubr.f32.gmra.mrb[0].mxu0 %v1689
        %v1792 = vpop.f32.mrb[0].mxu0
        %v1793 = vadd.f32 0.0, %v1792
        %v1794 = vpop.f32.mrb[0].mxu0
        %1795 = vdwg.mxu0
        %1796 = vrot.lane.b32.xlu0 %v1376, 120
        %v1797 = vpop.permute.xlu0 %1796
        %1798 = vrot.lane.b32.xlu0 %v1377, 120
        %v1799 = vpop.permute.xlu0 %1798
        %1800 = vrot.lane.b32.xlu0 %v1378, 120
        %v1801 = vpop.permute.xlu0 %1800
        %1802 = vrot.lane.b32.xlu0 %v1379, 120
        %v1803 = vpop.permute.xlu0 %1802
        %1804 = vrot.lane.b32.xlu0 %v1380, 120
        %v1805 = vpop.permute.xlu0 %1804
        %1806 = vrot.lane.b32.xlu0 %v1381, 120
        %v1807 = vpop.permute.xlu0 %1806
        %1808 = vrot.lane.b32.xlu0 %v1382, 120
        %v1809 = vpop.permute.xlu0 %1808
        %1810 = vrot.lane.b32.xlu0 %v1383, 120
        %v1811 = vpop.permute.xlu0 %1810
        %1812 = vrot.lane.b32.xlu0 %v1334, 88
        %v1813 = vpop.permute.xlu0 %1812
        %1814 = vrot.lane.b32.xlu0 %v1339, 88
        %v1815 = vpop.permute.xlu0 %1814
        %1816 = vrot.lane.b32.xlu0 %v1344, 88
        %v1817 = vpop.permute.xlu0 %1816
        %1818 = vrot.lane.b32.xlu0 %v1349, 88
        %v1819 = vpop.permute.xlu0 %1818
        %1820 = vrot.lane.b32.xlu0 %v1354, 88
        %v1821 = vpop.permute.xlu0 %1820
        %1822 = vrot.lane.b32.xlu0 %v1359, 88
        %v1823 = vpop.permute.xlu0 %1822
        %1824 = vrot.lane.b32.xlu0 %v1364, 88
        %v1825 = vpop.permute.xlu0 %1824
        %1826 = vrot.lane.b32.xlu0 %v1369, 88
        %v1827 = vpop.permute.xlu0 %1826
        %v1828 = vsel %vm1408, %v1797, 0
        %v1830 = vsel %vm1408, %v1799, 0
        %v1832 = vsel %vm1408, %v1801, 0
        %v1834 = vsel %vm1408, %v1803, 0
        %v1836 = vsel %vm1408, %v1805, 0
        %v1838 = vsel %vm1408, %v1807, 0
        %v1840 = vsel %vm1408, %v1809, 0
        %v1842 = vsel %vm1408, %v1811, 0
        %v1844 = vsel %vm1408, %v1813, 0
        %v1846 = vsel %vm1408, %v1815, 0
        %v1848 = vsel %vm1408, %v1817, 0
        %v1850 = vsel %vm1408, %v1819, 0
        %v1852 = vsel %vm1408, %v1821, 0
        %v1854 = vsel %vm1408, %v1823, 0
        %v1856 = vsel %vm1408, %v1825, 0
        %v1858 = vsel %vm1408, %v1827, 0
        %1860 = vmatprep.subr.mxu0 0.0
        %1861 = vmatpush1.xpose.msra.mxu0 %v1844
        %1862 = vmatprep.subr.mxu0 0.0
        %1863 = vmatpush1.xpose.msra.mxu0 %v1846
        %1864 = vmatprep.subr.mxu0 0.0
        %1865 = vmatpush1.xpose.msra.mxu0 %v1848
        %1866 = vmatprep.subr.mxu0 0.0
        %1867 = vmatpush1.xpose.msra.mxu0 %v1850
        %1868 = vmatprep.subr.mxu0 0.0
        %1869 = vmatpush1.xpose.msra.mxu0 %v1852
        %1870 = vmatprep.subr.mxu0 0.0
        %1871 = vmatpush1.xpose.msra.mxu0 %v1854
        %1872 = vmatprep.subr.mxu0 0.0
        %1873 = vmatpush1.xpose.msra.mxu0 %v1856
        %1874 = vmatprep.subr.mxu0 0.0
        %1875 = vmatpush1.xpose.msra.mxu0 %v1858
        %1876 = vmatprep.subr.mxu0 0.0
        %1877 = vmatpush1.xpose.msra.mxu0 0.0
        %1878 = vmatprep.subr.mxu0 0.0
        %1879 = vmatpush1.xpose.msra.mxu0 0.0
        %1880 = vmatprep.subr.mxu0 0.0
        %1881 = vmatpush1.xpose.msra.mxu0 0.0
        %1882 = vmatprep.subr.mxu0 0.0
        %1883 = vmatpush1.xpose.msra.mxu0 0.0
        %1884 = vmatprep.subr.mxu0 0.0
        %1885 = vmatpush1.xpose.msra.mxu0 0.0
        %1886 = vmatprep.subr.mxu0 0.0
        %1887 = vmatpush1.xpose.msra.mxu0 0.0
        %1888 = vmatprep.subr.mxu0 0.0
        %1889 = vmatpush1.xpose.msra.mxu0 0.0
        %1890 = vmatprep.subr.mxu0 0.0
        %1891 = vmatpush1.xpose.msra.mxu0 0.0
        %1892 = vmatprep.subr.mxu0 0.0
        %1893 = vmatpush1.xpose.msra.mxu0 0.0
        %1894 = vmatprep.subr.mxu0 0.0
        %1895 = vmatpush1.xpose.msra.mxu0 0.0
        %1896 = vmatprep.subr.mxu0 0.0
        %1897 = vmatpush1.xpose.msra.mxu0 0.0
        %1898 = vmatprep.subr.mxu0 0.0
        %1899 = vmatpush1.xpose.msra.mxu0 0.0
        %1900 = vmatprep.subr.mxu0 0.0
        %1901 = vmatpush1.xpose.msra.mxu0 0.0
        %1902 = vmatprep.subr.mxu0 0.0
        %1903 = vmatpush1.xpose.msra.mxu0 0.0
        %1904 = vmatprep.subr.mxu0 0.0
        %1905 = vmatpush1.xpose.msra.mxu0 0.0
        %1906 = vmatprep.subr.mxu0 0.0
        %1907 = vmatpush1.xpose.msra.mxu0 0.0
        %1908 = vmatprep.subr.mxu0 0.0
        %1909 = vmatpush1.xpose.msra.mxu0 0.0
        %1910 = vmatprep.subr.mxu0 0.0
        %1911 = vmatpush1.xpose.msra.mxu0 0.0
        %1912 = vmatprep.subr.mxu0 0.0
        %1913 = vmatpush1.xpose.msra.mxu0 0.0
        %1914 = vmatprep.subr.mxu0 0.0
        %1915 = vmatpush1.xpose.msra.mxu0 0.0
        %1916 = vmatprep.subr.mxu0 0.0
        %1917 = vmatpush1.xpose.msra.mxu0 0.0
        %1918 = vmatprep.subr.mxu0 0.0
        %1919 = vmatpush1.xpose.msra.mxu0 0.0
        %1920 = vmatprep.subr.mxu0 0.0
        %1921 = vmatpush1.xpose.msra.mxu0 0.0
        %1922 = vmatprep.subr.mxu0 0.0
        %1923 = vmatpush1.xpose.msra.mxu0 0.0
        %1924 = vmatprep.mubr.f32.mxu0 0.0
        %1925 = vmatmul.mubr.f32.gmra.mrb[0].mxu0 %v1828
        %v1926 = vpop.f32.mrb[0].mxu0
        %v1927 = vadd.f32 0.0, %v1926
        %v1928 = vpop.f32.mrb[0].mxu0
        %1929 = vmatprep.mubr.f32.mxu0 0.0
        %1930 = vmatmul.mubr.f32.gmra.mrb[0].mxu0 %v1830
        %v1931 = vpop.f32.mrb[0].mxu0
        %v1932 = vadd.f32 0.0, %v1931
        %v1933 = vpop.f32.mrb[0].mxu0
        %1934 = vmatprep.mubr.f32.mxu0 0.0
        %1935 = vmatmul.mubr.f32.gmra.mrb[0].mxu0 %v1832
        %v1936 = vpop.f32.mrb[0].mxu0
        %v1937 = vadd.f32 0.0, %v1936
        %v1938 = vpop.f32.mrb[0].mxu0
        %1939 = vmatprep.mubr.f32.mxu0 0.0
        %1940 = vmatmul.mubr.f32.gmra.mrb[0].mxu0 %v1834
        %v1941 = vpop.f32.mrb[0].mxu0
        %v1942 = vadd.f32 0.0, %v1941
        %v1943 = vpop.f32.mrb[0].mxu0
        %1944 = vmatprep.mubr.f32.mxu0 0.0
        %1945 = vmatmul.mubr.f32.gmra.mrb[0].mxu0 %v1836
        %v1946 = vpop.f32.mrb[0].mxu0
        %v1947 = vadd.f32 0.0, %v1946
        %v1948 = vpop.f32.mrb[0].mxu0
        %1949 = vmatprep.mubr.f32.mxu0 0.0
        %1950 = vmatmul.mubr.f32.gmra.mrb[0].mxu0 %v1838
        %v1951 = vpop.f32.mrb[0].mxu0
        %v1952 = vadd.f32 0.0, %v1951
        %v1953 = vpop.f32.mrb[0].mxu0
        %1954 = vmatprep.mubr.f32.mxu0 0.0
        %1955 = vmatmul.mubr.f32.gmra.mrb[0].mxu0 %v1840
        %v1956 = vpop.f32.mrb[0].mxu0
        %v1957 = vadd.f32 0.0, %v1956
        %v1958 = vpop.f32.mrb[0].mxu0
        %1959 = vmatprep.mubr.f32.mxu0 0.0
        %1960 = vmatmul.mubr.f32.gmra.mrb[0].mxu0 %v1842
        %v1961 = vpop.f32.mrb[0].mxu0
        %v1962 = vadd.f32 0.0, %v1961
        %v1963 = vpop.f32.mrb[0].mxu0
        %1964 = vdwg.mxu0
        %v1965 = vsel %vm1554, %v1927, -inf
        %1966 = vmax.xlane.f32.xlu0 %v1965
        %v1967 = vpop.xlane.xlu0 %1966
        %v1968 = vsel %vm1554, %v1932, -inf
        %1969 = vmax.xlane.f32.xlu0 %v1968
        %v1970 = vpop.xlane.xlu0 %1969
        %v1971 = vsel %vm1554, %v1937, -inf
        %1972 = vmax.xlane.f32.xlu0 %v1971
        %v1973 = vpop.xlane.xlu0 %1972
        %v1974 = vsel %vm1554, %v1942, -inf
        %1975 = vmax.xlane.f32.xlu0 %v1974
        %v1976 = vpop.xlane.xlu0 %1975
        %v1977 = vsel %vm1554, %v1947, -inf
        %1978 = vmax.xlane.f32.xlu0 %v1977
        %v1979 = vpop.xlane.xlu0 %1978
        %v1980 = vsel %vm1554, %v1952, -inf
        %1981 = vmax.xlane.f32.xlu0 %v1980
        %v1982 = vpop.xlane.xlu0 %1981
        %v1983 = vsel %vm1554, %v1957, -inf
        %1984 = vmax.xlane.f32.xlu0 %v1983
        %v1985 = vpop.xlane.xlu0 %1984
        %v1986 = vsel %vm1554, %v1962, -inf
        %1987 = vmax.xlane.f32.xlu0 %v1986
        %v1988 = vpop.xlane.xlu0 %1987
        %v1989 = vsub.f32 %v1927, %v1967
        %v1990 = vsub.f32 %v1932, %v1970
        %v1991 = vsub.f32 %v1937, %v1973
        %v1992 = vsub.f32 %v1942, %v1976
        %v1993 = vsub.f32 %v1947, %v1979
        %v1994 = vsub.f32 %v1952, %v1982
        %v1995 = vsub.f32 %v1957, %v1985
        %v1996 = vsub.f32 %v1962, %v1988
        %v1997 = vmul.f32 %v1989, 1.442695
        %v1998 = vpow.pop %v1997
        %v1999 = vmul.f32 %v1990, 1.442695
        %v2000 = vpow.pop %v1999
        %v2001 = vmul.f32 %v1991, 1.442695
        %v2002 = vpow.pop %v2001
        %v2003 = vmul.f32 %v1992, 1.442695
        %v2004 = vpow.pop %v2003
        %v2005 = vmul.f32 %v1993, 1.442695
        %v2006 = vpow.pop %v2005
        %v2007 = vmul.f32 %v1994, 1.442695
        %v2008 = vpow.pop %v2007
        %v2009 = vmul.f32 %v1995, 1.442695
        %v2010 = vpow.pop %v2009
        %v2011 = vmul.f32 %v1996, 1.442695
        %v2012 = vpow.pop %v2011
        %v2013 = vsel %vm1554, %v1998, 0.0
        %2014 = vadd.xlane.f32.xlu0 %v2013
        %v2015 = vpop.xlane.xlu0 %2014
        %v2016 = vsel %vm1554, %v2000, 0.0
        %2017 = vadd.xlane.f32.xlu0 %v2016
        %v2018 = vpop.xlane.xlu0 %2017
        %v2019 = vsel %vm1554, %v2002, 0.0
        %2020 = vadd.xlane.f32.xlu0 %v2019
        %v2021 = vpop.xlane.xlu0 %2020
        %v2022 = vsel %vm1554, %v2004, 0.0
        %2023 = vadd.xlane.f32.xlu0 %v2022
        %v2024 = vpop.xlane.xlu0 %2023
        %v2025 = vsel %vm1554, %v2006, 0.0
        %2026 = vadd.xlane.f32.xlu0 %v2025
        %v2027 = vpop.xlane.xlu0 %2026
        %v2028 = vsel %vm1554, %v2008, 0.0
        %2029 = vadd.xlane.f32.xlu0 %v2028
        %v2030 = vpop.xlane.xlu0 %2029
        %v2031 = vsel %vm1554, %v2010, 0.0
        %2032 = vadd.xlane.f32.xlu0 %v2031
        %v2033 = vpop.xlane.xlu0 %2032
        %v2034 = vsel %vm1554, %v2012, 0.0
        %2035 = vadd.xlane.f32.xlu0 %v2034
        %v2036 = vpop.xlane.xlu0 %2035
        %v2037 = vrcp.pop %v2015
        %v2038 = vmul.f32 %v1998, %v2037
        %v2039 = vrcp.pop %v2018
        %v2040 = vmul.f32 %v2000, %v2039
        %v2041 = vrcp.pop %v2021
        %v2042 = vmul.f32 %v2002, %v2041
        %v2043 = vrcp.pop %v2024
        %v2044 = vmul.f32 %v2004, %v2043
        %v2045 = vrcp.pop %v2027
        %v2046 = vmul.f32 %v2006, %v2045
        %v2047 = vrcp.pop %v2030
        %v2048 = vmul.f32 %v2008, %v2047
        %v2049 = vrcp.pop %v2033
        %v2050 = vmul.f32 %v2010, %v2049
        %v2051 = vrcp.pop %v2036
        %v2052 = vmul.f32 %v2012, %v2051
        %2053 = vrot.lane.b32.xlu0 %v1334, 56
        %v2054 = vpop.permute.xlu0 %2053
        %2055 = vrot.lane.b32.xlu0 %v1339, 56
        %v2056 = vpop.permute.xlu0 %2055
        %2057 = vrot.lane.b32.xlu0 %v1344, 56
        %v2058 = vpop.permute.xlu0 %2057
        %2059 = vrot.lane.b32.xlu0 %v1349, 56
        %v2060 = vpop.permute.xlu0 %2059
        %2061 = vrot.lane.b32.xlu0 %v1354, 56
        %v2062 = vpop.permute.xlu0 %2061
        %2063 = vrot.lane.b32.xlu0 %v1359, 56
        %v2064 = vpop.permute.xlu0 %2063
        %2065 = vrot.lane.b32.xlu0 %v1364, 56
        %v2066 = vpop.permute.xlu0 %2065
        %2067 = vrot.lane.b32.xlu0 %v1369, 56
        %v2068 = vpop.permute.xlu0 %2067
        %v2078 = vsel %vm1554, %v2038, 0
        %v2081 = vsel %vm1554, %v2040, 0
        %v2084 = vsel %vm1554, %v2042, 0
        %v2087 = vsel %vm1554, %v2044, 0
        %v2090 = vsel %vm1554, %v2046, 0
        %v2093 = vsel %vm1554, %v2048, 0
        %v2096 = vsel %vm1554, %v2050, 0
        %v2099 = vsel %vm1554, %v2052, 0
        %2101 = vmatprep.subr.mxu0 0.0
        %2102 = vmatpush1.msra.mxu0 %v2054
        %2103 = vmatprep.subr.mxu0 0.0
        %2104 = vmatpush1.msra.mxu0 %v2056
        %2105 = vmatprep.subr.mxu0 0.0
        %2106 = vmatpush1.msra.mxu0 %v2058
        %2107 = vmatprep.subr.mxu0 0.0
        %2108 = vmatpush1.msra.mxu0 %v2060
        %2109 = vmatprep.subr.mxu0 0.0
        %2110 = vmatpush1.msra.mxu0 %v2062
        %2111 = vmatprep.subr.mxu0 0.0
        %2112 = vmatpush1.msra.mxu0 %v2064
        %2113 = vmatprep.subr.mxu0 0.0
        %2114 = vmatpush1.msra.mxu0 %v2066
        %2115 = vmatprep.subr.mxu0 0.0
        %2116 = vmatpush1.msra.mxu0 %v2068
        %2117 = vmatprep.subr.mxu0 0.0
        %2118 = vmatpush1.msra.mxu0 0.0
        %2119 = vmatprep.subr.mxu0 0.0
        %2120 = vmatpush1.msra.mxu0 0.0
        %2121 = vmatprep.subr.mxu0 0.0
        %2122 = vmatpush1.msra.mxu0 0.0
        %2123 = vmatprep.subr.mxu0 0.0
        %2124 = vmatpush1.msra.mxu0 0.0
        %2125 = vmatprep.subr.mxu0 0.0
        %2126 = vmatpush1.msra.mxu0 0.0
        %2127 = vmatprep.subr.mxu0 0.0
        %2128 = vmatpush1.msra.mxu0 0.0
        %2129 = vmatprep.subr.mxu0 0.0
        %2130 = vmatpush1.msra.mxu0 0.0
        %2131 = vmatprep.subr.mxu0 0.0
        %2132 = vmatpush1.msra.mxu0 0.0
        %2133 = vmatprep.subr.mxu0 0.0
        %2134 = vmatpush1.msra.mxu0 0.0
        %2135 = vmatprep.subr.mxu0 0.0
        %2136 = vmatpush1.msra.mxu0 0.0
        %2137 = vmatprep.subr.mxu0 0.0
        %2138 = vmatpush1.msra.mxu0 0.0
        %2139 = vmatprep.subr.mxu0 0.0
        %2140 = vmatpush1.msra.mxu0 0.0
        %2141 = vmatprep.subr.mxu0 0.0
        %2142 = vmatpush1.msra.mxu0 0.0
        %2143 = vmatprep.subr.mxu0 0.0
        %2144 = vmatpush1.msra.mxu0 0.0
        %2145 = vmatprep.subr.mxu0 0.0
        %2146 = vmatpush1.msra.mxu0 0.0
        %2147 = vmatprep.subr.mxu0 0.0
        %2148 = vmatpush1.msra.mxu0 0.0
        %2149 = vmatprep.subr.mxu0 0.0
        %2150 = vmatpush1.msra.mxu0 0.0
        %2151 = vmatprep.subr.mxu0 0.0
        %2152 = vmatpush1.msra.mxu0 0.0
        %2153 = vmatprep.subr.mxu0 0.0
        %2154 = vmatpush1.msra.mxu0 0.0
        %2155 = vmatprep.subr.mxu0 0.0
        %2156 = vmatpush1.msra.mxu0 0.0
        %2157 = vmatprep.subr.mxu0 0.0
        %2158 = vmatpush1.msra.mxu0 0.0
        %2159 = vmatprep.subr.mxu0 0.0
        %2160 = vmatpush1.msra.mxu0 0.0
        %2161 = vmatprep.subr.mxu0 0.0
        %2162 = vmatpush1.msra.mxu0 0.0
        %2163 = vmatprep.subr.mxu0 0.0
        %2164 = vmatpush1.msra.mxu0 0.0
        %2165 = vmatprep.mubr.f32.mxu0 0.0
        %2166 = vmatmul.mubr.f32.gmra.mrb[0].mxu0 %v2078
        %v2167 = vpop.f32.mrb[0].mxu0
        %v2168 = vadd.f32 0.0, %v2167
        %v2169 = vpop.f32.mrb[0].mxu0
        %2170 = vmatprep.mubr.f32.mxu0 0.0
        %2171 = vmatmul.mubr.f32.gmra.mrb[0].mxu0 %v2081
        %v2172 = vpop.f32.mrb[0].mxu0
        %v2173 = vadd.f32 0.0, %v2172
        %v2174 = vpop.f32.mrb[0].mxu0
        %2175 = vmatprep.mubr.f32.mxu0 0.0
        %2176 = vmatmul.mubr.f32.gmra.mrb[0].mxu0 %v2084
        %v2177 = vpop.f32.mrb[0].mxu0
        %v2178 = vadd.f32 0.0, %v2177
        %v2179 = vpop.f32.mrb[0].mxu0
        %2180 = vmatprep.mubr.f32.mxu0 0.0
        %2181 = vmatmul.mubr.f32.gmra.mrb[0].mxu0 %v2087
        %v2182 = vpop.f32.mrb[0].mxu0
        %v2183 = vadd.f32 0.0, %v2182
        %v2184 = vpop.f32.mrb[0].mxu0
        %2185 = vmatprep.mubr.f32.mxu0 0.0
        %2186 = vmatmul.mubr.f32.gmra.mrb[0].mxu0 %v2090
        %v2187 = vpop.f32.mrb[0].mxu0
        %v2188 = vadd.f32 0.0, %v2187
        %v2189 = vpop.f32.mrb[0].mxu0
        %2190 = vmatprep.mubr.f32.mxu0 0.0
        %2191 = vmatmul.mubr.f32.gmra.mrb[0].mxu0 %v2093
        %v2192 = vpop.f32.mrb[0].mxu0
        %v2193 = vadd.f32 0.0, %v2192
        %v2194 = vpop.f32.mrb[0].mxu0
        %2195 = vmatprep.mubr.f32.mxu0 0.0
        %2196 = vmatmul.mubr.f32.gmra.mrb[0].mxu0 %v2096
        %v2197 = vpop.f32.mrb[0].mxu0
        %v2198 = vadd.f32 0.0, %v2197
        %v2199 = vpop.f32.mrb[0].mxu0
        %2200 = vmatprep.mubr.f32.mxu0 0.0
        %2201 = vmatmul.mubr.f32.gmra.mrb[0].mxu0 %v2099
        %v2202 = vpop.f32.mrb[0].mxu0
        %v2203 = vadd.f32 0.0, %v2202
        %v2204 = vpop.f32.mrb[0].mxu0
        %2205 = vdwg.mxu0
        %v2207 = vsel %vm1408, %v2168, 0
        %v2210 = vsel %vm1408, %v2173, 0
        %v2213 = vsel %vm1408, %v2178, 0
        %v2216 = vsel %vm1408, %v2183, 0
        %v2219 = vsel %vm1408, %v2188, 0
        %v2222 = vsel %vm1408, %v2193, 0
        %v2225 = vsel %vm1408, %v2198, 0
        %v2228 = vsel %vm1408, %v2203, 0
        %2230 = vmatprep.subr.mxu0 0.0
        %2231 = vmatpush1.msra.mxu0 %v1373
        %2232 = vmatprep.subr.mxu0 0.0
        %2233 = vmatpush1.msra.mxu0 0.0
        %2234 = vmatprep.subr.mxu0 0.0
        %2235 = vmatpush1.msra.mxu0 0.0
        %2236 = vmatprep.subr.mxu0 0.0
        %2237 = vmatpush1.msra.mxu0 0.0
        %2238 = vmatprep.subr.mxu0 0.0
        %2239 = vmatpush1.msra.mxu0 0.0
        %2240 = vmatprep.subr.mxu0 0.0
        %2241 = vmatpush1.msra.mxu0 0.0
        %2242 = vmatprep.subr.mxu0 0.0
        %2243 = vmatpush1.msra.mxu0 0.0
        %2244 = vmatprep.subr.mxu0 0.0
        %2245 = vmatpush1.msra.mxu0 0.0
        %2246 = vmatprep.subr.mxu0 0.0
        %2247 = vmatpush1.msra.mxu0 0.0
        %2248 = vmatprep.subr.mxu0 0.0
        %2249 = vmatpush1.msra.mxu0 0.0
        %2250 = vmatprep.subr.mxu0 0.0
        %2251 = vmatpush1.msra.mxu0 0.0
        %2252 = vmatprep.subr.mxu0 0.0
        %2253 = vmatpush1.msra.mxu0 0.0
        %2254 = vmatprep.subr.mxu0 0.0
        %2255 = vmatpush1.msra.mxu0 0.0
        %2256 = vmatprep.subr.mxu0 0.0
        %2257 = vmatpush1.msra.mxu0 0.0
        %2258 = vmatprep.subr.mxu0 0.0
        %2259 = vmatpush1.msra.mxu0 0.0
        %2260 = vmatprep.subr.mxu0 0.0
        %2261 = vmatpush1.msra.mxu0 0.0
        %2262 = vmatprep.subr.mxu0 0.0
        %2263 = vmatpush1.msra.mxu0 0.0
        %2264 = vmatprep.subr.mxu0 0.0
        %2265 = vmatpush1.msra.mxu0 0.0
        %2266 = vmatprep.subr.mxu0 0.0
        %2267 = vmatpush1.msra.mxu0 0.0
        %2268 = vmatprep.subr.mxu0 0.0
        %2269 = vmatpush1.msra.mxu0 0.0
        %2270 = vmatprep.subr.mxu0 0.0
        %2271 = vmatpush1.msra.mxu0 0.0
        %2272 = vmatprep.subr.mxu0 0.0
        %2273 = vmatpush1.msra.mxu0 0.0
        %2274 = vmatprep.subr.mxu0 0.0
        %2275 = vmatpush1.msra.mxu0 0.0
        %2276 = vmatprep.subr.mxu0 0.0
        %2277 = vmatpush1.msra.mxu0 0.0
        %2278 = vmatprep.subr.mxu0 0.0
        %2279 = vmatpush1.msra.mxu0 0.0
        %2280 = vmatprep.subr.mxu0 0.0
        %2281 = vmatpush1.msra.mxu0 0.0
        %2282 = vmatprep.subr.mxu0 0.0
        %2283 = vmatpush1.msra.mxu0 0.0
        %2284 = vmatprep.subr.mxu0 0.0
        %2285 = vmatpush1.msra.mxu0 0.0
        %2286 = vmatprep.subr.mxu0 0.0
        %2287 = vmatpush1.msra.mxu0 0.0
        %2288 = vmatprep.subr.mxu0 0.0
        %2289 = vmatpush1.msra.mxu0 0.0
        %2290 = vmatprep.subr.mxu0 0.0
        %2291 = vmatpush1.msra.mxu0 0.0
        %2292 = vmatprep.subr.mxu0 0.0
        %2293 = vmatpush1.msra.mxu0 0.0
        %2294 = vmatprep.mubr.f32.mxu0 0.0
        %2295 = vmatmul.mubr.f32.gmra.mrb[0].mxu0 %v2207
        %v2296 = vpop.f32.mrb[0].mxu0
        %v2297 = vadd.f32 0.0, %v2296
        %v2298 = vpop.f32.mrb[0].mxu0
        %2299 = vmatprep.mubr.f32.mxu0 0.0
        %2300 = vmatmul.mubr.f32.gmra.mrb[0].mxu0 %v2210
        %v2301 = vpop.f32.mrb[0].mxu0
        %v2302 = vadd.f32 0.0, %v2301
        %v2303 = vpop.f32.mrb[0].mxu0
        %2304 = vmatprep.mubr.f32.mxu0 0.0
        %2305 = vmatmul.mubr.f32.gmra.mrb[0].mxu0 %v2213
        %v2306 = vpop.f32.mrb[0].mxu0
        %v2307 = vadd.f32 0.0, %v2306
        %v2308 = vpop.f32.mrb[0].mxu0
        %2309 = vmatprep.mubr.f32.mxu0 0.0
        %2310 = vmatmul.mubr.f32.gmra.mrb[0].mxu0 %v2216
        %v2311 = vpop.f32.mrb[0].mxu0
        %v2312 = vadd.f32 0.0, %v2311
        %v2313 = vpop.f32.mrb[0].mxu0
        %2314 = vmatprep.mubr.f32.mxu0 0.0
        %2315 = vmatmul.mubr.f32.gmra.mrb[0].mxu0 %v2219
        %v2316 = vpop.f32.mrb[0].mxu0
        %v2317 = vadd.f32 0.0, %v2316
        %v2318 = vpop.f32.mrb[0].mxu0
        %2319 = vmatprep.mubr.f32.mxu0 0.0
        %2320 = vmatmul.mubr.f32.gmra.mrb[0].mxu0 %v2222
        %v2321 = vpop.f32.mrb[0].mxu0
        %v2322 = vadd.f32 0.0, %v2321
        %v2323 = vpop.f32.mrb[0].mxu0
        %2324 = vmatprep.mubr.f32.mxu0 0.0
        %2325 = vmatmul.mubr.f32.gmra.mrb[0].mxu0 %v2225
        %v2326 = vpop.f32.mrb[0].mxu0
        %v2327 = vadd.f32 0.0, %v2326
        %v2328 = vpop.f32.mrb[0].mxu0
        %2329 = vmatprep.mubr.f32.mxu0 0.0
        %2330 = vmatmul.mubr.f32.gmra.mrb[0].mxu0 %v2228
        %v2331 = vpop.f32.mrb[0].mxu0
        %v2332 = vadd.f32 0.0, %v2331
        %v2333 = vpop.f32.mrb[0].mxu0
        %2334 = vdwg.mxu0
        %v2336 = vsel %vm1408, %v1758, 0
        %v2339 = vsel %vm1408, %v1763, 0
        %v2342 = vsel %vm1408, %v1768, 0
        %v2345 = vsel %vm1408, %v1773, 0
        %v2348 = vsel %vm1408, %v1778, 0
        %v2351 = vsel %vm1408, %v1783, 0
        %v2354 = vsel %vm1408, %v1788, 0
        %v2357 = vsel %vm1408, %v1793, 0
        %2359 = vmatprep.subr.mxu0 0.0
        %2360 = vmatpush1.msra.mxu0 %v1372
        %2361 = vmatprep.subr.mxu0 0.0
        %2362 = vmatpush1.msra.mxu0 0.0
        %2363 = vmatprep.subr.mxu0 0.0
        %2364 = vmatpush1.msra.mxu0 0.0
        %2365 = vmatprep.subr.mxu0 0.0
        %2366 = vmatpush1.msra.mxu0 0.0
        %2367 = vmatprep.subr.mxu0 0.0
        %2368 = vmatpush1.msra.mxu0 0.0
        %2369 = vmatprep.subr.mxu0 0.0
        %2370 = vmatpush1.msra.mxu0 0.0
        %2371 = vmatprep.subr.mxu0 0.0
        %2372 = vmatpush1.msra.mxu0 0.0
        %2373 = vmatprep.subr.mxu0 0.0
        %2374 = vmatpush1.msra.mxu0 0.0
        %2375 = vmatprep.subr.mxu0 0.0
        %2376 = vmatpush1.msra.mxu0 0.0
        %2377 = vmatprep.subr.mxu0 0.0
        %2378 = vmatpush1.msra.mxu0 0.0
        %2379 = vmatprep.subr.mxu0 0.0
        %2380 = vmatpush1.msra.mxu0 0.0
        %2381 = vmatprep.subr.mxu0 0.0
        %2382 = vmatpush1.msra.mxu0 0.0
        %2383 = vmatprep.subr.mxu0 0.0
        %2384 = vmatpush1.msra.mxu0 0.0
        %2385 = vmatprep.subr.mxu0 0.0
        %2386 = vmatpush1.msra.mxu0 0.0
        %2387 = vmatprep.subr.mxu0 0.0
        %2388 = vmatpush1.msra.mxu0 0.0
        %2389 = vmatprep.subr.mxu0 0.0
        %2390 = vmatpush1.msra.mxu0 0.0
        %2391 = vmatprep.subr.mxu0 0.0
        %2392 = vmatpush1.msra.mxu0 0.0
        %2393 = vmatprep.subr.mxu0 0.0
        %2394 = vmatpush1.msra.mxu0 0.0
        %2395 = vmatprep.subr.mxu0 0.0
        %2396 = vmatpush1.msra.mxu0 0.0
        %2397 = vmatprep.subr.mxu0 0.0
        %2398 = vmatpush1.msra.mxu0 0.0
        %2399 = vmatprep.subr.mxu0 0.0
        %2400 = vmatpush1.msra.mxu0 0.0
        %2401 = vmatprep.subr.mxu0 0.0
        %2402 = vmatpush1.msra.mxu0 0.0
        %2403 = vmatprep.subr.mxu0 0.0
        %2404 = vmatpush1.msra.mxu0 0.0
        %2405 = vmatprep.subr.mxu0 0.0
        %2406 = vmatpush1.msra.mxu0 0.0
        %2407 = vmatprep.subr.mxu0 0.0
        %2408 = vmatpush1.msra.mxu0 0.0
        %2409 = vmatprep.subr.mxu0 0.0
        %2410 = vmatpush1.msra.mxu0 0.0
        %2411 = vmatprep.subr.mxu0 0.0
        %2412 = vmatpush1.msra.mxu0 0.0
        %2413 = vmatprep.subr.mxu0 0.0
        %2414 = vmatpush1.msra.mxu0 0.0
        %2415 = vmatprep.subr.mxu0 0.0
        %2416 = vmatpush1.msra.mxu0 0.0
        %2417 = vmatprep.subr.mxu0 0.0
        %2418 = vmatpush1.msra.mxu0 0.0
        %2419 = vmatprep.subr.mxu0 0.0
        %2420 = vmatpush1.msra.mxu0 0.0
        %2421 = vmatprep.subr.mxu0 0.0
        %2422 = vmatpush1.msra.mxu0 0.0
        %2423 = vmatprep.mubr.f32.mxu0 0.0
        %2424 = vmatmul.mubr.f32.gmra.mrb[0].mxu0 %v2336
        %v2425 = vpop.f32.mrb[0].mxu0
        %v2426 = vadd.f32 %v2297, %v2425
        %v2427 = vpop.f32.mrb[0].mxu0
        %2428 = vmatprep.mubr.f32.mxu0 0.0
        %2429 = vmatmul.mubr.f32.gmra.mrb[0].mxu0 %v2339
        %v2430 = vpop.f32.mrb[0].mxu0
        %v2431 = vadd.f32 %v2302, %v2430
        %v2432 = vpop.f32.mrb[0].mxu0
        %2433 = vmatprep.mubr.f32.mxu0 0.0
        %2434 = vmatmul.mubr.f32.gmra.mrb[0].mxu0 %v2342
        %v2435 = vpop.f32.mrb[0].mxu0
        %v2436 = vadd.f32 %v2307, %v2435
        %v2437 = vpop.f32.mrb[0].mxu0
        %2438 = vmatprep.mubr.f32.mxu0 0.0
        %2439 = vmatmul.mubr.f32.gmra.mrb[0].mxu0 %v2345
        %v2440 = vpop.f32.mrb[0].mxu0
        %v2441 = vadd.f32 %v2312, %v2440
        %v2442 = vpop.f32.mrb[0].mxu0
        %2443 = vmatprep.mubr.f32.mxu0 0.0
        %2444 = vmatmul.mubr.f32.gmra.mrb[0].mxu0 %v2348
        %v2445 = vpop.f32.mrb[0].mxu0
        %v2446 = vadd.f32 %v2317, %v2445
        %v2447 = vpop.f32.mrb[0].mxu0
        %2448 = vmatprep.mubr.f32.mxu0 0.0
        %2449 = vmatmul.mubr.f32.gmra.mrb[0].mxu0 %v2351
        %v2450 = vpop.f32.mrb[0].mxu0
        %v2451 = vadd.f32 %v2322, %v2450
        %v2452 = vpop.f32.mrb[0].mxu0
        %2453 = vmatprep.mubr.f32.mxu0 0.0
        %2454 = vmatmul.mubr.f32.gmra.mrb[0].mxu0 %v2354
        %v2455 = vpop.f32.mrb[0].mxu0
        %v2456 = vadd.f32 %v2327, %v2455
        %v2457 = vpop.f32.mrb[0].mxu0
        %2458 = vmatprep.mubr.f32.mxu0 0.0
        %2459 = vmatmul.mubr.f32.gmra.mrb[0].mxu0 %v2357
        %v2460 = vpop.f32.mrb[0].mxu0
        %v2461 = vadd.f32 %v2332, %v2460
        %v2462 = vpop.f32.mrb[0].mxu0
        %2463 = vdwg.mxu0
        %2464 = vrot.lane.b32.xlu0 %v1376, 112
        %v2465 = vpop.permute.xlu0 %2464
        %2466 = vrot.lane.b32.xlu0 %v1377, 112
        %v2467 = vpop.permute.xlu0 %2466
        %2468 = vrot.lane.b32.xlu0 %v1378, 112
        %v2469 = vpop.permute.xlu0 %2468
        %2470 = vrot.lane.b32.xlu0 %v1379, 112
        %v2471 = vpop.permute.xlu0 %2470
        %2472 = vrot.lane.b32.xlu0 %v1380, 112
        %v2473 = vpop.permute.xlu0 %2472
        %2474 = vrot.lane.b32.xlu0 %v1381, 112
        %v2475 = vpop.permute.xlu0 %2474
        %2476 = vrot.lane.b32.xlu0 %v1382, 112
        %v2477 = vpop.permute.xlu0 %2476
        %2478 = vrot.lane.b32.xlu0 %v1383, 112
        %v2479 = vpop.permute.xlu0 %2478
        %2480 = vrot.lane.b32.xlu0 %v1334, 80
        %v2481 = vpop.permute.xlu0 %2480
        %2482 = vrot.lane.b32.xlu0 %v1339, 80
        %v2483 = vpop.permute.xlu0 %2482
        %2484 = vrot.lane.b32.xlu0 %v1344, 80
        %v2485 = vpop.permute.xlu0 %2484
        %2486 = vrot.lane.b32.xlu0 %v1349, 80
        %v2487 = vpop.permute.xlu0 %2486
        %2488 = vrot.lane.b32.xlu0 %v1354, 80
        %v2489 = vpop.permute.xlu0 %2488
        %2490 = vrot.lane.b32.xlu0 %v1359, 80
        %v2491 = vpop.permute.xlu0 %2490
        %2492 = vrot.lane.b32.xlu0 %v1364, 80
        %v2493 = vpop.permute.xlu0 %2492
        %2494 = vrot.lane.b32.xlu0 %v1369, 80
        %v2495 = vpop.permute.xlu0 %2494
        %v2496 = vsel %vm1408, %v2465, 0
        %v2498 = vsel %vm1408, %v2467, 0
        %v2500 = vsel %vm1408, %v2469, 0
        %v2502 = vsel %vm1408, %v2471, 0
        %v2504 = vsel %vm1408, %v2473, 0
        %v2506 = vsel %vm1408, %v2475, 0
        %v2508 = vsel %vm1408, %v2477, 0
        %v2510 = vsel %vm1408, %v2479, 0
        %v2512 = vsel %vm1408, %v2481, 0
        %v2514 = vsel %vm1408, %v2483, 0
        %v2516 = vsel %vm1408, %v2485, 0
        %v2518 = vsel %vm1408, %v2487, 0
        %v2520 = vsel %vm1408, %v2489, 0
        %v2522 = vsel %vm1408, %v2491, 0
        %v2524 = vsel %vm1408, %v2493, 0
        %v2526 = vsel %vm1408, %v2495, 0
        %2528 = vmatprep.subr.mxu0 0.0
        %2529 = vmatpush1.xpose.msra.mxu0 %v2512
        %2530 = vmatprep.subr.mxu0 0.0
        %2531 = vmatpush1.xpose.msra.mxu0 %v2514
        %2532 = vmatprep.subr.mxu0 0.0
        %2533 = vmatpush1.xpose.msra.mxu0 %v2516
        %2534 = vmatprep.subr.mxu0 0.0
        %2535 = vmatpush1.xpose.msra.mxu0 %v2518
        %2536 = vmatprep.subr.mxu0 0.0
        %2537 = vmatpush1.xpose.msra.mxu0 %v2520
        %2538 = vmatprep.subr.mxu0 0.0
        %2539 = vmatpush1.xpose.msra.mxu0 %v2522
        %2540 = vmatprep.subr.mxu0 0.0
        %2541 = vmatpush1.xpose.msra.mxu0 %v2524
        %2542 = vmatprep.subr.mxu0 0.0
        %2543 = vmatpush1.xpose.msra.mxu0 %v2526
        %2544 = vmatprep.subr.mxu0 0.0
        %2545 = vmatpush1.xpose.msra.mxu0 0.0
        %2546 = vmatprep.subr.mxu0 0.0
        %2547 = vmatpush1.xpose.msra.mxu0 0.0
        %2548 = vmatprep.subr.mxu0 0.0
        %2549 = vmatpush1.xpose.msra.mxu0 0.0
        %2550 = vmatprep.subr.mxu0 0.0
        %2551 = vmatpush1.xpose.msra.mxu0 0.0
        %2552 = vmatprep.subr.mxu0 0.0
        %2553 = vmatpush1.xpose.msra.mxu0 0.0
        %2554 = vmatprep.subr.mxu0 0.0
        %2555 = vmatpush1.xpose.msra.mxu0 0.0
        %2556 = vmatprep.subr.mxu0 0.0
        %2557 = vmatpush1.xpose.msra.mxu0 0.0
        %2558 = vmatprep.subr.mxu0 0.0
        %2559 = vmatpush1.xpose.msra.mxu0 0.0
        %2560 = vmatprep.subr.mxu0 0.0
        %2561 = vmatpush1.xpose.msra.mxu0 0.0
        %2562 = vmatprep.subr.mxu0 0.0
        %2563 = vmatpush1.xpose.msra.mxu0 0.0
        %2564 = vmatprep.subr.mxu0 0.0
        %2565 = vmatpush1.xpose.msra.mxu0 0.0
        %2566 = vmatprep.subr.mxu0 0.0
        %2567 = vmatpush1.xpose.msra.mxu0 0.0
        %2568 = vmatprep.subr.mxu0 0.0
        %2569 = vmatpush1.xpose.msra.mxu0 0.0
        %2570 = vmatprep.subr.mxu0 0.0
        %2571 = vmatpush1.xpose.msra.mxu0 0.0
        %2572 = vmatprep.subr.mxu0 0.0
        %2573 = vmatpush1.xpose.msra.mxu0 0.0
        %2574 = vmatprep.subr.mxu0 0.0
        %2575 = vmatpush1.xpose.msra.mxu0 0.0
        %2576 = vmatprep.subr.mxu0 0.0
        %2577 = vmatpush1.xpose.msra.mxu0 0.0
        %2578 = vmatprep.subr.mxu0 0.0
        %2579 = vmatpush1.xpose.msra.mxu0 0.0
        %2580 = vmatprep.subr.mxu0 0.0
        %2581 = vmatpush1.xpose.msra.mxu0 0.0
        %2582 = vmatprep.subr.mxu0 0.0
        %2583 = vmatpush1.xpose.msra.mxu0 0.0
        %2584 = vmatprep.subr.mxu0 0.0
        %2585 = vmatpush1.xpose.msra.mxu0 0.0
        %2586 = vmatprep.subr.mxu0 0.0
        %2587 = vmatpush1.xpose.msra.mxu0 0.0
        %2588 = vmatprep.subr.mxu0 0.0
        %2589 = vmatpush1.xpose.msra.mxu0 0.0
        %2590 = vmatprep.subr.mxu0 0.0
        %2591 = vmatpush1.xpose.msra.mxu0 0.0
        %2592 = vmatprep.mubr.f32.mxu0 0.0
        %2593 = vmatmul.mubr.f32.gmra.mrb[0].mxu0 %v2496
        %v2594 = vpop.f32.mrb[0].mxu0
        %v2595 = vadd.f32 0.0, %v2594
        %v2596 = vpop.f32.mrb[0].mxu0
        %2597 = vmatprep.mubr.f32.mxu0 0.0
        %2598 = vmatmul.mubr.f32.gmra.mrb[0].mxu0 %v2498
        %v2599 = vpop.f32.mrb[0].mxu0
        %v2600 = vadd.f32 0.0, %v2599
        %v2601 = vpop.f32.mrb[0].mxu0
        %2602 = vmatprep.mubr.f32.mxu0 0.0
        %2603 = vmatmul.mubr.f32.gmra.mrb[0].mxu0 %v2500
        %v2604 = vpop.f32.mrb[0].mxu0
        %v2605 = vadd.f32 0.0, %v2604
        %v2606 = vpop.f32.mrb[0].mxu0
        %2607 = vmatprep.mubr.f32.mxu0 0.0
        %2608 = vmatmul.mubr.f32.gmra.mrb[0].mxu0 %v2502
        %v2609 = vpop.f32.mrb[0].mxu0
        %v2610 = vadd.f32 0.0, %v2609
        %v2611 = vpop.f32.mrb[0].mxu0
        %2612 = vmatprep.mubr.f32.mxu0 0.0
        %2613 = vmatmul.mubr.f32.gmra.mrb[0].mxu0 %v2504
        %v2614 = vpop.f32.mrb[0].mxu0
        %v2615 = vadd.f32 0.0, %v2614
        %v2616 = vpop.f32.mrb[0].mxu0
        %2617 = vmatprep.mubr.f32.mxu0 0.0
        %2618 = vmatmul.mubr.f32.gmra.mrb[0].mxu0 %v2506
        %v2619 = vpop.f32.mrb[0].mxu0
        %v2620 = vadd.f32 0.0, %v2619
        %v2621 = vpop.f32.mrb[0].mxu0
        %2622 = vmatprep.mubr.f32.mxu0 0.0
        %2623 = vmatmul.mubr.f32.gmra.mrb[0].mxu0 %v2508
        %v2624 = vpop.f32.mrb[0].mxu0
        %v2625 = vadd.f32 0.0, %v2624
        %v2626 = vpop.f32.mrb[0].mxu0
        %2627 = vmatprep.mubr.f32.mxu0 0.0
        %2628 = vmatmul.mubr.f32.gmra.mrb[0].mxu0 %v2510
        %v2629 = vpop.f32.mrb[0].mxu0
        %v2630 = vadd.f32 0.0, %v2629
        %v2631 = vpop.f32.mrb[0].mxu0
        %2632 = vdwg.mxu0
        %v2633 = vsel %vm1554, %v2595, -inf
        %2634 = vmax.xlane.f32.xlu0 %v2633
        %v2635 = vpop.xlane.xlu0 %2634
        %v2636 = vsel %vm1554, %v2600, -inf
        %2637 = vmax.xlane.f32.xlu0 %v2636
        %v2638 = vpop.xlane.xlu0 %2637
        %v2639 = vsel %vm1554, %v2605, -inf
        %2640 = vmax.xlane.f32.xlu0 %v2639
        %v2641 = vpop.xlane.xlu0 %2640
        %v2642 = vsel %vm1554, %v2610, -inf
        %2643 = vmax.xlane.f32.xlu0 %v2642
        %v2644 = vpop.xlane.xlu0 %2643
        %v2645 = vsel %vm1554, %v2615, -inf
        %2646 = vmax.xlane.f32.xlu0 %v2645
        %v2647 = vpop.xlane.xlu0 %2646
        %v2648 = vsel %vm1554, %v2620, -inf
        %2649 = vmax.xlane.f32.xlu0 %v2648
        %v2650 = vpop.xlane.xlu0 %2649
        %v2651 = vsel %vm1554, %v2625, -inf
        %2652 = vmax.xlane.f32.xlu0 %v2651
        %v2653 = vpop.xlane.xlu0 %2652
        %v2654 = vsel %vm1554, %v2630, -inf
        %2655 = vmax.xlane.f32.xlu0 %v2654
        %v2656 = vpop.xlane.xlu0 %2655
        %v2657 = vsub.f32 %v2595, %v2635
        %v2658 = vsub.f32 %v2600, %v2638
        %v2659 = vsub.f32 %v2605, %v2641
        %v2660 = vsub.f32 %v2610, %v2644
        %v2661 = vsub.f32 %v2615, %v2647
        %v2662 = vsub.f32 %v2620, %v2650
        %v2663 = vsub.f32 %v2625, %v2653
        %v2664 = vsub.f32 %v2630, %v2656
        %v2665 = vmul.f32 %v2657, 1.442695
        %v2666 = vpow.pop %v2665
        %v2667 = vmul.f32 %v2658, 1.442695
        %v2668 = vpow.pop %v2667
        %v2669 = vmul.f32 %v2659, 1.442695
        %v2670 = vpow.pop %v2669
        %v2671 = vmul.f32 %v2660, 1.442695
        %v2672 = vpow.pop %v2671
        %v2673 = vmul.f32 %v2661, 1.442695
        %v2674 = vpow.pop %v2673
        %v2675 = vmul.f32 %v2662, 1.442695
        %v2676 = vpow.pop %v2675
        %v2677 = vmul.f32 %v2663, 1.442695
        %v2678 = vpow.pop %v2677
        %v2679 = vmul.f32 %v2664, 1.442695
        %v2680 = vpow.pop %v2679
        %v2681 = vsel %vm1554, %v2666, 0.0
        %2682 = vadd.xlane.f32.xlu0 %v2681
        %v2683 = vpop.xlane.xlu0 %2682
        %v2684 = vsel %vm1554, %v2668, 0.0
        %2685 = vadd.xlane.f32.xlu0 %v2684
        %v2686 = vpop.xlane.xlu0 %2685
        %v2687 = vsel %vm1554, %v2670, 0.0
        %2688 = vadd.xlane.f32.xlu0 %v2687
        %v2689 = vpop.xlane.xlu0 %2688
        %v2690 = vsel %vm1554, %v2672, 0.0
        %2691 = vadd.xlane.f32.xlu0 %v2690
        %v2692 = vpop.xlane.xlu0 %2691
        %v2693 = vsel %vm1554, %v2674, 0.0
        %2694 = vadd.xlane.f32.xlu0 %v2693
        %v2695 = vpop.xlane.xlu0 %2694
        %v2696 = vsel %vm1554, %v2676, 0.0
        %2697 = vadd.xlane.f32.xlu0 %v2696
        %v2698 = vpop.xlane.xlu0 %2697
        %v2699 = vsel %vm1554, %v2678, 0.0
        %2700 = vadd.xlane.f32.xlu0 %v2699
        %v2701 = vpop.xlane.xlu0 %2700
        %v2702 = vsel %vm1554, %v2680, 0.0
        %2703 = vadd.xlane.f32.xlu0 %v2702
        %v2704 = vpop.xlane.xlu0 %2703
        %v2705 = vrcp.pop %v2683
        %v2706 = vmul.f32 %v2666, %v2705
        %v2707 = vrcp.pop %v2686
        %v2708 = vmul.f32 %v2668, %v2707
        %v2709 = vrcp.pop %v2689
        %v2710 = vmul.f32 %v2670, %v2709
        %v2711 = vrcp.pop %v2692
        %v2712 = vmul.f32 %v2672, %v2711
        %v2713 = vrcp.pop %v2695
        %v2714 = vmul.f32 %v2674, %v2713
        %v2715 = vrcp.pop %v2698
        %v2716 = vmul.f32 %v2676, %v2715
        %v2717 = vrcp.pop %v2701
        %v2718 = vmul.f32 %v2678, %v2717
        %v2719 = vrcp.pop %v2704
        %v2720 = vmul.f32 %v2680, %v2719
        %2721 = vrot.lane.b32.xlu0 %v1334, 48
        %v2722 = vpop.permute.xlu0 %2721
        %2723 = vrot.lane.b32.xlu0 %v1339, 48
        %v2724 = vpop.permute.xlu0 %2723
        %2725 = vrot.lane.b32.xlu0 %v1344, 48
        %v2726 = vpop.permute.xlu0 %2725
        %2727 = vrot.lane.b32.xlu0 %v1349, 48
        %v2728 = vpop.permute.xlu0 %2727
        %2729 = vrot.lane.b32.xlu0 %v1354, 48
        %v2730 = vpop.permute.xlu0 %2729
        %2731 = vrot.lane.b32.xlu0 %v1359, 48
        %v2732 = vpop.permute.xlu0 %2731
        %2733 = vrot.lane.b32.xlu0 %v1364, 48
        %v2734 = vpop.permute.xlu0 %2733
        %2735 = vrot.lane.b32.xlu0 %v1369, 48
        %v2736 = vpop.permute.xlu0 %2735
        %v2746 = vsel %vm1554, %v2706, 0
        %v2749 = vsel %vm1554, %v2708, 0
        %v2752 = vsel %vm1554, %v2710, 0
        %v2755 = vsel %vm1554, %v2712, 0
        %v2758 = vsel %vm1554, %v2714, 0
        %v2761 = vsel %vm1554, %v2716, 0
        %v2764 = vsel %vm1554, %v2718, 0
        %v2767 = vsel %vm1554, %v2720, 0
        %2769 = vmatprep.subr.mxu0 0.0
        %2770 = vmatpush1.msra.mxu0 %v2722
        %2771 = vmatprep.subr.mxu0 0.0
        %2772 = vmatpush1.msra.mxu0 %v2724
        %2773 = vmatprep.subr.mxu0 0.0
        %2774 = vmatpush1.msra.mxu0 %v2726
        %2775 = vmatprep.subr.mxu0 0.0
        %2776 = vmatpush1.msra.mxu0 %v2728
        %2777 = vmatprep.subr.mxu0 0.0
        %2778 = vmatpush1.msra.mxu0 %v2730
        %2779 = vmatprep.subr.mxu0 0.0
        %2780 = vmatpush1.msra.mxu0 %v2732
        %2781 = vmatprep.subr.mxu0 0.0
        %2782 = vmatpush1.msra.mxu0 %v2734
        %2783 = vmatprep.subr.mxu0 0.0
        %2784 = vmatpush1.msra.mxu0 %v2736
        %2785 = vmatprep.subr.mxu0 0.0
        %2786 = vmatpush1.msra.mxu0 0.0
        %2787 = vmatprep.subr.mxu0 0.0
        %2788 = vmatpush1.msra.mxu0 0.0
        %2789 = vmatprep.subr.mxu0 0.0
        %2790 = vmatpush1.msra.mxu0 0.0
        %2791 = vmatprep.subr.mxu0 0.0
        %2792 = vmatpush1.msra.mxu0 0.0
        %2793 = vmatprep.subr.mxu0 0.0
        %2794 = vmatpush1.msra.mxu0 0.0
        %2795 = vmatprep.subr.mxu0 0.0
        %2796 = vmatpush1.msra.mxu0 0.0
        %2797 = vmatprep.subr.mxu0 0.0
        %2798 = vmatpush1.msra.mxu0 0.0
        %2799 = vmatprep.subr.mxu0 0.0
        %2800 = vmatpush1.msra.mxu0 0.0
        %2801 = vmatprep.subr.mxu0 0.0
        %2802 = vmatpush1.msra.mxu0 0.0
        %2803 = vmatprep.subr.mxu0 0.0
        %2804 = vmatpush1.msra.mxu0 0.0
        %2805 = vmatprep.subr.mxu0 0.0
        %2806 = vmatpush1.msra.mxu0 0.0
        %2807 = vmatprep.subr.mxu0 0.0
        %2808 = vmatpush1.msra.mxu0 0.0
        %2809 = vmatprep.subr.mxu0 0.0
        %2810 = vmatpush1.msra.mxu0 0.0
        %2811 = vmatprep.subr.mxu0 0.0
        %2812 = vmatpush1.msra.mxu0 0.0
        %2813 = vmatprep.subr.mxu0 0.0
        %2814 = vmatpush1.msra.mxu0 0.0
        %2815 = vmatprep.subr.mxu0 0.0
        %2816 = vmatpush1.msra.mxu0 0.0
        %2817 = vmatprep.subr.mxu0 0.0
        %2818 = vmatpush1.msra.mxu0 0.0
        %2819 = vmatprep.subr.mxu0 0.0
        %2820 = vmatpush1.msra.mxu0 0.0
        %2821 = vmatprep.subr.mxu0 0.0
        %2822 = vmatpush1.msra.mxu0 0.0
        %2823 = vmatprep.subr.mxu0 0.0
        %2824 = vmatpush1.msra.mxu0 0.0
        %2825 = vmatprep.subr.mxu0 0.0
        %2826 = vmatpush1.msra.mxu0 0.0
        %2827 = vmatprep.subr.mxu0 0.0
        %2828 = vmatpush1.msra.mxu0 0.0
        %2829 = vmatprep.subr.mxu0 0.0
        %2830 = vmatpush1.msra.mxu0 0.0
        %2831 = vmatprep.subr.mxu0 0.0
        %2832 = vmatpush1.msra.mxu0 0.0
        %2833 = vmatprep.mubr.f32.mxu0 0.0
        %2834 = vmatmul.mubr.f32.gmra.mrb[0].mxu0 %v2746
        %v2835 = vpop.f32.mrb[0].mxu0
        %v2836 = vadd.f32 0.0, %v2835
        %v2837 = vpop.f32.mrb[0].mxu0
        %2838 = vmatprep.mubr.f32.mxu0 0.0
        %2839 = vmatmul.mubr.f32.gmra.mrb[0].mxu0 %v2749
        %v2840 = vpop.f32.mrb[0].mxu0
        %v2841 = vadd.f32 0.0, %v2840
        %v2842 = vpop.f32.mrb[0].mxu0
        %2843 = vmatprep.mubr.f32.mxu0 0.0
        %2844 = vmatmul.mubr.f32.gmra.mrb[0].mxu0 %v2752
        %v2845 = vpop.f32.mrb[0].mxu0
        %v2846 = vadd.f32 0.0, %v2845
        %v2847 = vpop.f32.mrb[0].mxu0
        %2848 = vmatprep.mubr.f32.mxu0 0.0
        %2849 = vmatmul.mubr.f32.gmra.mrb[0].mxu0 %v2755
        %v2850 = vpop.f32.mrb[0].mxu0
        %v2851 = vadd.f32 0.0, %v2850
        %v2852 = vpop.f32.mrb[0].mxu0
        %2853 = vmatprep.mubr.f32.mxu0 0.0
        %2854 = vmatmul.mubr.f32.gmra.mrb[0].mxu0 %v2758
        %v2855 = vpop.f32.mrb[0].mxu0
        %v2856 = vadd.f32 0.0, %v2855
        %v2857 = vpop.f32.mrb[0].mxu0
        %2858 = vmatprep.mubr.f32.mxu0 0.0
        %2859 = vmatmul.mubr.f32.gmra.mrb[0].mxu0 %v2761
        %v2860 = vpop.f32.mrb[0].mxu0
        %v2861 = vadd.f32 0.0, %v2860
        %v2862 = vpop.f32.mrb[0].mxu0
        %2863 = vmatprep.mubr.f32.mxu0 0.0
        %2864 = vmatmul.mubr.f32.gmra.mrb[0].mxu0 %v2764
        %v2865 = vpop.f32.mrb[0].mxu0
        %v2866 = vadd.f32 0.0, %v2865
        %v2867 = vpop.f32.mrb[0].mxu0
        %2868 = vmatprep.mubr.f32.mxu0 0.0
        %2869 = vmatmul.mubr.f32.gmra.mrb[0].mxu0 %v2767
        %v2870 = vpop.f32.mrb[0].mxu0
        %v2871 = vadd.f32 0.0, %v2870
        %v2872 = vpop.f32.mrb[0].mxu0
        %2873 = vdwg.mxu0
        %v2875 = vsel %vm1408, %v2836, 0
        %v2878 = vsel %vm1408, %v2841, 0
        %v2881 = vsel %vm1408, %v2846, 0
        %v2884 = vsel %vm1408, %v2851, 0
        %v2887 = vsel %vm1408, %v2856, 0
        %v2890 = vsel %vm1408, %v2861, 0
        %v2893 = vsel %vm1408, %v2866, 0
        %v2896 = vsel %vm1408, %v2871, 0
        %2898 = vmatprep.subr.mxu0 0.0
        %2899 = vmatpush1.msra.mxu0 %v1374
        %2900 = vmatprep.subr.mxu0 0.0
        %2901 = vmatpush1.msra.mxu0 0.0
        %2902 = vmatprep.subr.mxu0 0.0
        %2903 = vmatpush1.msra.mxu0 0.0
        %2904 = vmatprep.subr.mxu0 0.0
        %2905 = vmatpush1.msra.mxu0 0.0
        %2906 = vmatprep.subr.mxu0 0.0
        %2907 = vmatpush1.msra.mxu0 0.0
        %2908 = vmatprep.subr.mxu0 0.0
        %2909 = vmatpush1.msra.mxu0 0.0
        %2910 = vmatprep.subr.mxu0 0.0
        %2911 = vmatpush1.msra.mxu0 0.0
        %2912 = vmatprep.subr.mxu0 0.0
        %2913 = vmatpush1.msra.mxu0 0.0
        %2914 = vmatprep.subr.mxu0 0.0
        %2915 = vmatpush1.msra.mxu0 0.0
        %2916 = vmatprep.subr.mxu0 0.0
        %2917 = vmatpush1.msra.mxu0 0.0
        %2918 = vmatprep.subr.mxu0 0.0
        %2919 = vmatpush1.msra.mxu0 0.0
        %2920 = vmatprep.subr.mxu0 0.0
        %2921 = vmatpush1.msra.mxu0 0.0
        %2922 = vmatprep.subr.mxu0 0.0
        %2923 = vmatpush1.msra.mxu0 0.0
        %2924 = vmatprep.subr.mxu0 0.0
        %2925 = vmatpush1.msra.mxu0 0.0
        %2926 = vmatprep.subr.mxu0 0.0
        %2927 = vmatpush1.msra.mxu0 0.0
        %2928 = vmatprep.subr.mxu0 0.0
        %2929 = vmatpush1.msra.mxu0 0.0
        %2930 = vmatprep.subr.mxu0 0.0
        %2931 = vmatpush1.msra.mxu0 0.0
        %2932 = vmatprep.subr.mxu0 0.0
        %2933 = vmatpush1.msra.mxu0 0.0
        %2934 = vmatprep.subr.mxu0 0.0
        %2935 = vmatpush1.msra.mxu0 0.0
        %2936 = vmatprep.subr.mxu0 0.0
        %2937 = vmatpush1.msra.mxu0 0.0
        %2938 = vmatprep.subr.mxu0 0.0
        %2939 = vmatpush1.msra.mxu0 0.0
        %2940 = vmatprep.subr.mxu0 0.0
        %2941 = vmatpush1.msra.mxu0 0.0
        %2942 = vmatprep.subr.mxu0 0.0
        %2943 = vmatpush1.msra.mxu0 0.0
        %2944 = vmatprep.subr.mxu0 0.0
        %2945 = vmatpush1.msra.mxu0 0.0
        %2946 = vmatprep.subr.mxu0 0.0
        %2947 = vmatpush1.msra.mxu0 0.0
        %2948 = vmatprep.subr.mxu0 0.0
        %2949 = vmatpush1.msra.mxu0 0.0
        %2950 = vmatprep.subr.mxu0 0.0
        %2951 = vmatpush1.msra.mxu0 0.0
        %2952 = vmatprep.subr.mxu0 0.0
        %2953 = vmatpush1.msra.mxu0 0.0
        %2954 = vmatprep.subr.mxu0 0.0
        %2955 = vmatpush1.msra.mxu0 0.0
        %2956 = vmatprep.subr.mxu0 0.0
        %2957 = vmatpush1.msra.mxu0 0.0
        %2958 = vmatprep.subr.mxu0 0.0
        %2959 = vmatpush1.msra.mxu0 0.0
        %2960 = vmatprep.subr.mxu0 0.0
        %2961 = vmatpush1.msra.mxu0 0.0
        %2962 = vmatprep.mubr.f32.mxu0 0.0
        %2963 = vmatmul.mubr.f32.gmra.mrb[0].mxu0 %v2875
        %v2964 = vpop.f32.mrb[0].mxu0
        %v2965 = vadd.f32 0.0, %v2964
        %v2966 = vpop.f32.mrb[0].mxu0
        %2967 = vmatprep.mubr.f32.mxu0 0.0
        %2968 = vmatmul.mubr.f32.gmra.mrb[0].mxu0 %v2878
        %v2969 = vpop.f32.mrb[0].mxu0
        %v2970 = vadd.f32 0.0, %v2969
        %v2971 = vpop.f32.mrb[0].mxu0
        %2972 = vmatprep.mubr.f32.mxu0 0.0
        %2973 = vmatmul.mubr.f32.gmra.mrb[0].mxu0 %v2881
        %v2974 = vpop.f32.mrb[0].mxu0
        %v2975 = vadd.f32 0.0, %v2974
        %v2976 = vpop.f32.mrb[0].mxu0
        %2977 = vmatprep.mubr.f32.mxu0 0.0
        %2978 = vmatmul.mubr.f32.gmra.mrb[0].mxu0 %v2884
        %v2979 = vpop.f32.mrb[0].mxu0
        %v2980 = vadd.f32 0.0, %v2979
        %v2981 = vpop.f32.mrb[0].mxu0
        %2982 = vmatprep.mubr.f32.mxu0 0.0
        %2983 = vmatmul.mubr.f32.gmra.mrb[0].mxu0 %v2887
        %v2984 = vpop.f32.mrb[0].mxu0
        %v2985 = vadd.f32 0.0, %v2984
        %v2986 = vpop.f32.mrb[0].mxu0
        %2987 = vmatprep.mubr.f32.mxu0 0.0
        %2988 = vmatmul.mubr.f32.gmra.mrb[0].mxu0 %v2890
        %v2989 = vpop.f32.mrb[0].mxu0
        %v2990 = vadd.f32 0.0, %v2989
        %v2991 = vpop.f32.mrb[0].mxu0
        %2992 = vmatprep.mubr.f32.mxu0 0.0
        %2993 = vmatmul.mubr.f32.gmra.mrb[0].mxu0 %v2893
        %v2994 = vpop.f32.mrb[0].mxu0
        %v2995 = vadd.f32 0.0, %v2994
        %v2996 = vpop.f32.mrb[0].mxu0
        %2997 = vmatprep.mubr.f32.mxu0 0.0
        %2998 = vmatmul.mubr.f32.gmra.mrb[0].mxu0 %v2896
        %v2999 = vpop.f32.mrb[0].mxu0
        %v3000 = vadd.f32 0.0, %v2999
        %v3001 = vpop.f32.mrb[0].mxu0
        %3002 = vdwg.mxu0
        %v3003 = vadd.f32 %v2426, %v2965
        %v3004 = vadd.f32 %v2431, %v2970
        %v3005 = vadd.f32 %v2436, %v2975
        %v3006 = vadd.f32 %v2441, %v2980
        %v3007 = vadd.f32 %v2446, %v2985
        %v3008 = vadd.f32 %v2451, %v2990
        %v3009 = vadd.f32 %v2456, %v2995
        %v3010 = vadd.f32 %v2461, %v3000
        %3011 = vrot.lane.b32.xlu0 %v1376, 104
        %v3012 = vpop.permute.xlu0 %3011
        %3013 = vrot.lane.b32.xlu0 %v1377, 104
        %v3014 = vpop.permute.xlu0 %3013
        %3015 = vrot.lane.b32.xlu0 %v1378, 104
        %v3016 = vpop.permute.xlu0 %3015
        %3017 = vrot.lane.b32.xlu0 %v1379, 104
        %v3018 = vpop.permute.xlu0 %3017
        %3019 = vrot.lane.b32.xlu0 %v1380, 104
        %v3020 = vpop.permute.xlu0 %3019
        %3021 = vrot.lane.b32.xlu0 %v1381, 104
        %v3022 = vpop.permute.xlu0 %3021
        %3023 = vrot.lane.b32.xlu0 %v1382, 104
        %v3024 = vpop.permute.xlu0 %3023
        %3025 = vrot.lane.b32.xlu0 %v1383, 104
        %v3026 = vpop.permute.xlu0 %3025
        %3027 = vrot.lane.b32.xlu0 %v1334, 72
        %v3028 = vpop.permute.xlu0 %3027
        %3029 = vrot.lane.b32.xlu0 %v1339, 72
        %v3030 = vpop.permute.xlu0 %3029
        %3031 = vrot.lane.b32.xlu0 %v1344, 72
        %v3032 = vpop.permute.xlu0 %3031
        %3033 = vrot.lane.b32.xlu0 %v1349, 72
        %v3034 = vpop.permute.xlu0 %3033
        %3035 = vrot.lane.b32.xlu0 %v1354, 72
        %v3036 = vpop.permute.xlu0 %3035
        %3037 = vrot.lane.b32.xlu0 %v1359, 72
        %v3038 = vpop.permute.xlu0 %3037
        %3039 = vrot.lane.b32.xlu0 %v1364, 72
        %v3040 = vpop.permute.xlu0 %3039
        %3041 = vrot.lane.b32.xlu0 %v1369, 72
        %v3042 = vpop.permute.xlu0 %3041
        %v3043 = vsel %vm1408, %v3012, 0
        %v3045 = vsel %vm1408, %v3014, 0
        %v3047 = vsel %vm1408, %v3016, 0
        %v3049 = vsel %vm1408, %v3018, 0
        %v3051 = vsel %vm1408, %v3020, 0
        %v3053 = vsel %vm1408, %v3022, 0
        %v3055 = vsel %vm1408, %v3024, 0
        %v3057 = vsel %vm1408, %v3026, 0
        %v3059 = vsel %vm1408, %v3028, 0
        %v3061 = vsel %vm1408, %v3030, 0
        %v3063 = vsel %vm1408, %v3032, 0
        %v3065 = vsel %vm1408, %v3034, 0
        %v3067 = vsel %vm1408, %v3036, 0
        %v3069 = vsel %vm1408, %v3038, 0
        %v3071 = vsel %vm1408, %v3040, 0
        %v3073 = vsel %vm1408, %v3042, 0
        %3075 = vmatprep.subr.mxu0 0.0
        %3076 = vmatpush1.xpose.msra.mxu0 %v3059
        %3077 = vmatprep.subr.mxu0 0.0
        %3078 = vmatpush1.xpose.msra.mxu0 %v3061
        %3079 = vmatprep.subr.mxu0 0.0
        %3080 = vmatpush1.xpose.msra.mxu0 %v3063
        %3081 = vmatprep.subr.mxu0 0.0
        %3082 = vmatpush1.xpose.msra.mxu0 %v3065
        %3083 = vmatprep.subr.mxu0 0.0
        %3084 = vmatpush1.xpose.msra.mxu0 %v3067
        %3085 = vmatprep.subr.mxu0 0.0
        %3086 = vmatpush1.xpose.msra.mxu0 %v3069
        %3087 = vmatprep.subr.mxu0 0.0
        %3088 = vmatpush1.xpose.msra.mxu0 %v3071
        %3089 = vmatprep.subr.mxu0 0.0
        %3090 = vmatpush1.xpose.msra.mxu0 %v3073
        %3091 = vmatprep.subr.mxu0 0.0
        %3092 = vmatpush1.xpose.msra.mxu0 0.0
        %3093 = vmatprep.subr.mxu0 0.0
        %3094 = vmatpush1.xpose.msra.mxu0 0.0
        %3095 = vmatprep.subr.mxu0 0.0
        %3096 = vmatpush1.xpose.msra.mxu0 0.0
        %3097 = vmatprep.subr.mxu0 0.0
        %3098 = vmatpush1.xpose.msra.mxu0 0.0
        %3099 = vmatprep.subr.mxu0 0.0
        %3100 = vmatpush1.xpose.msra.mxu0 0.0
        %3101 = vmatprep.subr.mxu0 0.0
        %3102 = vmatpush1.xpose.msra.mxu0 0.0
        %3103 = vmatprep.subr.mxu0 0.0
        %3104 = vmatpush1.xpose.msra.mxu0 0.0
        %3105 = vmatprep.subr.mxu0 0.0
        %3106 = vmatpush1.xpose.msra.mxu0 0.0
        %3107 = vmatprep.subr.mxu0 0.0
        %3108 = vmatpush1.xpose.msra.mxu0 0.0
        %3109 = vmatprep.subr.mxu0 0.0
        %3110 = vmatpush1.xpose.msra.mxu0 0.0
        %3111 = vmatprep.subr.mxu0 0.0
        %3112 = vmatpush1.xpose.msra.mxu0 0.0
        %3113 = vmatprep.subr.mxu0 0.0
        %3114 = vmatpush1.xpose.msra.mxu0 0.0
        %3115 = vmatprep.subr.mxu0 0.0
        %3116 = vmatpush1.xpose.msra.mxu0 0.0
        %3117 = vmatprep.subr.mxu0 0.0
        %3118 = vmatpush1.xpose.msra.mxu0 0.0
        %3119 = vmatprep.subr.mxu0 0.0
        %3120 = vmatpush1.xpose.msra.mxu0 0.0
        %3121 = vmatprep.subr.mxu0 0.0
        %3122 = vmatpush1.xpose.msra.mxu0 0.0
        %3123 = vmatprep.subr.mxu0 0.0
        %3124 = vmatpush1.xpose.msra.mxu0 0.0
        %3125 = vmatprep.subr.mxu0 0.0
        %3126 = vmatpush1.xpose.msra.mxu0 0.0
        %3127 = vmatprep.subr.mxu0 0.0
        %3128 = vmatpush1.xpose.msra.mxu0 0.0
        %3129 = vmatprep.subr.mxu0 0.0
        %3130 = vmatpush1.xpose.msra.mxu0 0.0
        %3131 = vmatprep.subr.mxu0 0.0
        %3132 = vmatpush1.xpose.msra.mxu0 0.0
        %3133 = vmatprep.subr.mxu0 0.0
        %3134 = vmatpush1.xpose.msra.mxu0 0.0
        %3135 = vmatprep.subr.mxu0 0.0
        %3136 = vmatpush1.xpose.msra.mxu0 0.0
        %3137 = vmatprep.subr.mxu0 0.0
        %3138 = vmatpush1.xpose.msra.mxu0 0.0
        %3139 = vmatprep.mubr.f32.mxu0 0.0
        %3140 = vmatmul.mubr.f32.gmra.mrb[0].mxu0 %v3043
        %v3141 = vpop.f32.mrb[0].mxu0
        %v3142 = vadd.f32 0.0, %v3141
        %v3143 = vpop.f32.mrb[0].mxu0
        %3144 = vmatprep.mubr.f32.mxu0 0.0
        %3145 = vmatmul.mubr.f32.gmra.mrb[0].mxu0 %v3045
        %v3146 = vpop.f32.mrb[0].mxu0
        %v3147 = vadd.f32 0.0, %v3146
        %v3148 = vpop.f32.mrb[0].mxu0
        %3149 = vmatprep.mubr.f32.mxu0 0.0
        %3150 = vmatmul.mubr.f32.gmra.mrb[0].mxu0 %v3047
        %v3151 = vpop.f32.mrb[0].mxu0
        %v3152 = vadd.f32 0.0, %v3151
        %v3153 = vpop.f32.mrb[0].mxu0
        %3154 = vmatprep.mubr.f32.mxu0 0.0
        %3155 = vmatmul.mubr.f32.gmra.mrb[0].mxu0 %v3049
        %v3156 = vpop.f32.mrb[0].mxu0
        %v3157 = vadd.f32 0.0, %v3156
        %v3158 = vpop.f32.mrb[0].mxu0
        %3159 = vmatprep.mubr.f32.mxu0 0.0
        %3160 = vmatmul.mubr.f32.gmra.mrb[0].mxu0 %v3051
        %v3161 = vpop.f32.mrb[0].mxu0
        %v3162 = vadd.f32 0.0, %v3161
        %v3163 = vpop.f32.mrb[0].mxu0
        %3164 = vmatprep.mubr.f32.mxu0 0.0
        %3165 = vmatmul.mubr.f32.gmra.mrb[0].mxu0 %v3053
        %v3166 = vpop.f32.mrb[0].mxu0
        %v3167 = vadd.f32 0.0, %v3166
        %v3168 = vpop.f32.mrb[0].mxu0
        %3169 = vmatprep.mubr.f32.mxu0 0.0
        %3170 = vmatmul.mubr.f32.gmra.mrb[0].mxu0 %v3055
        %v3171 = vpop.f32.mrb[0].mxu0
        %v3172 = vadd.f32 0.0, %v3171
        %v3173 = vpop.f32.mrb[0].mxu0
        %3174 = vmatprep.mubr.f32.mxu0 0.0
        %3175 = vmatmul.mubr.f32.gmra.mrb[0].mxu0 %v3057
        %v3176 = vpop.f32.mrb[0].mxu0
        %v3177 = vadd.f32 0.0, %v3176
        %v3178 = vpop.f32.mrb[0].mxu0
        %3179 = vdwg.mxu0
        %v3180 = vsel %vm1554, %v3142, -inf
        %3181 = vmax.xlane.f32.xlu0 %v3180
        %v3182 = vpop.xlane.xlu0 %3181
        %v3183 = vsel %vm1554, %v3147, -inf
        %3184 = vmax.xlane.f32.xlu0 %v3183
        %v3185 = vpop.xlane.xlu0 %3184
        %v3186 = vsel %vm1554, %v3152, -inf
        %3187 = vmax.xlane.f32.xlu0 %v3186
        %v3188 = vpop.xlane.xlu0 %3187
        %v3189 = vsel %vm1554, %v3157, -inf
        %3190 = vmax.xlane.f32.xlu0 %v3189
        %v3191 = vpop.xlane.xlu0 %3190
        %v3192 = vsel %vm1554, %v3162, -inf
        %3193 = vmax.xlane.f32.xlu0 %v3192
        %v3194 = vpop.xlane.xlu0 %3193
        %v3195 = vsel %vm1554, %v3167, -inf
        %3196 = vmax.xlane.f32.xlu0 %v3195
        %v3197 = vpop.xlane.xlu0 %3196
        %v3198 = vsel %vm1554, %v3172, -inf
        %3199 = vmax.xlane.f32.xlu0 %v3198
        %v3200 = vpop.xlane.xlu0 %3199
        %v3201 = vsel %vm1554, %v3177, -inf
        %3202 = vmax.xlane.f32.xlu0 %v3201
        %v3203 = vpop.xlane.xlu0 %3202
        %v3204 = vsub.f32 %v3142, %v3182
        %v3205 = vsub.f32 %v3147, %v3185
        %v3206 = vsub.f32 %v3152, %v3188
        %v3207 = vsub.f32 %v3157, %v3191
        %v3208 = vsub.f32 %v3162, %v3194
        %v3209 = vsub.f32 %v3167, %v3197
        %v3210 = vsub.f32 %v3172, %v3200
        %v3211 = vsub.f32 %v3177, %v3203
        %v3212 = vmul.f32 %v3204, 1.442695
        %v3213 = vpow.pop %v3212
        %v3214 = vmul.f32 %v3205, 1.442695
        %v3215 = vpow.pop %v3214
        %v3216 = vmul.f32 %v3206, 1.442695
        %v3217 = vpow.pop %v3216
        %v3218 = vmul.f32 %v3207, 1.442695
        %v3219 = vpow.pop %v3218
        %v3220 = vmul.f32 %v3208, 1.442695
        %v3221 = vpow.pop %v3220
        %v3222 = vmul.f32 %v3209, 1.442695
        %v3223 = vpow.pop %v3222
        %v3224 = vmul.f32 %v3210, 1.442695
        %v3225 = vpow.pop %v3224
        %v3226 = vmul.f32 %v3211, 1.442695
        %v3227 = vpow.pop %v3226
        %v3228 = vsel %vm1554, %v3213, 0.0
        %3229 = vadd.xlane.f32.xlu0 %v3228
        %v3230 = vpop.xlane.xlu0 %3229
        %v3231 = vsel %vm1554, %v3215, 0.0
        %3232 = vadd.xlane.f32.xlu0 %v3231
        %v3233 = vpop.xlane.xlu0 %3232
        %v3234 = vsel %vm1554, %v3217, 0.0
        %3235 = vadd.xlane.f32.xlu0 %v3234
        %v3236 = vpop.xlane.xlu0 %3235
        %v3237 = vsel %vm1554, %v3219, 0.0
        %3238 = vadd.xlane.f32.xlu0 %v3237
        %v3239 = vpop.xlane.xlu0 %3238
        %v3240 = vsel %vm1554, %v3221, 0.0
        %3241 = vadd.xlane.f32.xlu0 %v3240
        %v3242 = vpop.xlane.xlu0 %3241
        %v3243 = vsel %vm1554, %v3223, 0.0
        %3244 = vadd.xlane.f32.xlu0 %v3243
        %v3245 = vpop.xlane.xlu0 %3244
        %v3246 = vsel %vm1554, %v3225, 0.0
        %3247 = vadd.xlane.f32.xlu0 %v3246
        %v3248 = vpop.xlane.xlu0 %3247
        %v3249 = vsel %vm1554, %v3227, 0.0
        %3250 = vadd.xlane.f32.xlu0 %v3249
        %v3251 = vpop.xlane.xlu0 %3250
        %v3252 = vrcp.pop %v3230
        %v3253 = vmul.f32 %v3213, %v3252
        %v3254 = vrcp.pop %v3233
        %v3255 = vmul.f32 %v3215, %v3254
        %v3256 = vrcp.pop %v3236
        %v3257 = vmul.f32 %v3217, %v3256
        %v3258 = vrcp.pop %v3239
        %v3259 = vmul.f32 %v3219, %v3258
        %v3260 = vrcp.pop %v3242
        %v3261 = vmul.f32 %v3221, %v3260
        %v3262 = vrcp.pop %v3245
        %v3263 = vmul.f32 %v3223, %v3262
        %v3264 = vrcp.pop %v3248
        %v3265 = vmul.f32 %v3225, %v3264
        %v3266 = vrcp.pop %v3251
        %v3267 = vmul.f32 %v3227, %v3266
        %3268 = vrot.lane.b32.xlu0 %v1334, 40
        %v3269 = vpop.permute.xlu0 %3268
        %3270 = vrot.lane.b32.xlu0 %v1339, 40
        %v3271 = vpop.permute.xlu0 %3270
        %3272 = vrot.lane.b32.xlu0 %v1344, 40
        %v3273 = vpop.permute.xlu0 %3272
        %3274 = vrot.lane.b32.xlu0 %v1349, 40
        %v3275 = vpop.permute.xlu0 %3274
        %3276 = vrot.lane.b32.xlu0 %v1354, 40
        %v3277 = vpop.permute.xlu0 %3276
        %3278 = vrot.lane.b32.xlu0 %v1359, 40
        %v3279 = vpop.permute.xlu0 %3278
        %3280 = vrot.lane.b32.xlu0 %v1364, 40
        %v3281 = vpop.permute.xlu0 %3280
        %3282 = vrot.lane.b32.xlu0 %v1369, 40
        %v3283 = vpop.permute.xlu0 %3282
        %v3293 = vsel %vm1554, %v3253, 0
        %v3296 = vsel %vm1554, %v3255, 0
        %v3299 = vsel %vm1554, %v3257, 0
        %v3302 = vsel %vm1554, %v3259, 0
        %v3305 = vsel %vm1554, %v3261, 0
        %v3308 = vsel %vm1554, %v3263, 0
        %v3311 = vsel %vm1554, %v3265, 0
        %v3314 = vsel %vm1554, %v3267, 0
        %3316 = vmatprep.subr.mxu0 0.0
        %3317 = vmatpush1.msra.mxu0 %v3269
        %3318 = vmatprep.subr.mxu0 0.0
        %3319 = vmatpush1.msra.mxu0 %v3271
        %3320 = vmatprep.subr.mxu0 0.0
        %3321 = vmatpush1.msra.mxu0 %v3273
        %3322 = vmatprep.subr.mxu0 0.0
        %3323 = vmatpush1.msra.mxu0 %v3275
        %3324 = vmatprep.subr.mxu0 0.0
        %3325 = vmatpush1.msra.mxu0 %v3277
        %3326 = vmatprep.subr.mxu0 0.0
        %3327 = vmatpush1.msra.mxu0 %v3279
        %3328 = vmatprep.subr.mxu0 0.0
        %3329 = vmatpush1.msra.mxu0 %v3281
        %3330 = vmatprep.subr.mxu0 0.0
        %3331 = vmatpush1.msra.mxu0 %v3283
        %3332 = vmatprep.subr.mxu0 0.0
        %3333 = vmatpush1.msra.mxu0 0.0
        %3334 = vmatprep.subr.mxu0 0.0
        %3335 = vmatpush1.msra.mxu0 0.0
        %3336 = vmatprep.subr.mxu0 0.0
        %3337 = vmatpush1.msra.mxu0 0.0
        %3338 = vmatprep.subr.mxu0 0.0
        %3339 = vmatpush1.msra.mxu0 0.0
        %3340 = vmatprep.subr.mxu0 0.0
        %3341 = vmatpush1.msra.mxu0 0.0
        %3342 = vmatprep.subr.mxu0 0.0
        %3343 = vmatpush1.msra.mxu0 0.0
        %3344 = vmatprep.subr.mxu0 0.0
        %3345 = vmatpush1.msra.mxu0 0.0
        %3346 = vmatprep.subr.mxu0 0.0
        %3347 = vmatpush1.msra.mxu0 0.0
        %3348 = vmatprep.subr.mxu0 0.0
        %3349 = vmatpush1.msra.mxu0 0.0
        %3350 = vmatprep.subr.mxu0 0.0
        %3351 = vmatpush1.msra.mxu0 0.0
        %3352 = vmatprep.subr.mxu0 0.0
        %3353 = vmatpush1.msra.mxu0 0.0
        %3354 = vmatprep.subr.mxu0 0.0
        %3355 = vmatpush1.msra.mxu0 0.0
        %3356 = vmatprep.subr.mxu0 0.0
        %3357 = vmatpush1.msra.mxu0 0.0
        %3358 = vmatprep.subr.mxu0 0.0
        %3359 = vmatpush1.msra.mxu0 0.0
        %3360 = vmatprep.subr.mxu0 0.0
        %3361 = vmatpush1.msra.mxu0 0.0
        %3362 = vmatprep.subr.mxu0 0.0
        %3363 = vmatpush1.msra.mxu0 0.0
        %3364 = vmatprep.subr.mxu0 0.0
        %3365 = vmatpush1.msra.mxu0 0.0
        %3366 = vmatprep.subr.mxu0 0.0
        %3367 = vmatpush1.msra.mxu0 0.0
        %3368 = vmatprep.subr.mxu0 0.0
        %3369 = vmatpush1.msra.mxu0 0.0
        %3370 = vmatprep.subr.mxu0 0.0
        %3371 = vmatpush1.msra.mxu0 0.0
        %3372 = vmatprep.subr.mxu0 0.0
        %3373 = vmatpush1.msra.mxu0 0.0
        %3374 = vmatprep.subr.mxu0 0.0
        %3375 = vmatpush1.msra.mxu0 0.0
        %3376 = vmatprep.subr.mxu0 0.0
        %3377 = vmatpush1.msra.mxu0 0.0
        %3378 = vmatprep.subr.mxu0 0.0
        %3379 = vmatpush1.msra.mxu0 0.0
        %3380 = vmatprep.mubr.f32.mxu0 0.0
        %3381 = vmatmul.mubr.f32.gmra.mrb[0].mxu0 %v3293
        %v3382 = vpop.f32.mrb[0].mxu0
        %v3383 = vadd.f32 0.0, %v3382
        %v3384 = vpop.f32.mrb[0].mxu0
        %3385 = vmatprep.mubr.f32.mxu0 0.0
        %3386 = vmatmul.mubr.f32.gmra.mrb[0].mxu0 %v3296
        %v3387 = vpop.f32.mrb[0].mxu0
        %v3388 = vadd.f32 0.0, %v3387
        %v3389 = vpop.f32.mrb[0].mxu0
        %3390 = vmatprep.mubr.f32.mxu0 0.0
        %3391 = vmatmul.mubr.f32.gmra.mrb[0].mxu0 %v3299
        %v3392 = vpop.f32.mrb[0].mxu0
        %v3393 = vadd.f32 0.0, %v3392
        %v3394 = vpop.f32.mrb[0].mxu0
        %3395 = vmatprep.mubr.f32.mxu0 0.0
        %3396 = vmatmul.mubr.f32.gmra.mrb[0].mxu0 %v3302
        %v3397 = vpop.f32.mrb[0].mxu0
        %v3398 = vadd.f32 0.0, %v3397
        %v3399 = vpop.f32.mrb[0].mxu0
        %3400 = vmatprep.mubr.f32.mxu0 0.0
        %3401 = vmatmul.mubr.f32.gmra.mrb[0].mxu0 %v3305
        %v3402 = vpop.f32.mrb[0].mxu0
        %v3403 = vadd.f32 0.0, %v3402
        %v3404 = vpop.f32.mrb[0].mxu0
        %3405 = vmatprep.mubr.f32.mxu0 0.0
        %3406 = vmatmul.mubr.f32.gmra.mrb[0].mxu0 %v3308
        %v3407 = vpop.f32.mrb[0].mxu0
        %v3408 = vadd.f32 0.0, %v3407
        %v3409 = vpop.f32.mrb[0].mxu0
        %3410 = vmatprep.mubr.f32.mxu0 0.0
        %3411 = vmatmul.mubr.f32.gmra.mrb[0].mxu0 %v3311
        %v3412 = vpop.f32.mrb[0].mxu0
        %v3413 = vadd.f32 0.0, %v3412
        %v3414 = vpop.f32.mrb[0].mxu0
        %3415 = vmatprep.mubr.f32.mxu0 0.0
        %3416 = vmatmul.mubr.f32.gmra.mrb[0].mxu0 %v3314
        %v3417 = vpop.f32.mrb[0].mxu0
        %v3418 = vadd.f32 0.0, %v3417
        %v3419 = vpop.f32.mrb[0].mxu0
        %3420 = vdwg.mxu0
        %v3422 = vsel %vm1408, %v3383, 0
        %v3425 = vsel %vm1408, %v3388, 0
        %v3428 = vsel %vm1408, %v3393, 0
        %v3431 = vsel %vm1408, %v3398, 0
        %v3434 = vsel %vm1408, %v3403, 0
        %v3437 = vsel %vm1408, %v3408, 0
        %v3440 = vsel %vm1408, %v3413, 0
        %v3443 = vsel %vm1408, %v3418, 0
        %3445 = vmatprep.subr.mxu0 0.0
        %3446 = vmatpush1.msra.mxu0 %v1375
        %3447 = vmatprep.subr.mxu0 0.0
        %3448 = vmatpush1.msra.mxu0 0.0
        %3449 = vmatprep.subr.mxu0 0.0
        %3450 = vmatpush1.msra.mxu0 0.0
        %3451 = vmatprep.subr.mxu0 0.0
        %3452 = vmatpush1.msra.mxu0 0.0
        %3453 = vmatprep.subr.mxu0 0.0
        %3454 = vmatpush1.msra.mxu0 0.0
        %3455 = vmatprep.subr.mxu0 0.0
        %3456 = vmatpush1.msra.mxu0 0.0
        %3457 = vmatprep.subr.mxu0 0.0
        %3458 = vmatpush1.msra.mxu0 0.0
        %3459 = vmatprep.subr.mxu0 0.0
        %3460 = vmatpush1.msra.mxu0 0.0
        %3461 = vmatprep.subr.mxu0 0.0
        %3462 = vmatpush1.msra.mxu0 0.0
        %3463 = vmatprep.subr.mxu0 0.0
        %3464 = vmatpush1.msra.mxu0 0.0
        %3465 = vmatprep.subr.mxu0 0.0
        %3466 = vmatpush1.msra.mxu0 0.0
        %3467 = vmatprep.subr.mxu0 0.0
        %3468 = vmatpush1.msra.mxu0 0.0
        %3469 = vmatprep.subr.mxu0 0.0
        %3470 = vmatpush1.msra.mxu0 0.0
        %3471 = vmatprep.subr.mxu0 0.0
        %3472 = vmatpush1.msra.mxu0 0.0
        %3473 = vmatprep.subr.mxu0 0.0
        %3474 = vmatpush1.msra.mxu0 0.0
        %3475 = vmatprep.subr.mxu0 0.0
        %3476 = vmatpush1.msra.mxu0 0.0
        %3477 = vmatprep.subr.mxu0 0.0
        %3478 = vmatpush1.msra.mxu0 0.0
        %3479 = vmatprep.subr.mxu0 0.0
        %3480 = vmatpush1.msra.mxu0 0.0
        %3481 = vmatprep.subr.mxu0 0.0
        %3482 = vmatpush1.msra.mxu0 0.0
        %3483 = vmatprep.subr.mxu0 0.0
        %3484 = vmatpush1.msra.mxu0 0.0
        %3485 = vmatprep.subr.mxu0 0.0
        %3486 = vmatpush1.msra.mxu0 0.0
        %3487 = vmatprep.subr.mxu0 0.0
        %3488 = vmatpush1.msra.mxu0 0.0
        %3489 = vmatprep.subr.mxu0 0.0
        %3490 = vmatpush1.msra.mxu0 0.0
        %3491 = vmatprep.subr.mxu0 0.0
        %3492 = vmatpush1.msra.mxu0 0.0
        %3493 = vmatprep.subr.mxu0 0.0
        %3494 = vmatpush1.msra.mxu0 0.0
        %3495 = vmatprep.subr.mxu0 0.0
        %3496 = vmatpush1.msra.mxu0 0.0
        %3497 = vmatprep.subr.mxu0 0.0
        %3498 = vmatpush1.msra.mxu0 0.0
        %3499 = vmatprep.subr.mxu0 0.0
        %3500 = vmatpush1.msra.mxu0 0.0
        %3501 = vmatprep.subr.mxu0 0.0
        %3502 = vmatpush1.msra.mxu0 0.0
        %3503 = vmatprep.subr.mxu0 0.0
        %3504 = vmatpush1.msra.mxu0 0.0
        %3505 = vmatprep.subr.mxu0 0.0
        %3506 = vmatpush1.msra.mxu0 0.0
        %3507 = vmatprep.subr.mxu0 0.0
        %3508 = vmatpush1.msra.mxu0 0.0
        %3509 = vmatprep.mubr.f32.mxu0 0.0
        %3510 = vmatmul.mubr.f32.gmra.mrb[0].mxu0 %v3422
        %v3511 = vpop.f32.mrb[0].mxu0
        %v3512 = vadd.f32 0.0, %v3511
        %v3513 = vpop.f32.mrb[0].mxu0
        %3514 = vmatprep.mubr.f32.mxu0 0.0
        %3515 = vmatmul.mubr.f32.gmra.mrb[0].mxu0 %v3425
        %v3516 = vpop.f32.mrb[0].mxu0
        %v3517 = vadd.f32 0.0, %v3516
        %v3518 = vpop.f32.mrb[0].mxu0
        %3519 = vmatprep.mubr.f32.mxu0 0.0
        %3520 = vmatmul.mubr.f32.gmra.mrb[0].mxu0 %v3428
        %v3521 = vpop.f32.mrb[0].mxu0
        %v3522 = vadd.f32 0.0, %v3521
        %v3523 = vpop.f32.mrb[0].mxu0
        %3524 = vmatprep.mubr.f32.mxu0 0.0
        %3525 = vmatmul.mubr.f32.gmra.mrb[0].mxu0 %v3431
        %v3526 = vpop.f32.mrb[0].mxu0
        %v3527 = vadd.f32 0.0, %v3526
        %v3528 = vpop.f32.mrb[0].mxu0
        %3529 = vmatprep.mubr.f32.mxu0 0.0
        %3530 = vmatmul.mubr.f32.gmra.mrb[0].mxu0 %v3434
        %v3531 = vpop.f32.mrb[0].mxu0
        %v3532 = vadd.f32 0.0, %v3531
        %v3533 = vpop.f32.mrb[0].mxu0
        %3534 = vmatprep.mubr.f32.mxu0 0.0
        %3535 = vmatmul.mubr.f32.gmra.mrb[0].mxu0 %v3437
        %v3536 = vpop.f32.mrb[0].mxu0
        %v3537 = vadd.f32 0.0, %v3536
        %v3538 = vpop.f32.mrb[0].mxu0
        %3539 = vmatprep.mubr.f32.mxu0 0.0
        %3540 = vmatmul.mubr.f32.gmra.mrb[0].mxu0 %v3440
        %v3541 = vpop.f32.mrb[0].mxu0
        %v3542 = vadd.f32 0.0, %v3541
        %v3543 = vpop.f32.mrb[0].mxu0
        %3544 = vmatprep.mubr.f32.mxu0 0.0
        %3545 = vmatmul.mubr.f32.gmra.mrb[0].mxu0 %v3443
        %v3546 = vpop.f32.mrb[0].mxu0
        %v3547 = vadd.f32 0.0, %v3546
        %v3548 = vpop.f32.mrb[0].mxu0
        %3549 = vdwg.mxu0
        %v3550 = vadd.f32 %v3003, %v3512
        %v3551 = vadd.f32 %v3004, %v3517
        %v3552 = vadd.f32 %v3005, %v3522
        %v3553 = vadd.f32 %v3006, %v3527
        %v3554 = vadd.f32 %v3007, %v3532
        %v3555 = vadd.f32 %v3008, %v3537
        %v3556 = vadd.f32 %v3009, %v3542
        %v3557 = vadd.f32 %v3010, %v3547
        %v3558 = vadd.f32 %v1088, %v3550
        %v3559 = vadd.f32 %v1089, %v3551
        %v3560 = vadd.f32 %v1090, %v3552
        %v3561 = vadd.f32 %v1091, %v3553
        %v3562 = vadd.f32 %v1092, %v3554
        %v3563 = vadd.f32 %v1093, %v3555
        %v3564 = vadd.f32 %v1094, %v3556
        %v3565 = vadd.f32 %v1095, %v3557
        %v3566 = vld [vmem:[%s890] sm:$0x1]
        %v3568 = vlaneseq
        %v3569 = vshrl.u32 %v3568, 7
        %v3570 = vsub.s32 0, %v3569
        %v3571 = vrot.slane %v3566, %v3570
        %v3573 = vadd.f32 %v3558, %v3571
        %v3574 = vadd.f32 %v3559, %v3571
        %v3575 = vadd.f32 %v3560, %v3571
        %v3576 = vadd.f32 %v3561, %v3571
        %v3577 = vadd.f32 %v3562, %v3571
        %v3578 = vadd.f32 %v3563, %v3571
        %v3579 = vadd.f32 %v3564, %v3571
        %v3580 = vadd.f32 %v3565, %v3571
        %v3581 = vld [vmem:[%s893] sm:$0x1]
        %v3582 = vld [vmem:[%s896] sm:$0x1]
        %v3583 = vsel %vm1098, %v3573, 0.0
        %3584 = vadd.xlane.f32.xlu0 %v3583
        %v3585 = vpop.xlane.xlu0 %3584
        %v3586 = vsel %vm1098, %v3574, 0.0
        %3587 = vadd.xlane.f32.xlu0 %v3586
        %v3588 = vpop.xlane.xlu0 %3587
        %v3589 = vsel %vm1098, %v3575, 0.0
        %3590 = vadd.xlane.f32.xlu0 %v3589
        %v3591 = vpop.xlane.xlu0 %3590
        %v3592 = vsel %vm1098, %v3576, 0.0
        %3593 = vadd.xlane.f32.xlu0 %v3592
        %v3594 = vpop.xlane.xlu0 %3593
        %v3595 = vsel %vm1098, %v3577, 0.0
        %3596 = vadd.xlane.f32.xlu0 %v3595
        %v3597 = vpop.xlane.xlu0 %3596
        %v3598 = vsel %vm1098, %v3578, 0.0
        %3599 = vadd.xlane.f32.xlu0 %v3598
        %v3600 = vpop.xlane.xlu0 %3599
        %v3601 = vsel %vm1098, %v3579, 0.0
        %3602 = vadd.xlane.f32.xlu0 %v3601
        %v3603 = vpop.xlane.xlu0 %3602
        %v3604 = vsel %vm1098, %v3580, 0.0
        %3605 = vadd.xlane.f32.xlu0 %v3604
        %v3606 = vpop.xlane.xlu0 %3605
        %v3607 = vmul.f32 %v3585, %v1123
        %v3608 = vmul.f32 %v3588, %v1123
        %v3609 = vmul.f32 %v3591, %v1123
        %v3610 = vmul.f32 %v3594, %v1123
        %v3611 = vmul.f32 %v3597, %v1123
        %v3612 = vmul.f32 %v3600, %v1123
        %v3613 = vmul.f32 %v3603, %v1123
        %v3614 = vmul.f32 %v3606, %v1123
        %v3615 = vsub.f32 %v3573, %v3607
        %v3616 = vsub.f32 %v3574, %v3608
        %v3617 = vsub.f32 %v3575, %v3609
        %v3618 = vsub.f32 %v3576, %v3610
        %v3619 = vsub.f32 %v3577, %v3611
        %v3620 = vsub.f32 %v3578, %v3612
        %v3621 = vsub.f32 %v3579, %v3613
        %v3622 = vsub.f32 %v3580, %v3614
        %v3623 = vmul.f32 %v3615, %v3615
        %v3624 = vmul.f32 %v3616, %v3616
        %v3625 = vmul.f32 %v3617, %v3617
        %v3626 = vmul.f32 %v3618, %v3618
        %v3627 = vmul.f32 %v3619, %v3619
        %v3628 = vmul.f32 %v3620, %v3620
        %v3629 = vmul.f32 %v3621, %v3621
        %v3630 = vmul.f32 %v3622, %v3622
        %v3631 = vsel %vm1098, %v3623, 0.0
        %3632 = vadd.xlane.f32.xlu0 %v3631
        %v3633 = vpop.xlane.xlu0 %3632
        %v3634 = vsel %vm1098, %v3624, 0.0
        %3635 = vadd.xlane.f32.xlu0 %v3634
        %v3636 = vpop.xlane.xlu0 %3635
        %v3637 = vsel %vm1098, %v3625, 0.0
        %3638 = vadd.xlane.f32.xlu0 %v3637
        %v3639 = vpop.xlane.xlu0 %3638
        %v3640 = vsel %vm1098, %v3626, 0.0
        %3641 = vadd.xlane.f32.xlu0 %v3640
        %v3642 = vpop.xlane.xlu0 %3641
        %v3643 = vsel %vm1098, %v3627, 0.0
        %3644 = vadd.xlane.f32.xlu0 %v3643
        %v3645 = vpop.xlane.xlu0 %3644
        %v3646 = vsel %vm1098, %v3628, 0.0
        %3647 = vadd.xlane.f32.xlu0 %v3646
        %v3648 = vpop.xlane.xlu0 %3647
        %v3649 = vsel %vm1098, %v3629, 0.0
        %3650 = vadd.xlane.f32.xlu0 %v3649
        %v3651 = vpop.xlane.xlu0 %3650
        %v3652 = vsel %vm1098, %v3630, 0.0
        %3653 = vadd.xlane.f32.xlu0 %v3652
        %v3654 = vpop.xlane.xlu0 %3653
        %v3655 = vmul.f32 %v3633, %v1123
        %v3656 = vmul.f32 %v3636, %v1123
        %v3657 = vmul.f32 %v3639, %v1123
        %v3658 = vmul.f32 %v3642, %v1123
        %v3659 = vmul.f32 %v3645, %v1123
        %v3660 = vmul.f32 %v3648, %v1123
        %v3661 = vmul.f32 %v3651, %v1123
        %v3662 = vmul.f32 %v3654, %v1123
        %v3663 = vadd.f32 %v3655, 1e-06
        %v3664 = vadd.f32 %v3656, 1e-06
        %v3665 = vadd.f32 %v3657, 1e-06
        %v3666 = vadd.f32 %v3658, 1e-06
        %v3667 = vadd.f32 %v3659, 1e-06
        %v3668 = vadd.f32 %v3660, 1e-06
        %v3669 = vadd.f32 %v3661, 1e-06
        %v3670 = vadd.f32 %v3662, 1e-06
        %v3671 = vrsqrt.pop %v3663
        %v3672 = vrsqrt.pop %v3664
        %v3673 = vrsqrt.pop %v3665
        %v3674 = vrsqrt.pop %v3666
        %v3675 = vrsqrt.pop %v3667
        %v3676 = vrsqrt.pop %v3668
        %v3677 = vrsqrt.pop %v3669
        %v3678 = vrsqrt.pop %v3670
        %v3679 = vmul.f32 %v3615, %v3671
        %v3680 = vmul.f32 %v3616, %v3672
        %v3681 = vmul.f32 %v3617, %v3673
        %v3682 = vmul.f32 %v3618, %v3674
        %v3683 = vmul.f32 %v3619, %v3675
        %v3684 = vmul.f32 %v3620, %v3676
        %v3685 = vmul.f32 %v3621, %v3677
        %v3686 = vmul.f32 %v3622, %v3678
        %v3688 = vlaneseq
        %v3689 = vshrl.u32 %v3688, 7
        %v3690 = vsub.s32 0, %v3689
        %v3691 = vrot.slane %v3581, %v3690
        %v3693 = vmul.f32 %v3679, %v3691
        %v3694 = vmul.f32 %v3680, %v3691
        %v3695 = vmul.f32 %v3681, %v3691
        %v3696 = vmul.f32 %v3682, %v3691
        %v3697 = vmul.f32 %v3683, %v3691
        %v3698 = vmul.f32 %v3684, %v3691
        %v3699 = vmul.f32 %v3685, %v3691
        %v3700 = vmul.f32 %v3686, %v3691
        %v3702 = vlaneseq
        %v3703 = vshrl.u32 %v3702, 7
        %v3704 = vsub.s32 0, %v3703
        %v3705 = vrot.slane %v3582, %v3704
        %v3707 = vadd.f32 %v3693, %v3705
        %v3708 = vadd.f32 %v3694, %v3705
        %v3709 = vadd.f32 %v3695, %v3705
        %v3710 = vadd.f32 %v3696, %v3705
        %v3711 = vadd.f32 %v3697, %v3705
        %v3712 = vadd.f32 %v3698, %v3705
        %v3713 = vadd.f32 %v3699, %v3705
        %v3714 = vadd.f32 %v3700, %v3705
        %v3715 = vld [vmem:[%s901] sm:$0xff]
        %v3716 = vld [vmem:[%s901 + $0x8] sm:$0xff]
        %v3717 = vld [vmem:[%s901 + $0x10] sm:$0xff]
        %v3718 = vld [vmem:[%s901 + $0x18] sm:$0xff]
        %v3719 = vld [vmem:[%s904] sm:$0x1]
        %v3721 = vlaneseq
        %v3722 = vshrl.u32 %v3721, 7
        %v3723 = vsub.s32 0, %v3722
        %v3724 = vrot.slane %v3719, %v3723
        %v3727 = vsel %vm1098, %v3707, 0
        %v3730 = vsel %vm1098, %v3708, 0
        %v3733 = vsel %vm1098, %v3709, 0
        %v3736 = vsel %vm1098, %v3710, 0
        %v3739 = vsel %vm1098, %v3711, 0
        %v3742 = vsel %vm1098, %v3712, 0
        %v3745 = vsel %vm1098, %v3713, 0
        %v3748 = vsel %vm1098, %v3714, 0
        %3750 = vmatprep.subr.mxu0 0.0
        %3751 = vmatpush1.msra.mxu0 %v3715
        %3752 = vmatprep.subr.mxu0 0.0
        %3753 = vmatpush1.msra.mxu0 %v3716
        %3754 = vmatprep.subr.mxu0 0.0
        %3755 = vmatpush1.msra.mxu0 %v3717
        %3756 = vmatprep.subr.mxu0 0.0
        %3757 = vmatpush1.msra.mxu0 %v3718
        %3758 = vmatprep.subr.mxu0 0.0
        %3759 = vmatpush1.msra.mxu0 0.0
        %3760 = vmatprep.subr.mxu0 0.0
        %3761 = vmatpush1.msra.mxu0 0.0
        %3762 = vmatprep.subr.mxu0 0.0
        %3763 = vmatpush1.msra.mxu0 0.0
        %3764 = vmatprep.subr.mxu0 0.0
        %3765 = vmatpush1.msra.mxu0 0.0
        %3766 = vmatprep.subr.mxu0 0.0
        %3767 = vmatpush1.msra.mxu0 0.0
        %3768 = vmatprep.subr.mxu0 0.0
        %3769 = vmatpush1.msra.mxu0 0.0
        %3770 = vmatprep.subr.mxu0 0.0
        %3771 = vmatpush1.msra.mxu0 0.0
        %3772 = vmatprep.subr.mxu0 0.0
        %3773 = vmatpush1.msra.mxu0 0.0
        %3774 = vmatprep.subr.mxu0 0.0
        %3775 = vmatpush1.msra.mxu0 0.0
        %3776 = vmatprep.subr.mxu0 0.0
        %3777 = vmatpush1.msra.mxu0 0.0
        %3778 = vmatprep.subr.mxu0 0.0
        %3779 = vmatpush1.msra.mxu0 0.0
        %3780 = vmatprep.subr.mxu0 0.0
        %3781 = vmatpush1.msra.mxu0 0.0
        %3782 = vmatprep.subr.mxu0 0.0
        %3783 = vmatpush1.msra.mxu0 0.0
        %3784 = vmatprep.subr.mxu0 0.0
        %3785 = vmatpush1.msra.mxu0 0.0
        %3786 = vmatprep.subr.mxu0 0.0
        %3787 = vmatpush1.msra.mxu0 0.0
        %3788 = vmatprep.subr.mxu0 0.0
        %3789 = vmatpush1.msra.mxu0 0.0
        %3790 = vmatprep.subr.mxu0 0.0
        %3791 = vmatpush1.msra.mxu0 0.0
        %3792 = vmatprep.subr.mxu0 0.0
        %3793 = vmatpush1.msra.mxu0 0.0
        %3794 = vmatprep.subr.mxu0 0.0
        %3795 = vmatpush1.msra.mxu0 0.0
        %3796 = vmatprep.subr.mxu0 0.0
        %3797 = vmatpush1.msra.mxu0 0.0
        %3798 = vmatprep.subr.mxu0 0.0
        %3799 = vmatpush1.msra.mxu0 0.0
        %3800 = vmatprep.subr.mxu0 0.0
        %3801 = vmatpush1.msra.mxu0 0.0
        %3802 = vmatprep.subr.mxu0 0.0
        %3803 = vmatpush1.msra.mxu0 0.0
        %3804 = vmatprep.subr.mxu0 0.0
        %3805 = vmatpush1.msra.mxu0 0.0
        %3806 = vmatprep.subr.mxu0 0.0
        %3807 = vmatpush1.msra.mxu0 0.0
        %3808 = vmatprep.subr.mxu0 0.0
        %3809 = vmatpush1.msra.mxu0 0.0
        %3810 = vmatprep.subr.mxu0 0.0
        %3811 = vmatpush1.msra.mxu0 0.0
        %3812 = vmatprep.subr.mxu0 0.0
        %3813 = vmatpush1.msra.mxu0 0.0
        %3814 = vmatprep.mubr.f32.mxu0 0.0
        %3815 = vmatmul.mubr.f32.gmra.mrb[0].mxu0 %v3727
        %v3816 = vpop.f32.mrb[0].mxu0
        %v3817 = vadd.f32 %v3724, %v3816
        %v3818 = vpop.f32.mrb[0].mxu0
        %3819 = vmatprep.mubr.f32.mxu0 0.0
        %3820 = vmatmul.mubr.f32.gmra.mrb[0].mxu0 %v3730
        %v3821 = vpop.f32.mrb[0].mxu0
        %v3822 = vadd.f32 %v3724, %v3821
        %v3823 = vpop.f32.mrb[0].mxu0
        %3824 = vmatprep.mubr.f32.mxu0 0.0
        %3825 = vmatmul.mubr.f32.gmra.mrb[0].mxu0 %v3733
        %v3826 = vpop.f32.mrb[0].mxu0
        %v3827 = vadd.f32 %v3724, %v3826
        %v3828 = vpop.f32.mrb[0].mxu0
        %3829 = vmatprep.mubr.f32.mxu0 0.0
        %3830 = vmatmul.mubr.f32.gmra.mrb[0].mxu0 %v3736
        %v3831 = vpop.f32.mrb[0].mxu0
        %v3832 = vadd.f32 %v3724, %v3831
        %v3833 = vpop.f32.mrb[0].mxu0
        %3834 = vmatprep.mubr.f32.mxu0 0.0
        %3835 = vmatmul.mubr.f32.gmra.mrb[0].mxu0 %v3739
        %v3836 = vpop.f32.mrb[0].mxu0
        %v3837 = vadd.f32 %v3724, %v3836
        %v3838 = vpop.f32.mrb[0].mxu0
        %3839 = vmatprep.mubr.f32.mxu0 0.0
        %3840 = vmatmul.mubr.f32.gmra.mrb[0].mxu0 %v3742
        %v3841 = vpop.f32.mrb[0].mxu0
        %v3842 = vadd.f32 %v3724, %v3841
        %v3843 = vpop.f32.mrb[0].mxu0
        %3844 = vmatprep.mubr.f32.mxu0 0.0
        %3845 = vmatmul.mubr.f32.gmra.mrb[0].mxu0 %v3745
        %v3846 = vpop.f32.mrb[0].mxu0
        %v3847 = vadd.f32 %v3724, %v3846
        %v3848 = vpop.f32.mrb[0].mxu0
        %3849 = vmatprep.mubr.f32.mxu0 0.0
        %3850 = vmatmul.mubr.f32.gmra.mrb[0].mxu0 %v3748
        %v3851 = vpop.f32.mrb[0].mxu0
        %v3852 = vadd.f32 %v3724, %v3851
        %v3853 = vpop.f32.mrb[0].mxu0
        %3854 = vdwg.mxu0
        %v3855 = vmul.f32 %v3817, 0.5
        %v3856 = vmul.f32 %v3822, 0.5
        %v3857 = vmul.f32 %v3827, 0.5
        %v3858 = vmul.f32 %v3832, 0.5
        %v3859 = vmul.f32 %v3837, 0.5
        %v3860 = vmul.f32 %v3842, 0.5
        %v3861 = vmul.f32 %v3847, 0.5
        %v3862 = vmul.f32 %v3852, 0.5
        %v3863 = vmul.f32 %v3817, 0.70710677
        %v3864 = vmul.f32 %v3822, 0.70710677
        %v3865 = vmul.f32 %v3827, 0.70710677
        %v3866 = vmul.f32 %v3832, 0.70710677
        %v3867 = vmul.f32 %v3837, 0.70710677
        %v3868 = vmul.f32 %v3842, 0.70710677
        %v3869 = vmul.f32 %v3847, 0.70710677
        %v3870 = vmul.f32 %v3852, 0.70710677
        %v3871 = verf.f32.pop %v3863
        %v3872 = verf.f32.pop %v3864
        %v3873 = verf.f32.pop %v3865
        %v3874 = verf.f32.pop %v3866
        %v3875 = verf.f32.pop %v3867
        %v3876 = verf.f32.pop %v3868
        %v3877 = verf.f32.pop %v3869
        %v3878 = verf.f32.pop %v3870
        %v3879 = vadd.f32 %v3871, 1.0
        %v3880 = vadd.f32 %v3872, 1.0
        %v3881 = vadd.f32 %v3873, 1.0
        %v3882 = vadd.f32 %v3874, 1.0
        %v3883 = vadd.f32 %v3875, 1.0
        %v3884 = vadd.f32 %v3876, 1.0
        %v3885 = vadd.f32 %v3877, 1.0
        %v3886 = vadd.f32 %v3878, 1.0
        %v3887 = vmul.f32 %v3855, %v3879
        %v3888 = vmul.f32 %v3856, %v3880
        %v3889 = vmul.f32 %v3857, %v3881
        %v3890 = vmul.f32 %v3858, %v3882
        %v3891 = vmul.f32 %v3859, %v3883
        %v3892 = vmul.f32 %v3860, %v3884
        %v3893 = vmul.f32 %v3861, %v3885
        %v3894 = vmul.f32 %v3862, %v3886
        %v3895 = vld [vmem:[%s909] sm:$0xff]
        %v3896 = vld [vmem:[%s909 + $0x8] sm:$0xff]
        %v3897 = vld [vmem:[%s909 + $0x10] sm:$0xff]
        %v3898 = vld [vmem:[%s909 + $0x18] sm:$0xff]
        %v3899 = vld [vmem:[%s909 + $0x20] sm:$0xff]
        %v3900 = vld [vmem:[%s909 + $0x28] sm:$0xff]
        %v3901 = vld [vmem:[%s909 + $0x30] sm:$0xff]
        %v3902 = vld [vmem:[%s909 + $0x38] sm:$0xff]
        %v3903 = vld [vmem:[%s909 + $0x40] sm:$0xff]
        %v3904 = vld [vmem:[%s909 + $0x48] sm:$0xff]
        %v3905 = vld [vmem:[%s909 + $0x50] sm:$0xff]
        %v3906 = vld [vmem:[%s909 + $0x58] sm:$0xff]
        %v3907 = vld [vmem:[%s909 + $0x60] sm:$0xff]
        %v3908 = vld [vmem:[%s909 + $0x68] sm:$0xff]
        %v3909 = vld [vmem:[%s909 + $0x70] sm:$0xff]
        %v3910 = vld [vmem:[%s909 + $0x78] sm:$0xff]
        %3911 = vmatprep.subr.mxu0 0.0
        %3912 = vmatpush1.msra.mxu0 %v3895
        %3913 = vmatprep.subr.mxu0 0.0
        %3914 = vmatpush1.msra.mxu0 %v3896
        %3915 = vmatprep.subr.mxu0 0.0
        %3916 = vmatpush1.msra.mxu0 %v3897
        %3917 = vmatprep.subr.mxu0 0.0
        %3918 = vmatpush1.msra.mxu0 %v3898
        %3919 = vmatprep.subr.mxu0 0.0
        %3920 = vmatpush1.msra.mxu0 %v3899
        %3921 = vmatprep.subr.mxu0 0.0
        %3922 = vmatpush1.msra.mxu0 %v3900
        %3923 = vmatprep.subr.mxu0 0.0
        %3924 = vmatpush1.msra.mxu0 %v3901
        %3925 = vmatprep.subr.mxu0 0.0
        %3926 = vmatpush1.msra.mxu0 %v3902
        %3927 = vmatprep.subr.mxu0 0.0
        %3928 = vmatpush1.msra.mxu0 %v3903
        %3929 = vmatprep.subr.mxu0 0.0
        %3930 = vmatpush1.msra.mxu0 %v3904
        %3931 = vmatprep.subr.mxu0 0.0
        %3932 = vmatpush1.msra.mxu0 %v3905
        %3933 = vmatprep.subr.mxu0 0.0
        %3934 = vmatpush1.msra.mxu0 %v3906
        %3935 = vmatprep.subr.mxu0 0.0
        %3936 = vmatpush1.msra.mxu0 %v3907
        %3937 = vmatprep.subr.mxu0 0.0
        %3938 = vmatpush1.msra.mxu0 %v3908
        %3939 = vmatprep.subr.mxu0 0.0
        %3940 = vmatpush1.msra.mxu0 %v3909
        %3941 = vmatprep.subr.mxu0 0.0
        %3942 = vmatpush1.msra.mxu0 %v3910
        %3943 = vmatprep.subr.mxu0 0.0
        %3944 = vmatpush1.msra.mxu0 0.0
        %3945 = vmatprep.subr.mxu0 0.0
        %3946 = vmatpush1.msra.mxu0 0.0
        %3947 = vmatprep.subr.mxu0 0.0
        %3948 = vmatpush1.msra.mxu0 0.0
        %3949 = vmatprep.subr.mxu0 0.0
        %3950 = vmatpush1.msra.mxu0 0.0
        %3951 = vmatprep.subr.mxu0 0.0
        %3952 = vmatpush1.msra.mxu0 0.0
        %3953 = vmatprep.subr.mxu0 0.0
        %3954 = vmatpush1.msra.mxu0 0.0
        %3955 = vmatprep.subr.mxu0 0.0
        %3956 = vmatpush1.msra.mxu0 0.0
        %3957 = vmatprep.subr.mxu0 0.0
        %3958 = vmatpush1.msra.mxu0 0.0
        %3959 = vmatprep.subr.mxu0 0.0
        %3960 = vmatpush1.msra.mxu0 0.0
        %3961 = vmatprep.subr.mxu0 0.0
        %3962 = vmatpush1.msra.mxu0 0.0
        %3963 = vmatprep.subr.mxu0 0.0
        %3964 = vmatpush1.msra.mxu0 0.0
        %3965 = vmatprep.subr.mxu0 0.0
        %3966 = vmatpush1.msra.mxu0 0.0
        %3967 = vmatprep.subr.mxu0 0.0
        %3968 = vmatpush1.msra.mxu0 0.0
        %3969 = vmatprep.subr.mxu0 0.0
        %3970 = vmatpush1.msra.mxu0 0.0
        %3971 = vmatprep.subr.mxu0 0.0
        %3972 = vmatpush1.msra.mxu0 0.0
        %3973 = vmatprep.subr.mxu0 0.0
        %3974 = vmatpush1.msra.mxu0 0.0
        %3975 = vmatprep.mubr.f32.mxu0 0.0
        %3976 = vmatmul.mubr.f32.gmra.mrb[0].mxu0 %v3887
        %v3977 = vpop.f32.mrb[0].mxu0
        %v3978 = vadd.f32 0.0, %v3977
        %v3979 = vpop.f32.mrb[0].mxu0
        %3980 = vmatprep.mubr.f32.mxu0 0.0
        %3981 = vmatmul.mubr.f32.gmra.mrb[0].mxu0 %v3888
        %v3982 = vpop.f32.mrb[0].mxu0
        %v3983 = vadd.f32 0.0, %v3982
        %v3984 = vpop.f32.mrb[0].mxu0
        %3985 = vmatprep.mubr.f32.mxu0 0.0
        %3986 = vmatmul.mubr.f32.gmra.mrb[0].mxu0 %v3889
        %v3987 = vpop.f32.mrb[0].mxu0
        %v3988 = vadd.f32 0.0, %v3987
        %v3989 = vpop.f32.mrb[0].mxu0
        %3990 = vmatprep.mubr.f32.mxu0 0.0
        %3991 = vmatmul.mubr.f32.gmra.mrb[0].mxu0 %v3890
        %v3992 = vpop.f32.mrb[0].mxu0
        %v3993 = vadd.f32 0.0, %v3992
        %v3994 = vpop.f32.mrb[0].mxu0
        %3995 = vmatprep.mubr.f32.mxu0 0.0
        %3996 = vmatmul.mubr.f32.gmra.mrb[0].mxu0 %v3891
        %v3997 = vpop.f32.mrb[0].mxu0
        %v3998 = vadd.f32 0.0, %v3997
        %v3999 = vpop.f32.mrb[0].mxu0
        %4000 = vmatprep.mubr.f32.mxu0 0.0
        %4001 = vmatmul.mubr.f32.gmra.mrb[0].mxu0 %v3892
        %v4002 = vpop.f32.mrb[0].mxu0
        %v4003 = vadd.f32 0.0, %v4002
        %v4004 = vpop.f32.mrb[0].mxu0
        %4005 = vmatprep.mubr.f32.mxu0 0.0
        %4006 = vmatmul.mubr.f32.gmra.mrb[0].mxu0 %v3893
        %v4007 = vpop.f32.mrb[0].mxu0
        %v4008 = vadd.f32 0.0, %v4007
        %v4009 = vpop.f32.mrb[0].mxu0
        %4010 = vmatprep.mubr.f32.mxu0 0.0
        %4011 = vmatmul.mubr.f32.gmra.mrb[0].mxu0 %v3894
        %v4012 = vpop.f32.mrb[0].mxu0
        %v4013 = vadd.f32 0.0, %v4012
        %v4014 = vpop.f32.mrb[0].mxu0
        %4015 = vdwg.mxu0
        %v4016 = vadd.f32 %v3573, %v3978
        %v4017 = vadd.f32 %v3574, %v3983
        %v4018 = vadd.f32 %v3575, %v3988
        %v4019 = vadd.f32 %v3576, %v3993
        %v4020 = vadd.f32 %v3577, %v3998
        %v4021 = vadd.f32 %v3578, %v4003
        %v4022 = vadd.f32 %v3579, %v4008
        %v4023 = vadd.f32 %v3580, %v4013
        %v4024 = vld [vmem:[%s912] sm:$0x1]
        %v4026 = vlaneseq
        %v4027 = vshrl.u32 %v4026, 7
        %v4028 = vsub.s32 0, %v4027
        %v4029 = vrot.slane %v4024, %v4028
        %v4031 = vadd.f32 %v4016, %v4029
        %v4032 = vadd.f32 %v4017, %v4029
        %v4033 = vadd.f32 %v4018, %v4029
        %v4034 = vadd.f32 %v4019, %v4029
        %v4035 = vadd.f32 %v4020, %v4029
        %v4036 = vadd.f32 %v4021, %v4029
        %v4037 = vadd.f32 %v4022, %v4029
        %v4038 = vadd.f32 %v4023, %v4029
        %4039 = vst.msk [vmem:[#allocation2] sm:$0xff] %vm1098, %v4031
        %4040 = vst.msk [vmem:[#allocation2 + $0x8] sm:$0xff] %vm1098, %v4032
        %4041 = vst.msk [vmem:[#allocation2 + $0x10] sm:$0xff] %vm1098, %v4033
        %4042 = vst.msk [vmem:[#allocation2 + $0x18] sm:$0xff] %vm1098, %v4034
        %4043 = vst.msk [vmem:[#allocation2 + $0x20] sm:$0xff] %vm1098, %v4035
        %4044 = vst.msk [vmem:[#allocation2 + $0x28] sm:$0xff] %vm1098, %v4036
        %4045 = vst.msk [vmem:[#allocation2 + $0x30] sm:$0xff] %vm1098, %v4037
        %4046 = vst.msk [vmem:[#allocation2 + $0x38] sm:$0xff] %vm1098, %v4038
        %p4047 = scmp.eq.s32.totalorder %s42, 2
        // Predicated region
        $region117: #{image_encoder_vit_forward.1} parent=111 // pred_check
          %p4048 = pneg %p4047
        $region118: #{image_encoder_vit_forward.1} parent=111 // pred_check_branch
          %4050 = sbr.rel (%p4048) target = $region120
        $region119: #{image_encoder_vit_forward.1} parent=111 // pred_region
          %4051 = vst.msk [vmem:[#allocation3] sm:$0xff] %vm1098, %v4031
          %4052 = vst.msk [vmem:[#allocation3 + $0x8] sm:$0xff] %vm1098, %v4032
          %4053 = vst.msk [vmem:[#allocation3 + $0x10] sm:$0xff] %vm1098, %v4033
          %4054 = vst.msk [vmem:[#allocation3 + $0x18] sm:$0xff] %vm1098, %v4034
          %4055 = vst.msk [vmem:[#allocation3 + $0x20] sm:$0xff] %vm1098, %v4035
          %4056 = vst.msk [vmem:[#allocation3 + $0x28] sm:$0xff] %vm1098, %v4036
          %4057 = vst.msk [vmem:[#allocation3 + $0x30] sm:$0xff] %vm1098, %v4037
          %4058 = vst.msk [vmem:[#allocation3 + $0x38] sm:$0xff] %vm1098, %v4038
        $region120: #{image_encoder_vit_forward.1} parent=111 // pred_fallthru
          _
        %p4059 = scmp.eq.s32.totalorder %s42, 5
        // Predicated region
        $region121: #{image_encoder_vit_forward.1} parent=111 // pred_check
          %p4060 = pneg %p4059
        $region122: #{image_encoder_vit_forward.1} parent=111 // pred_check_branch
          %4062 = sbr.rel (%p4060) target = $region124
        $region123: #{image_encoder_vit_forward.1} parent=111 // pred_region
          %s4063 = scalar_lea.vmem [#allocation3], 64
          %4064 = vst.msk [vmem:[%s4063] sm:$0xff] %vm1098, %v4031
          %4065 = vst.msk [vmem:[%s4063 + $0x8] sm:$0xff] %vm1098, %v4032
          %4066 = vst.msk [vmem:[%s4063 + $0x10] sm:$0xff] %vm1098, %v4033
          %4067 = vst.msk [vmem:[%s4063 + $0x18] sm:$0xff] %vm1098, %v4034
          %4068 = vst.msk [vmem:[%s4063 + $0x20] sm:$0xff] %vm1098, %v4035
          %4069 = vst.msk [vmem:[%s4063 + $0x28] sm:$0xff] %vm1098, %v4036
          %4070 = vst.msk [vmem:[%s4063 + $0x30] sm:$0xff] %vm1098, %v4037
          %4071 = vst.msk [vmem:[%s4063 + $0x38] sm:$0xff] %vm1098, %v4038
        $region124: #{image_encoder_vit_forward.1} parent=111 // pred_fallthru
          _
        %p4072 = scmp.eq.s32.totalorder %s42, 8
        // Predicated region
        $region125: #{image_encoder_vit_forward.1} parent=111 // pred_check
          %p4073 = pneg %p4072
        $region126: #{image_encoder_vit_forward.1} parent=111 // pred_check_branch
          %4075 = sbr.rel (%p4073) target = $region128
        $region127: #{image_encoder_vit_forward.1} parent=111 // pred_region
          %s4076 = scalar_lea.vmem [#allocation3], 128
          %4077 = vst.msk [vmem:[%s4076] sm:$0xff] %vm1098, %v4031
          %4078 = vst.msk [vmem:[%s4076 + $0x8] sm:$0xff] %vm1098, %v4032
          %4079 = vst.msk [vmem:[%s4076 + $0x10] sm:$0xff] %vm1098, %v4033
          %4080 = vst.msk [vmem:[%s4076 + $0x18] sm:$0xff] %vm1098, %v4034
          %4081 = vst.msk [vmem:[%s4076 + $0x20] sm:$0xff] %vm1098, %v4035
          %4082 = vst.msk [vmem:[%s4076 + $0x28] sm:$0xff] %vm1098, %v4036
          %4083 = vst.msk [vmem:[%s4076 + $0x30] sm:$0xff] %vm1098, %v4037
          %4084 = vst.msk [vmem:[%s4076 + $0x38] sm:$0xff] %vm1098, %v4038
        $region128: #{image_encoder_vit_forward.1} parent=111 // pred_fallthru
          _
        %p4085 = scmp.eq.s32.totalorder %s42, 11
        // Predicated region
        $region129: #{image_encoder_vit_forward.1} parent=111 // pred_check
          %p4086 = pneg %p4085
        $region130: #{image_encoder_vit_forward.1} parent=111 // pred_check_branch
          %4088 = sbr.rel (%p4086) target = $region132
        $region131: #{image_encoder_vit_forward.1} parent=111 // pred_region
          %s4089 = scalar_lea.vmem [#allocation3], 192
          %4090 = vst.msk [vmem:[%s4089] sm:$0xff] %vm1098, %v4031
          %4091 = vst.msk [vmem:[%s4089 + $0x8] sm:$0xff] %vm1098, %v4032
          %4092 = vst.msk [vmem:[%s4089 + $0x10] sm:$0xff] %vm1098, %v4033
          %4093 = vst.msk [vmem:[%s4089 + $0x18] sm:$0xff] %vm1098, %v4034
          %4094 = vst.msk [vmem:[%s4089 + $0x20] sm:$0xff] %vm1098, %v4035
          %4095 = vst.msk [vmem:[%s4089 + $0x28] sm:$0xff] %vm1098, %v4036
          %4096 = vst.msk [vmem:[%s4089 + $0x30] sm:$0xff] %vm1098, %v4037
          %4097 = vst.msk [vmem:[%s4089 + $0x38] sm:$0xff] %vm1098, %v4038
          %v4098 = vld [vmem:[%s16] sm:$0xff]
          %v4099 = vld [vmem:[%s16 + $0x8] sm:$0xff]
          %v4100 = vld [vmem:[%s16 + $0x10] sm:$0xff]
          %v4101 = vld [vmem:[%s16 + $0x18] sm:$0xff]
          %v4103 = vsel %vm1098, %v4031, 0
          %v4106 = vsel %vm1098, %v4032, 0
          %v4109 = vsel %vm1098, %v4033, 0
          %v4112 = vsel %vm1098, %v4034, 0
          %v4115 = vsel %vm1098, %v4035, 0
          %v4118 = vsel %vm1098, %v4036, 0
          %v4121 = vsel %vm1098, %v4037, 0
          %v4124 = vsel %vm1098, %v4038, 0
          %4126 = vmatprep.subr.mxu0 0.0
          %4127 = vmatpush1.msra.mxu0 %v4098
          %4128 = vmatprep.subr.mxu0 0.0
          %4129 = vmatpush1.msra.mxu0 %v4099
          %4130 = vmatprep.subr.mxu0 0.0
          %4131 = vmatpush1.msra.mxu0 %v4100
          %4132 = vmatprep.subr.mxu0 0.0
          %4133 = vmatpush1.msra.mxu0 %v4101
          %4134 = vmatprep.subr.mxu0 0.0
          %4135 = vmatpush1.msra.mxu0 0.0
          %4136 = vmatprep.subr.mxu0 0.0
          %4137 = vmatpush1.msra.mxu0 0.0
          %4138 = vmatprep.subr.mxu0 0.0
          %4139 = vmatpush1.msra.mxu0 0.0
          %4140 = vmatprep.subr.mxu0 0.0
          %4141 = vmatpush1.msra.mxu0 0.0
          %4142 = vmatprep.subr.mxu0 0.0
          %4143 = vmatpush1.msra.mxu0 0.0
          %4144 = vmatprep.subr.mxu0 0.0
          %4145 = vmatpush1.msra.mxu0 0.0
          %4146 = vmatprep.subr.mxu0 0.0
          %4147 = vmatpush1.msra.mxu0 0.0
          %4148 = vmatprep.subr.mxu0 0.0
          %4149 = vmatpush1.msra.mxu0 0.0
          %4150 = vmatprep.subr.mxu0 0.0
          %4151 = vmatpush1.msra.mxu0 0.0
          %4152 = vmatprep.subr.mxu0 0.0
          %4153 = vmatpush1.msra.mxu0 0.0
          %4154 = vmatprep.subr.mxu0 0.0
          %4155 = vmatpush1.msra.mxu0 0.0
          %4156 = vmatprep.subr.mxu0 0.0
          %4157 = vmatpush1.msra.mxu0 0.0
          %4158 = vmatprep.subr.mxu0 0.0
          %4159 = vmatpush1.msra.mxu0 0.0
          %4160 = vmatprep.subr.mxu0 0.0
          %4161 = vmatpush1.msra.mxu0 0.0
          %4162 = vmatprep.subr.mxu0 0.0
          %4163 = vmatpush1.msra.mxu0 0.0
          %4164 = vmatprep.subr.mxu0 0.0
          %4165 = vmatpush1.msra.mxu0 0.0
          %4166 = vmatprep.subr.mxu0 0.0
          %4167 = vmatpush1.msra.mxu0 0.0
          %4168 = vmatprep.subr.mxu0 0.0
          %4169 = vmatpush1.msra.mxu0 0.0
          %4170 = vmatprep.subr.mxu0 0.0
          %4171 = vmatpush1.msra.mxu0 0.0
          %4172 = vmatprep.subr.mxu0 0.0
          %4173 = vmatpush1.msra.mxu0 0.0
          %4174 = vmatprep.subr.mxu0 0.0
          %4175 = vmatpush1.msra.mxu0 0.0
          %4176 = vmatprep.subr.mxu0 0.0
          %4177 = vmatpush1.msra.mxu0 0.0
          %4178 = vmatprep.subr.mxu0 0.0
          %4179 = vmatpush1.msra.mxu0 0.0
          %4180 = vmatprep.subr.mxu0 0.0
          %4181 = vmatpush1.msra.mxu0 0.0
          %4182 = vmatprep.subr.mxu0 0.0
          %4183 = vmatpush1.msra.mxu0 0.0
          %4184 = vmatprep.subr.mxu0 0.0
          %4185 = vmatpush1.msra.mxu0 0.0
          %4186 = vmatprep.subr.mxu0 0.0
          %4187 = vmatpush1.msra.mxu0 0.0
          %4188 = vmatprep.subr.mxu0 0.0
          %4189 = vmatpush1.msra.mxu0 0.0
          %4190 = vmatprep.mubr.f32.mxu0 0.0
          %4191 = vmatmul.mubr.f32.gmra.mrb[0].mxu0 %v4103
          %v4192 = vpop.f32.mrb[0].mxu0
          %v4193 = vadd.f32 0.0, %v4192
          %v4194 = vpop.f32.mrb[0].mxu0
          %4195 = vmatprep.mubr.f32.mxu0 0.0
          %4196 = vmatmul.mubr.f32.gmra.mrb[0].mxu0 %v4106
          %v4197 = vpop.f32.mrb[0].mxu0
          %v4198 = vadd.f32 0.0, %v4197
          %v4199 = vpop.f32.mrb[0].mxu0
          %4200 = vmatprep.mubr.f32.mxu0 0.0
          %4201 = vmatmul.mubr.f32.gmra.mrb[0].mxu0 %v4109
          %v4202 = vpop.f32.mrb[0].mxu0
          %v4203 = vadd.f32 0.0, %v4202
          %v4204 = vpop.f32.mrb[0].mxu0
          %4205 = vmatprep.mubr.f32.mxu0 0.0
          %4206 = vmatmul.mubr.f32.gmra.mrb[0].mxu0 %v4112
          %v4207 = vpop.f32.mrb[0].mxu0
          %v4208 = vadd.f32 0.0, %v4207
          %v4209 = vpop.f32.mrb[0].mxu0
          %4210 = vmatprep.mubr.f32.mxu0 0.0
          %4211 = vmatmul.mubr.f32.gmra.mrb[0].mxu0 %v4115
          %v4212 = vpop.f32.mrb[0].mxu0
          %v4213 = vadd.f32 0.0, %v4212
          %v4214 = vpop.f32.mrb[0].mxu0
          %4215 = vmatprep.mubr.f32.mxu0 0.0
          %4216 = vmatmul.mubr.f32.gmra.mrb[0].mxu0 %v4118
          %v4217 = vpop.f32.mrb[0].mxu0
          %v4218 = vadd.f32 0.0, %v4217
          %v4219 = vpop.f32.mrb[0].mxu0
          %4220 = vmatprep.mubr.f32.mxu0 0.0
          %4221 = vmatmul.mubr.f32.gmra.mrb[0].mxu0 %v4121
          %v4222 = vpop.f32.mrb[0].mxu0
          %v4223 = vadd.f32 0.0, %v4222
          %v4224 = vpop.f32.mrb[0].mxu0
          %4225 = vmatprep.mubr.f32.mxu0 0.0
          %4226 = vmatmul.mubr.f32.gmra.mrb[0].mxu0 %v4124
          %v4227 = vpop.f32.mrb[0].mxu0
          %v4228 = vadd.f32 0.0, %v4227
          %v4229 = vpop.f32.mrb[0].mxu0
          %4230 = vdwg.mxu0
          %vm4231 = vcmask 31744
          %v4232 = vsel %vm4231, %v4193, -inf
          %4233 = vmax.xlane.f32.xlu0 %v4232
          %v4234 = vpop.xlane.xlu0 %4233
          %v4235 = vsel %vm4231, %v4198, -inf
          %4236 = vmax.xlane.f32.xlu0 %v4235
          %v4237 = vpop.xlane.xlu0 %4236
          %v4238 = vsel %vm4231, %v4203, -inf
          %4239 = vmax.xlane.f32.xlu0 %v4238
          %v4240 = vpop.xlane.xlu0 %4239
          %v4241 = vsel %vm4231, %v4208, -inf
          %4242 = vmax.xlane.f32.xlu0 %v4241
          %v4243 = vpop.xlane.xlu0 %4242
          %v4244 = vsel %vm4231, %v4213, -inf
          %4245 = vmax.xlane.f32.xlu0 %v4244
          %v4246 = vpop.xlane.xlu0 %4245
          %v4247 = vsel %vm4231, %v4218, -inf
          %4248 = vmax.xlane.f32.xlu0 %v4247
          %v4249 = vpop.xlane.xlu0 %4248
          %v4250 = vsel %vm4231, %v4223, -inf
          %4251 = vmax.xlane.f32.xlu0 %v4250
          %v4252 = vpop.xlane.xlu0 %4251
          %v4253 = vsel %vm4231, %v4228, -inf
          %4254 = vmax.xlane.f32.xlu0 %v4253
          %v4255 = vpop.xlane.xlu0 %4254
          %v4256 = vsub.f32 %v4193, %v4234
          %v4257 = vsub.f32 %v4198, %v4237
          %v4258 = vsub.f32 %v4203, %v4240
          %v4259 = vsub.f32 %v4208, %v4243
          %v4260 = vsub.f32 %v4213, %v4246
          %v4261 = vsub.f32 %v4218, %v4249
          %v4262 = vsub.f32 %v4223, %v4252
          %v4263 = vsub.f32 %v4228, %v4255
          %v4264 = vmul.f32 %v4256, 1.442695
          %v4265 = vpow.pop %v4264
          %v4266 = vmul.f32 %v4257, 1.442695
          %v4267 = vpow.pop %v4266
          %v4268 = vmul.f32 %v4258, 1.442695
          %v4269 = vpow.pop %v4268
          %v4270 = vmul.f32 %v4259, 1.442695
          %v4271 = vpow.pop %v4270
          %v4272 = vmul.f32 %v4260, 1.442695
          %v4273 = vpow.pop %v4272
          %v4274 = vmul.f32 %v4261, 1.442695
          %v4275 = vpow.pop %v4274
          %v4276 = vmul.f32 %v4262, 1.442695
          %v4277 = vpow.pop %v4276
          %v4278 = vmul.f32 %v4263, 1.442695
          %v4279 = vpow.pop %v4278
          %v4280 = vsel %vm4231, %v4265, 0.0
          %4281 = vadd.xlane.f32.xlu0 %v4280
          %v4282 = vpop.xlane.xlu0 %4281
          %v4283 = vsel %vm4231, %v4267, 0.0
          %4284 = vadd.xlane.f32.xlu0 %v4283
          %v4285 = vpop.xlane.xlu0 %4284
          %v4286 = vsel %vm4231, %v4269, 0.0
          %4287 = vadd.xlane.f32.xlu0 %v4286
          %v4288 = vpop.xlane.xlu0 %4287
          %v4289 = vsel %vm4231, %v4271, 0.0
          %4290 = vadd.xlane.f32.xlu0 %v4289
          %v4291 = vpop.xlane.xlu0 %4290
          %v4292 = vsel %vm4231, %v4273, 0.0
          %4293 = vadd.xlane.f32.xlu0 %v4292
          %v4294 = vpop.xlane.xlu0 %4293
          %v4295 = vsel %vm4231, %v4275, 0.0
          %4296 = vadd.xlane.f32.xlu0 %v4295
          %v4297 = vpop.xlane.xlu0 %4296
          %v4298 = vsel %vm4231, %v4277, 0.0
          %4299 = vadd.xlane.f32.xlu0 %v4298
          %v4300 = vpop.xlane.xlu0 %4299
          %v4301 = vsel %vm4231, %v4279, 0.0
          %4302 = vadd.xlane.f32.xlu0 %v4301
          %v4303 = vpop.xlane.xlu0 %4302
          %v4304 = vrcp.pop %v4282
          %v4305 = vmul.f32 %v4265, %v4304
          %v4306 = vrcp.pop %v4285
          %v4307 = vmul.f32 %v4267, %v4306
          %v4308 = vrcp.pop %v4288
          %v4309 = vmul.f32 %v4269, %v4308
          %v4310 = vrcp.pop %v4291
          %v4311 = vmul.f32 %v4271, %v4310
          %v4312 = vrcp.pop %v4294
          %v4313 = vmul.f32 %v4273, %v4312
          %v4314 = vrcp.pop %v4297
          %v4315 = vmul.f32 %v4275, %v4314
          %v4316 = vrcp.pop %v4300
          %v4317 = vmul.f32 %v4277, %v4316
          %v4318 = vrcp.pop %v4303
          %v4319 = vmul.f32 %v4279, %v4318
          %v4320 = vld [vmem:[#allocation3] sm:$0xff]
          %v4321 = vld [vmem:[#allocation3 + $0x8] sm:$0xff]
          %v4322 = vld [vmem:[#allocation3 + $0x10] sm:$0xff]
          %v4323 = vld [vmem:[#allocation3 + $0x18] sm:$0xff]
          %v4324 = vld [vmem:[#allocation3 + $0x20] sm:$0xff]
          %v4325 = vld [vmem:[#allocation3 + $0x28] sm:$0xff]
          %v4326 = vld [vmem:[#allocation3 + $0x30] sm:$0xff]
          %v4327 = vld [vmem:[#allocation3 + $0x38] sm:$0xff]
          %4329 = vset.pattern.permute.xlu0 0
          %4330 = vperm.xlu0 %4329, %v4305
          %v4331 = vpop.permute.xlu0 %4330
          %4334 = vset.pattern.permute.xlu0 0
          %4335 = vperm.xlu0 %4334, %v4307
          %v4336 = vpop.permute.xlu0 %4335
          %4339 = vset.pattern.permute.xlu0 0
          %4340 = vperm.xlu0 %4339, %v4309
          %v4341 = vpop.permute.xlu0 %4340
          %4344 = vset.pattern.permute.xlu0 0
          %4345 = vperm.xlu0 %4344, %v4311
          %v4346 = vpop.permute.xlu0 %4345
          %4349 = vset.pattern.permute.xlu0 0
          %4350 = vperm.xlu0 %4349, %v4313
          %v4351 = vpop.permute.xlu0 %4350
          %4354 = vset.pattern.permute.xlu0 0
          %4355 = vperm.xlu0 %4354, %v4315
          %v4356 = vpop.permute.xlu0 %4355
          %4359 = vset.pattern.permute.xlu0 0
          %4360 = vperm.xlu0 %4359, %v4317
          %v4361 = vpop.permute.xlu0 %4360
          %4364 = vset.pattern.permute.xlu0 0
          %4365 = vperm.xlu0 %4364, %v4319
          %v4366 = vpop.permute.xlu0 %4365
          %v4368 = vmul.f32 %v4331, %v4320
          %v4369 = vmul.f32 %v4336, %v4321
          %v4370 = vmul.f32 %v4341, %v4322
          %v4371 = vmul.f32 %v4346, %v4323
          %v4372 = vmul.f32 %v4351, %v4324
          %v4373 = vmul.f32 %v4356, %v4325
          %v4374 = vmul.f32 %v4361, %v4326
          %v4375 = vmul.f32 %v4366, %v4327
          %v4376 = vadd.f32 %v4031, %v4368
          %v4377 = vadd.f32 %v4032, %v4369
          %v4378 = vadd.f32 %v4033, %v4370
          %v4379 = vadd.f32 %v4034, %v4371
          %v4380 = vadd.f32 %v4035, %v4372
          %v4381 = vadd.f32 %v4036, %v4373
          %v4382 = vadd.f32 %v4037, %v4374
          %v4383 = vadd.f32 %v4038, %v4375
          %s4384 = scalar_lea.vmem [#allocation3], 64
          %v4385 = vld [vmem:[%s4384] sm:$0xff]
          %v4386 = vld [vmem:[%s4384 + $0x8] sm:$0xff]
          %v4387 = vld [vmem:[%s4384 + $0x10] sm:$0xff]
          %v4388 = vld [vmem:[%s4384 + $0x18] sm:$0xff]
          %v4389 = vld [vmem:[%s4384 + $0x20] sm:$0xff]
          %v4390 = vld [vmem:[%s4384 + $0x28] sm:$0xff]
          %v4391 = vld [vmem:[%s4384 + $0x30] sm:$0xff]
          %v4392 = vld [vmem:[%s4384 + $0x38] sm:$0xff]
          %4393 = vset.pattern.permute.xlu0 1
          %4394 = vperm.xlu0 %4393, %v4305
          %v4395 = vpop.permute.xlu0 %4394
          %4397 = vset.pattern.permute.xlu0 1
          %4398 = vperm.xlu0 %4397, %v4307
          %v4399 = vpop.permute.xlu0 %4398
          %4401 = vset.pattern.permute.xlu0 1
          %4402 = vperm.xlu0 %4401, %v4309
          %v4403 = vpop.permute.xlu0 %4402
          %4405 = vset.pattern.permute.xlu0 1
          %4406 = vperm.xlu0 %4405, %v4311
          %v4407 = vpop.permute.xlu0 %4406
          %4409 = vset.pattern.permute.xlu0 1
          %4410 = vperm.xlu0 %4409, %v4313
          %v4411 = vpop.permute.xlu0 %4410
          %4413 = vset.pattern.permute.xlu0 1
          %4414 = vperm.xlu0 %4413, %v4315
          %v4415 = vpop.permute.xlu0 %4414
          %4417 = vset.pattern.permute.xlu0 1
          %4418 = vperm.xlu0 %4417, %v4317
          %v4419 = vpop.permute.xlu0 %4418
          %4421 = vset.pattern.permute.xlu0 1
          %4422 = vperm.xlu0 %4421, %v4319
          %v4423 = vpop.permute.xlu0 %4422
          %v4425 = vmul.f32 %v4395, %v4385
          %v4426 = vmul.f32 %v4399, %v4386
          %v4427 = vmul.f32 %v4403, %v4387
          %v4428 = vmul.f32 %v4407, %v4388
          %v4429 = vmul.f32 %v4411, %v4389
          %v4430 = vmul.f32 %v4415, %v4390
          %v4431 = vmul.f32 %v4419, %v4391
          %v4432 = vmul.f32 %v4423, %v4392
          %v4433 = vadd.f32 %v4376, %v4425
          %v4434 = vadd.f32 %v4377, %v4426
          %v4435 = vadd.f32 %v4378, %v4427
          %v4436 = vadd.f32 %v4379, %v4428
          %v4437 = vadd.f32 %v4380, %v4429
          %v4438 = vadd.f32 %v4381, %v4430
          %v4439 = vadd.f32 %v4382, %v4431
          %v4440 = vadd.f32 %v4383, %v4432
          %s4441 = scalar_lea.vmem [#allocation3], 128
          %v4442 = vld [vmem:[%s4441] sm:$0xff]
          %v4443 = vld [vmem:[%s4441 + $0x8] sm:$0xff]
          %v4444 = vld [vmem:[%s4441 + $0x10] sm:$0xff]
          %v4445 = vld [vmem:[%s4441 + $0x18] sm:$0xff]
          %v4446 = vld [vmem:[%s4441 + $0x20] sm:$0xff]
          %v4447 = vld [vmem:[%s4441 + $0x28] sm:$0xff]
          %v4448 = vld [vmem:[%s4441 + $0x30] sm:$0xff]
          %v4449 = vld [vmem:[%s4441 + $0x38] sm:$0xff]
          %4450 = vset.pattern.permute.xlu0 2
          %4451 = vperm.xlu0 %4450, %v4305
          %v4452 = vpop.permute.xlu0 %4451
          %4454 = vset.pattern.permute.xlu0 2
          %4455 = vperm.xlu0 %4454, %v4307
          %v4456 = vpop.permute.xlu0 %4455
          %4458 = vset.pattern.permute.xlu0 2
          %4459 = vperm.xlu0 %4458, %v4309
          %v4460 = vpop.permute.xlu0 %4459
          %4462 = vset.pattern.permute.xlu0 2
          %4463 = vperm.xlu0 %4462, %v4311
          %v4464 = vpop.permute.xlu0 %4463
          %4466 = vset.pattern.permute.xlu0 2
          %4467 = vperm.xlu0 %4466, %v4313
          %v4468 = vpop.permute.xlu0 %4467
          %4470 = vset.pattern.permute.xlu0 2
          %4471 = vperm.xlu0 %4470, %v4315
          %v4472 = vpop.permute.xlu0 %4471
          %4474 = vset.pattern.permute.xlu0 2
          %4475 = vperm.xlu0 %4474, %v4317
          %v4476 = vpop.permute.xlu0 %4475
          %4478 = vset.pattern.permute.xlu0 2
          %4479 = vperm.xlu0 %4478, %v4319
          %v4480 = vpop.permute.xlu0 %4479
          %v4482 = vmul.f32 %v4452, %v4442
          %v4483 = vmul.f32 %v4456, %v4443
          %v4484 = vmul.f32 %v4460, %v4444
          %v4485 = vmul.f32 %v4464, %v4445
          %v4486 = vmul.f32 %v4468, %v4446
          %v4487 = vmul.f32 %v4472, %v4447
          %v4488 = vmul.f32 %v4476, %v4448
          %v4489 = vmul.f32 %v4480, %v4449
          %v4490 = vadd.f32 %v4433, %v4482
          %v4491 = vadd.f32 %v4434, %v4483
          %v4492 = vadd.f32 %v4435, %v4484
          %v4493 = vadd.f32 %v4436, %v4485
          %v4494 = vadd.f32 %v4437, %v4486
          %v4495 = vadd.f32 %v4438, %v4487
          %v4496 = vadd.f32 %v4439, %v4488
          %v4497 = vadd.f32 %v4440, %v4489
          %v4498 = vld [vmem:[%s4089] sm:$0xff]
          %v4499 = vld [vmem:[%s4089 + $0x8] sm:$0xff]
          %v4500 = vld [vmem:[%s4089 + $0x10] sm:$0xff]
          %v4501 = vld [vmem:[%s4089 + $0x18] sm:$0xff]
          %v4502 = vld [vmem:[%s4089 + $0x20] sm:$0xff]
          %v4503 = vld [vmem:[%s4089 + $0x28] sm:$0xff]
          %v4504 = vld [vmem:[%s4089 + $0x30] sm:$0xff]
          %v4505 = vld [vmem:[%s4089 + $0x38] sm:$0xff]
          %4506 = vset.pattern.permute.xlu0 3
          %4507 = vperm.xlu0 %4506, %v4305
          %v4508 = vpop.permute.xlu0 %4507
          %4510 = vset.pattern.permute.xlu0 3
          %4511 = vperm.xlu0 %4510, %v4307
          %v4512 = vpop.permute.xlu0 %4511
          %4514 = vset.pattern.permute.xlu0 3
          %4515 = vperm.xlu0 %4514, %v4309
          %v4516 = vpop.permute.xlu0 %4515
          %4518 = vset.pattern.permute.xlu0 3
          %4519 = vperm.xlu0 %4518, %v4311
          %v4520 = vpop.permute.xlu0 %4519
          %4522 = vset.pattern.permute.xlu0 3
          %4523 = vperm.xlu0 %4522, %v4313
          %v4524 = vpop.permute.xlu0 %4523
          %4526 = vset.pattern.permute.xlu0 3
          %4527 = vperm.xlu0 %4526, %v4315
          %v4528 = vpop.permute.xlu0 %4527
          %4530 = vset.pattern.permute.xlu0 3
          %4531 = vperm.xlu0 %4530, %v4317
          %v4532 = vpop.permute.xlu0 %4531
          %4534 = vset.pattern.permute.xlu0 3
          %4535 = vperm.xlu0 %4534, %v4319
          %v4536 = vpop.permute.xlu0 %4535
          %v4538 = vmul.f32 %v4508, %v4498
          %v4539 = vmul.f32 %v4512, %v4499
          %v4540 = vmul.f32 %v4516, %v4500
          %v4541 = vmul.f32 %v4520, %v4501
          %v4542 = vmul.f32 %v4524, %v4502
          %v4543 = vmul.f32 %v4528, %v4503
          %v4544 = vmul.f32 %v4532, %v4504
          %v4545 = vmul.f32 %v4536, %v4505
          %v4546 = vadd.f32 %v4490, %v4538
          %v4547 = vadd.f32 %v4491, %v4539
          %v4548 = vadd.f32 %v4492, %v4540
          %v4549 = vadd.f32 %v4493, %v4541
          %v4550 = vadd.f32 %v4494, %v4542
          %v4551 = vadd.f32 %v4495, %v4543
          %v4552 = vadd.f32 %v4496, %v4544
          %v4553 = vadd.f32 %v4497, %v4545
          %v4554 = vld [vmem:[%s17] sm:$0xff]
          %v4555 = vld [vmem:[%s17 + $0x8] sm:$0xff]
          %v4556 = vld [vmem:[%s17 + $0x10] sm:$0xff]
          %v4557 = vld [vmem:[%s17 + $0x18] sm:$0xff]
          %v4559 = vsel %vm1098, %v4546, 0
          %v4562 = vsel %vm1098, %v4547, 0
          %v4565 = vsel %vm1098, %v4548, 0
          %v4568 = vsel %vm1098, %v4549, 0
          %v4571 = vsel %vm1098, %v4550, 0
          %v4574 = vsel %vm1098, %v4551, 0
          %v4577 = vsel %vm1098, %v4552, 0
          %v4580 = vsel %vm1098, %v4553, 0
          %4582 = vmatprep.subr.mxu0 0.0
          %4583 = vmatpush1.msra.mxu0 %v4554
          %4584 = vmatprep.subr.mxu0 0.0
          %4585 = vmatpush1.msra.mxu0 %v4555
          %4586 = vmatprep.subr.mxu0 0.0
          %4587 = vmatpush1.msra.mxu0 %v4556
          %4588 = vmatprep.subr.mxu0 0.0
          %4589 = vmatpush1.msra.mxu0 %v4557
          %4590 = vmatprep.subr.mxu0 0.0
          %4591 = vmatpush1.msra.mxu0 0.0
          %4592 = vmatprep.subr.mxu0 0.0
          %4593 = vmatpush1.msra.mxu0 0.0
          %4594 = vmatprep.subr.mxu0 0.0
          %4595 = vmatpush1.msra.mxu0 0.0
          %4596 = vmatprep.subr.mxu0 0.0
          %4597 = vmatpush1.msra.mxu0 0.0
          %4598 = vmatprep.subr.mxu0 0.0
          %4599 = vmatpush1.msra.mxu0 0.0
          %4600 = vmatprep.subr.mxu0 0.0
          %4601 = vmatpush1.msra.mxu0 0.0
          %4602 = vmatprep.subr.mxu0 0.0
          %4603 = vmatpush1.msra.mxu0 0.0
          %4604 = vmatprep.subr.mxu0 0.0
          %4605 = vmatpush1.msra.mxu0 0.0
          %4606 = vmatprep.subr.mxu0 0.0
          %4607 = vmatpush1.msra.mxu0 0.0
          %4608 = vmatprep.subr.mxu0 0.0
          %4609 = vmatpush1.msra.mxu0 0.0
          %4610 = vmatprep.subr.mxu0 0.0
          %4611 = vmatpush1.msra.mxu0 0.0
          %4612 = vmatprep.subr.mxu0 0.0
          %4613 = vmatpush1.msra.mxu0 0.0
          %4614 = vmatprep.subr.mxu0 0.0
          %4615 = vmatpush1.msra.mxu0 0.0
          %4616 = vmatprep.subr.mxu0 0.0
          %4617 = vmatpush1.msra.mxu0 0.0
          %4618 = vmatprep.subr.mxu0 0.0
          %4619 = vmatpush1.msra.mxu0 0.0
          %4620 = vmatprep.subr.mxu0 0.0
          %4621 = vmatpush1.msra.mxu0 0.0
          %4622 = vmatprep.subr.mxu0 0.0
          %4623 = vmatpush1.msra.mxu0 0.0
          %4624 = vmatprep.subr.mxu0 0.0
          %4625 = vmatpush1.msra.mxu0 0.0
          %4626 = vmatprep.subr.mxu0 0.0
          %4627 = vmatpush1.msra.mxu0 0.0
          %4628 = vmatprep.subr.mxu0 0.0
          %4629 = vmatpush1.msra.mxu0 0.0
          %4630 = vmatprep.subr.mxu0 0.0
          %4631 = vmatpush1.msra.mxu0 0.0
          %4632 = vmatprep.subr.mxu0 0.0
          %4633 = vmatpush1.msra.mxu0 0.0
          %4634 = vmatprep.subr.mxu0 0.0
          %4635 = vmatpush1.msra.mxu0 0.0
          %4636 = vmatprep.subr.mxu0 0.0
          %4637 = vmatpush1.msra.mxu0 0.0
          %4638 = vmatprep.subr.mxu0 0.0
          %4639 = vmatpush1.msra.mxu0 0.0
          %4640 = vmatprep.subr.mxu0 0.0
          %4641 = vmatpush1.msra.mxu0 0.0
          %4642 = vmatprep.subr.mxu0 0.0
          %4643 = vmatpush1.msra.mxu0 0.0
          %4644 = vmatprep.subr.mxu0 0.0
          %4645 = vmatpush1.msra.mxu0 0.0
          %4646 = vmatprep.mubr.f32.mxu0 0.0
          %4647 = vmatmul.mubr.f32.gmra.mrb[0].mxu0 %v4559
          %v4648 = vpop.f32.mrb[0].mxu0
          %v4649 = vadd.f32 0.0, %v4648
          %v4650 = vpop.f32.mrb[0].mxu0
          %4651 = vmatprep.mubr.f32.mxu0 0.0
          %4652 = vmatmul.mubr.f32.gmra.mrb[0].mxu0 %v4562
          %v4653 = vpop.f32.mrb[0].mxu0
          %v4654 = vadd.f32 0.0, %v4653
          %v4655 = vpop.f32.mrb[0].mxu0
          %4656 = vmatprep.mubr.f32.mxu0 0.0
          %4657 = vmatmul.mubr.f32.gmra.mrb[0].mxu0 %v4565
          %v4658 = vpop.f32.mrb[0].mxu0
          %v4659 = vadd.f32 0.0, %v4658
          %v4660 = vpop.f32.mrb[0].mxu0
          %4661 = vmatprep.mubr.f32.mxu0 0.0
          %4662 = vmatmul.mubr.f32.gmra.mrb[0].mxu0 %v4568
          %v4663 = vpop.f32.mrb[0].mxu0
          %v4664 = vadd.f32 0.0, %v4663
          %v4665 = vpop.f32.mrb[0].mxu0
          %4666 = vmatprep.mubr.f32.mxu0 0.0
          %4667 = vmatmul.mubr.f32.gmra.mrb[0].mxu0 %v4571
          %v4668 = vpop.f32.mrb[0].mxu0
          %v4669 = vadd.f32 0.0, %v4668
          %v4670 = vpop.f32.mrb[0].mxu0
          %4671 = vmatprep.mubr.f32.mxu0 0.0
          %4672 = vmatmul.mubr.f32.gmra.mrb[0].mxu0 %v4574
          %v4673 = vpop.f32.mrb[0].mxu0
          %v4674 = vadd.f32 0.0, %v4673
          %v4675 = vpop.f32.mrb[0].mxu0
          %4676 = vmatprep.mubr.f32.mxu0 0.0
          %4677 = vmatmul.mubr.f32.gmra.mrb[0].mxu0 %v4577
          %v4678 = vpop.f32.mrb[0].mxu0
          %v4679 = vadd.f32 0.0, %v4678
          %v4680 = vpop.f32.mrb[0].mxu0
          %4681 = vmatprep.mubr.f32.mxu0 0.0
          %4682 = vmatmul.mubr.f32.gmra.mrb[0].mxu0 %v4580
          %v4683 = vpop.f32.mrb[0].mxu0
          %v4684 = vadd.f32 0.0, %v4683
          %v4685 = vpop.f32.mrb[0].mxu0
          %4686 = vdwg.mxu0
          %v4687 = vld [vmem:[%s18] sm:$0x1]
          %v4688 = vld [vmem:[%s19] sm:$0x1]
          %vm4689 = vcmask 130048
          %v4690 = vsel %vm4689, %v4649, 0.0
          %4691 = vadd.xlane.f32.xlu0 %v4690
          %v4692 = vpop.xlane.xlu0 %4691
          %v4693 = vsel %vm4689, %v4654, 0.0
          %4694 = vadd.xlane.f32.xlu0 %v4693
          %v4695 = vpop.xlane.xlu0 %4694
          %v4696 = vsel %vm4689, %v4659, 0.0
          %4697 = vadd.xlane.f32.xlu0 %v4696
          %v4698 = vpop.xlane.xlu0 %4697
          %v4699 = vsel %vm4689, %v4664, 0.0
          %4700 = vadd.xlane.f32.xlu0 %v4699
          %v4701 = vpop.xlane.xlu0 %4700
          %v4702 = vsel %vm4689, %v4669, 0.0
          %4703 = vadd.xlane.f32.xlu0 %v4702
          %v4704 = vpop.xlane.xlu0 %4703
          %v4705 = vsel %vm4689, %v4674, 0.0
          %4706 = vadd.xlane.f32.xlu0 %v4705
          %v4707 = vpop.xlane.xlu0 %4706
          %v4708 = vsel %vm4689, %v4679, 0.0
          %4709 = vadd.xlane.f32.xlu0 %v4708
          %v4710 = vpop.xlane.xlu0 %4709
          %v4711 = vsel %vm4689, %v4684, 0.0
          %4712 = vadd.xlane.f32.xlu0 %v4711
          %v4713 = vpop.xlane.xlu0 %4712
          %v4714 = vrcp.pop 16.0
          %v4715 = vmul.f32 %v4692, %v4714
          %v4716 = vmul.f32 %v4695, %v4714
          %v4717 = vmul.f32 %v4698, %v4714
          %v4718 = vmul.f32 %v4701, %v4714
          %v4719 = vmul.f32 %v4704, %v4714
          %v4720 = vmul.f32 %v4707, %v4714
          %v4721 = vmul.f32 %v4710, %v4714
          %v4722 = vmul.f32 %v4713, %v4714
          %v4723 = vsub.f32 %v4649, %v4715
          %v4724 = vsub.f32 %v4654, %v4716
          %v4725 = vsub.f32 %v4659, %v4717
          %v4726 = vsub.f32 %v4664, %v4718
          %v4727 = vsub.f32 %v4669, %v4719
          %v4728 = vsub.f32 %v4674, %v4720
          %v4729 = vsub.f32 %v4679, %v4721
          %v4730 = vsub.f32 %v4684, %v4722
          %v4731 = vmul.f32 %v4723, %v4723
          %v4732 = vmul.f32 %v4724, %v4724
          %v4733 = vmul.f32 %v4725, %v4725
          %v4734 = vmul.f32 %v4726, %v4726
          %v4735 = vmul.f32 %v4727, %v4727
          %v4736 = vmul.f32 %v4728, %v4728
          %v4737 = vmul.f32 %v4729, %v4729
          %v4738 = vmul.f32 %v4730, %v4730
          %v4739 = vsel %vm4689, %v4731, 0.0
          %4740 = vadd.xlane.f32.xlu0 %v4739
          %v4741 = vpop.xlane.xlu0 %4740
          %v4742 = vsel %vm4689, %v4732, 0.0
          %4743 = vadd.xlane.f32.xlu0 %v4742
          %v4744 = vpop.xlane.xlu0 %4743
          %v4745 = vsel %vm4689, %v4733, 0.0
          %4746 = vadd.xlane.f32.xlu0 %v4745
          %v4747 = vpop.xlane.xlu0 %4746
          %v4748 = vsel %vm4689, %v4734, 0.0
          %4749 = vadd.xlane.f32.xlu0 %v4748
          %v4750 = vpop.xlane.xlu0 %4749
          %v4751 = vsel %vm4689, %v4735, 0.0
          %4752 = vadd.xlane.f32.xlu0 %v4751
          %v4753 = vpop.xlane.xlu0 %4752
          %v4754 = vsel %vm4689, %v4736, 0.0
          %4755 = vadd.xlane.f32.xlu0 %v4754
          %v4756 = vpop.xlane.xlu0 %4755
          %v4757 = vsel %vm4689, %v4737, 0.0
          %4758 = vadd.xlane.f32.xlu0 %v4757
          %v4759 = vpop.xlane.xlu0 %4758
          %v4760 = vsel %vm4689, %v4738, 0.0
          %4761 = vadd.xlane.f32.xlu0 %v4760
          %v4762 = vpop.xlane.xlu0 %4761
          %v4763 = vmul.f32 %v4741, %v4714
          %v4764 = vmul.f32 %v4744, %v4714
          %v4765 = vmul.f32 %v4747, %v4714
          %v4766 = vmul.f32 %v4750, %v4714
          %v4767 = vmul.f32 %v4753, %v4714
          %v4768 = vmul.f32 %v4756, %v4714
          %v4769 = vmul.f32 %v4759, %v4714
          %v4770 = vmul.f32 %v4762, %v4714
          %v4771 = vadd.f32 %v4763, 1e-06
          %v4772 = vadd.f32 %v4764, 1e-06
          %v4773 = vadd.f32 %v4765, 1e-06
          %v4774 = vadd.f32 %v4766, 1e-06
          %v4775 = vadd.f32 %v4767, 1e-06
          %v4776 = vadd.f32 %v4768, 1e-06
          %v4777 = vadd.f32 %v4769, 1e-06
          %v4778 = vadd.f32 %v4770, 1e-06
          %v4779 = vrsqrt.pop %v4771
          %v4780 = vrsqrt.pop %v4772
          %v4781 = vrsqrt.pop %v4773
          %v4782 = vrsqrt.pop %v4774
          %v4783 = vrsqrt.pop %v4775
          %v4784 = vrsqrt.pop %v4776
          %v4785 = vrsqrt.pop %v4777
          %v4786 = vrsqrt.pop %v4778
          %v4787 = vmul.f32 %v4723, %v4779
          %v4788 = vmul.f32 %v4724, %v4780
          %v4789 = vmul.f32 %v4725, %v4781
          %v4790 = vmul.f32 %v4726, %v4782
          %v4791 = vmul.f32 %v4727, %v4783
          %v4792 = vmul.f32 %v4728, %v4784
          %v4793 = vmul.f32 %v4729, %v4785
          %v4794 = vmul.f32 %v4730, %v4786
          %v4796 = vlaneseq
          %v4797 = vshrl.u32 %v4796, 7
          %v4798 = vsub.s32 0, %v4797
          %v4799 = vrot.slane %v4687, %v4798
          %v4801 = vmul.f32 %v4787, %v4799
          %v4802 = vmul.f32 %v4788, %v4799
          %v4803 = vmul.f32 %v4789, %v4799
          %v4804 = vmul.f32 %v4790, %v4799
          %v4805 = vmul.f32 %v4791, %v4799
          %v4806 = vmul.f32 %v4792, %v4799
          %v4807 = vmul.f32 %v4793, %v4799
          %v4808 = vmul.f32 %v4794, %v4799
          %v4810 = vlaneseq
          %v4811 = vshrl.u32 %v4810, 7
          %v4812 = vsub.s32 0, %v4811
          %v4813 = vrot.slane %v4688, %v4812
          %v4815 = vadd.f32 %v4801, %v4813
          %v4816 = vadd.f32 %v4802, %v4813
          %v4817 = vadd.f32 %v4803, %v4813
          %v4818 = vadd.f32 %v4804, %v4813
          %v4819 = vadd.f32 %v4805, %v4813
          %v4820 = vadd.f32 %v4806, %v4813
          %v4821 = vadd.f32 %v4807, %v4813
          %v4822 = vadd.f32 %v4808, %v4813
          %4823 = vst.msk [vmem:[#allocation4] sm:$0xff] %vm4689, 0.0
          %vm4824 = vcmask 123904
          %4825 = vst.msk [vmem:[#allocation4 + $0x8] sm:$0x3] %vm4824, 0.0
          %4826 = vst.msk [vmem:[#allocation4 + $0x10] sm:$0xff] %vm4689, 0.0
          %4827 = vst.msk [vmem:[#allocation4 + $0x18] sm:$0x3] %vm4824, 0.0
          %4828 = vst.msk [vmem:[#allocation4 + $0x20] sm:$0xff] %vm4689, 0.0
          %4829 = vst.msk [vmem:[#allocation4 + $0x28] sm:$0x3] %vm4824, 0.0
          %4830 = vst.msk [vmem:[#allocation4 + $0x30] sm:$0xff] %vm4689, 0.0
          %4831 = vst.msk [vmem:[#allocation4 + $0x38] sm:$0x3] %vm4824, 0.0
          %4832 = vst.msk [vmem:[#allocation4 + $0x40] sm:$0xff] %vm4689, 0.0
          %4833 = vst.msk [vmem:[#allocation4 + $0x48] sm:$0x3] %vm4824, 0.0
          %4834 = vst.msk [vmem:[#allocation4 + $0x50] sm:$0xff] %vm4689, 0.0
          %4835 = vst.msk [vmem:[#allocation4 + $0x58] sm:$0x3] %vm4824, 0.0
          %4836 = vst.msk [vmem:[#allocation4 + $0x60] sm:$0xff] %vm4689, 0.0
          %4837 = vst.msk [vmem:[#allocation4 + $0x68] sm:$0x3] %vm4824, 0.0
          %4838 = vst.msk [vmem:[#allocation4 + $0x70] sm:$0xff] %vm4689, 0.0
          %4839 = vst.msk [vmem:[#allocation4 + $0x78] sm:$0x3] %vm4824, 0.0
          %4840 = vst.msk [vmem:[#allocation4 + $0x80] sm:$0xff] %vm4689, 0.0
          %4841 = vst.msk [vmem:[#allocation4 + $0x88] sm:$0x3] %vm4824, 0.0
          %4842 = vst.msk [vmem:[#allocation4 + $0x90] sm:$0xff] %vm4689, 0.0
          %4843 = vst.msk [vmem:[#allocation4 + $0x98] sm:$0x3] %vm4824, 0.0
          %s4844 = scalar_lea.vmem [#allocation4], 16
          %4845 = vst.msk [vmem:[%s4844 + $0x1] sm:$0xff] %vm4689, %v4815
          %4846 = vst.msk [vmem:[%s4844 + $0x11] sm:$0xff] %vm4689, %v4816
          %4847 = vst.msk [vmem:[%s4844 + $0x21] sm:$0xff] %vm4689, %v4817
          %4848 = vst.msk [vmem:[%s4844 + $0x31] sm:$0xff] %vm4689, %v4818
          %4849 = vst.msk [vmem:[%s4844 + $0x41] sm:$0xff] %vm4689, %v4819
          %4850 = vst.msk [vmem:[%s4844 + $0x51] sm:$0xff] %vm4689, %v4820
          %4851 = vst.msk [vmem:[%s4844 + $0x61] sm:$0xff] %vm4689, %v4821
          %4852 = vst.msk [vmem:[%s4844 + $0x71] sm:$0xff] %vm4689, %v4822
          %v4853 = vld [vmem:[#allocation4] sm:$0xff]
          %v4854 = vld [vmem:[#allocation4 + $0x10] sm:$0xff]
          %v4855 = vld [vmem:[#allocation4 + $0x20] sm:$0xff]
          %v4856 = vld [vmem:[#allocation4 + $0x30] sm:$0xff]
          %v4857 = vld [vmem:[#allocation4 + $0x40] sm:$0xff]
          %v4858 = vld [vmem:[#allocation4 + $0x50] sm:$0xff]
          %v4859 = vld [vmem:[#allocation4 + $0x60] sm:$0xff]
          %v4860 = vld [vmem:[#allocation4 + $0x70] sm:$0xff]
          %v4861 = vld [vmem:[%s20] sm:$0xff]
          %v4862 = vld [vmem:[%s20 + $0x8] sm:$0xff]
          %v4863 = vld [vmem:[#allocation4 + $0x1] sm:$0xff]
          %v4864 = vld [vmem:[#allocation4 + $0x11] sm:$0xff]
          %v4865 = vld [vmem:[#allocation4 + $0x21] sm:$0xff]
          %v4866 = vld [vmem:[#allocation4 + $0x31] sm:$0xff]
          %v4867 = vld [vmem:[#allocation4 + $0x41] sm:$0xff]
          %v4868 = vld [vmem:[#allocation4 + $0x51] sm:$0xff]
          %v4869 = vld [vmem:[#allocation4 + $0x61] sm:$0xff]
          %v4870 = vld [vmem:[#allocation4 + $0x71] sm:$0xff]
          %s4871 = scalar_lea.vmem %s20, 16
          %v4872 = vld [vmem:[%s4871] sm:$0xff]
          %v4873 = vld [vmem:[%s4871 + $0x8] sm:$0xff]
          %v4875 = vsel %vm4689, %v4863, 0
          %v4878 = vsel %vm4689, %v4864, 0
          %v4881 = vsel %vm4689, %v4865, 0
          %v4884 = vsel %vm4689, %v4866, 0
          %v4887 = vsel %vm4689, %v4867, 0
          %v4890 = vsel %vm4689, %v4868, 0
          %v4893 = vsel %vm4689, %v4869, 0
          %v4896 = vsel %vm4689, %v4870, 0
          %4898 = vmatprep.subr.mxu0 0.0
          %4899 = vmatpush1.msra.mxu0 %v4872
          %4900 = vmatprep.subr.mxu0 0.0
          %4901 = vmatpush1.msra.mxu0 %v4873
          %4902 = vmatprep.subr.mxu0 0.0
          %4903 = vmatpush1.msra.mxu0 0.0
          %4904 = vmatprep.subr.mxu0 0.0
          %4905 = vmatpush1.msra.mxu0 0.0
          %4906 = vmatprep.subr.mxu0 0.0
          %4907 = vmatpush1.msra.mxu0 0.0
          %4908 = vmatprep.subr.mxu0 0.0
          %4909 = vmatpush1.msra.mxu0 0.0
          %4910 = vmatprep.subr.mxu0 0.0
          %4911 = vmatpush1.msra.mxu0 0.0
          %4912 = vmatprep.subr.mxu0 0.0
          %4913 = vmatpush1.msra.mxu0 0.0
          %4914 = vmatprep.subr.mxu0 0.0
          %4915 = vmatpush1.msra.mxu0 0.0
          %4916 = vmatprep.subr.mxu0 0.0
          %4917 = vmatpush1.msra.mxu0 0.0
          %4918 = vmatprep.subr.mxu0 0.0
          %4919 = vmatpush1.msra.mxu0 0.0
          %4920 = vmatprep.subr.mxu0 0.0
          %4921 = vmatpush1.msra.mxu0 0.0
          %4922 = vmatprep.subr.mxu0 0.0
          %4923 = vmatpush1.msra.mxu0 0.0
          %4924 = vmatprep.subr.mxu0 0.0
          %4925 = vmatpush1.msra.mxu0 0.0
          %4926 = vmatprep.subr.mxu0 0.0
          %4927 = vmatpush1.msra.mxu0 0.0
          %4928 = vmatprep.subr.mxu0 0.0
          %4929 = vmatpush1.msra.mxu0 0.0
          %4930 = vmatprep.subr.mxu0 0.0
          %4931 = vmatpush1.msra.mxu0 0.0
          %4932 = vmatprep.subr.mxu0 0.0
          %4933 = vmatpush1.msra.mxu0 0.0
          %4934 = vmatprep.subr.mxu0 0.0
          %4935 = vmatpush1.msra.mxu0 0.0
          %4936 = vmatprep.subr.mxu0 0.0
          %4937 = vmatpush1.msra.mxu0 0.0
          %4938 = vmatprep.subr.mxu0 0.0
          %4939 = vmatpush1.msra.mxu0 0.0
          %4940 = vmatprep.subr.mxu0 0.0
          %4941 = vmatpush1.msra.mxu0 0.0
          %4942 = vmatprep.subr.mxu0 0.0
          %4943 = vmatpush1.msra.mxu0 0.0
          %4944 = vmatprep.subr.mxu0 0.0
          %4945 = vmatpush1.msra.mxu0 0.0
          %4946 = vmatprep.subr.mxu0 0.0
          %4947 = vmatpush1.msra.mxu0 0.0
          %4948 = vmatprep.subr.mxu0 0.0
          %4949 = vmatpush1.msra.mxu0 0.0
          %4950 = vmatprep.subr.mxu0 0.0
          %4951 = vmatpush1.msra.mxu0 0.0
          %4952 = vmatprep.subr.mxu0 0.0
          %4953 = vmatpush1.msra.mxu0 0.0
          %4954 = vmatprep.subr.mxu0 0.0
          %4955 = vmatpush1.msra.mxu0 0.0
          %4956 = vmatprep.subr.mxu0 0.0
          %4957 = vmatpush1.msra.mxu0 0.0
          %4958 = vmatprep.subr.mxu0 0.0
          %4959 = vmatpush1.msra.mxu0 0.0
          %4960 = vmatprep.subr.mxu0 0.0
          %4961 = vmatpush1.msra.mxu0 0.0
          %4962 = vmatprep.mubr.f32.mxu0 0.0
          %4963 = vmatmul.mubr.f32.gmra.mrb[0].mxu0 %v4875
          %v4964 = vpop.f32.mrb[0].mxu0
          %v4965 = vadd.f32 0.0, %v4964
          %v4966 = vpop.f32.mrb[0].mxu0
          %4967 = vmatprep.mubr.f32.mxu0 0.0
          %4968 = vmatmul.mubr.f32.gmra.mrb[0].mxu0 %v4878
          %v4969 = vpop.f32.mrb[0].mxu0
          %v4970 = vadd.f32 0.0, %v4969
          %v4971 = vpop.f32.mrb[0].mxu0
          %4972 = vmatprep.mubr.f32.mxu0 0.0
          %4973 = vmatmul.mubr.f32.gmra.mrb[0].mxu0 %v4881
          %v4974 = vpop.f32.mrb[0].mxu0
          %v4975 = vadd.f32 0.0, %v4974
          %v4976 = vpop.f32.mrb[0].mxu0
          %4977 = vmatprep.mubr.f32.mxu0 0.0
          %4978 = vmatmul.mubr.f32.gmra.mrb[0].mxu0 %v4884
          %v4979 = vpop.f32.mrb[0].mxu0
          %v4980 = vadd.f32 0.0, %v4979
          %v4981 = vpop.f32.mrb[0].mxu0
          %4982 = vmatprep.mubr.f32.mxu0 0.0
          %4983 = vmatmul.mubr.f32.gmra.mrb[0].mxu0 %v4887
          %v4984 = vpop.f32.mrb[0].mxu0
          %v4985 = vadd.f32 0.0, %v4984
          %v4986 = vpop.f32.mrb[0].mxu0
          %4987 = vmatprep.mubr.f32.mxu0 0.0
          %4988 = vmatmul.mubr.f32.gmra.mrb[0].mxu0 %v4890
          %v4989 = vpop.f32.mrb[0].mxu0
          %v4990 = vadd.f32 0.0, %v4989
          %v4991 = vpop.f32.mrb[0].mxu0
          %4992 = vmatprep.mubr.f32.mxu0 0.0
          %4993 = vmatmul.mubr.f32.gmra.mrb[0].mxu0 %v4893
          %v4994 = vpop.f32.mrb[0].mxu0
          %v4995 = vadd.f32 0.0, %v4994
          %v4996 = vpop.f32.mrb[0].mxu0
          %4997 = vmatprep.mubr.f32.mxu0 0.0
          %4998 = vmatmul.mubr.f32.gmra.mrb[0].mxu0 %v4896
          %v4999 = vpop.f32.mrb[0].mxu0
          %v5000 = vadd.f32 0.0, %v4999
          %v5001 = vpop.f32.mrb[0].mxu0
          %5002 = vdwg.mxu0
          %v5004 = vsel %vm4689, %v4853, 0
          %v5007 = vsel %vm4689, %v4854, 0
          %v5010 = vsel %vm4689, %v4855, 0
          %v5013 = vsel %vm4689, %v4856, 0
          %v5016 = vsel %vm4689, %v4857, 0
          %v5019 = vsel %vm4689, %v4858, 0
          %v5022 = vsel %vm4689, %v4859, 0
          %v5025 = vsel %vm4689, %v4860, 0
          %5027 = vmatprep.subr.mxu0 0.0
          %5028 = vmatpush1.msra.mxu0 %v4861
          %5029 = vmatprep.subr.mxu0 0.0
          %5030 = vmatpush1.msra.mxu0 %v4862
          %5031 = vmatprep.subr.mxu0 0.0
          %5032 = vmatpush1.msra.mxu0 0.0
          %5033 = vmatprep.subr.mxu0 0.0
          %5034 = vmatpush1.msra.mxu0 0.0
          %5035 = vmatprep.subr.mxu0 0.0
          %5036 = vmatpush1.msra.mxu0 0.0
          %5037 = vmatprep.subr.mxu0 0.0
          %5038 = vmatpush1.msra.mxu0 0.0
          %5039 = vmatprep.subr.mxu0 0.0
          %5040 = vmatpush1.msra.mxu0 0.0
          %5041 = vmatprep.subr.mxu0 0.0
          %5042 = vmatpush1.msra.mxu0 0.0
          %5043 = vmatprep.subr.mxu0 0.0
          %5044 = vmatpush1.msra.mxu0 0.0
          %5045 = vmatprep.subr.mxu0 0.0
          %5046 = vmatpush1.msra.mxu0 0.0
          %5047 = vmatprep.subr.mxu0 0.0
          %5048 = vmatpush1.msra.mxu0 0.0
          %5049 = vmatprep.subr.mxu0 0.0
          %5050 = vmatpush1.msra.mxu0 0.0
          %5051 = vmatprep.subr.mxu0 0.0
          %5052 = vmatpush1.msra.mxu0 0.0
          %5053 = vmatprep.subr.mxu0 0.0
          %5054 = vmatpush1.msra.mxu0 0.0
          %5055 = vmatprep.subr.mxu0 0.0
          %5056 = vmatpush1.msra.mxu0 0.0
          %5057 = vmatprep.subr.mxu0 0.0
          %5058 = vmatpush1.msra.mxu0 0.0
          %5059 = vmatprep.subr.mxu0 0.0
          %5060 = vmatpush1.msra.mxu0 0.0
          %5061 = vmatprep.subr.mxu0 0.0
          %5062 = vmatpush1.msra.mxu0 0.0
          %5063 = vmatprep.subr.mxu0 0.0
          %5064 = vmatpush1.msra.mxu0 0.0
          %5065 = vmatprep.subr.mxu0 0.0
          %5066 = vmatpush1.msra.mxu0 0.0
          %5067 = vmatprep.subr.mxu0 0.0
          %5068 = vmatpush1.msra.mxu0 0.0
          %5069 = vmatprep.subr.mxu0 0.0
          %5070 = vmatpush1.msra.mxu0 0.0
          %5071 = vmatprep.subr.mxu0 0.0
          %5072 = vmatpush1.msra.mxu0 0.0
          %5073 = vmatprep.subr.mxu0 0.0
          %5074 = vmatpush1.msra.mxu0 0.0
          %5075 = vmatprep.subr.mxu0 0.0
          %5076 = vmatpush1.msra.mxu0 0.0
          %5077 = vmatprep.subr.mxu0 0.0
          %5078 = vmatpush1.msra.mxu0 0.0
          %5079 = vmatprep.subr.mxu0 0.0
          %5080 = vmatpush1.msra.mxu0 0.0
          %5081 = vmatprep.subr.mxu0 0.0
          %5082 = vmatpush1.msra.mxu0 0.0
          %5083 = vmatprep.subr.mxu0 0.0
          %5084 = vmatpush1.msra.mxu0 0.0
          %5085 = vmatprep.subr.mxu0 0.0
          %5086 = vmatpush1.msra.mxu0 0.0
          %5087 = vmatprep.subr.mxu0 0.0
          %5088 = vmatpush1.msra.mxu0 0.0
          %5089 = vmatprep.subr.mxu0 0.0
          %5090 = vmatpush1.msra.mxu0 0.0
          %5091 = vmatprep.mubr.f32.mxu0 0.0
          %5092 = vmatmul.mubr.f32.gmra.mrb[0].mxu0 %v5004
          %v5093 = vpop.f32.mrb[0].mxu0
          %v5094 = vadd.f32 %v4965, %v5093
          %v5095 = vpop.f32.mrb[0].mxu0
          %5096 = vmatprep.mubr.f32.mxu0 0.0
          %5097 = vmatmul.mubr.f32.gmra.mrb[0].mxu0 %v5007
          %v5098 = vpop.f32.mrb[0].mxu0
          %v5099 = vadd.f32 %v4970, %v5098
          %v5100 = vpop.f32.mrb[0].mxu0
          %5101 = vmatprep.mubr.f32.mxu0 0.0
          %5102 = vmatmul.mubr.f32.gmra.mrb[0].mxu0 %v5010
          %v5103 = vpop.f32.mrb[0].mxu0
          %v5104 = vadd.f32 %v4975, %v5103
          %v5105 = vpop.f32.mrb[0].mxu0
          %5106 = vmatprep.mubr.f32.mxu0 0.0
          %5107 = vmatmul.mubr.f32.gmra.mrb[0].mxu0 %v5013
          %v5108 = vpop.f32.mrb[0].mxu0
          %v5109 = vadd.f32 %v4980, %v5108
          %v5110 = vpop.f32.mrb[0].mxu0
          %5111 = vmatprep.mubr.f32.mxu0 0.0
          %5112 = vmatmul.mubr.f32.gmra.mrb[0].mxu0 %v5016
          %v5113 = vpop.f32.mrb[0].mxu0
          %v5114 = vadd.f32 %v4985, %v5113
          %v5115 = vpop.f32.mrb[0].mxu0
          %5116 = vmatprep.mubr.f32.mxu0 0.0
          %5117 = vmatmul.mubr.f32.gmra.mrb[0].mxu0 %v5019
          %v5118 = vpop.f32.mrb[0].mxu0
          %v5119 = vadd.f32 %v4990, %v5118
          %v5120 = vpop.f32.mrb[0].mxu0
          %5121 = vmatprep.mubr.f32.mxu0 0.0
          %5122 = vmatmul.mubr.f32.gmra.mrb[0].mxu0 %v5022
          %v5123 = vpop.f32.mrb[0].mxu0
          %v5124 = vadd.f32 %v4995, %v5123
          %v5125 = vpop.f32.mrb[0].mxu0
          %5126 = vmatprep.mubr.f32.mxu0 0.0
          %5127 = vmatmul.mubr.f32.gmra.mrb[0].mxu0 %v5025
          %v5128 = vpop.f32.mrb[0].mxu0
          %v5129 = vadd.f32 %v5000, %v5128
          %v5130 = vpop.f32.mrb[0].mxu0
          %5131 = vdwg.mxu0
          %v5132 = vld [vmem:[#allocation4 + $0x2] sm:$0xff]
          %v5133 = vld [vmem:[#allocation4 + $0x12] sm:$0xff]
          %v5134 = vld [vmem:[#allocation4 + $0x22] sm:$0xff]
          %v5135 = vld [vmem:[#allocation4 + $0x32] sm:$0xff]
          %v5136 = vld [vmem:[#allocation4 + $0x42] sm:$0xff]
          %v5137 = vld [vmem:[#allocation4 + $0x52] sm:$0xff]
          %v5138 = vld [vmem:[#allocation4 + $0x62] sm:$0xff]
          %v5139 = vld [vmem:[#allocation4 + $0x72] sm:$0xff]
          %s5140 = scalar_lea.vmem %s20, 32
          %v5141 = vld [vmem:[%s5140] sm:$0xff]
          %v5142 = vld [vmem:[%s5140 + $0x8] sm:$0xff]
          %v5144 = vsel %vm4689, %v5132, 0
          %v5147 = vsel %vm4689, %v5133, 0
          %v5150 = vsel %vm4689, %v5134, 0
          %v5153 = vsel %vm4689, %v5135, 0
          %v5156 = vsel %vm4689, %v5136, 0
          %v5159 = vsel %vm4689, %v5137, 0
          %v5162 = vsel %vm4689, %v5138, 0
          %v5165 = vsel %vm4689, %v5139, 0
          %5167 = vmatprep.subr.mxu0 0.0
          %5168 = vmatpush1.msra.mxu0 %v5141
          %5169 = vmatprep.subr.mxu0 0.0
          %5170 = vmatpush1.msra.mxu0 %v5142
          %5171 = vmatprep.subr.mxu0 0.0
          %5172 = vmatpush1.msra.mxu0 0.0
          %5173 = vmatprep.subr.mxu0 0.0
          %5174 = vmatpush1.msra.mxu0 0.0
          %5175 = vmatprep.subr.mxu0 0.0
          %5176 = vmatpush1.msra.mxu0 0.0
          %5177 = vmatprep.subr.mxu0 0.0
          %5178 = vmatpush1.msra.mxu0 0.0
          %5179 = vmatprep.subr.mxu0 0.0
          %5180 = vmatpush1.msra.mxu0 0.0
          %5181 = vmatprep.subr.mxu0 0.0
          %5182 = vmatpush1.msra.mxu0 0.0
          %5183 = vmatprep.subr.mxu0 0.0
          %5184 = vmatpush1.msra.mxu0 0.0
          %5185 = vmatprep.subr.mxu0 0.0
          %5186 = vmatpush1.msra.mxu0 0.0
          %5187 = vmatprep.subr.mxu0 0.0
          %5188 = vmatpush1.msra.mxu0 0.0
          %5189 = vmatprep.subr.mxu0 0.0
          %5190 = vmatpush1.msra.mxu0 0.0
          %5191 = vmatprep.subr.mxu0 0.0
          %5192 = vmatpush1.msra.mxu0 0.0
          %5193 = vmatprep.subr.mxu0 0.0
          %5194 = vmatpush1.msra.mxu0 0.0
          %5195 = vmatprep.subr.mxu0 0.0
          %5196 = vmatpush1.msra.mxu0 0.0
          %5197 = vmatprep.subr.mxu0 0.0
          %5198 = vmatpush1.msra.mxu0 0.0
          %5199 = vmatprep.subr.mxu0 0.0
          %5200 = vmatpush1.msra.mxu0 0.0
          %5201 = vmatprep.subr.mxu0 0.0
          %5202 = vmatpush1.msra.mxu0 0.0
          %5203 = vmatprep.subr.mxu0 0.0
          %5204 = vmatpush1.msra.mxu0 0.0
          %5205 = vmatprep.subr.mxu0 0.0
          %5206 = vmatpush1.msra.mxu0 0.0
          %5207 = vmatprep.subr.mxu0 0.0
          %5208 = vmatpush1.msra.mxu0 0.0
          %5209 = vmatprep.subr.mxu0 0.0
          %5210 = vmatpush1.msra.mxu0 0.0
          %5211 = vmatprep.subr.mxu0 0.0
          %5212 = vmatpush1.msra.mxu0 0.0
          %5213 = vmatprep.subr.mxu0 0.0
          %5214 = vmatpush1.msra.mxu0 0.0
          %5215 = vmatprep.subr.mxu0 0.0
          %5216 = vmatpush1.msra.mxu0 0.0
          %5217 = vmatprep.subr.mxu0 0.0
          %5218 = vmatpush1.msra.mxu0 0.0
          %5219 = vmatprep.subr.mxu0 0.0
          %5220 = vmatpush1.msra.mxu0 0.0
          %5221 = vmatprep.subr.mxu0 0.0
          %5222 = vmatpush1.msra.mxu0 0.0
          %5223 = vmatprep.subr.mxu0 0.0
          %5224 = vmatpush1.msra.mxu0 0.0
          %5225 = vmatprep.subr.mxu0 0.0
          %5226 = vmatpush1.msra.mxu0 0.0
          %5227 = vmatprep.subr.mxu0 0.0
          %5228 = vmatpush1.msra.mxu0 0.0
          %5229 = vmatprep.subr.mxu0 0.0
          %5230 = vmatpush1.msra.mxu0 0.0
          %5231 = vmatprep.mubr.f32.mxu0 0.0
          %5232 = vmatmul.mubr.f32.gmra.mrb[0].mxu0 %v5144
          %v5233 = vpop.f32.mrb[0].mxu0
          %v5234 = vadd.f32 0.0, %v5233
          %v5235 = vpop.f32.mrb[0].mxu0
          %5236 = vmatprep.mubr.f32.mxu0 0.0
          %5237 = vmatmul.mubr.f32.gmra.mrb[0].mxu0 %v5147
          %v5238 = vpop.f32.mrb[0].mxu0
          %v5239 = vadd.f32 0.0, %v5238
          %v5240 = vpop.f32.mrb[0].mxu0
          %5241 = vmatprep.mubr.f32.mxu0 0.0
          %5242 = vmatmul.mubr.f32.gmra.mrb[0].mxu0 %v5150
          %v5243 = vpop.f32.mrb[0].mxu0
          %v5244 = vadd.f32 0.0, %v5243
          %v5245 = vpop.f32.mrb[0].mxu0
          %5246 = vmatprep.mubr.f32.mxu0 0.0
          %5247 = vmatmul.mubr.f32.gmra.mrb[0].mxu0 %v5153
          %v5248 = vpop.f32.mrb[0].mxu0
          %v5249 = vadd.f32 0.0, %v5248
          %v5250 = vpop.f32.mrb[0].mxu0
          %5251 = vmatprep.mubr.f32.mxu0 0.0
          %5252 = vmatmul.mubr.f32.gmra.mrb[0].mxu0 %v5156
          %v5253 = vpop.f32.mrb[0].mxu0
          %v5254 = vadd.f32 0.0, %v5253
          %v5255 = vpop.f32.mrb[0].mxu0
          %5256 = vmatprep.mubr.f32.mxu0 0.0
          %5257 = vmatmul.mubr.f32.gmra.mrb[0].mxu0 %v5159
          %v5258 = vpop.f32.mrb[0].mxu0
          %v5259 = vadd.f32 0.0, %v5258
          %v5260 = vpop.f32.mrb[0].mxu0
          %5261 = vmatprep.mubr.f32.mxu0 0.0
          %5262 = vmatmul.mubr.f32.gmra.mrb[0].mxu0 %v5162
          %v5263 = vpop.f32.mrb[0].mxu0
          %v5264 = vadd.f32 0.0, %v5263
          %v5265 = vpop.f32.mrb[0].mxu0
          %5266 = vmatprep.mubr.f32.mxu0 0.0
          %5267 = vmatmul.mubr.f32.gmra.mrb[0].mxu0 %v5165
          %v5268 = vpop.f32.mrb[0].mxu0
          %v5269 = vadd.f32 0.0, %v5268
          %v5270 = vpop.f32.mrb[0].mxu0
          %5271 = vdwg.mxu0
          %v5272 = vadd.f32 %v5094, %v5234
          %v5273 = vadd.f32 %v5099, %v5239
          %v5274 = vadd.f32 %v5104, %v5244
          %v5275 = vadd.f32 %v5109, %v5249
          %v5276 = vadd.f32 %v5114, %v5254
          %v5277 = vadd.f32 %v5119, %v5259
          %v5278 = vadd.f32 %v5124, %v5264
          %v5279 = vadd.f32 %v5129, %v5269
          %v5280 = vld [vmem:[%s4844] sm:$0xff]
          %v5281 = vld [vmem:[%s4844 + $0x10] sm:$0xff]
          %v5282 = vld [vmem:[%s4844 + $0x20] sm:$0xff]
          %v5283 = vld [vmem:[%s4844 + $0x30] sm:$0xff]
          %v5284 = vld [vmem:[%s4844 + $0x40] sm:$0xff]
          %v5285 = vld [vmem:[%s4844 + $0x50] sm:$0xff]
          %v5286 = vld [vmem:[%s4844 + $0x60] sm:$0xff]
          %v5287 = vld [vmem:[%s4844 + $0x70] sm:$0xff]
          %s5288 = scalar_lea.vmem %s20, 48
          %v5289 = vld [vmem:[%s5288] sm:$0xff]
          %v5290 = vld [vmem:[%s5288 + $0x8] sm:$0xff]
          %v5292 = vsel %vm4689, %v5280, 0
          %v5295 = vsel %vm4689, %v5281, 0
          %v5298 = vsel %vm4689, %v5282, 0
          %v5301 = vsel %vm4689, %v5283, 0
          %v5304 = vsel %vm4689, %v5284, 0
          %v5307 = vsel %vm4689, %v5285, 0
          %v5310 = vsel %vm4689, %v5286, 0
          %v5313 = vsel %vm4689, %v5287, 0
          %5315 = vmatprep.subr.mxu0 0.0
          %5316 = vmatpush1.msra.mxu0 %v5289
          %5317 = vmatprep.subr.mxu0 0.0
          %5318 = vmatpush1.msra.mxu0 %v5290
          %5319 = vmatprep.subr.mxu0 0.0
          %5320 = vmatpush1.msra.mxu0 0.0
          %5321 = vmatprep.subr.mxu0 0.0
          %5322 = vmatpush1.msra.mxu0 0.0
          %5323 = vmatprep.subr.mxu0 0.0
          %5324 = vmatpush1.msra.mxu0 0.0
          %5325 = vmatprep.subr.mxu0 0.0
          %5326 = vmatpush1.msra.mxu0 0.0
          %5327 = vmatprep.subr.mxu0 0.0
          %5328 = vmatpush1.msra.mxu0 0.0
          %5329 = vmatprep.subr.mxu0 0.0
          %5330 = vmatpush1.msra.mxu0 0.0
          %5331 = vmatprep.subr.mxu0 0.0
          %5332 = vmatpush1.msra.mxu0 0.0
          %5333 = vmatprep.subr.mxu0 0.0
          %5334 = vmatpush1.msra.mxu0 0.0
          %5335 = vmatprep.subr.mxu0 0.0
          %5336 = vmatpush1.msra.mxu0 0.0
          %5337 = vmatprep.subr.mxu0 0.0
          %5338 = vmatpush1.msra.mxu0 0.0
          %5339 = vmatprep.subr.mxu0 0.0
          %5340 = vmatpush1.msra.mxu0 0.0
          %5341 = vmatprep.subr.mxu0 0.0
          %5342 = vmatpush1.msra.mxu0 0.0
          %5343 = vmatprep.subr.mxu0 0.0
          %5344 = vmatpush1.msra.mxu0 0.0
          %5345 = vmatprep.subr.mxu0 0.0
          %5346 = vmatpush1.msra.mxu0 0.0
          %5347 = vmatprep.subr.mxu0 0.0
          %5348 = vmatpush1.msra.mxu0 0.0
          %5349 = vmatprep.subr.mxu0 0.0
          %5350 = vmatpush1.msra.mxu0 0.0
          %5351 = vmatprep.subr.mxu0 0.0
          %5352 = vmatpush1.msra.mxu0 0.0
          %5353 = vmatprep.subr.mxu0 0.0
          %5354 = vmatpush1.msra.mxu0 0.0
          %5355 = vmatprep.subr.mxu0 0.0
          %5356 = vmatpush1.msra.mxu0 0.0
          %5357 = vmatprep.subr.mxu0 0.0
          %5358 = vmatpush1.msra.mxu0 0.0
          %5359 = vmatprep.subr.mxu0 0.0
          %5360 = vmatpush1.msra.mxu0 0.0
          %5361 = vmatprep.subr.mxu0 0.0
          %5362 = vmatpush1.msra.mxu0 0.0
          %5363 = vmatprep.subr.mxu0 0.0
          %5364 = vmatpush1.msra.mxu0 0.0
          %5365 = vmatprep.subr.mxu0 0.0
          %5366 = vmatpush1.msra.mxu0 0.0
          %5367 = vmatprep.subr.mxu0 0.0
          %5368 = vmatpush1.msra.mxu0 0.0
          %5369 = vmatprep.subr.mxu0 0.0
          %5370 = vmatpush1.msra.mxu0 0.0
          %5371 = vmatprep.subr.mxu0 0.0
          %5372 = vmatpush1.msra.mxu0 0.0
          %5373 = vmatprep.subr.mxu0 0.0
          %5374 = vmatpush1.msra.mxu0 0.0
          %5375 = vmatprep.subr.mxu0 0.0
          %5376 = vmatpush1.msra.mxu0 0.0
          %5377 = vmatprep.subr.mxu0 0.0
          %5378 = vmatpush1.msra.mxu0 0.0
          %5379 = vmatprep.mubr.f32.mxu0 0.0
          %5380 = vmatmul.mubr.f32.gmra.mrb[0].mxu0 %v5292
          %v5381 = vpop.f32.mrb[0].mxu0
          %v5382 = vadd.f32 0.0, %v5381
          %v5383 = vpop.f32.mrb[0].mxu0
          %5384 = vmatprep.mubr.f32.mxu0 0.0
          %5385 = vmatmul.mubr.f32.gmra.mrb[0].mxu0 %v5295
          %v5386 = vpop.f32.mrb[0].mxu0
          %v5387 = vadd.f32 0.0, %v5386
          %v5388 = vpop.f32.mrb[0].mxu0
          %5389 = vmatprep.mubr.f32.mxu0 0.0
          %5390 = vmatmul.mubr.f32.gmra.mrb[0].mxu0 %v5298
          %v5391 = vpop.f32.mrb[0].mxu0
          %v5392 = vadd.f32 0.0, %v5391
          %v5393 = vpop.f32.mrb[0].mxu0
          %5394 = vmatprep.mubr.f32.mxu0 0.0
          %5395 = vmatmul.mubr.f32.gmra.mrb[0].mxu0 %v5301
          %v5396 = vpop.f32.mrb[0].mxu0
          %v5397 = vadd.f32 0.0, %v5396
          %v5398 = vpop.f32.mrb[0].mxu0
          %5399 = vmatprep.mubr.f32.mxu0 0.0
          %5400 = vmatmul.mubr.f32.gmra.mrb[0].mxu0 %v5304
          %v5401 = vpop.f32.mrb[0].mxu0
          %v5402 = vadd.f32 0.0, %v5401
          %v5403 = vpop.f32.mrb[0].mxu0
          %5404 = vmatprep.mubr.f32.mxu0 0.0
          %5405 = vmatmul.mubr.f32.gmra.mrb[0].mxu0 %v5307
          %v5406 = vpop.f32.mrb[0].mxu0
          %v5407 = vadd.f32 0.0, %v5406
          %v5408 = vpop.f32.mrb[0].mxu0
          %5409 = vmatprep.mubr.f32.mxu0 0.0
          %5410 = vmatmul.mubr.f32.gmra.mrb[0].mxu0 %v5310
          %v5411 = vpop.f32.mrb[0].mxu0
          %v5412 = vadd.f32 0.0, %v5411
          %v5413 = vpop.f32.mrb[0].mxu0
          %5414 = vmatprep.mubr.f32.mxu0 0.0
          %5415 = vmatmul.mubr.f32.gmra.mrb[0].mxu0 %v5313
          %v5416 = vpop.f32.mrb[0].mxu0
          %v5417 = vadd.f32 0.0, %v5416
          %v5418 = vpop.f32.mrb[0].mxu0
          %5419 = vdwg.mxu0
          %v5420 = vadd.f32 %v5272, %v5382
          %v5421 = vadd.f32 %v5273, %v5387
          %v5422 = vadd.f32 %v5274, %v5392
          %v5423 = vadd.f32 %v5275, %v5397
          %v5424 = vadd.f32 %v5276, %v5402
          %v5425 = vadd.f32 %v5277, %v5407
          %v5426 = vadd.f32 %v5278, %v5412
          %v5427 = vadd.f32 %v5279, %v5417
          %v5428 = vld [vmem:[%s4844 + $0x1] sm:$0xff]
          %v5429 = vld [vmem:[%s4844 + $0x11] sm:$0xff]
          %v5430 = vld [vmem:[%s4844 + $0x21] sm:$0xff]
          %v5431 = vld [vmem:[%s4844 + $0x31] sm:$0xff]
          %v5432 = vld [vmem:[%s4844 + $0x41] sm:$0xff]
          %v5433 = vld [vmem:[%s4844 + $0x51] sm:$0xff]
          %v5434 = vld [vmem:[%s4844 + $0x61] sm:$0xff]
          %v5435 = vld [vmem:[%s4844 + $0x71] sm:$0xff]
          %s5436 = scalar_lea.vmem %s20, 64
          %v5437 = vld [vmem:[%s5436] sm:$0xff]
          %v5438 = vld [vmem:[%s5436 + $0x8] sm:$0xff]
          %v5440 = vsel %vm4689, %v5428, 0
          %v5443 = vsel %vm4689, %v5429, 0
          %v5446 = vsel %vm4689, %v5430, 0
          %v5449 = vsel %vm4689, %v5431, 0
          %v5452 = vsel %vm4689, %v5432, 0
          %v5455 = vsel %vm4689, %v5433, 0
          %v5458 = vsel %vm4689, %v5434, 0
          %v5461 = vsel %vm4689, %v5435, 0
          %5463 = vmatprep.subr.mxu0 0.0
          %5464 = vmatpush1.msra.mxu0 %v5437
          %5465 = vmatprep.subr.mxu0 0.0
          %5466 = vmatpush1.msra.mxu0 %v5438
          %5467 = vmatprep.subr.mxu0 0.0
          %5468 = vmatpush1.msra.mxu0 0.0
          %5469 = vmatprep.subr.mxu0 0.0
          %5470 = vmatpush1.msra.mxu0 0.0
          %5471 = vmatprep.subr.mxu0 0.0
          %5472 = vmatpush1.msra.mxu0 0.0
          %5473 = vmatprep.subr.mxu0 0.0
          %5474 = vmatpush1.msra.mxu0 0.0
          %5475 = vmatprep.subr.mxu0 0.0
          %5476 = vmatpush1.msra.mxu0 0.0
          %5477 = vmatprep.subr.mxu0 0.0
          %5478 = vmatpush1.msra.mxu0 0.0
          %5479 = vmatprep.subr.mxu0 0.0
          %5480 = vmatpush1.msra.mxu0 0.0
          %5481 = vmatprep.subr.mxu0 0.0
          %5482 = vmatpush1.msra.mxu0 0.0
          %5483 = vmatprep.subr.mxu0 0.0
          %5484 = vmatpush1.msra.mxu0 0.0
          %5485 = vmatprep.subr.mxu0 0.0
          %5486 = vmatpush1.msra.mxu0 0.0
          %5487 = vmatprep.subr.mxu0 0.0
          %5488 = vmatpush1.msra.mxu0 0.0
          %5489 = vmatprep.subr.mxu0 0.0
          %5490 = vmatpush1.msra.mxu0 0.0
          %5491 = vmatprep.subr.mxu0 0.0
          %5492 = vmatpush1.msra.mxu0 0.0
          %5493 = vmatprep.subr.mxu0 0.0
          %5494 = vmatpush1.msra.mxu0 0.0
          %5495 = vmatprep.subr.mxu0 0.0
          %5496 = vmatpush1.msra.mxu0 0.0
          %5497 = vmatprep.subr.mxu0 0.0
          %5498 = vmatpush1.msra.mxu0 0.0
          %5499 = vmatprep.subr.mxu0 0.0
          %5500 = vmatpush1.msra.mxu0 0.0
          %5501 = vmatprep.subr.mxu0 0.0
          %5502 = vmatpush1.msra.mxu0 0.0
          %5503 = vmatprep.subr.mxu0 0.0
          %5504 = vmatpush1.msra.mxu0 0.0
          %5505 = vmatprep.subr.mxu0 0.0
          %5506 = vmatpush1.msra.mxu0 0.0
          %5507 = vmatprep.subr.mxu0 0.0
          %5508 = vmatpush1.msra.mxu0 0.0
          %5509 = vmatprep.subr.mxu0 0.0
          %5510 = vmatpush1.msra.mxu0 0.0
          %5511 = vmatprep.subr.mxu0 0.0
          %5512 = vmatpush1.msra.mxu0 0.0
          %5513 = vmatprep.subr.mxu0 0.0
          %5514 = vmatpush1.msra.mxu0 0.0
          %5515 = vmatprep.subr.mxu0 0.0
          %5516 = vmatpush1.msra.mxu0 0.0
          %5517 = vmatprep.subr.mxu0 0.0
          %5518 = vmatpush1.msra.mxu0 0.0
          %5519 = vmatprep.subr.mxu0 0.0
          %5520 = vmatpush1.msra.mxu0 0.0
          %5521 = vmatprep.subr.mxu0 0.0
          %5522 = vmatpush1.msra.mxu0 0.0
          %5523 = vmatprep.subr.mxu0 0.0
          %5524 = vmatpush1.msra.mxu0 0.0
          %5525 = vmatprep.subr.mxu0 0.0
          %5526 = vmatpush1.msra.mxu0 0.0
          %5527 = vmatprep.mubr.f32.mxu0 0.0
          %5528 = vmatmul.mubr.f32.gmra.mrb[0].mxu0 %v5440
          %v5529 = vpop.f32.mrb[0].mxu0
          %v5530 = vadd.f32 0.0, %v5529
          %v5531 = vpop.f32.mrb[0].mxu0
          %5532 = vmatprep.mubr.f32.mxu0 0.0
          %5533 = vmatmul.mubr.f32.gmra.mrb[0].mxu0 %v5443
          %v5534 = vpop.f32.mrb[0].mxu0
          %v5535 = vadd.f32 0.0, %v5534
          %v5536 = vpop.f32.mrb[0].mxu0
          %5537 = vmatprep.mubr.f32.mxu0 0.0
          %5538 = vmatmul.mubr.f32.gmra.mrb[0].mxu0 %v5446
          %v5539 = vpop.f32.mrb[0].mxu0
          %v5540 = vadd.f32 0.0, %v5539
          %v5541 = vpop.f32.mrb[0].mxu0
          %5542 = vmatprep.mubr.f32.mxu0 0.0
          %5543 = vmatmul.mubr.f32.gmra.mrb[0].mxu0 %v5449
          %v5544 = vpop.f32.mrb[0].mxu0
          %v5545 = vadd.f32 0.0, %v5544
          %v5546 = vpop.f32.mrb[0].mxu0
          %5547 = vmatprep.mubr.f32.mxu0 0.0
          %5548 = vmatmul.mubr.f32.gmra.mrb[0].mxu0 %v5452
          %v5549 = vpop.f32.mrb[0].mxu0
          %v5550 = vadd.f32 0.0, %v5549
          %v5551 = vpop.f32.mrb[0].mxu0
          %5552 = vmatprep.mubr.f32.mxu0 0.0
          %5553 = vmatmul.mubr.f32.gmra.mrb[0].mxu0 %v5455
          %v5554 = vpop.f32.mrb[0].mxu0
          %v5555 = vadd.f32 0.0, %v5554
          %v5556 = vpop.f32.mrb[0].mxu0
          %5557 = vmatprep.mubr.f32.mxu0 0.0
          %5558 = vmatmul.mubr.f32.gmra.mrb[0].mxu0 %v5458
          %v5559 = vpop.f32.mrb[0].mxu0
          %v5560 = vadd.f32 0.0, %v5559
          %v5561 = vpop.f32.mrb[0].mxu0
          %5562 = vmatprep.mubr.f32.mxu0 0.0
          %5563 = vmatmul.mubr.f32.gmra.mrb[0].mxu0 %v5461
          %v5564 = vpop.f32.mrb[0].mxu0
          %v5565 = vadd.f32 0.0, %v5564
          %v5566 = vpop.f32.mrb[0].mxu0
          %5567 = vdwg.mxu0
          %v5568 = vadd.f32 %v5420, %v5530
          %v5569 = vadd.f32 %v5421, %v5535
          %v5570 = vadd.f32 %v5422, %v5540
          %v5571 = vadd.f32 %v5423, %v5545
          %v5572 = vadd.f32 %v5424, %v5550
          %v5573 = vadd.f32 %v5425, %v5555
          %v5574 = vadd.f32 %v5426, %v5560
          %v5575 = vadd.f32 %v5427, %v5565
          %v5576 = vld [vmem:[%s4844 + $0x2] sm:$0xff]
          %v5577 = vld [vmem:[%s4844 + $0x12] sm:$0xff]
          %v5578 = vld [vmem:[%s4844 + $0x22] sm:$0xff]
          %v5579 = vld [vmem:[%s4844 + $0x32] sm:$0xff]
          %v5580 = vld [vmem:[%s4844 + $0x42] sm:$0xff]
          %v5581 = vld [vmem:[%s4844 + $0x52] sm:$0xff]
          %v5582 = vld [vmem:[%s4844 + $0x62] sm:$0xff]
          %v5583 = vld [vmem:[%s4844 + $0x72] sm:$0xff]
          %s5584 = scalar_lea.vmem %s20, 80
          %v5585 = vld [vmem:[%s5584] sm:$0xff]
          %v5586 = vld [vmem:[%s5584 + $0x8] sm:$0xff]
          %v5588 = vsel %vm4689, %v5576, 0
          %v5591 = vsel %vm4689, %v5577, 0
          %v5594 = vsel %vm4689, %v5578, 0
          %v5597 = vsel %vm4689, %v5579, 0
          %v5600 = vsel %vm4689, %v5580, 0
          %v5603 = vsel %vm4689, %v5581, 0
          %v5606 = vsel %vm4689, %v5582, 0
          %v5609 = vsel %vm4689, %v5583, 0
          %5611 = vmatprep.subr.mxu0 0.0
          %5612 = vmatpush1.msra.mxu0 %v5585
          %5613 = vmatprep.subr.mxu0 0.0
          %5614 = vmatpush1.msra.mxu0 %v5586
          %5615 = vmatprep.subr.mxu0 0.0
          %5616 = vmatpush1.msra.mxu0 0.0
          %5617 = vmatprep.subr.mxu0 0.0
          %5618 = vmatpush1.msra.mxu0 0.0
          %5619 = vmatprep.subr.mxu0 0.0
          %5620 = vmatpush1.msra.mxu0 0.0
          %5621 = vmatprep.subr.mxu0 0.0
          %5622 = vmatpush1.msra.mxu0 0.0
          %5623 = vmatprep.subr.mxu0 0.0
          %5624 = vmatpush1.msra.mxu0 0.0
          %5625 = vmatprep.subr.mxu0 0.0
          %5626 = vmatpush1.msra.mxu0 0.0
          %5627 = vmatprep.subr.mxu0 0.0
          %5628 = vmatpush1.msra.mxu0 0.0
          %5629 = vmatprep.subr.mxu0 0.0
          %5630 = vmatpush1.msra.mxu0 0.0
          %5631 = vmatprep.subr.mxu0 0.0
          %5632 = vmatpush1.msra.mxu0 0.0
          %5633 = vmatprep.subr.mxu0 0.0
          %5634 = vmatpush1.msra.mxu0 0.0
          %5635 = vmatprep.subr.mxu0 0.0
          %5636 = vmatpush1.msra.mxu0 0.0
          %5637 = vmatprep.subr.mxu0 0.0
          %5638 = vmatpush1.msra.mxu0 0.0
          %5639 = vmatprep.subr.mxu0 0.0
          %5640 = vmatpush1.msra.mxu0 0.0
          %5641 = vmatprep.subr.mxu0 0.0
          %5642 = vmatpush1.msra.mxu0 0.0
          %5643 = vmatprep.subr.mxu0 0.0
          %5644 = vmatpush1.msra.mxu0 0.0
          %5645 = vmatprep.subr.mxu0 0.0
          %5646 = vmatpush1.msra.mxu0 0.0
          %5647 = vmatprep.subr.mxu0 0.0
          %5648 = vmatpush1.msra.mxu0 0.0
          %5649 = vmatprep.subr.mxu0 0.0
          %5650 = vmatpush1.msra.mxu0 0.0
          %5651 = vmatprep.subr.mxu0 0.0
          %5652 = vmatpush1.msra.mxu0 0.0
          %5653 = vmatprep.subr.mxu0 0.0
          %5654 = vmatpush1.msra.mxu0 0.0
          %5655 = vmatprep.subr.mxu0 0.0
          %5656 = vmatpush1.msra.mxu0 0.0
          %5657 = vmatprep.subr.mxu0 0.0
          %5658 = vmatpush1.msra.mxu0 0.0
          %5659 = vmatprep.subr.mxu0 0.0
          %5660 = vmatpush1.msra.mxu0 0.0
          %5661 = vmatprep.subr.mxu0 0.0
          %5662 = vmatpush1.msra.mxu0 0.0
          %5663 = vmatprep.subr.mxu0 0.0
          %5664 = vmatpush1.msra.mxu0 0.0
          %5665 = vmatprep.subr.mxu0 0.0
          %5666 = vmatpush1.msra.mxu0 0.0
          %5667 = vmatprep.subr.mxu0 0.0
          %5668 = vmatpush1.msra.mxu0 0.0
          %5669 = vmatprep.subr.mxu0 0.0
          %5670 = vmatpush1.msra.mxu0 0.0
          %5671 = vmatprep.subr.mxu0 0.0
          %5672 = vmatpush1.msra.mxu0 0.0
          %5673 = vmatprep.subr.mxu0 0.0
          %5674 = vmatpush1.msra.mxu0 0.0
          %5675 = vmatprep.mubr.f32.mxu0 0.0
          %5676 = vmatmul.mubr.f32.gmra.mrb[0].mxu0 %v5588
          %v5677 = vpop.f32.mrb[0].mxu0
          %v5678 = vadd.f32 0.0, %v5677
          %v5679 = vpop.f32.mrb[0].mxu0
          %5680 = vmatprep.mubr.f32.mxu0 0.0
          %5681 = vmatmul.mubr.f32.gmra.mrb[0].mxu0 %v5591
          %v5682 = vpop.f32.mrb[0].mxu0
          %v5683 = vadd.f32 0.0, %v5682
          %v5684 = vpop.f32.mrb[0].mxu0
          %5685 = vmatprep.mubr.f32.mxu0 0.0
          %5686 = vmatmul.mubr.f32.gmra.mrb[0].mxu0 %v5594
          %v5687 = vpop.f32.mrb[0].mxu0
          %v5688 = vadd.f32 0.0, %v5687
          %v5689 = vpop.f32.mrb[0].mxu0
          %5690 = vmatprep.mubr.f32.mxu0 0.0
          %5691 = vmatmul.mubr.f32.gmra.mrb[0].mxu0 %v5597
          %v5692 = vpop.f32.mrb[0].mxu0
          %v5693 = vadd.f32 0.0, %v5692
          %v5694 = vpop.f32.mrb[0].mxu0
          %5695 = vmatprep.mubr.f32.mxu0 0.0
          %5696 = vmatmul.mubr.f32.gmra.mrb[0].mxu0 %v5600
          %v5697 = vpop.f32.mrb[0].mxu0
          %v5698 = vadd.f32 0.0, %v5697
          %v5699 = vpop.f32.mrb[0].mxu0
          %5700 = vmatprep.mubr.f32.mxu0 0.0
          %5701 = vmatmul.mubr.f32.gmra.mrb[0].mxu0 %v5603
          %v5702 = vpop.f32.mrb[0].mxu0
          %v5703 = vadd.f32 0.0, %v5702
          %v5704 = vpop.f32.mrb[0].mxu0
          %5705 = vmatprep.mubr.f32.mxu0 0.0
          %5706 = vmatmul.mubr.f32.gmra.mrb[0].mxu0 %v5606
          %v5707 = vpop.f32.mrb[0].mxu0
          %v5708 = vadd.f32 0.0, %v5707
          %v5709 = vpop.f32.mrb[0].mxu0
          %5710 = vmatprep.mubr.f32.mxu0 0.0
          %5711 = vmatmul.mubr.f32.gmra.mrb[0].mxu0 %v5609
          %v5712 = vpop.f32.mrb[0].mxu0
          %v5713 = vadd.f32 0.0, %v5712
          %v5714 = vpop.f32.mrb[0].mxu0
          %5715 = vdwg.mxu0
          %v5716 = vadd.f32 %v5568, %v5678
          %v5717 = vadd.f32 %v5569, %v5683
          %v5718 = vadd.f32 %v5570, %v5688
          %v5719 = vadd.f32 %v5571, %v5693
          %v5720 = vadd.f32 %v5572, %v5698
          %v5721 = vadd.f32 %v5573, %v5703
          %v5722 = vadd.f32 %v5574, %v5708
          %v5723 = vadd.f32 %v5575, %v5713
          %s5724 = scalar_lea.vmem [#allocation4], 32
          %v5725 = vld [vmem:[%s5724] sm:$0xff]
          %v5726 = vld [vmem:[%s5724 + $0x10] sm:$0xff]
          %v5727 = vld [vmem:[%s5724 + $0x20] sm:$0xff]
          %v5728 = vld [vmem:[%s5724 + $0x30] sm:$0xff]
          %v5729 = vld [vmem:[%s5724 + $0x40] sm:$0xff]
          %v5730 = vld [vmem:[%s5724 + $0x50] sm:$0xff]
          %v5731 = vld [vmem:[%s5724 + $0x60] sm:$0xff]
          %v5732 = vld [vmem:[%s5724 + $0x70] sm:$0xff]
          %s5733 = scalar_lea.vmem %s20, 96
          %v5734 = vld [vmem:[%s5733] sm:$0xff]
          %v5735 = vld [vmem:[%s5733 + $0x8] sm:$0xff]
          %v5737 = vsel %vm4689, %v5725, 0
          %v5740 = vsel %vm4689, %v5726, 0
          %v5743 = vsel %vm4689, %v5727, 0
          %v5746 = vsel %vm4689, %v5728, 0
          %v5749 = vsel %vm4689, %v5729, 0
          %v5752 = vsel %vm4689, %v5730, 0
          %v5755 = vsel %vm4689, %v5731, 0
          %v5758 = vsel %vm4689, %v5732, 0
          %5760 = vmatprep.subr.mxu0 0.0
          %5761 = vmatpush1.msra.mxu0 %v5734
          %5762 = vmatprep.subr.mxu0 0.0
          %5763 = vmatpush1.msra.mxu0 %v5735
          %5764 = vmatprep.subr.mxu0 0.0
          %5765 = vmatpush1.msra.mxu0 0.0
          %5766 = vmatprep.subr.mxu0 0.0
          %5767 = vmatpush1.msra.mxu0 0.0
          %5768 = vmatprep.subr.mxu0 0.0
          %5769 = vmatpush1.msra.mxu0 0.0
          %5770 = vmatprep.subr.mxu0 0.0
          %5771 = vmatpush1.msra.mxu0 0.0
          %5772 = vmatprep.subr.mxu0 0.0
          %5773 = vmatpush1.msra.mxu0 0.0
          %5774 = vmatprep.subr.mxu0 0.0
          %5775 = vmatpush1.msra.mxu0 0.0
          %5776 = vmatprep.subr.mxu0 0.0
          %5777 = vmatpush1.msra.mxu0 0.0
          %5778 = vmatprep.subr.mxu0 0.0
          %5779 = vmatpush1.msra.mxu0 0.0
          %5780 = vmatprep.subr.mxu0 0.0
          %5781 = vmatpush1.msra.mxu0 0.0
          %5782 = vmatprep.subr.mxu0 0.0
          %5783 = vmatpush1.msra.mxu0 0.0
          %5784 = vmatprep.subr.mxu0 0.0
          %5785 = vmatpush1.msra.mxu0 0.0
          %5786 = vmatprep.subr.mxu0 0.0
          %5787 = vmatpush1.msra.mxu0 0.0
          %5788 = vmatprep.subr.mxu0 0.0
          %5789 = vmatpush1.msra.mxu0 0.0
          %5790 = vmatprep.subr.mxu0 0.0
          %5791 = vmatpush1.msra.mxu0 0.0
          %5792 = vmatprep.subr.mxu0 0.0
          %5793 = vmatpush1.msra.mxu0 0.0
          %5794 = vmatprep.subr.mxu0 0.0
          %5795 = vmatpush1.msra.mxu0 0.0
          %5796 = vmatprep.subr.mxu0 0.0
          %5797 = vmatpush1.msra.mxu0 0.0
          %5798 = vmatprep.subr.mxu0 0.0
          %5799 = vmatpush1.msra.mxu0 0.0
          %5800 = vmatprep.subr.mxu0 0.0
          %5801 = vmatpush1.msra.mxu0 0.0
          %5802 = vmatprep.subr.mxu0 0.0
          %5803 = vmatpush1.msra.mxu0 0.0
          %5804 = vmatprep.subr.mxu0 0.0
          %5805 = vmatpush1.msra.mxu0 0.0
          %5806 = vmatprep.subr.mxu0 0.0
          %5807 = vmatpush1.msra.mxu0 0.0
          %5808 = vmatprep.subr.mxu0 0.0
          %5809 = vmatpush1.msra.mxu0 0.0
          %5810 = vmatprep.subr.mxu0 0.0
          %5811 = vmatpush1.msra.mxu0 0.0
          %5812 = vmatprep.subr.mxu0 0.0
          %5813 = vmatpush1.msra.mxu0 0.0
          %5814 = vmatprep.subr.mxu0 0.0
          %5815 = vmatpush1.msra.mxu0 0.0
          %5816 = vmatprep.subr.mxu0 0.0
          %5817 = vmatpush1.msra.mxu0 0.0
          %5818 = vmatprep.subr.mxu0 0.0
          %5819 = vmatpush1.msra.mxu0 0.0
          %5820 = vmatprep.subr.mxu0 0.0
          %5821 = vmatpush1.msra.mxu0 0.0
          %5822 = vmatprep.subr.mxu0 0.0
          %5823 = vmatpush1.msra.mxu0 0.0
          %5824 = vmatprep.mubr.f32.mxu0 0.0
          %5825 = vmatmul.mubr.f32.gmra.mrb[0].mxu0 %v5737
          %v5826 = vpop.f32.mrb[0].mxu0
          %v5827 = vadd.f32 0.0, %v5826
          %v5828 = vpop.f32.mrb[0].mxu0
          %5829 = vmatprep.mubr.f32.mxu0 0.0
          %5830 = vmatmul.mubr.f32.gmra.mrb[0].mxu0 %v5740
          %v5831 = vpop.f32.mrb[0].mxu0
          %v5832 = vadd.f32 0.0, %v5831
          %v5833 = vpop.f32.mrb[0].mxu0
          %5834 = vmatprep.mubr.f32.mxu0 0.0
          %5835 = vmatmul.mubr.f32.gmra.mrb[0].mxu0 %v5743
          %v5836 = vpop.f32.mrb[0].mxu0
          %v5837 = vadd.f32 0.0, %v5836
          %v5838 = vpop.f32.mrb[0].mxu0
          %5839 = vmatprep.mubr.f32.mxu0 0.0
          %5840 = vmatmul.mubr.f32.gmra.mrb[0].mxu0 %v5746
          %v5841 = vpop.f32.mrb[0].mxu0
          %v5842 = vadd.f32 0.0, %v5841
          %v5843 = vpop.f32.mrb[0].mxu0
          %5844 = vmatprep.mubr.f32.mxu0 0.0
          %5845 = vmatmul.mubr.f32.gmra.mrb[0].mxu0 %v5749
          %v5846 = vpop.f32.mrb[0].mxu0
          %v5847 = vadd.f32 0.0, %v5846
          %v5848 = vpop.f32.mrb[0].mxu0
          %5849 = vmatprep.mubr.f32.mxu0 0.0
          %5850 = vmatmul.mubr.f32.gmra.mrb[0].mxu0 %v5752
          %v5851 = vpop.f32.mrb[0].mxu0
          %v5852 = vadd.f32 0.0, %v5851
          %v5853 = vpop.f32.mrb[0].mxu0
          %5854 = vmatprep.mubr.f32.mxu0 0.0
          %5855 = vmatmul.mubr.f32.gmra.mrb[0].mxu0 %v5755
          %v5856 = vpop.f32.mrb[0].mxu0
          %v5857 = vadd.f32 0.0, %v5856
          %v5858 = vpop.f32.mrb[0].mxu0
          %5859 = vmatprep.mubr.f32.mxu0 0.0
          %5860 = vmatmul.mubr.f32.gmra.mrb[0].mxu0 %v5758
          %v5861 = vpop.f32.mrb[0].mxu0
          %v5862 = vadd.f32 0.0, %v5861
          %v5863 = vpop.f32.mrb[0].mxu0
          %5864 = vdwg.mxu0
          %v5865 = vadd.f32 %v5716, %v5827
          %v5866 = vadd.f32 %v5717, %v5832
          %v5867 = vadd.f32 %v5718, %v5837
          %v5868 = vadd.f32 %v5719, %v5842
          %v5869 = vadd.f32 %v5720, %v5847
          %v5870 = vadd.f32 %v5721, %v5852
          %v5871 = vadd.f32 %v5722, %v5857
          %v5872 = vadd.f32 %v5723, %v5862
          %v5873 = vld [vmem:[%s5724 + $0x1] sm:$0xff]
          %v5874 = vld [vmem:[%s5724 + $0x11] sm:$0xff]
          %v5875 = vld [vmem:[%s5724 + $0x21] sm:$0xff]
          %v5876 = vld [vmem:[%s5724 + $0x31] sm:$0xff]
          %v5877 = vld [vmem:[%s5724 + $0x41] sm:$0xff]
          %v5878 = vld [vmem:[%s5724 + $0x51] sm:$0xff]
          %v5879 = vld [vmem:[%s5724 + $0x61] sm:$0xff]
          %v5880 = vld [vmem:[%s5724 + $0x71] sm:$0xff]
          %s5881 = scalar_lea.vmem %s20, 112
          %v5882 = vld [vmem:[%s5881] sm:$0xff]
          %v5883 = vld [vmem:[%s5881 + $0x8] sm:$0xff]
          %v5885 = vsel %vm4689, %v5873, 0
          %v5888 = vsel %vm4689, %v5874, 0
          %v5891 = vsel %vm4689, %v5875, 0
          %v5894 = vsel %vm4689, %v5876, 0
          %v5897 = vsel %vm4689, %v5877, 0
          %v5900 = vsel %vm4689, %v5878, 0
          %v5903 = vsel %vm4689, %v5879, 0
          %v5906 = vsel %vm4689, %v5880, 0
          %5908 = vmatprep.subr.mxu0 0.0
          %5909 = vmatpush1.msra.mxu0 %v5882
          %5910 = vmatprep.subr.mxu0 0.0
          %5911 = vmatpush1.msra.mxu0 %v5883
          %5912 = vmatprep.subr.mxu0 0.0
          %5913 = vmatpush1.msra.mxu0 0.0
          %5914 = vmatprep.subr.mxu0 0.0
          %5915 = vmatpush1.msra.mxu0 0.0
          %5916 = vmatprep.subr.mxu0 0.0
          %5917 = vmatpush1.msra.mxu0 0.0
          %5918 = vmatprep.subr.mxu0 0.0
          %5919 = vmatpush1.msra.mxu0 0.0
          %5920 = vmatprep.subr.mxu0 0.0
          %5921 = vmatpush1.msra.mxu0 0.0
          %5922 = vmatprep.subr.mxu0 0.0
          %5923 = vmatpush1.msra.mxu0 0.0
          %5924 = vmatprep.subr.mxu0 0.0
          %5925 = vmatpush1.msra.mxu0 0.0
          %5926 = vmatprep.subr.mxu0 0.0
          %5927 = vmatpush1.msra.mxu0 0.0
          %5928 = vmatprep.subr.mxu0 0.0
          %5929 = vmatpush1.msra.mxu0 0.0
          %5930 = vmatprep.subr.mxu0 0.0
          %5931 = vmatpush1.msra.mxu0 0.0
          %5932 = vmatprep.subr.mxu0 0.0
          %5933 = vmatpush1.msra.mxu0 0.0
          %5934 = vmatprep.subr.mxu0 0.0
          %5935 = vmatpush1.msra.mxu0 0.0
          %5936 = vmatprep.subr.mxu0 0.0
          %5937 = vmatpush1.msra.mxu0 0.0
          %5938 = vmatprep.subr.mxu0 0.0
          %5939 = vmatpush1.msra.mxu0 0.0
          %5940 = vmatprep.subr.mxu0 0.0
          %5941 = vmatpush1.msra.mxu0 0.0
          %5942 = vmatprep.subr.mxu0 0.0
          %5943 = vmatpush1.msra.mxu0 0.0
          %5944 = vmatprep.subr.mxu0 0.0
          %5945 = vmatpush1.msra.mxu0 0.0
          %5946 = vmatprep.subr.mxu0 0.0
          %5947 = vmatpush1.msra.mxu0 0.0
          %5948 = vmatprep.subr.mxu0 0.0
          %5949 = vmatpush1.msra.mxu0 0.0
          %5950 = vmatprep.subr.mxu0 0.0
          %5951 = vmatpush1.msra.mxu0 0.0
          %5952 = vmatprep.subr.mxu0 0.0
          %5953 = vmatpush1.msra.mxu0 0.0
          %5954 = vmatprep.subr.mxu0 0.0
          %5955 = vmatpush1.msra.mxu0 0.0
          %5956 = vmatprep.subr.mxu0 0.0
          %5957 = vmatpush1.msra.mxu0 0.0
          %5958 = vmatprep.subr.mxu0 0.0
          %5959 = vmatpush1.msra.mxu0 0.0
          %5960 = vmatprep.subr.mxu0 0.0
          %5961 = vmatpush1.msra.mxu0 0.0
          %5962 = vmatprep.subr.mxu0 0.0
          %5963 = vmatpush1.msra.mxu0 0.0
          %5964 = vmatprep.subr.mxu0 0.0
          %5965 = vmatpush1.msra.mxu0 0.0
          %5966 = vmatprep.subr.mxu0 0.0
          %5967 = vmatpush1.msra.mxu0 0.0
          %5968 = vmatprep.subr.mxu0 0.0
          %5969 = vmatpush1.msra.mxu0 0.0
          %5970 = vmatprep.subr.mxu0 0.0
          %5971 = vmatpush1.msra.mxu0 0.0
          %5972 = vmatprep.mubr.f32.mxu0 0.0
          %5973 = vmatmul.mubr.f32.gmra.mrb[0].mxu0 %v5885
          %v5974 = vpop.f32.mrb[0].mxu0
          %v5975 = vadd.f32 0.0, %v5974
          %v5976 = vpop.f32.mrb[0].mxu0
          %5977 = vmatprep.mubr.f32.mxu0 0.0
          %5978 = vmatmul.mubr.f32.gmra.mrb[0].mxu0 %v5888
          %v5979 = vpop.f32.mrb[0].mxu0
          %v5980 = vadd.f32 0.0, %v5979
          %v5981 = vpop.f32.mrb[0].mxu0
          %5982 = vmatprep.mubr.f32.mxu0 0.0
          %5983 = vmatmul.mubr.f32.gmra.mrb[0].mxu0 %v5891
          %v5984 = vpop.f32.mrb[0].mxu0
          %v5985 = vadd.f32 0.0, %v5984
          %v5986 = vpop.f32.mrb[0].mxu0
          %5987 = vmatprep.mubr.f32.mxu0 0.0
          %5988 = vmatmul.mubr.f32.gmra.mrb[0].mxu0 %v5894
          %v5989 = vpop.f32.mrb[0].mxu0
          %v5990 = vadd.f32 0.0, %v5989
          %v5991 = vpop.f32.mrb[0].mxu0
          %5992 = vmatprep.mubr.f32.mxu0 0.0
          %5993 = vmatmul.mubr.f32.gmra.mrb[0].mxu0 %v5897
          %v5994 = vpop.f32.mrb[0].mxu0
          %v5995 = vadd.f32 0.0, %v5994
          %v5996 = vpop.f32.mrb[0].mxu0
          %5997 = vmatprep.mubr.f32.mxu0 0.0
          %5998 = vmatmul.mubr.f32.gmra.mrb[0].mxu0 %v5900
          %v5999 = vpop.f32.mrb[0].mxu0
          %v6000 = vadd.f32 0.0, %v5999
          %v6001 = vpop.f32.mrb[0].mxu0
          %6002 = vmatprep.mubr.f32.mxu0 0.0
          %6003 = vmatmul.mubr.f32.gmra.mrb[0].mxu0 %v5903
          %v6004 = vpop.f32.mrb[0].mxu0
          %v6005 = vadd.f32 0.0, %v6004
          %v6006 = vpop.f32.mrb[0].mxu0
          %6007 = vmatprep.mubr.f32.mxu0 0.0
          %6008 = vmatmul.mubr.f32.gmra.mrb[0].mxu0 %v5906
          %v6009 = vpop.f32.mrb[0].mxu0
          %v6010 = vadd.f32 0.0, %v6009
          %v6011 = vpop.f32.mrb[0].mxu0
          %6012 = vdwg.mxu0
          %v6013 = vadd.f32 %v5865, %v5975
          %v6014 = vadd.f32 %v5866, %v5980
          %v6015 = vadd.f32 %v5867, %v5985
          %v6016 = vadd.f32 %v5868, %v5990
          %v6017 = vadd.f32 %v5869, %v5995
          %v6018 = vadd.f32 %v5870, %v6000
          %v6019 = vadd.f32 %v5871, %v6005
          %v6020 = vadd.f32 %v5872, %v6010
          %v6021 = vld [vmem:[%s5724 + $0x2] sm:$0xff]
          %v6022 = vld [vmem:[%s5724 + $0x12] sm:$0xff]
          %v6023 = vld [vmem:[%s5724 + $0x22] sm:$0xff]
          %v6024 = vld [vmem:[%s5724 + $0x32] sm:$0xff]
          %v6025 = vld [vmem:[%s5724 + $0x42] sm:$0xff]
          %v6026 = vld [vmem:[%s5724 + $0x52] sm:$0xff]
          %v6027 = vld [vmem:[%s5724 + $0x62] sm:$0xff]
          %v6028 = vld [vmem:[%s5724 + $0x72] sm:$0xff]
          %s6029 = scalar_lea.vmem %s20, 128
          %v6030 = vld [vmem:[%s6029] sm:$0xff]
          %v6031 = vld [vmem:[%s6029 + $0x8] sm:$0xff]
          %v6033 = vsel %vm4689, %v6021, 0
          %v6036 = vsel %vm4689, %v6022, 0
          %v6039 = vsel %vm4689, %v6023, 0
          %v6042 = vsel %vm4689, %v6024, 0
          %v6045 = vsel %vm4689, %v6025, 0
          %v6048 = vsel %vm4689, %v6026, 0
          %v6051 = vsel %vm4689, %v6027, 0
          %v6054 = vsel %vm4689, %v6028, 0
          %6056 = vmatprep.subr.mxu0 0.0
          %6057 = vmatpush1.msra.mxu0 %v6030
          %6058 = vmatprep.subr.mxu0 0.0
          %6059 = vmatpush1.msra.mxu0 %v6031
          %6060 = vmatprep.subr.mxu0 0.0
          %6061 = vmatpush1.msra.mxu0 0.0
          %6062 = vmatprep.subr.mxu0 0.0
          %6063 = vmatpush1.msra.mxu0 0.0
          %6064 = vmatprep.subr.mxu0 0.0
          %6065 = vmatpush1.msra.mxu0 0.0
          %6066 = vmatprep.subr.mxu0 0.0
          %6067 = vmatpush1.msra.mxu0 0.0
          %6068 = vmatprep.subr.mxu0 0.0
          %6069 = vmatpush1.msra.mxu0 0.0
          %6070 = vmatprep.subr.mxu0 0.0
          %6071 = vmatpush1.msra.mxu0 0.0
          %6072 = vmatprep.subr.mxu0 0.0
          %6073 = vmatpush1.msra.mxu0 0.0
          %6074 = vmatprep.subr.mxu0 0.0
          %6075 = vmatpush1.msra.mxu0 0.0
          %6076 = vmatprep.subr.mxu0 0.0
          %6077 = vmatpush1.msra.mxu0 0.0
          %6078 = vmatprep.subr.mxu0 0.0
          %6079 = vmatpush1.msra.mxu0 0.0
          %6080 = vmatprep.subr.mxu0 0.0
          %6081 = vmatpush1.msra.mxu0 0.0
          %6082 = vmatprep.subr.mxu0 0.0
          %6083 = vmatpush1.msra.mxu0 0.0
          %6084 = vmatprep.subr.mxu0 0.0
          %6085 = vmatpush1.msra.mxu0 0.0
          %6086 = vmatprep.subr.mxu0 0.0
          %6087 = vmatpush1.msra.mxu0 0.0
          %6088 = vmatprep.subr.mxu0 0.0
          %6089 = vmatpush1.msra.mxu0 0.0
          %6090 = vmatprep.subr.mxu0 0.0
          %6091 = vmatpush1.msra.mxu0 0.0
          %6092 = vmatprep.subr.mxu0 0.0
          %6093 = vmatpush1.msra.mxu0 0.0
          %6094 = vmatprep.subr.mxu0 0.0
          %6095 = vmatpush1.msra.mxu0 0.0
          %6096 = vmatprep.subr.mxu0 0.0
          %6097 = vmatpush1.msra.mxu0 0.0
          %6098 = vmatprep.subr.mxu0 0.0
          %6099 = vmatpush1.msra.mxu0 0.0
          %6100 = vmatprep.subr.mxu0 0.0
          %6101 = vmatpush1.msra.mxu0 0.0
          %6102 = vmatprep.subr.mxu0 0.0
          %6103 = vmatpush1.msra.mxu0 0.0
          %6104 = vmatprep.subr.mxu0 0.0
          %6105 = vmatpush1.msra.mxu0 0.0
          %6106 = vmatprep.subr.mxu0 0.0
          %6107 = vmatpush1.msra.mxu0 0.0
          %6108 = vmatprep.subr.mxu0 0.0
          %6109 = vmatpush1.msra.mxu0 0.0
          %6110 = vmatprep.subr.mxu0 0.0
          %6111 = vmatpush1.msra.mxu0 0.0
          %6112 = vmatprep.subr.mxu0 0.0
          %6113 = vmatpush1.msra.mxu0 0.0
          %6114 = vmatprep.subr.mxu0 0.0
          %6115 = vmatpush1.msra.mxu0 0.0
          %6116 = vmatprep.subr.mxu0 0.0
          %6117 = vmatpush1.msra.mxu0 0.0
          %6118 = vmatprep.subr.mxu0 0.0
          %6119 = vmatpush1.msra.mxu0 0.0
          %6120 = vmatprep.mubr.f32.mxu0 0.0
          %6121 = vmatmul.mubr.f32.gmra.mrb[0].mxu0 %v6033
          %v6122 = vpop.f32.mrb[0].mxu0
          %v6123 = vadd.f32 0.0, %v6122
          %v6124 = vpop.f32.mrb[0].mxu0
          %6125 = vmatprep.mubr.f32.mxu0 0.0
          %6126 = vmatmul.mubr.f32.gmra.mrb[0].mxu0 %v6036
          %v6127 = vpop.f32.mrb[0].mxu0
          %v6128 = vadd.f32 0.0, %v6127
          %v6129 = vpop.f32.mrb[0].mxu0
          %6130 = vmatprep.mubr.f32.mxu0 0.0
          %6131 = vmatmul.mubr.f32.gmra.mrb[0].mxu0 %v6039
          %v6132 = vpop.f32.mrb[0].mxu0
          %v6133 = vadd.f32 0.0, %v6132
          %v6134 = vpop.f32.mrb[0].mxu0
          %6135 = vmatprep.mubr.f32.mxu0 0.0
          %6136 = vmatmul.mubr.f32.gmra.mrb[0].mxu0 %v6042
          %v6137 = vpop.f32.mrb[0].mxu0
          %v6138 = vadd.f32 0.0, %v6137
          %v6139 = vpop.f32.mrb[0].mxu0
          %6140 = vmatprep.mubr.f32.mxu0 0.0
          %6141 = vmatmul.mubr.f32.gmra.mrb[0].mxu0 %v6045
          %v6142 = vpop.f32.mrb[0].mxu0
          %v6143 = vadd.f32 0.0, %v6142
          %v6144 = vpop.f32.mrb[0].mxu0
          %6145 = vmatprep.mubr.f32.mxu0 0.0
          %6146 = vmatmul.mubr.f32.gmra.mrb[0].mxu0 %v6048
          %v6147 = vpop.f32.mrb[0].mxu0
          %v6148 = vadd.f32 0.0, %v6147
          %v6149 = vpop.f32.mrb[0].mxu0
          %6150 = vmatprep.mubr.f32.mxu0 0.0
          %6151 = vmatmul.mubr.f32.gmra.mrb[0].mxu0 %v6051
          %v6152 = vpop.f32.mrb[0].mxu0
          %v6153 = vadd.f32 0.0, %v6152
          %v6154 = vpop.f32.mrb[0].mxu0
          %6155 = vmatprep.mubr.f32.mxu0 0.0
          %6156 = vmatmul.mubr.f32.gmra.mrb[0].mxu0 %v6054
          %v6157 = vpop.f32.mrb[0].mxu0
          %v6158 = vadd.f32 0.0, %v6157
          %v6159 = vpop.f32.mrb[0].mxu0
          %6160 = vdwg.mxu0
          %v6161 = vadd.f32 %v6013, %v6123
          %v6162 = vadd.f32 %v6014, %v6128
          %v6163 = vadd.f32 %v6015, %v6133
          %v6164 = vadd.f32 %v6016, %v6138
          %v6165 = vadd.f32 %v6017, %v6143
          %v6166 = vadd.f32 %v6018, %v6148
          %v6167 = vadd.f32 %v6019, %v6153
          %v6168 = vadd.f32 %v6020, %v6158
          %v6169 = vld [vmem:[%s21] sm:$0x1]
          %v6170 = vld [vmem:[%s22] sm:$0x1]
          %v6171 = vsel %vm4689, %v6161, 0.0
          %6172 = vadd.xlane.f32.xlu0 %v6171
          %v6173 = vpop.xlane.xlu0 %6172
          %v6174 = vsel %vm4689, %v6162, 0.0
          %6175 = vadd.xlane.f32.xlu0 %v6174
          %v6176 = vpop.xlane.xlu0 %6175
          %v6177 = vsel %vm4689, %v6163, 0.0
          %6178 = vadd.xlane.f32.xlu0 %v6177
          %v6179 = vpop.xlane.xlu0 %6178
          %v6180 = vsel %vm4689, %v6164, 0.0
          %6181 = vadd.xlane.f32.xlu0 %v6180
          %v6182 = vpop.xlane.xlu0 %6181
          %v6183 = vsel %vm4689, %v6165, 0.0
          %6184 = vadd.xlane.f32.xlu0 %v6183
          %v6185 = vpop.xlane.xlu0 %6184
          %v6186 = vsel %vm4689, %v6166, 0.0
          %6187 = vadd.xlane.f32.xlu0 %v6186
          %v6188 = vpop.xlane.xlu0 %6187
          %v6189 = vsel %vm4689, %v6167, 0.0
          %6190 = vadd.xlane.f32.xlu0 %v6189
          %v6191 = vpop.xlane.xlu0 %6190
          %v6192 = vsel %vm4689, %v6168, 0.0
          %6193 = vadd.xlane.f32.xlu0 %v6192
          %v6194 = vpop.xlane.xlu0 %6193
          %v6195 = vmul.f32 %v6173, %v4714
          %v6196 = vmul.f32 %v6176, %v4714
          %v6197 = vmul.f32 %v6179, %v4714
          %v6198 = vmul.f32 %v6182, %v4714
          %v6199 = vmul.f32 %v6185, %v4714
          %v6200 = vmul.f32 %v6188, %v4714
          %v6201 = vmul.f32 %v6191, %v4714
          %v6202 = vmul.f32 %v6194, %v4714
          %v6203 = vsub.f32 %v6161, %v6195
          %v6204 = vsub.f32 %v6162, %v6196
          %v6205 = vsub.f32 %v6163, %v6197
          %v6206 = vsub.f32 %v6164, %v6198
          %v6207 = vsub.f32 %v6165, %v6199
          %v6208 = vsub.f32 %v6166, %v6200
          %v6209 = vsub.f32 %v6167, %v6201
          %v6210 = vsub.f32 %v6168, %v6202
          %v6211 = vmul.f32 %v6203, %v6203
          %v6212 = vmul.f32 %v6204, %v6204
          %v6213 = vmul.f32 %v6205, %v6205
          %v6214 = vmul.f32 %v6206, %v6206
          %v6215 = vmul.f32 %v6207, %v6207
          %v6216 = vmul.f32 %v6208, %v6208
          %v6217 = vmul.f32 %v6209, %v6209
          %v6218 = vmul.f32 %v6210, %v6210
          %v6219 = vsel %vm4689, %v6211, 0.0
          %6220 = vadd.xlane.f32.xlu0 %v6219
          %v6221 = vpop.xlane.xlu0 %6220
          %v6222 = vsel %vm4689, %v6212, 0.0
          %6223 = vadd.xlane.f32.xlu0 %v6222
          %v6224 = vpop.xlane.xlu0 %6223
          %v6225 = vsel %vm4689, %v6213, 0.0
          %6226 = vadd.xlane.f32.xlu0 %v6225
          %v6227 = vpop.xlane.xlu0 %6226
          %v6228 = vsel %vm4689, %v6214, 0.0
          %6229 = vadd.xlane.f32.xlu0 %v6228
          %v6230 = vpop.xlane.xlu0 %6229
          %v6231 = vsel %vm4689, %v6215, 0.0
          %6232 = vadd.xlane.f32.xlu0 %v6231
          %v6233 = vpop.xlane.xlu0 %6232
          %v6234 = vsel %vm4689, %v6216, 0.0
          %6235 = vadd.xlane.f32.xlu0 %v6234
          %v6236 = vpop.xlane.xlu0 %6235
          %v6237 = vsel %vm4689, %v6217, 0.0
          %6238 = vadd.xlane.f32.xlu0 %v6237
          %v6239 = vpop.xlane.xlu0 %6238
          %v6240 = vsel %vm4689, %v6218, 0.0
          %6241 = vadd.xlane.f32.xlu0 %v6240
          %v6242 = vpop.xlane.xlu0 %6241
          %v6243 = vmul.f32 %v6221, %v4714
          %v6244 = vmul.f32 %v6224, %v4714
          %v6245 = vmul.f32 %v6227, %v4714
          %v6246 = vmul.f32 %v6230, %v4714
          %v6247 = vmul.f32 %v6233, %v4714
          %v6248 = vmul.f32 %v6236, %v4714
          %v6249 = vmul.f32 %v6239, %v4714
          %v6250 = vmul.f32 %v6242, %v4714
          %v6251 = vadd.f32 %v6243, 1e-06
          %v6252 = vadd.f32 %v6244, 1e-06
          %v6253 = vadd.f32 %v6245, 1e-06
          %v6254 = vadd.f32 %v6246, 1e-06
          %v6255 = vadd.f32 %v6247, 1e-06
          %v6256 = vadd.f32 %v6248, 1e-06
          %v6257 = vadd.f32 %v6249, 1e-06
          %v6258 = vadd.f32 %v6250, 1e-06
          %v6259 = vrsqrt.pop %v6251
          %v6260 = vrsqrt.pop %v6252
          %v6261 = vrsqrt.pop %v6253
          %v6262 = vrsqrt.pop %v6254
          %v6263 = vrsqrt.pop %v6255
          %v6264 = vrsqrt.pop %v6256
          %v6265 = vrsqrt.pop %v6257
          %v6266 = vrsqrt.pop %v6258
          %v6267 = vmul.f32 %v6203, %v6259
          %v6268 = vmul.f32 %v6204, %v6260
          %v6269 = vmul.f32 %v6205, %v6261
          %v6270 = vmul.f32 %v6206, %v6262
          %v6271 = vmul.f32 %v6207, %v6263
          %v6272 = vmul.f32 %v6208, %v6264
          %v6273 = vmul.f32 %v6209, %v6265
          %v6274 = vmul.f32 %v6210, %v6266
          %v6276 = vlaneseq
          %v6277 = vshrl.u32 %v6276, 7
          %v6278 = vsub.s32 0, %v6277
          %v6279 = vrot.slane %v6169, %v6278
          %v6281 = vmul.f32 %v6267, %v6279
          %v6282 = vmul.f32 %v6268, %v6279
          %v6283 = vmul.f32 %v6269, %v6279
          %v6284 = vmul.f32 %v6270, %v6279
          %v6285 = vmul.f32 %v6271, %v6279
          %v6286 = vmul.f32 %v6272, %v6279
          %v6287 = vmul.f32 %v6273, %v6279
          %v6288 = vmul.f32 %v6274, %v6279
          %v6290 = vlaneseq
          %v6291 = vshrl.u32 %v6290, 7
          %v6292 = vsub.s32 0, %v6291
          %v6293 = vrot.slane %v6170, %v6292
          %v6295 = vadd.f32 %v6281, %v6293
          %v6296 = vadd.f32 %v6282, %v6293
          %v6297 = vadd.f32 %v6283, %v6293
          %v6298 = vadd.f32 %v6284, %v6293
          %v6299 = vadd.f32 %v6285, %v6293
          %v6300 = vadd.f32 %v6286, %v6293
          %v6301 = vadd.f32 %v6287, %v6293
          %v6302 = vadd.f32 %v6288, %v6293
          %6303 = vst.msk [vmem:[%s863] sm:$0xff] %vm4689, %v6295
          %6304 = vst.msk [vmem:[%s863 + $0x8] sm:$0xff] %vm4689, %v6296
          %6305 = vst.msk [vmem:[%s863 + $0x10] sm:$0xff] %vm4689, %v6297
          %6306 = vst.msk [vmem:[%s863 + $0x18] sm:$0xff] %vm4689, %v6298
          %6307 = vst.msk [vmem:[%s863 + $0x20] sm:$0xff] %vm4689, %v6299
          %6308 = vst.msk [vmem:[%s863 + $0x28] sm:$0xff] %vm4689, %v6300
          %6309 = vst.msk [vmem:[%s863 + $0x30] sm:$0xff] %vm4689, %v6301
          %6310 = vst.msk [vmem:[%s863 + $0x38] sm:$0xff] %vm4689, %v6302
        $region132: #{image_encoder_vit_forward.1} parent=111 // pred_fallthru
          _
        %s6311 = sand.u32 %s605, 1
        %s6312 = scalar_lea.sflag [#allocation6], %s6311
        %s6313 = sand.u32 %s605, 1
        %s6314 = smul.addr %s6313, 64
        %s6315 = scalar_lea.vmem [#allocation5], %s6314
        // Predicated region
        $region133: #{image_encoder_vit_forward.1} parent=111 // pred_check
          %p6316 = pneg %p615
        $region134: #{image_encoder_vit_forward.1} parent=111 // pred_check_branch
          %6318 = sbr.rel (%p6316) target = $region136
        $region135: #{image_encoder_vit_forward.1} parent=111 // pred_region
          %s6320 = ssub.s32 1024, 1024
          %6321 = vsyncadd %s6312, %s6320
          %s6322 = smul.addr %s41, 8
          %s6323 = smul.addr %s6322, 128
          %s6324 = scalar_lea.hbm %s23, %s6323
          %s6325 = sshll.u32 %s6315, 4
          %s6326 = int_to_ptr.vmem [resolvable:$true] %s6325
          %6331 = dma.vmem_to_hbm [thread:$0]  %s6326, 1024, %s6324, %s6312, 128, 128, 8
        $region136: #{image_encoder_vit_forward.1} parent=111 // pred_fallthru
          _
      $region112: #{image_encoder_vit_forward.1} parent=5 // pred_fallthru
        _
      %p6332 = scmp.le.s32.totalorder 2, %s32
      // Predicated region
      $region137: #{image_encoder_vit_forward.1} parent=5 // pred_check
        %p6333 = pneg %p6332
      $region138: #{image_encoder_vit_forward.1} parent=5 // pred_check_branch
        %6335 = sbr.rel (%p6333) target = $region140
      $region139: #{image_encoder_vit_forward.1} parent=5 // pred_region
        %s6336 = ssub.s32 %s32, 2
        // Predicated region
        $region141: #{image_encoder_vit_forward.1} parent=139 // pred_check
          %p6337 = pneg %p621
        $region142: #{image_encoder_vit_forward.1} parent=139 // pred_check_branch
          %6339 = sbr.rel (%p6337) target = $region144
        $region143: #{image_encoder_vit_forward.1} parent=139 // pred_region
          %s6340 = sand.u32 %s606, 1
          %s6341 = scalar_lea.sflag [#allocation6], %s6340
          %s6342 = sand.u32 %s606, 1
          %s6343 = smul.addr %s6342, 64
          %s6344 = scalar_lea.vmem [#allocation5], %s6343
          %6345 = dma.done %s6341, 1024
        $region144: #{image_encoder_vit_forward.1} parent=139 // pred_fallthru
          _
      $region140: #{image_encoder_vit_forward.1} parent=5 // pred_fallthru
        _
    $region6: #{image_encoder_vit_forward.1} parent=1 // loop_footer
      %s36 = sadd.s32 1, %s32
    $region7: #{image_encoder_vit_forward.1} parent=1 // loop_footer_branch
      %31 = sbr.rel target = $region3
    $region8: #{image_encoder_vit_forward.1} parent=1 // loop_exit
      _
    %6346 = vsyncpa [#allocation6], 1
    %s6347 = scalar_lea.sflag [#allocation6], 1
    %6348 = vsyncpa %s6347, 1

</llo_original>
